<compile_context>
chip_gen: v6e
topology: v6e:2x2x1
jax: 0.10.0
libtpu: 0.0.40
codegen_flags: <defaults>
</compile_context>

<pallas_src>
import math
import functools

import jax
import jax.numpy as jnp
from jax.experimental import pallas as pl
from jax.experimental.pallas import tpu as pltpu

LN_EPS = 1e-5  # nn.LayerNorm default

# Order of the stacked/fused weight arrays passed to the kernel.
FUSED_KEYS = (
    "n1g", "n1b", "sa_wqkv", "sa_bqkv", "sa_wo", "sa_bo",
    "n2g", "n2b", "ca_wq", "ca_bq", "ca_wkv", "ca_bkv", "ca_wo", "ca_bo",
    "n3g", "n3b", "ff_w1", "ff_b1", "ff_w2", "ff_b2",
)


# ---------------------------------------------------------------------------
# Math helpers (shared by the Pallas kernel and the pure-JAX reference).
# ---------------------------------------------------------------------------
def _erf(x):
    # Abramowitz & Stegun 7.1.26, |error| < 1.5e-7 (~f32 precision); avoids
    # relying on an erf lowering in Mosaic and matches torch's erf-GELU.
    a1, a2, a3, a4, a5 = 0.254829592, -0.284496736, 1.421413741, -1.453152027, 1.061405429
    p = 0.3275911
    ax = jnp.abs(x)
    t = 1.0 / (1.0 + p * ax)
    poly = ((((a5 * t + a4) * t + a3) * t + a2) * t + a1) * t
    e = 1.0 - poly * jnp.exp(-ax * ax)
    return jnp.where(x >= 0.0, e, -e)


def _gelu_exact(x):
    # nn.GELU() default (erf-based); kept in f32 (VPU/EUP) in both configs.
    return 0.5 * x * (1.0 + _erf(x * (1.0 / math.sqrt(2.0))))


def _layernorm(h, g, b):
    mu = jnp.mean(h, axis=-1, keepdims=True)
    var = jnp.mean((h - mu) ** 2, axis=-1, keepdims=True)
    return (h - mu) * jax.lax.rsqrt(var + LN_EPS) * g + b


def _attn_core(q2, k2, v2, B, Sq, Skv, wo, bo, num_heads, cd, fast_math):
    """Scaled-dot-product MHA core on pre-projected q/k/v (flattened rows).

    q2: (B*Sq, D); k2/v2: (B*Skv, D). Per-head scores/softmax/PV run as 3-D
    einsums batched over B (known-good Mosaic lowering); head outputs are
    concatenated along the feature dim and sent through ONE out-projection.

    # TODO(synk): a fully head-batched einsum over (B*H, S, hd) would also
    # remove the hd=8 lane slices, but needs a (B,S,H,hd)->(B,H,S,hd)
    # transpose whose Mosaic lowering support is not guaranteed; at this size
    # the concat form (review's first alternative) is kept.
    """
    D = q2.shape[-1]
    hd = D // num_heads
    scale = 1.0 / math.sqrt(hd)
    q3 = q2.reshape(B, Sq, D).astype(cd)
    k3 = k2.reshape(B, Skv, D).astype(cd)
    v3 = v2.reshape(B, Skv, D).astype(cd)
    o_heads = []
    for h in range(num_heads):
        sl = slice(h * hd, (h + 1) * hd)
        s = jnp.einsum('bqc,bkc->bqk', q3[..., sl], k3[..., sl],
                       preferred_element_type=jnp.float32) * scale
        s = s - jnp.max(s, axis=-1, keepdims=True)
        p = jnp.exp(s)
        denom = jnp.sum(p, axis=-1, keepdims=True)
        if fast_math:
            p = p * pl.reciprocal(denom, approx=True)   # EUP slot, VALU-free
        else:
            p = p / denom                               # exact (1e-4 config)
        o_heads.append(jnp.einsum('bqk,bkc->bqc', p.astype(cd), v3[..., sl],
                                  preferred_element_type=jnp.float32))
    # Concat heads along the feature dim, single out-projection (K=D).
    o = jnp.concatenate(o_heads, axis=-1).reshape(B * Sq, D)
    return jnp.dot(o.astype(cd), wo, preferred_element_type=jnp.float32) + bo


# ---------------------------------------------------------------------------
# Fused whole-model Pallas kernel: no grid, everything VMEM-resident, layers
# statically unrolled.
# ---------------------------------------------------------------------------
def _qformer_fused_kernel(q0_ref, vis_ref, *rest, batch, num_heads, fast_math):
    *w_refs, out_ref = rest
    assert len(w_refs) == len(FUSED_KEYS)
    w = dict(zip(FUSED_KEYS, w_refs))
    cd = jnp.bfloat16 if fast_math else jnp.float32

    rows_q, D = q0_ref.shape
    B = batch
    Q = rows_q // B
    V = vis_ref.shape[0] // B
    L = w["sa_wqkv"].shape[0]

    x2 = q0_ref[...]                    # (B*Q, D) f32; resident across layers
    vis2c = vis_ref[...].astype(cd)     # cast hoisted out of the layer loop

    for l in range(L):                  # static unroll; L is tiny (=2 here)
        # --- self-attention block (fused QKV in-projection) --------------
        h2 = _layernorm(x2, w["n1g"][l], w["n1b"][l])
        qkv = jnp.dot(h2.astype(cd), w["sa_wqkv"][l],
                      preferred_element_type=jnp.float32) + w["sa_bqkv"][l]
        x2 = x2 + _attn_core(qkv[:, :D], qkv[:, D:2 * D], qkv[:, 2 * D:],
                             B, Q, Q, w["sa_wo"][l], w["sa_bo"][l],
                             num_heads, cd, fast_math)

        # --- cross-attention block (fused K/V projection of visual embs) -
        h2 = _layernorm(x2, w["n2g"][l], w["n2b"][l])
        q2 = jnp.dot(h2.astype(cd), w["ca_wq"][l],
                     preferred_element_type=jnp.float32) + w["ca_bq"][l]
        kv = jnp.dot(vis2c, w["ca_wkv"][l],
                     preferred_element_type=jnp.float32) + w["ca_bkv"][l]
        x2 = x2 + _attn_core(q2, kv[:, :D], kv[:, D:],
                             B, Q, V, w["ca_wo"][l], w["ca_bo"][l],
                             num_heads, cd, fast_math)

        # --- feed-forward block (Dropout is identity at inference) -------
        h2 = _layernorm(x2, w["n3g"][l], w["n3b"][l])
        ff = jnp.dot(h2.astype(cd), w["ff_w1"][l],
                     preferred_element_type=jnp.float32) + w["ff_b1"][l]
        ff = _gelu_exact(ff)
        ff = jnp.dot(ff.astype(cd), w["ff_w2"][l],
                     preferred_element_type=jnp.float32) + w["ff_b2"][l]
        x2 = x2 + ff

    out_ref[...] = x2.astype(out_ref.dtype)   # single store, once


# ---------------------------------------------------------------------------
# Host-side weight stacking + QKV / KV fusion (and optional bf16 cast of the
# matmul weights; biases and LayerNorm params stay f32).
# ---------------------------------------------------------------------------
def _stack_and_fuse_params(layers, fast_math):
    wdt = jnp.bfloat16 if fast_math else jnp.float32
    st = lambda k: jnp.stack([lw[k] for lw in layers], axis=0)
    cat = lambda ks: jnp.concatenate([st(k) for k in ks], axis=-1)
    return {
        "n1g": st("n1g"), "n1b": st("n1b"),
        "sa_wqkv": cat(("sa_wq", "sa_wk", "sa_wv")).astype(wdt),   # (L, D, 3D)
        "sa_bqkv": cat(("sa_bq", "sa_bk", "sa_bv")),               # (L, 1, 3D)
        "sa_wo": st("sa_wo").astype(wdt), "sa_bo": st("sa_bo"),
        "n2g": st("n2g"), "n2b": st("n2b"),
        "ca_wq": st("ca_wq").astype(wdt), "ca_bq": st("ca_bq"),
        "ca_wkv": cat(("ca_wk", "ca_wv")).astype(wdt),             # (L, D, 2D)
        "ca_bkv": cat(("ca_bk", "ca_bv")),                         # (L, 1, 2D)
        "ca_wo": st("ca_wo").astype(wdt), "ca_bo": st("ca_bo"),
        "n3g": st("n3g"), "n3b": st("n3b"),
        "ff_w1": st("ff_w1").astype(wdt), "ff_b1": st("ff_b1"),
        "ff_w2": st("ff_w2").astype(wdt), "ff_b2": st("ff_b2"),
    }


def qformer_forward(visual_embs, text_embs, params, num_heads, fast_math=True):
    del text_embs  # unused by the PyTorch forward as well
    visual_embs = visual_embs.astype(jnp.float32)
    B, V, D = visual_embs.shape
    Q = params["learned_queries"].shape[0]

    # Flatten activations once host-side (free XLA reshape): no in-kernel
    # (B, S, D) <-> (B*S, D) relayouts.
    queries0 = jnp.broadcast_to(params["learned_queries"][None], (B, Q, D))
    queries0 = queries0.reshape(B * Q, D).astype(jnp.float32)
    vis2 = visual_embs.reshape(B * V, D)

    fused = _stack_and_fuse_params(params["layers"], fast_math)
    warrs = [fused[k] for k in FUSED_KEYS]

    # TODO(synk): for production sizes (large L, D~768) switch to a grid=(L,)
    # "arbitrary" layer axis with per-layer weight BlockSpecs (and on v7x split
    # ff_w1/ff_w2 along the 4D dim / raise vmem_limit_bytes, plus a "parallel"
    # batch axis to use both TensorCores); at this toy size the no-grid
    # unrolled form avoids the ~0.35 us/step grid overhead and all weights
    # (~130 KB) fit VMEM trivially.
    kernel = functools.partial(_qformer_fused_kernel, batch=B,
                               num_heads=num_heads, fast_math=fast_math)
    vmem = pl.BlockSpec(memory_space=pltpu.MemorySpace.VMEM)
    out2 = pl.pallas_call(
        kernel,
        out_shape=jax.ShapeDtypeStruct((B * Q, D), jnp.float32),
        in_specs=[vmem] * (2 + len(warrs)),
        out_specs=vmem,
    )(queries0, vis2, *warrs)
    return out2.reshape(B, Q, D)


# ---------------------------------------------------------------------------
# Pure-JAX reference (same math, no Pallas) for correctness checking.
# ---------------------------------------------------------------------------
def _mha_ref(xq, xkv, wq, wk, wv, bq, bk, bv, wo, bo, num_heads):
    D = xq.shape[-1]
    hd = D // num_heads
    scale = 1.0 / math.sqrt(hd)
    q = jnp.dot(xq, wq, preferred_element_type=jnp.float32) + bq
    k = jnp.dot(xkv, wk, preferred_element_type=jnp.float32) + bk
    v = jnp.dot(xkv, wv, preferred_element_type=jnp.float32) + bv
    outs = []
    for h in range(num_heads):
        sl = slice(h * hd, (h + 1) * hd)
        qh, kh, vh = q[:, sl], k[:, sl], v[:, sl]
        s = jax.lax.dot_general(qh, kh, (((1,), (1,)), ((), ())),
                                preferred_element_type=jnp.float32) * scale
        s = s - jnp.max(s, axis=-1, keepdims=True)
        p = jnp.exp(s)
        p = p / jnp.sum(p, axis=-1, keepdims=True)
        outs.append(jnp.dot(p, vh, preferred_element_type=jnp.float32))
    o = jnp.concatenate(outs, axis=-1)
    return jnp.dot(o, wo, preferred_element_type=jnp.float32) + bo


def reference_forward(visual_embs, text_embs, params, num_heads):
    del text_embs
    B, _, D = visual_embs.shape
    Q = params["learned_queries"].shape[0]
    x = jnp.broadcast_to(params["learned_queries"][None], (B, Q, D)).astype(jnp.float32)
    for lw in params["layers"]:
        def layer_fn(xb, vb, lw=lw):
            h = _layernorm(xb, lw["n1g"], lw["n1b"])
            xb = xb + _mha_ref(h, h, lw["sa_wq"], lw["sa_wk"], lw["sa_wv"],
                               lw["sa_bq"], lw["sa_bk"], lw["sa_bv"],
                               lw["sa_wo"], lw["sa_bo"], num_heads)
            h = _layernorm(xb, lw["n2g"], lw["n2b"])
            xb = xb + _mha_ref(h, vb, lw["ca_wq"], lw["ca_wk"], lw["ca_wv"],
                               lw["ca_bq"], lw["ca_bk"], lw["ca_bv"],
                               lw["ca_wo"], lw["ca_bo"], num_heads)
            h = _layernorm(xb, lw["n3g"], lw["n3b"])
            ff = jnp.dot(h, lw["ff_w1"], preferred_element_type=jnp.float32) + lw["ff_b1"]
            ff = _gelu_exact(ff)
            ff = jnp.dot(ff, lw["ff_w2"], preferred_element_type=jnp.float32) + lw["ff_b2"]
            return xb + ff
        x = jax.vmap(layer_fn)(x, visual_embs)
    return x


# ---------------------------------------------------------------------------
# Deterministic parameter init (synthetic; mirrors the module's shapes).
# ---------------------------------------------------------------------------
def init_params(key, hidden_dim, num_heads, num_layers, num_queries):
    D = hidden_dim
    kq, *layer_keys = jax.random.split(key, num_layers + 1)
    params = {"learned_queries": jax.random.normal(kq, (num_queries, D), dtype=jnp.float32)}
    layers = []
    wscale = 1.0 / math.sqrt(D)
    for lk in layer_keys:
        ks = jax.random.split(lk, 20)

        def nrm(i, shape, scale):
            return (scale * jax.random.normal(ks[i], shape)).astype(jnp.float32)

        lw = {
            "n1g": jnp.ones((1, D), jnp.float32), "n1b": jnp.zeros((1, D), jnp.float32),
            "sa_wq": nrm(0, (D, D), wscale), "sa_wk": nrm(1, (D, D), wscale),
            "sa_wv": nrm(2, (D, D), wscale),
            "sa_bq": nrm(3, (1, D), 0.02), "sa_bk": nrm(4, (1, D), 0.02),
            "sa_bv": nrm(5, (1, D), 0.02),
            "sa_wo": nrm(6, (D, D), wscale), "sa_bo": nrm(7, (1, D), 0.02),
            "n2g": jnp.ones((1, D), jnp.float32), "n2b": jnp.zeros((1, D), jnp.float32),
            "ca_wq": nrm(8, (D, D), wscale), "ca_wk": nrm(9, (D, D), wscale),
            "ca_wv": nrm(10, (D, D), wscale),
            "ca_bq": nrm(11, (1, D), 0.02), "ca_bk": nrm(12, (1, D), 0.02),
            "ca_bv": nrm(13, (1, D), 0.02),
            "ca_wo": nrm(14, (D, D), wscale), "ca_bo": nrm(15, (1, D), 0.02),
            "n3g": jnp.ones((1, D), jnp.float32), "n3b": jnp.zeros((1, D), jnp.float32),
            "ff_w1": nrm(16, (D, 4 * D), wscale), "ff_b1": nrm(17, (1, 4 * D), 0.02),
            "ff_w2": nrm(18, (4 * D, D), 1.0 / math.sqrt(4 * D)), "ff_b2": nrm(19, (1, D), 0.02),
        }
        layers.append(lw)
    params["layers"] = layers
    return params


if __name__ == "__main__":
    hidden_dim, num_heads, num_layers, num_queries = 32, 4, 2, 8
    B, visual_neighbor_num, seq_len = 2, 8, 8

    key = jax.random.PRNGKey(0)
    kp, kv, kt = jax.random.split(key, 3)
    params = init_params(kp, hidden_dim, num_heads, num_layers, num_queries)
    visual_embs = jax.random.normal(kv, (B, visual_neighbor_num, hidden_dim), dtype=jnp.float32)
    text_embs = jax.random.normal(kt, (B, seq_len, hidden_dim), dtype=jnp.float32)

    ref = reference_forward(visual_embs, text_embs, params, num_heads)

    # Exact config (f32 matmul operands, exact softmax divide): tight match.
    out_f32 = jax.block_until_ready(
        qformer_forward(visual_embs, text_embs, params, num_heads, fast_math=False))
    assert out_f32.shape == (B, num_queries, hidden_dim)
    assert bool(jnp.all(jnp.isfinite(out_f32)))
    assert jnp.allclose(out_f32, ref, rtol=1e-4, atol=1e-4), \
        float(jnp.max(jnp.abs(out_f32 - ref)))

    # Fast config (bf16 matmul operands with f32 accumulate + approx softmax
    # reciprocal): accuracy bounded by bf16 operand rounding (~2^-9 relative),
    # so compare at a bf16-appropriate tolerance.
    out_fast = jax.block_until_ready(
        qformer_forward(visual_embs, text_embs, params, num_heads, fast_math=True))
    assert out_fast.shape == (B, num_queries, hidden_dim)
    assert bool(jnp.all(jnp.isfinite(out_fast)))
    assert jnp.allclose(out_fast, ref, rtol=5e-2, atol=1e-1), \
        float(jnp.max(jnp.abs(out_fast - ref)))

    print("KERNEL_OK")
</pallas_src>

<mosaic_0001>
module attributes {stable_mosaic.version = 11 : i64} {
  func.func @_qformer_fused_kernel(%arg0: memref<16x32xf32, #tpu.memory_space<vmem>>, %arg1: memref<16x32xf32, #tpu.memory_space<vmem>>, %arg2: memref<2x1x32xf32, #tpu.memory_space<vmem>>, %arg3: memref<2x1x32xf32, #tpu.memory_space<vmem>>, %arg4: memref<2x32x96xf32, #tpu.memory_space<vmem>>, %arg5: memref<2x1x96xf32, #tpu.memory_space<vmem>>, %arg6: memref<2x32x32xf32, #tpu.memory_space<vmem>>, %arg7: memref<2x1x32xf32, #tpu.memory_space<vmem>>, %arg8: memref<2x1x32xf32, #tpu.memory_space<vmem>>, %arg9: memref<2x1x32xf32, #tpu.memory_space<vmem>>, %arg10: memref<2x32x32xf32, #tpu.memory_space<vmem>>, %arg11: memref<2x1x32xf32, #tpu.memory_space<vmem>>, %arg12: memref<2x32x64xf32, #tpu.memory_space<vmem>>, %arg13: memref<2x1x64xf32, #tpu.memory_space<vmem>>, %arg14: memref<2x32x32xf32, #tpu.memory_space<vmem>>, %arg15: memref<2x1x32xf32, #tpu.memory_space<vmem>>, %arg16: memref<2x1x32xf32, #tpu.memory_space<vmem>>, %arg17: memref<2x1x32xf32, #tpu.memory_space<vmem>>, %arg18: memref<2x32x128xf32, #tpu.memory_space<vmem>>, %arg19: memref<2x1x128xf32, #tpu.memory_space<vmem>>, %arg20: memref<2x128x32xf32, #tpu.memory_space<vmem>>, %arg21: memref<2x1x32xf32, #tpu.memory_space<vmem>>, %arg22: memref<16x32xf32, #tpu.memory_space<vmem>>) attributes {dimension_semantics = [], scalar_prefetch = 0 : i64, scratch_operands = 0 : i64, tpu.core_type = #tpu.core_type<tc>} {
    %c0 = arith.constant 0 : index
    %c0_0 = arith.constant 0 : index
    %0 = vector.load %arg0[%c0, %c0_0] : memref<16x32xf32, #tpu.memory_space<vmem>>, vector<16x32xf32>
    %c0_1 = arith.constant 0 : index
    %c0_2 = arith.constant 0 : index
    %1 = vector.load %arg1[%c0_1, %c0_2] : memref<16x32xf32, #tpu.memory_space<vmem>>, vector<16x32xf32>
    %c0_3 = arith.constant 0 : index
    %c0_4 = arith.constant 0 : index
    %c0_5 = arith.constant 0 : index
    %2 = vector.load %arg2[%c0_3, %c0_4, %c0_5] : memref<2x1x32xf32, #tpu.memory_space<vmem>>, vector<1x1x32xf32>
    %3 = vector.shape_cast %2 : vector<1x1x32xf32> to vector<1x32xf32>
    %c0_6 = arith.constant 0 : index
    %c0_7 = arith.constant 0 : index
    %c0_8 = arith.constant 0 : index
    %4 = vector.load %arg3[%c0_6, %c0_7, %c0_8] : memref<2x1x32xf32, #tpu.memory_space<vmem>>, vector<1x1x32xf32>
    %5 = vector.shape_cast %4 : vector<1x1x32xf32> to vector<1x32xf32>
    %cst = arith.constant dense<0.000000e+00> : vector<16xf32>
    %6 = vector.multi_reduction <add>, %0, %cst [1] : vector<16x32xf32> to vector<16xf32>
    %7 = vector.shape_cast %6 : vector<16xf32> to vector<16x1xf32>
    %cst_9 = arith.constant 3.200000e+01 : f32
    %8 = vector.broadcast %cst_9 : f32 to vector<16x1xf32>
    %9 = arith.divf %7, %8 : vector<16x1xf32>
    %10 = vector.broadcast %9 : vector<16x1xf32> to vector<16x32xf32>
    %11 = arith.subf %0, %10 : vector<16x32xf32>
    %12 = arith.mulf %11, %11 : vector<16x32xf32>
    %cst_10 = arith.constant dense<0.000000e+00> : vector<16xf32>
    %13 = vector.multi_reduction <add>, %12, %cst_10 [1] : vector<16x32xf32> to vector<16xf32>
    %14 = vector.shape_cast %13 : vector<16xf32> to vector<16x1xf32>
    %cst_11 = arith.constant 3.200000e+01 : f32
    %15 = vector.broadcast %cst_11 : f32 to vector<16x1xf32>
    %16 = arith.divf %14, %15 : vector<16x1xf32>
    %17 = vector.broadcast %9 : vector<16x1xf32> to vector<16x32xf32>
    %18 = arith.subf %0, %17 : vector<16x32xf32>
    %cst_12 = arith.constant 9.99999974E-6 : f32
    %19 = vector.broadcast %cst_12 : f32 to vector<16x1xf32>
    %20 = arith.addf %16, %19 : vector<16x1xf32>
    %21 = math.rsqrt %20 : vector<16x1xf32>
    %22 = vector.broadcast %21 : vector<16x1xf32> to vector<16x32xf32>
    %23 = arith.mulf %18, %22 : vector<16x32xf32>
    %24 = vector.broadcast %3 : vector<1x32xf32> to vector<16x32xf32>
    %25 = arith.mulf %23, %24 : vector<16x32xf32>
    %26 = vector.broadcast %5 : vector<1x32xf32> to vector<16x32xf32>
    %27 = arith.addf %25, %26 : vector<16x32xf32>
    %c0_13 = arith.constant 0 : index
    %c0_14 = arith.constant 0 : index
    %c0_15 = arith.constant 0 : index
    %28 = vector.load %arg4[%c0_13, %c0_14, %c0_15] : memref<2x32x96xf32, #tpu.memory_space<vmem>>, vector<1x32x96xf32>
    %29 = vector.shape_cast %28 : vector<1x32x96xf32> to vector<32x96xf32>
    %cst_16 = arith.constant dense<0.000000e+00> : vector<16x96xf32>
    %30 = tpu.matmul %27, %29, %cst_16 {dimension_numbers = #tpu.dot_dimension_numbers<[1], [0], [0], [1], [0, 0, 1, 1], [], []>} : vector<16x32xf32>, vector<32x96xf32>, vector<16x96xf32> -> vector<16x96xf32>
    %c0_17 = arith.constant 0 : index
    %c0_18 = arith.constant 0 : index
    %c0_19 = arith.constant 0 : index
    %31 = vector.load %arg5[%c0_17, %c0_18, %c0_19] : memref<2x1x96xf32, #tpu.memory_space<vmem>>, vector<1x1x96xf32>
    %32 = vector.shape_cast %31 : vector<1x1x96xf32> to vector<1x96xf32>
    %33 = vector.broadcast %32 : vector<1x96xf32> to vector<16x96xf32>
    %34 = arith.addf %30, %33 : vector<16x96xf32>
    %35 = vector.extract_strided_slice %34 {offsets = [0, 0], sizes = [16, 32], strides = [1, 1]} : vector<16x96xf32> to vector<16x32xf32>
    %36 = vector.extract_strided_slice %34 {offsets = [0, 32], sizes = [16, 32], strides = [1, 1]} : vector<16x96xf32> to vector<16x32xf32>
    %37 = vector.extract_strided_slice %34 {offsets = [0, 64], sizes = [16, 32], strides = [1, 1]} : vector<16x96xf32> to vector<16x32xf32>
    %c0_20 = arith.constant 0 : index
    %c0_21 = arith.constant 0 : index
    %c0_22 = arith.constant 0 : index
    %38 = vector.load %arg6[%c0_20, %c0_21, %c0_22] : memref<2x32x32xf32, #tpu.memory_space<vmem>>, vector<1x32x32xf32>
    %39 = vector.shape_cast %38 : vector<1x32x32xf32> to vector<32x32xf32>
    %c0_23 = arith.constant 0 : index
    %c0_24 = arith.constant 0 : index
    %c0_25 = arith.constant 0 : index
    %40 = vector.load %arg7[%c0_23, %c0_24, %c0_25] : memref<2x1x32xf32, #tpu.memory_space<vmem>>, vector<1x1x32xf32>
    %41 = vector.shape_cast %40 : vector<1x1x32xf32> to vector<1x32xf32>
    %42 = vector.shape_cast %35 : vector<16x32xf32> to vector<2x8x32xf32>
    %43 = vector.shape_cast %36 : vector<16x32xf32> to vector<2x8x32xf32>
    %44 = vector.shape_cast %37 : vector<16x32xf32> to vector<2x8x32xf32>
    %45 = vector.extract_strided_slice %42 {offsets = [0, 0, 0], sizes = [2, 8, 8], strides = [1, 1, 1]} : vector<2x8x32xf32> to vector<2x8x8xf32>
    %46 = vector.extract_strided_slice %43 {offsets = [0, 0, 0], sizes = [2, 8, 8], strides = [1, 1, 1]} : vector<2x8x32xf32> to vector<2x8x8xf32>
    "tpu.trace_start"() <{level = 10 : i32, message = "bqc,bkc->bqk"}> : () -> ()
    %cst_26 = arith.constant dense<0.000000e+00> : vector<2x8x8xf32>
    %47 = tpu.matmul %45, %46, %cst_26 {dimension_numbers = #tpu.dot_dimension_numbers<[2], [2], [1], [1], [0, 0, 0, 1, 1, 1], [0], [0]>} : vector<2x8x8xf32>, vector<2x8x8xf32>, vector<2x8x8xf32> -> vector<2x8x8xf32>
    "tpu.trace_stop"() : () -> ()
    %cst_27 = arith.constant 0.353553385 : f32
    %48 = vector.broadcast %cst_27 : f32 to vector<2x8x8xf32>
    %49 = arith.mulf %47, %48 : vector<2x8x8xf32>
    %cst_28 = arith.constant dense<0xFF800000> : vector<2x8xf32>
    %50 = vector.multi_reduction <maximumf>, %49, %cst_28 [2] : vector<2x8x8xf32> to vector<2x8xf32>
    %51 = vector.shape_cast %50 : vector<2x8xf32> to vector<2x8x1xf32>
    %52 = vector.broadcast %51 : vector<2x8x1xf32> to vector<2x8x8xf32>
    %53 = arith.subf %49, %52 : vector<2x8x8xf32>
    %54 = math.exp %53 : vector<2x8x8xf32>
    %cst_29 = arith.constant dense<0.000000e+00> : vector<2x8xf32>
    %55 = vector.multi_reduction <add>, %54, %cst_29 [2] : vector<2x8x8xf32> to vector<2x8xf32>
    %56 = vector.shape_cast %55 : vector<2x8xf32> to vector<2x8x1xf32>
    %57 = vector.broadcast %56 : vector<2x8x1xf32> to vector<2x8x8xf32>
    %58 = arith.divf %54, %57 : vector<2x8x8xf32>
    %59 = vector.extract_strided_slice %44 {offsets = [0, 0, 0], sizes = [2, 8, 8], strides = [1, 1, 1]} : vector<2x8x32xf32> to vector<2x8x8xf32>
    "tpu.trace_start"() <{level = 10 : i32, message = "bqk,bkc->bqc"}> : () -> ()
    %cst_30 = arith.constant dense<0.000000e+00> : vector<2x8x8xf32>
    %60 = tpu.matmul %58, %59, %cst_30 {dimension_numbers = #tpu.dot_dimension_numbers<[2], [1], [1], [2], [0, 0, 0, 1, 1, 2], [0], [0]>} : vector<2x8x8xf32>, vector<2x8x8xf32>, vector<2x8x8xf32> -> vector<2x8x8xf32>
    "tpu.trace_stop"() : () -> ()
    %61 = vector.extract_strided_slice %42 {offsets = [0, 0, 8], sizes = [2, 8, 8], strides = [1, 1, 1]} : vector<2x8x32xf32> to vector<2x8x8xf32>
    %62 = vector.extract_strided_slice %43 {offsets = [0, 0, 8], sizes = [2, 8, 8], strides = [1, 1, 1]} : vector<2x8x32xf32> to vector<2x8x8xf32>
    "tpu.trace_start"() <{level = 10 : i32, message = "bqc,bkc->bqk"}> : () -> ()
    %cst_31 = arith.constant dense<0.000000e+00> : vector<2x8x8xf32>
    %63 = tpu.matmul %61, %62, %cst_31 {dimension_numbers = #tpu.dot_dimension_numbers<[2], [2], [1], [1], [0, 0, 0, 1, 1, 1], [0], [0]>} : vector<2x8x8xf32>, vector<2x8x8xf32>, vector<2x8x8xf32> -> vector<2x8x8xf32>
    "tpu.trace_stop"() : () -> ()
    %cst_32 = arith.constant 0.353553385 : f32
    %64 = vector.broadcast %cst_32 : f32 to vector<2x8x8xf32>
    %65 = arith.mulf %63, %64 : vector<2x8x8xf32>
    %cst_33 = arith.constant dense<0xFF800000> : vector<2x8xf32>
    %66 = vector.multi_reduction <maximumf>, %65, %cst_33 [2] : vector<2x8x8xf32> to vector<2x8xf32>
    %67 = vector.shape_cast %66 : vector<2x8xf32> to vector<2x8x1xf32>
    %68 = vector.broadcast %67 : vector<2x8x1xf32> to vector<2x8x8xf32>
    %69 = arith.subf %65, %68 : vector<2x8x8xf32>
    %70 = math.exp %69 : vector<2x8x8xf32>
    %cst_34 = arith.constant dense<0.000000e+00> : vector<2x8xf32>
    %71 = vector.multi_reduction <add>, %70, %cst_34 [2] : vector<2x8x8xf32> to vector<2x8xf32>
    %72 = vector.shape_cast %71 : vector<2x8xf32> to vector<2x8x1xf32>
    %73 = vector.broadcast %72 : vector<2x8x1xf32> to vector<2x8x8xf32>
    %74 = arith.divf %70, %73 : vector<2x8x8xf32>
    %75 = vector.extract_strided_slice %44 {offsets = [0, 0, 8], sizes = [2, 8, 8], strides = [1, 1, 1]} : vector<2x8x32xf32> to vector<2x8x8xf32>
    "tpu.trace_start"() <{level = 10 : i32, message = "bqk,bkc->bqc"}> : () -> ()
    %cst_35 = arith.constant dense<0.000000e+00> : vector<2x8x8xf32>
    %76 = tpu.matmul %74, %75, %cst_35 {dimension_numbers = #tpu.dot_dimension_numbers<[2], [1], [1], [2], [0, 0, 0, 1, 1, 2], [0], [0]>} : vector<2x8x8xf32>, vector<2x8x8xf32>, vector<2x8x8xf32> -> vector<2x8x8xf32>
    "tpu.trace_stop"() : () -> ()
    %77 = vector.extract_strided_slice %42 {offsets = [0, 0, 16], sizes = [2, 8, 8], strides = [1, 1, 1]} : vector<2x8x32xf32> to vector<2x8x8xf32>
    %78 = vector.extract_strided_slice %43 {offsets = [0, 0, 16], sizes = [2, 8, 8], strides = [1, 1, 1]} : vector<2x8x32xf32> to vector<2x8x8xf32>
    "tpu.trace_start"() <{level = 10 : i32, message = "bqc,bkc->bqk"}> : () -> ()
    %cst_36 = arith.constant dense<0.000000e+00> : vector<2x8x8xf32>
    %79 = tpu.matmul %77, %78, %cst_36 {dimension_numbers = #tpu.dot_dimension_numbers<[2], [2], [1], [1], [0, 0, 0, 1, 1, 1], [0], [0]>} : vector<2x8x8xf32>, vector<2x8x8xf32>, vector<2x8x8xf32> -> vector<2x8x8xf32>
    "tpu.trace_stop"() : () -> ()
    %cst_37 = arith.constant 0.353553385 : f32
    %80 = vector.broadcast %cst_37 : f32 to vector<2x8x8xf32>
    %81 = arith.mulf %79, %80 : vector<2x8x8xf32>
    %cst_38 = arith.constant dense<0xFF800000> : vector<2x8xf32>
    %82 = vector.multi_reduction <maximumf>, %81, %cst_38 [2] : vector<2x8x8xf32> to vector<2x8xf32>
    %83 = vector.shape_cast %82 : vector<2x8xf32> to vector<2x8x1xf32>
    %84 = vector.broadcast %83 : vector<2x8x1xf32> to vector<2x8x8xf32>
    %85 = arith.subf %81, %84 : vector<2x8x8xf32>
    %86 = math.exp %85 : vector<2x8x8xf32>
    %cst_39 = arith.constant dense<0.000000e+00> : vector<2x8xf32>
    %87 = vector.multi_reduction <add>, %86, %cst_39 [2] : vector<2x8x8xf32> to vector<2x8xf32>
    %88 = vector.shape_cast %87 : vector<2x8xf32> to vector<2x8x1xf32>
    %89 = vector.broadcast %88 : vector<2x8x1xf32> to vector<2x8x8xf32>
    %90 = arith.divf %86, %89 : vector<2x8x8xf32>
    %91 = vector.extract_strided_slice %44 {offsets = [0, 0, 16], sizes = [2, 8, 8], strides = [1, 1, 1]} : vector<2x8x32xf32> to vector<2x8x8xf32>
    "tpu.trace_start"() <{level = 10 : i32, message = "bqk,bkc->bqc"}> : () -> ()
    %cst_40 = arith.constant dense<0.000000e+00> : vector<2x8x8xf32>
    %92 = tpu.matmul %90, %91, %cst_40 {dimension_numbers = #tpu.dot_dimension_numbers<[2], [1], [1], [2], [0, 0, 0, 1, 1, 2], [0], [0]>} : vector<2x8x8xf32>, vector<2x8x8xf32>, vector<2x8x8xf32> -> vector<2x8x8xf32>
    "tpu.trace_stop"() : () -> ()
    %93 = vector.extract_strided_slice %42 {offsets = [0, 0, 24], sizes = [2, 8, 8], strides = [1, 1, 1]} : vector<2x8x32xf32> to vector<2x8x8xf32>
    %94 = vector.extract_strided_slice %43 {offsets = [0, 0, 24], sizes = [2, 8, 8], strides = [1, 1, 1]} : vector<2x8x32xf32> to vector<2x8x8xf32>
    "tpu.trace_start"() <{level = 10 : i32, message = "bqc,bkc->bqk"}> : () -> ()
    %cst_41 = arith.constant dense<0.000000e+00> : vector<2x8x8xf32>
    %95 = tpu.matmul %93, %94, %cst_41 {dimension_numbers = #tpu.dot_dimension_numbers<[2], [2], [1], [1], [0, 0, 0, 1, 1, 1], [0], [0]>} : vector<2x8x8xf32>, vector<2x8x8xf32>, vector<2x8x8xf32> -> vector<2x8x8xf32>
    "tpu.trace_stop"() : () -> ()
    %cst_42 = arith.constant 0.353553385 : f32
    %96 = vector.broadcast %cst_42 : f32 to vector<2x8x8xf32>
    %97 = arith.mulf %95, %96 : vector<2x8x8xf32>
    %cst_43 = arith.constant dense<0xFF800000> : vector<2x8xf32>
    %98 = vector.multi_reduction <maximumf>, %97, %cst_43 [2] : vector<2x8x8xf32> to vector<2x8xf32>
    %99 = vector.shape_cast %98 : vector<2x8xf32> to vector<2x8x1xf32>
    %100 = vector.broadcast %99 : vector<2x8x1xf32> to vector<2x8x8xf32>
    %101 = arith.subf %97, %100 : vector<2x8x8xf32>
    %102 = math.exp %101 : vector<2x8x8xf32>
    %cst_44 = arith.constant dense<0.000000e+00> : vector<2x8xf32>
    %103 = vector.multi_reduction <add>, %102, %cst_44 [2] : vector<2x8x8xf32> to vector<2x8xf32>
    %104 = vector.shape_cast %103 : vector<2x8xf32> to vector<2x8x1xf32>
    %105 = vector.broadcast %104 : vector<2x8x1xf32> to vector<2x8x8xf32>
    %106 = arith.divf %102, %105 : vector<2x8x8xf32>
    %107 = vector.extract_strided_slice %44 {offsets = [0, 0, 24], sizes = [2, 8, 8], strides = [1, 1, 1]} : vector<2x8x32xf32> to vector<2x8x8xf32>
    "tpu.trace_start"() <{level = 10 : i32, message = "bqk,bkc->bqc"}> : () -> ()
    %cst_45 = arith.constant dense<0.000000e+00> : vector<2x8x8xf32>
    %108 = tpu.matmul %106, %107, %cst_45 {dimension_numbers = #tpu.dot_dimension_numbers<[2], [1], [1], [2], [0, 0, 0, 1, 1, 2], [0], [0]>} : vector<2x8x8xf32>, vector<2x8x8xf32>, vector<2x8x8xf32> -> vector<2x8x8xf32>
    "tpu.trace_stop"() : () -> ()
    %109 = tpu.concatenate %60, %76, %92, %108 in 2 : vector<2x8x8xf32>, vector<2x8x8xf32>, vector<2x8x8xf32>, vector<2x8x8xf32> -> vector<2x8x32xf32>
    %110 = vector.shape_cast %109 : vector<2x8x32xf32> to vector<16x32xf32>
    %cst_46 = arith.constant dense<0.000000e+00> : vector<16x32xf32>
    %111 = tpu.matmul %110, %39, %cst_46 {dimension_numbers = #tpu.dot_dimension_numbers<[1], [0], [0], [1], [0, 0, 1, 1], [], []>} : vector<16x32xf32>, vector<32x32xf32>, vector<16x32xf32> -> vector<16x32xf32>
    %112 = vector.broadcast %41 : vector<1x32xf32> to vector<16x32xf32>
    %113 = arith.addf %111, %112 : vector<16x32xf32>
    %114 = arith.addf %0, %113 : vector<16x32xf32>
    %c0_47 = arith.constant 0 : index
    %c0_48 = arith.constant 0 : index
    %c0_49 = arith.constant 0 : index
    %115 = vector.load %arg8[%c0_47, %c0_48, %c0_49] : memref<2x1x32xf32, #tpu.memory_space<vmem>>, vector<1x1x32xf32>
    %116 = vector.shape_cast %115 : vector<1x1x32xf32> to vector<1x32xf32>
    %c0_50 = arith.constant 0 : index
    %c0_51 = arith.constant 0 : index
    %c0_52 = arith.constant 0 : index
    %117 = vector.load %arg9[%c0_50, %c0_51, %c0_52] : memref<2x1x32xf32, #tpu.memory_space<vmem>>, vector<1x1x32xf32>
    %118 = vector.shape_cast %117 : vector<1x1x32xf32> to vector<1x32xf32>
    %cst_53 = arith.constant dense<0.000000e+00> : vector<16xf32>
    %119 = vector.multi_reduction <add>, %114, %cst_53 [1] : vector<16x32xf32> to vector<16xf32>
    %120 = vector.shape_cast %119 : vector<16xf32> to vector<16x1xf32>
    %cst_54 = arith.constant 3.200000e+01 : f32
    %121 = vector.broadcast %cst_54 : f32 to vector<16x1xf32>
    %122 = arith.divf %120, %121 : vector<16x1xf32>
    %123 = vector.broadcast %122 : vector<16x1xf32> to vector<16x32xf32>
    %124 = arith.subf %114, %123 : vector<16x32xf32>
    %125 = arith.mulf %124, %124 : vector<16x32xf32>
    %cst_55 = arith.constant dense<0.000000e+00> : vector<16xf32>
    %126 = vector.multi_reduction <add>, %125, %cst_55 [1] : vector<16x32xf32> to vector<16xf32>
    %127 = vector.shape_cast %126 : vector<16xf32> to vector<16x1xf32>
    %cst_56 = arith.constant 3.200000e+01 : f32
    %128 = vector.broadcast %cst_56 : f32 to vector<16x1xf32>
    %129 = arith.divf %127, %128 : vector<16x1xf32>
    %130 = vector.broadcast %122 : vector<16x1xf32> to vector<16x32xf32>
    %131 = arith.subf %114, %130 : vector<16x32xf32>
    %cst_57 = arith.constant 9.99999974E-6 : f32
    %132 = vector.broadcast %cst_57 : f32 to vector<16x1xf32>
    %133 = arith.addf %129, %132 : vector<16x1xf32>
    %134 = math.rsqrt %133 : vector<16x1xf32>
    %135 = vector.broadcast %134 : vector<16x1xf32> to vector<16x32xf32>
    %136 = arith.mulf %131, %135 : vector<16x32xf32>
    %137 = vector.broadcast %116 : vector<1x32xf32> to vector<16x32xf32>
    %138 = arith.mulf %136, %137 : vector<16x32xf32>
    %139 = vector.broadcast %118 : vector<1x32xf32> to vector<16x32xf32>
    %140 = arith.addf %138, %139 : vector<16x32xf32>
    %c0_58 = arith.constant 0 : index
    %c0_59 = arith.constant 0 : index
    %c0_60 = arith.constant 0 : index
    %141 = vector.load %arg10[%c0_58, %c0_59, %c0_60] : memref<2x32x32xf32, #tpu.memory_space<vmem>>, vector<1x32x32xf32>
    %142 = vector.shape_cast %141 : vector<1x32x32xf32> to vector<32x32xf32>
    %cst_61 = arith.constant dense<0.000000e+00> : vector<16x32xf32>
    %143 = tpu.matmul %140, %142, %cst_61 {dimension_numbers = #tpu.dot_dimension_numbers<[1], [0], [0], [1], [0, 0, 1, 1], [], []>} : vector<16x32xf32>, vector<32x32xf32>, vector<16x32xf32> -> vector<16x32xf32>
    %c0_62 = arith.constant 0 : index
    %c0_63 = arith.constant 0 : index
    %c0_64 = arith.constant 0 : index
    %144 = vector.load %arg11[%c0_62, %c0_63, %c0_64] : memref<2x1x32xf32, #tpu.memory_space<vmem>>, vector<1x1x32xf32>
    %145 = vector.shape_cast %144 : vector<1x1x32xf32> to vector<1x32xf32>
    %146 = vector.broadcast %145 : vector<1x32xf32> to vector<16x32xf32>
    %147 = arith.addf %143, %146 : vector<16x32xf32>
    %c0_65 = arith.constant 0 : index
    %c0_66 = arith.constant 0 : index
    %c0_67 = arith.constant 0 : index
    %148 = vector.load %arg12[%c0_65, %c0_66, %c0_67] : memref<2x32x64xf32, #tpu.memory_space<vmem>>, vector<1x32x64xf32>
    %149 = vector.shape_cast %148 : vector<1x32x64xf32> to vector<32x64xf32>
    %cst_68 = arith.constant dense<0.000000e+00> : vector<16x64xf32>
    %150 = tpu.matmul %1, %149, %cst_68 {dimension_numbers = #tpu.dot_dimension_numbers<[1], [0], [0], [1], [0, 0, 1, 1], [], []>} : vector<16x32xf32>, vector<32x64xf32>, vector<16x64xf32> -> vector<16x64xf32>
    %c0_69 = arith.constant 0 : index
    %c0_70 = arith.constant 0 : index
    %c0_71 = arith.constant 0 : index
    %151 = vector.load %arg13[%c0_69, %c0_70, %c0_71] : memref<2x1x64xf32, #tpu.memory_space<vmem>>, vector<1x1x64xf32>
    %152 = vector.shape_cast %151 : vector<1x1x64xf32> to vector<1x64xf32>
    %153 = vector.broadcast %152 : vector<1x64xf32> to vector<16x64xf32>
    %154 = arith.addf %150, %153 : vector<16x64xf32>
    %155 = vector.extract_strided_slice %154 {offsets = [0, 0], sizes = [16, 32], strides = [1, 1]} : vector<16x64xf32> to vector<16x32xf32>
    %156 = vector.extract_strided_slice %154 {offsets = [0, 32], sizes = [16, 32], strides = [1, 1]} : vector<16x64xf32> to vector<16x32xf32>
    %c0_72 = arith.constant 0 : index
    %c0_73 = arith.constant 0 : index
    %c0_74 = arith.constant 0 : index
    %157 = vector.load %arg14[%c0_72, %c0_73, %c0_74] : memref<2x32x32xf32, #tpu.memory_space<vmem>>, vector<1x32x32xf32>
    %158 = vector.shape_cast %157 : vector<1x32x32xf32> to vector<32x32xf32>
    %c0_75 = arith.constant 0 : index
    %c0_76 = arith.constant 0 : index
    %c0_77 = arith.constant 0 : index
    %159 = vector.load %arg15[%c0_75, %c0_76, %c0_77] : memref<2x1x32xf32, #tpu.memory_space<vmem>>, vector<1x1x32xf32>
    %160 = vector.shape_cast %159 : vector<1x1x32xf32> to vector<1x32xf32>
    %161 = vector.shape_cast %147 : vector<16x32xf32> to vector<2x8x32xf32>
    %162 = vector.shape_cast %155 : vector<16x32xf32> to vector<2x8x32xf32>
    %163 = vector.shape_cast %156 : vector<16x32xf32> to vector<2x8x32xf32>
    %164 = vector.extract_strided_slice %161 {offsets = [0, 0, 0], sizes = [2, 8, 8], strides = [1, 1, 1]} : vector<2x8x32xf32> to vector<2x8x8xf32>
    %165 = vector.extract_strided_slice %162 {offsets = [0, 0, 0], sizes = [2, 8, 8], strides = [1, 1, 1]} : vector<2x8x32xf32> to vector<2x8x8xf32>
    "tpu.trace_start"() <{level = 10 : i32, message = "bqc,bkc->bqk"}> : () -> ()
    %cst_78 = arith.constant dense<0.000000e+00> : vector<2x8x8xf32>
    %166 = tpu.matmul %164, %165, %cst_78 {dimension_numbers = #tpu.dot_dimension_numbers<[2], [2], [1], [1], [0, 0, 0, 1, 1, 1], [0], [0]>} : vector<2x8x8xf32>, vector<2x8x8xf32>, vector<2x8x8xf32> -> vector<2x8x8xf32>
    "tpu.trace_stop"() : () -> ()
    %cst_79 = arith.constant 0.353553385 : f32
    %167 = vector.broadcast %cst_79 : f32 to vector<2x8x8xf32>
    %168 = arith.mulf %166, %167 : vector<2x8x8xf32>
    %cst_80 = arith.constant dense<0xFF800000> : vector<2x8xf32>
    %169 = vector.multi_reduction <maximumf>, %168, %cst_80 [2] : vector<2x8x8xf32> to vector<2x8xf32>
    %170 = vector.shape_cast %169 : vector<2x8xf32> to vector<2x8x1xf32>
    %171 = vector.broadcast %170 : vector<2x8x1xf32> to vector<2x8x8xf32>
    %172 = arith.subf %168, %171 : vector<2x8x8xf32>
    %173 = math.exp %172 : vector<2x8x8xf32>
    %cst_81 = arith.constant dense<0.000000e+00> : vector<2x8xf32>
    %174 = vector.multi_reduction <add>, %173, %cst_81 [2] : vector<2x8x8xf32> to vector<2x8xf32>
    %175 = vector.shape_cast %174 : vector<2x8xf32> to vector<2x8x1xf32>
    %176 = vector.broadcast %175 : vector<2x8x1xf32> to vector<2x8x8xf32>
    %177 = arith.divf %173, %176 : vector<2x8x8xf32>
    %178 = vector.extract_strided_slice %163 {offsets = [0, 0, 0], sizes = [2, 8, 8], strides = [1, 1, 1]} : vector<2x8x32xf32> to vector<2x8x8xf32>
    "tpu.trace_start"() <{level = 10 : i32, message = "bqk,bkc->bqc"}> : () -> ()
    %cst_82 = arith.constant dense<0.000000e+00> : vector<2x8x8xf32>
    %179 = tpu.matmul %177, %178, %cst_82 {dimension_numbers = #tpu.dot_dimension_numbers<[2], [1], [1], [2], [0, 0, 0, 1, 1, 2], [0], [0]>} : vector<2x8x8xf32>, vector<2x8x8xf32>, vector<2x8x8xf32> -> vector<2x8x8xf32>
    "tpu.trace_stop"() : () -> ()
    %180 = vector.extract_strided_slice %161 {offsets = [0, 0, 8], sizes = [2, 8, 8], strides = [1, 1, 1]} : vector<2x8x32xf32> to vector<2x8x8xf32>
    %181 = vector.extract_strided_slice %162 {offsets = [0, 0, 8], sizes = [2, 8, 8], strides = [1, 1, 1]} : vector<2x8x32xf32> to vector<2x8x8xf32>
    "tpu.trace_start"() <{level = 10 : i32, message = "bqc,bkc->bqk"}> : () -> ()
    %cst_83 = arith.constant dense<0.000000e+00> : vector<2x8x8xf32>
    %182 = tpu.matmul %180, %181, %cst_83 {dimension_numbers = #tpu.dot_dimension_numbers<[2], [2], [1], [1], [0, 0, 0, 1, 1, 1], [0], [0]>} : vector<2x8x8xf32>, vector<2x8x8xf32>, vector<2x8x8xf32> -> vector<2x8x8xf32>
    "tpu.trace_stop"() : () -> ()
    %cst_84 = arith.constant 0.353553385 : f32
    %183 = vector.broadcast %cst_84 : f32 to vector<2x8x8xf32>
    %184 = arith.mulf %182, %183 : vector<2x8x8xf32>
    %cst_85 = arith.constant dense<0xFF800000> : vector<2x8xf32>
    %185 = vector.multi_reduction <maximumf>, %184, %cst_85 [2] : vector<2x8x8xf32> to vector<2x8xf32>
    %186 = vector.shape_cast %185 : vector<2x8xf32> to vector<2x8x1xf32>
    %187 = vector.broadcast %186 : vector<2x8x1xf32> to vector<2x8x8xf32>
    %188 = arith.subf %184, %187 : vector<2x8x8xf32>
    %189 = math.exp %188 : vector<2x8x8xf32>
    %cst_86 = arith.constant dense<0.000000e+00> : vector<2x8xf32>
    %190 = vector.multi_reduction <add>, %189, %cst_86 [2] : vector<2x8x8xf32> to vector<2x8xf32>
    %191 = vector.shape_cast %190 : vector<2x8xf32> to vector<2x8x1xf32>
    %192 = vector.broadcast %191 : vector<2x8x1xf32> to vector<2x8x8xf32>
    %193 = arith.divf %189, %192 : vector<2x8x8xf32>
    %194 = vector.extract_strided_slice %163 {offsets = [0, 0, 8], sizes = [2, 8, 8], strides = [1, 1, 1]} : vector<2x8x32xf32> to vector<2x8x8xf32>
    "tpu.trace_start"() <{level = 10 : i32, message = "bqk,bkc->bqc"}> : () -> ()
    %cst_87 = arith.constant dense<0.000000e+00> : vector<2x8x8xf32>
    %195 = tpu.matmul %193, %194, %cst_87 {dimension_numbers = #tpu.dot_dimension_numbers<[2], [1], [1], [2], [0, 0, 0, 1, 1, 2], [0], [0]>} : vector<2x8x8xf32>, vector<2x8x8xf32>, vector<2x8x8xf32> -> vector<2x8x8xf32>
    "tpu.trace_stop"() : () -> ()
    %196 = vector.extract_strided_slice %161 {offsets = [0, 0, 16], sizes = [2, 8, 8], strides = [1, 1, 1]} : vector<2x8x32xf32> to vector<2x8x8xf32>
    %197 = vector.extract_strided_slice %162 {offsets = [0, 0, 16], sizes = [2, 8, 8], strides = [1, 1, 1]} : vector<2x8x32xf32> to vector<2x8x8xf32>
    "tpu.trace_start"() <{level = 10 : i32, message = "bqc,bkc->bqk"}> : () -> ()
    %cst_88 = arith.constant dense<0.000000e+00> : vector<2x8x8xf32>
    %198 = tpu.matmul %196, %197, %cst_88 {dimension_numbers = #tpu.dot_dimension_numbers<[2], [2], [1], [1], [0, 0, 0, 1, 1, 1], [0], [0]>} : vector<2x8x8xf32>, vector<2x8x8xf32>, vector<2x8x8xf32> -> vector<2x8x8xf32>
    "tpu.trace_stop"() : () -> ()
    %cst_89 = arith.constant 0.353553385 : f32
    %199 = vector.broadcast %cst_89 : f32 to vector<2x8x8xf32>
    %200 = arith.mulf %198, %199 : vector<2x8x8xf32>
    %cst_90 = arith.constant dense<0xFF800000> : vector<2x8xf32>
    %201 = vector.multi_reduction <maximumf>, %200, %cst_90 [2] : vector<2x8x8xf32> to vector<2x8xf32>
    %202 = vector.shape_cast %201 : vector<2x8xf32> to vector<2x8x1xf32>
    %203 = vector.broadcast %202 : vector<2x8x1xf32> to vector<2x8x8xf32>
    %204 = arith.subf %200, %203 : vector<2x8x8xf32>
    %205 = math.exp %204 : vector<2x8x8xf32>
    %cst_91 = arith.constant dense<0.000000e+00> : vector<2x8xf32>
    %206 = vector.multi_reduction <add>, %205, %cst_91 [2] : vector<2x8x8xf32> to vector<2x8xf32>
    %207 = vector.shape_cast %206 : vector<2x8xf32> to vector<2x8x1xf32>
    %208 = vector.broadcast %207 : vector<2x8x1xf32> to vector<2x8x8xf32>
    %209 = arith.divf %205, %208 : vector<2x8x8xf32>
    %210 = vector.extract_strided_slice %163 {offsets = [0, 0, 16], sizes = [2, 8, 8], strides = [1, 1, 1]} : vector<2x8x32xf32> to vector<2x8x8xf32>
    "tpu.trace_start"() <{level = 10 : i32, message = "bqk,bkc->bqc"}> : () -> ()
    %cst_92 = arith.constant dense<0.000000e+00> : vector<2x8x8xf32>
    %211 = tpu.matmul %209, %210, %cst_92 {dimension_numbers = #tpu.dot_dimension_numbers<[2], [1], [1], [2], [0, 0, 0, 1, 1, 2], [0], [0]>} : vector<2x8x8xf32>, vector<2x8x8xf32>, vector<2x8x8xf32> -> vector<2x8x8xf32>
    "tpu.trace_stop"() : () -> ()
    %212 = vector.extract_strided_slice %161 {offsets = [0, 0, 24], sizes = [2, 8, 8], strides = [1, 1, 1]} : vector<2x8x32xf32> to vector<2x8x8xf32>
    %213 = vector.extract_strided_slice %162 {offsets = [0, 0, 24], sizes = [2, 8, 8], strides = [1, 1, 1]} : vector<2x8x32xf32> to vector<2x8x8xf32>
    "tpu.trace_start"() <{level = 10 : i32, message = "bqc,bkc->bqk"}> : () -> ()
    %cst_93 = arith.constant dense<0.000000e+00> : vector<2x8x8xf32>
    %214 = tpu.matmul %212, %213, %cst_93 {dimension_numbers = #tpu.dot_dimension_numbers<[2], [2], [1], [1], [0, 0, 0, 1, 1, 1], [0], [0]>} : vector<2x8x8xf32>, vector<2x8x8xf32>, vector<2x8x8xf32> -> vector<2x8x8xf32>
    "tpu.trace_stop"() : () -> ()
    %cst_94 = arith.constant 0.353553385 : f32
    %215 = vector.broadcast %cst_94 : f32 to vector<2x8x8xf32>
    %216 = arith.mulf %214, %215 : vector<2x8x8xf32>
    %cst_95 = arith.constant dense<0xFF800000> : vector<2x8xf32>
    %217 = vector.multi_reduction <maximumf>, %216, %cst_95 [2] : vector<2x8x8xf32> to vector<2x8xf32>
    %218 = vector.shape_cast %217 : vector<2x8xf32> to vector<2x8x1xf32>
    %219 = vector.broadcast %218 : vector<2x8x1xf32> to vector<2x8x8xf32>
    %220 = arith.subf %216, %219 : vector<2x8x8xf32>
    %221 = math.exp %220 : vector<2x8x8xf32>
    %cst_96 = arith.constant dense<0.000000e+00> : vector<2x8xf32>
    %222 = vector.multi_reduction <add>, %221, %cst_96 [2] : vector<2x8x8xf32> to vector<2x8xf32>
    %223 = vector.shape_cast %222 : vector<2x8xf32> to vector<2x8x1xf32>
    %224 = vector.broadcast %223 : vector<2x8x1xf32> to vector<2x8x8xf32>
    %225 = arith.divf %221, %224 : vector<2x8x8xf32>
    %226 = vector.extract_strided_slice %163 {offsets = [0, 0, 24], sizes = [2, 8, 8], strides = [1, 1, 1]} : vector<2x8x32xf32> to vector<2x8x8xf32>
    "tpu.trace_start"() <{level = 10 : i32, message = "bqk,bkc->bqc"}> : () -> ()
    %cst_97 = arith.constant dense<0.000000e+00> : vector<2x8x8xf32>
    %227 = tpu.matmul %225, %226, %cst_97 {dimension_numbers = #tpu.dot_dimension_numbers<[2], [1], [1], [2], [0, 0, 0, 1, 1, 2], [0], [0]>} : vector<2x8x8xf32>, vector<2x8x8xf32>, vector<2x8x8xf32> -> vector<2x8x8xf32>
    "tpu.trace_stop"() : () -> ()
    %228 = tpu.concatenate %179, %195, %211, %227 in 2 : vector<2x8x8xf32>, vector<2x8x8xf32>, vector<2x8x8xf32>, vector<2x8x8xf32> -> vector<2x8x32xf32>
    %229 = vector.shape_cast %228 : vector<2x8x32xf32> to vector<16x32xf32>
    %cst_98 = arith.constant dense<0.000000e+00> : vector<16x32xf32>
    %230 = tpu.matmul %229, %158, %cst_98 {dimension_numbers = #tpu.dot_dimension_numbers<[1], [0], [0], [1], [0, 0, 1, 1], [], []>} : vector<16x32xf32>, vector<32x32xf32>, vector<16x32xf32> -> vector<16x32xf32>
    %231 = vector.broadcast %160 : vector<1x32xf32> to vector<16x32xf32>
    %232 = arith.addf %230, %231 : vector<16x32xf32>
    %233 = arith.addf %114, %232 : vector<16x32xf32>
    %c0_99 = arith.constant 0 : index
    %c0_100 = arith.constant 0 : index
    %c0_101 = arith.constant 0 : index
    %234 = vector.load %arg16[%c0_99, %c0_100, %c0_101] : memref<2x1x32xf32, #tpu.memory_space<vmem>>, vector<1x1x32xf32>
    %235 = vector.shape_cast %234 : vector<1x1x32xf32> to vector<1x32xf32>
    %c0_102 = arith.constant 0 : index
    %c0_103 = arith.constant 0 : index
    %c0_104 = arith.constant 0 : index
    %236 = vector.load %arg17[%c0_102, %c0_103, %c0_104] : memref<2x1x32xf32, #tpu.memory_space<vmem>>, vector<1x1x32xf32>
    %237 = vector.shape_cast %236 : vector<1x1x32xf32> to vector<1x32xf32>
    %cst_105 = arith.constant dense<0.000000e+00> : vector<16xf32>
    %238 = vector.multi_reduction <add>, %233, %cst_105 [1] : vector<16x32xf32> to vector<16xf32>
    %239 = vector.shape_cast %238 : vector<16xf32> to vector<16x1xf32>
    %cst_106 = arith.constant 3.200000e+01 : f32
    %240 = vector.broadcast %cst_106 : f32 to vector<16x1xf32>
    %241 = arith.divf %239, %240 : vector<16x1xf32>
    %242 = vector.broadcast %241 : vector<16x1xf32> to vector<16x32xf32>
    %243 = arith.subf %233, %242 : vector<16x32xf32>
    %244 = arith.mulf %243, %243 : vector<16x32xf32>
    %cst_107 = arith.constant dense<0.000000e+00> : vector<16xf32>
    %245 = vector.multi_reduction <add>, %244, %cst_107 [1] : vector<16x32xf32> to vector<16xf32>
    %246 = vector.shape_cast %245 : vector<16xf32> to vector<16x1xf32>
    %cst_108 = arith.constant 3.200000e+01 : f32
    %247 = vector.broadcast %cst_108 : f32 to vector<16x1xf32>
    %248 = arith.divf %246, %247 : vector<16x1xf32>
    %249 = vector.broadcast %241 : vector<16x1xf32> to vector<16x32xf32>
    %250 = arith.subf %233, %249 : vector<16x32xf32>
    %cst_109 = arith.constant 9.99999974E-6 : f32
    %251 = vector.broadcast %cst_109 : f32 to vector<16x1xf32>
    %252 = arith.addf %248, %251 : vector<16x1xf32>
    %253 = math.rsqrt %252 : vector<16x1xf32>
    %254 = vector.broadcast %253 : vector<16x1xf32> to vector<16x32xf32>
    %255 = arith.mulf %250, %254 : vector<16x32xf32>
    %256 = vector.broadcast %235 : vector<1x32xf32> to vector<16x32xf32>
    %257 = arith.mulf %255, %256 : vector<16x32xf32>
    %258 = vector.broadcast %237 : vector<1x32xf32> to vector<16x32xf32>
    %259 = arith.addf %257, %258 : vector<16x32xf32>
    %c0_110 = arith.constant 0 : index
    %c0_111 = arith.constant 0 : index
    %c0_112 = arith.constant 0 : index
    %260 = vector.load %arg18[%c0_110, %c0_111, %c0_112] : memref<2x32x128xf32, #tpu.memory_space<vmem>>, vector<1x32x128xf32>
    %261 = vector.shape_cast %260 : vector<1x32x128xf32> to vector<32x128xf32>
    %cst_113 = arith.constant dense<0.000000e+00> : vector<16x128xf32>
    %262 = tpu.matmul %259, %261, %cst_113 {dimension_numbers = #tpu.dot_dimension_numbers<[1], [0], [0], [1], [0, 0, 1, 1], [], []>} : vector<16x32xf32>, vector<32x128xf32>, vector<16x128xf32> -> vector<16x128xf32>
    %c0_114 = arith.constant 0 : index
    %c0_115 = arith.constant 0 : index
    %c0_116 = arith.constant 0 : index
    %263 = vector.load %arg19[%c0_114, %c0_115, %c0_116] : memref<2x1x128xf32, #tpu.memory_space<vmem>>, vector<1x1x128xf32>
    %264 = vector.shape_cast %263 : vector<1x1x128xf32> to vector<1x128xf32>
    %265 = vector.broadcast %264 : vector<1x128xf32> to vector<16x128xf32>
    %266 = arith.addf %262, %265 : vector<16x128xf32>
    %cst_117 = arith.constant 5.000000e-01 : f32
    %267 = vector.broadcast %cst_117 : f32 to vector<16x128xf32>
    %268 = arith.mulf %267, %266 : vector<16x128xf32>
    %cst_118 = arith.constant 0.707106769 : f32
    %269 = vector.broadcast %cst_118 : f32 to vector<16x128xf32>
    %270 = arith.mulf %266, %269 : vector<16x128xf32>
    %271 = math.absf %270 : vector<16x128xf32>
    %cst_119 = arith.constant 0.327591091 : f32
    %272 = vector.broadcast %cst_119 : f32 to vector<16x128xf32>
    %273 = arith.mulf %272, %271 : vector<16x128xf32>
    %cst_120 = arith.constant 1.000000e+00 : f32
    %274 = vector.broadcast %cst_120 : f32 to vector<16x128xf32>
    %275 = arith.addf %274, %273 : vector<16x128xf32>
    %cst_121 = arith.constant 1.000000e+00 : f32
    %276 = vector.broadcast %cst_121 : f32 to vector<16x128xf32>
    %277 = arith.divf %276, %275 : vector<16x128xf32>
    %cst_122 = arith.constant 1.06140542 : f32
    %278 = vector.broadcast %cst_122 : f32 to vector<16x128xf32>
    %279 = arith.mulf %278, %277 : vector<16x128xf32>
    %cst_123 = arith.constant -1.45315206 : f32
    %280 = vector.broadcast %cst_123 : f32 to vector<16x128xf32>
    %281 = arith.addf %279, %280 : vector<16x128xf32>
    %282 = arith.mulf %281, %277 : vector<16x128xf32>
    %cst_124 = arith.constant 1.42141378 : f32
    %283 = vector.broadcast %cst_124 : f32 to vector<16x128xf32>
    %284 = arith.addf %282, %283 : vector<16x128xf32>
    %285 = arith.mulf %284, %277 : vector<16x128xf32>
    %cst_125 = arith.constant -0.284496725 : f32
    %286 = vector.broadcast %cst_125 : f32 to vector<16x128xf32>
    %287 = arith.addf %285, %286 : vector<16x128xf32>
    %288 = arith.mulf %287, %277 : vector<16x128xf32>
    %cst_126 = arith.constant 0.254829586 : f32
    %289 = vector.broadcast %cst_126 : f32 to vector<16x128xf32>
    %290 = arith.addf %288, %289 : vector<16x128xf32>
    %291 = arith.mulf %290, %277 : vector<16x128xf32>
    %cst_127 = arith.constant 0.000000e+00 : f32
    %292 = vector.broadcast %cst_127 : f32 to vector<16x128xf32>
    %293 = arith.subf %292, %271 : vector<16x128xf32>
    %294 = arith.mulf %293, %271 : vector<16x128xf32>
    %295 = math.exp %294 : vector<16x128xf32>
    %296 = arith.mulf %291, %295 : vector<16x128xf32>
    %cst_128 = arith.constant 1.000000e+00 : f32
    %297 = vector.broadcast %cst_128 : f32 to vector<16x128xf32>
    %298 = arith.subf %297, %296 : vector<16x128xf32>
    %cst_129 = arith.constant 0.000000e+00 : f32
    %299 = vector.broadcast %cst_129 : f32 to vector<16x128xf32>
    %300 = arith.cmpf oge, %270, %299 : vector<16x128xf32>
    %cst_130 = arith.constant 0.000000e+00 : f32
    %301 = vector.broadcast %cst_130 : f32 to vector<16x128xf32>
    %302 = arith.subf %301, %298 : vector<16x128xf32>
    %303 = arith.select %300, %298, %302 : vector<16x128xi1>, vector<16x128xf32>
    %cst_131 = arith.constant 1.000000e+00 : f32
    %304 = vector.broadcast %cst_131 : f32 to vector<16x128xf32>
    %305 = arith.addf %304, %303 : vector<16x128xf32>
    %306 = arith.mulf %268, %305 : vector<16x128xf32>
    %c0_132 = arith.constant 0 : index
    %c0_133 = arith.constant 0 : index
    %c0_134 = arith.constant 0 : index
    %307 = vector.load %arg20[%c0_132, %c0_133, %c0_134] : memref<2x128x32xf32, #tpu.memory_space<vmem>>, vector<1x128x32xf32>
    %308 = vector.shape_cast %307 : vector<1x128x32xf32> to vector<128x32xf32>
    %cst_135 = arith.constant dense<0.000000e+00> : vector<16x32xf32>
    %309 = tpu.matmul %306, %308, %cst_135 {dimension_numbers = #tpu.dot_dimension_numbers<[1], [0], [0], [1], [0, 0, 1, 1], [], []>} : vector<16x128xf32>, vector<128x32xf32>, vector<16x32xf32> -> vector<16x32xf32>
    %c0_136 = arith.constant 0 : index
    %c0_137 = arith.constant 0 : index
    %c0_138 = arith.constant 0 : index
    %310 = vector.load %arg21[%c0_136, %c0_137, %c0_138] : memref<2x1x32xf32, #tpu.memory_space<vmem>>, vector<1x1x32xf32>
    %311 = vector.shape_cast %310 : vector<1x1x32xf32> to vector<1x32xf32>
    %312 = vector.broadcast %311 : vector<1x32xf32> to vector<16x32xf32>
    %313 = arith.addf %309, %312 : vector<16x32xf32>
    %314 = arith.addf %233, %313 : vector<16x32xf32>
    %c1 = arith.constant 1 : index
    %c0_139 = arith.constant 0 : index
    %c0_140 = arith.constant 0 : index
    %315 = vector.load %arg2[%c1, %c0_139, %c0_140] : memref<2x1x32xf32, #tpu.memory_space<vmem>>, vector<1x1x32xf32>
    %316 = vector.shape_cast %315 : vector<1x1x32xf32> to vector<1x32xf32>
    %c1_141 = arith.constant 1 : index
    %c0_142 = arith.constant 0 : index
    %c0_143 = arith.constant 0 : index
    %317 = vector.load %arg3[%c1_141, %c0_142, %c0_143] : memref<2x1x32xf32, #tpu.memory_space<vmem>>, vector<1x1x32xf32>
    %318 = vector.shape_cast %317 : vector<1x1x32xf32> to vector<1x32xf32>
    %cst_144 = arith.constant dense<0.000000e+00> : vector<16xf32>
    %319 = vector.multi_reduction <add>, %314, %cst_144 [1] : vector<16x32xf32> to vector<16xf32>
    %320 = vector.shape_cast %319 : vector<16xf32> to vector<16x1xf32>
    %cst_145 = arith.constant 3.200000e+01 : f32
    %321 = vector.broadcast %cst_145 : f32 to vector<16x1xf32>
    %322 = arith.divf %320, %321 : vector<16x1xf32>
    %323 = vector.broadcast %322 : vector<16x1xf32> to vector<16x32xf32>
    %324 = arith.subf %314, %323 : vector<16x32xf32>
    %325 = arith.mulf %324, %324 : vector<16x32xf32>
    %cst_146 = arith.constant dense<0.000000e+00> : vector<16xf32>
    %326 = vector.multi_reduction <add>, %325, %cst_146 [1] : vector<16x32xf32> to vector<16xf32>
    %327 = vector.shape_cast %326 : vector<16xf32> to vector<16x1xf32>
    %cst_147 = arith.constant 3.200000e+01 : f32
    %328 = vector.broadcast %cst_147 : f32 to vector<16x1xf32>
    %329 = arith.divf %327, %328 : vector<16x1xf32>
    %330 = vector.broadcast %322 : vector<16x1xf32> to vector<16x32xf32>
    %331 = arith.subf %314, %330 : vector<16x32xf32>
    %cst_148 = arith.constant 9.99999974E-6 : f32
    %332 = vector.broadcast %cst_148 : f32 to vector<16x1xf32>
    %333 = arith.addf %329, %332 : vector<16x1xf32>
    %334 = math.rsqrt %333 : vector<16x1xf32>
    %335 = vector.broadcast %334 : vector<16x1xf32> to vector<16x32xf32>
    %336 = arith.mulf %331, %335 : vector<16x32xf32>
    %337 = vector.broadcast %316 : vector<1x32xf32> to vector<16x32xf32>
    %338 = arith.mulf %336, %337 : vector<16x32xf32>
    %339 = vector.broadcast %318 : vector<1x32xf32> to vector<16x32xf32>
    %340 = arith.addf %338, %339 : vector<16x32xf32>
    %c1_149 = arith.constant 1 : index
    %c0_150 = arith.constant 0 : index
    %c0_151 = arith.constant 0 : index
    %341 = vector.load %arg4[%c1_149, %c0_150, %c0_151] : memref<2x32x96xf32, #tpu.memory_space<vmem>>, vector<1x32x96xf32>
    %342 = vector.shape_cast %341 : vector<1x32x96xf32> to vector<32x96xf32>
    %cst_152 = arith.constant dense<0.000000e+00> : vector<16x96xf32>
    %343 = tpu.matmul %340, %342, %cst_152 {dimension_numbers = #tpu.dot_dimension_numbers<[1], [0], [0], [1], [0, 0, 1, 1], [], []>} : vector<16x32xf32>, vector<32x96xf32>, vector<16x96xf32> -> vector<16x96xf32>
    %c1_153 = arith.constant 1 : index
    %c0_154 = arith.constant 0 : index
    %c0_155 = arith.constant 0 : index
    %344 = vector.load %arg5[%c1_153, %c0_154, %c0_155] : memref<2x1x96xf32, #tpu.memory_space<vmem>>, vector<1x1x96xf32>
    %345 = vector.shape_cast %344 : vector<1x1x96xf32> to vector<1x96xf32>
    %346 = vector.broadcast %345 : vector<1x96xf32> to vector<16x96xf32>
    %347 = arith.addf %343, %346 : vector<16x96xf32>
    %348 = vector.extract_strided_slice %347 {offsets = [0, 0], sizes = [16, 32], strides = [1, 1]} : vector<16x96xf32> to vector<16x32xf32>
    %349 = vector.extract_strided_slice %347 {offsets = [0, 32], sizes = [16, 32], strides = [1, 1]} : vector<16x96xf32> to vector<16x32xf32>
    %350 = vector.extract_strided_slice %347 {offsets = [0, 64], sizes = [16, 32], strides = [1, 1]} : vector<16x96xf32> to vector<16x32xf32>
    %c1_156 = arith.constant 1 : index
    %c0_157 = arith.constant 0 : index
    %c0_158 = arith.constant 0 : index
    %351 = vector.load %arg6[%c1_156, %c0_157, %c0_158] : memref<2x32x32xf32, #tpu.memory_space<vmem>>, vector<1x32x32xf32>
    %352 = vector.shape_cast %351 : vector<1x32x32xf32> to vector<32x32xf32>
    %c1_159 = arith.constant 1 : index
    %c0_160 = arith.constant 0 : index
    %c0_161 = arith.constant 0 : index
    %353 = vector.load %arg7[%c1_159, %c0_160, %c0_161] : memref<2x1x32xf32, #tpu.memory_space<vmem>>, vector<1x1x32xf32>
    %354 = vector.shape_cast %353 : vector<1x1x32xf32> to vector<1x32xf32>
    %355 = vector.shape_cast %348 : vector<16x32xf32> to vector<2x8x32xf32>
    %356 = vector.shape_cast %349 : vector<16x32xf32> to vector<2x8x32xf32>
    %357 = vector.shape_cast %350 : vector<16x32xf32> to vector<2x8x32xf32>
    %358 = vector.extract_strided_slice %355 {offsets = [0, 0, 0], sizes = [2, 8, 8], strides = [1, 1, 1]} : vector<2x8x32xf32> to vector<2x8x8xf32>
    %359 = vector.extract_strided_slice %356 {offsets = [0, 0, 0], sizes = [2, 8, 8], strides = [1, 1, 1]} : vector<2x8x32xf32> to vector<2x8x8xf32>
    "tpu.trace_start"() <{level = 10 : i32, message = "bqc,bkc->bqk"}> : () -> ()
    %cst_162 = arith.constant dense<0.000000e+00> : vector<2x8x8xf32>
    %360 = tpu.matmul %358, %359, %cst_162 {dimension_numbers = #tpu.dot_dimension_numbers<[2], [2], [1], [1], [0, 0, 0, 1, 1, 1], [0], [0]>} : vector<2x8x8xf32>, vector<2x8x8xf32>, vector<2x8x8xf32> -> vector<2x8x8xf32>
    "tpu.trace_stop"() : () -> ()
    %cst_163 = arith.constant 0.353553385 : f32
    %361 = vector.broadcast %cst_163 : f32 to vector<2x8x8xf32>
    %362 = arith.mulf %360, %361 : vector<2x8x8xf32>
    %cst_164 = arith.constant dense<0xFF800000> : vector<2x8xf32>
    %363 = vector.multi_reduction <maximumf>, %362, %cst_164 [2] : vector<2x8x8xf32> to vector<2x8xf32>
    %364 = vector.shape_cast %363 : vector<2x8xf32> to vector<2x8x1xf32>
    %365 = vector.broadcast %364 : vector<2x8x1xf32> to vector<2x8x8xf32>
    %366 = arith.subf %362, %365 : vector<2x8x8xf32>
    %367 = math.exp %366 : vector<2x8x8xf32>
    %cst_165 = arith.constant dense<0.000000e+00> : vector<2x8xf32>
    %368 = vector.multi_reduction <add>, %367, %cst_165 [2] : vector<2x8x8xf32> to vector<2x8xf32>
    %369 = vector.shape_cast %368 : vector<2x8xf32> to vector<2x8x1xf32>
    %370 = vector.broadcast %369 : vector<2x8x1xf32> to vector<2x8x8xf32>
    %371 = arith.divf %367, %370 : vector<2x8x8xf32>
    %372 = vector.extract_strided_slice %357 {offsets = [0, 0, 0], sizes = [2, 8, 8], strides = [1, 1, 1]} : vector<2x8x32xf32> to vector<2x8x8xf32>
    "tpu.trace_start"() <{level = 10 : i32, message = "bqk,bkc->bqc"}> : () -> ()
    %cst_166 = arith.constant dense<0.000000e+00> : vector<2x8x8xf32>
    %373 = tpu.matmul %371, %372, %cst_166 {dimension_numbers = #tpu.dot_dimension_numbers<[2], [1], [1], [2], [0, 0, 0, 1, 1, 2], [0], [0]>} : vector<2x8x8xf32>, vector<2x8x8xf32>, vector<2x8x8xf32> -> vector<2x8x8xf32>
    "tpu.trace_stop"() : () -> ()
    %374 = vector.extract_strided_slice %355 {offsets = [0, 0, 8], sizes = [2, 8, 8], strides = [1, 1, 1]} : vector<2x8x32xf32> to vector<2x8x8xf32>
    %375 = vector.extract_strided_slice %356 {offsets = [0, 0, 8], sizes = [2, 8, 8], strides = [1, 1, 1]} : vector<2x8x32xf32> to vector<2x8x8xf32>
    "tpu.trace_start"() <{level = 10 : i32, message = "bqc,bkc->bqk"}> : () -> ()
    %cst_167 = arith.constant dense<0.000000e+00> : vector<2x8x8xf32>
    %376 = tpu.matmul %374, %375, %cst_167 {dimension_numbers = #tpu.dot_dimension_numbers<[2], [2], [1], [1], [0, 0, 0, 1, 1, 1], [0], [0]>} : vector<2x8x8xf32>, vector<2x8x8xf32>, vector<2x8x8xf32> -> vector<2x8x8xf32>
    "tpu.trace_stop"() : () -> ()
    %cst_168 = arith.constant 0.353553385 : f32
    %377 = vector.broadcast %cst_168 : f32 to vector<2x8x8xf32>
    %378 = arith.mulf %376, %377 : vector<2x8x8xf32>
    %cst_169 = arith.constant dense<0xFF800000> : vector<2x8xf32>
    %379 = vector.multi_reduction <maximumf>, %378, %cst_169 [2] : vector<2x8x8xf32> to vector<2x8xf32>
    %380 = vector.shape_cast %379 : vector<2x8xf32> to vector<2x8x1xf32>
    %381 = vector.broadcast %380 : vector<2x8x1xf32> to vector<2x8x8xf32>
    %382 = arith.subf %378, %381 : vector<2x8x8xf32>
    %383 = math.exp %382 : vector<2x8x8xf32>
    %cst_170 = arith.constant dense<0.000000e+00> : vector<2x8xf32>
    %384 = vector.multi_reduction <add>, %383, %cst_170 [2] : vector<2x8x8xf32> to vector<2x8xf32>
    %385 = vector.shape_cast %384 : vector<2x8xf32> to vector<2x8x1xf32>
    %386 = vector.broadcast %385 : vector<2x8x1xf32> to vector<2x8x8xf32>
    %387 = arith.divf %383, %386 : vector<2x8x8xf32>
    %388 = vector.extract_strided_slice %357 {offsets = [0, 0, 8], sizes = [2, 8, 8], strides = [1, 1, 1]} : vector<2x8x32xf32> to vector<2x8x8xf32>
    "tpu.trace_start"() <{level = 10 : i32, message = "bqk,bkc->bqc"}> : () -> ()
    %cst_171 = arith.constant dense<0.000000e+00> : vector<2x8x8xf32>
    %389 = tpu.matmul %387, %388, %cst_171 {dimension_numbers = #tpu.dot_dimension_numbers<[2], [1], [1], [2], [0, 0, 0, 1, 1, 2], [0], [0]>} : vector<2x8x8xf32>, vector<2x8x8xf32>, vector<2x8x8xf32> -> vector<2x8x8xf32>
    "tpu.trace_stop"() : () -> ()
    %390 = vector.extract_strided_slice %355 {offsets = [0, 0, 16], sizes = [2, 8, 8], strides = [1, 1, 1]} : vector<2x8x32xf32> to vector<2x8x8xf32>
    %391 = vector.extract_strided_slice %356 {offsets = [0, 0, 16], sizes = [2, 8, 8], strides = [1, 1, 1]} : vector<2x8x32xf32> to vector<2x8x8xf32>
    "tpu.trace_start"() <{level = 10 : i32, message = "bqc,bkc->bqk"}> : () -> ()
    %cst_172 = arith.constant dense<0.000000e+00> : vector<2x8x8xf32>
    %392 = tpu.matmul %390, %391, %cst_172 {dimension_numbers = #tpu.dot_dimension_numbers<[2], [2], [1], [1], [0, 0, 0, 1, 1, 1], [0], [0]>} : vector<2x8x8xf32>, vector<2x8x8xf32>, vector<2x8x8xf32> -> vector<2x8x8xf32>
    "tpu.trace_stop"() : () -> ()
    %cst_173 = arith.constant 0.353553385 : f32
    %393 = vector.broadcast %cst_173 : f32 to vector<2x8x8xf32>
    %394 = arith.mulf %392, %393 : vector<2x8x8xf32>
    %cst_174 = arith.constant dense<0xFF800000> : vector<2x8xf32>
    %395 = vector.multi_reduction <maximumf>, %394, %cst_174 [2] : vector<2x8x8xf32> to vector<2x8xf32>
    %396 = vector.shape_cast %395 : vector<2x8xf32> to vector<2x8x1xf32>
    %397 = vector.broadcast %396 : vector<2x8x1xf32> to vector<2x8x8xf32>
    %398 = arith.subf %394, %397 : vector<2x8x8xf32>
    %399 = math.exp %398 : vector<2x8x8xf32>
    %cst_175 = arith.constant dense<0.000000e+00> : vector<2x8xf32>
    %400 = vector.multi_reduction <add>, %399, %cst_175 [2] : vector<2x8x8xf32> to vector<2x8xf32>
    %401 = vector.shape_cast %400 : vector<2x8xf32> to vector<2x8x1xf32>
    %402 = vector.broadcast %401 : vector<2x8x1xf32> to vector<2x8x8xf32>
    %403 = arith.divf %399, %402 : vector<2x8x8xf32>
    %404 = vector.extract_strided_slice %357 {offsets = [0, 0, 16], sizes = [2, 8, 8], strides = [1, 1, 1]} : vector<2x8x32xf32> to vector<2x8x8xf32>
    "tpu.trace_start"() <{level = 10 : i32, message = "bqk,bkc->bqc"}> : () -> ()
    %cst_176 = arith.constant dense<0.000000e+00> : vector<2x8x8xf32>
    %405 = tpu.matmul %403, %404, %cst_176 {dimension_numbers = #tpu.dot_dimension_numbers<[2], [1], [1], [2], [0, 0, 0, 1, 1, 2], [0], [0]>} : vector<2x8x8xf32>, vector<2x8x8xf32>, vector<2x8x8xf32> -> vector<2x8x8xf32>
    "tpu.trace_stop"() : () -> ()
    %406 = vector.extract_strided_slice %355 {offsets = [0, 0, 24], sizes = [2, 8, 8], strides = [1, 1, 1]} : vector<2x8x32xf32> to vector<2x8x8xf32>
    %407 = vector.extract_strided_slice %356 {offsets = [0, 0, 24], sizes = [2, 8, 8], strides = [1, 1, 1]} : vector<2x8x32xf32> to vector<2x8x8xf32>
    "tpu.trace_start"() <{level = 10 : i32, message = "bqc,bkc->bqk"}> : () -> ()
    %cst_177 = arith.constant dense<0.000000e+00> : vector<2x8x8xf32>
    %408 = tpu.matmul %406, %407, %cst_177 {dimension_numbers = #tpu.dot_dimension_numbers<[2], [2], [1], [1], [0, 0, 0, 1, 1, 1], [0], [0]>} : vector<2x8x8xf32>, vector<2x8x8xf32>, vector<2x8x8xf32> -> vector<2x8x8xf32>
    "tpu.trace_stop"() : () -> ()
    %cst_178 = arith.constant 0.353553385 : f32
    %409 = vector.broadcast %cst_178 : f32 to vector<2x8x8xf32>
    %410 = arith.mulf %408, %409 : vector<2x8x8xf32>
    %cst_179 = arith.constant dense<0xFF800000> : vector<2x8xf32>
    %411 = vector.multi_reduction <maximumf>, %410, %cst_179 [2] : vector<2x8x8xf32> to vector<2x8xf32>
    %412 = vector.shape_cast %411 : vector<2x8xf32> to vector<2x8x1xf32>
    %413 = vector.broadcast %412 : vector<2x8x1xf32> to vector<2x8x8xf32>
    %414 = arith.subf %410, %413 : vector<2x8x8xf32>
    %415 = math.exp %414 : vector<2x8x8xf32>
    %cst_180 = arith.constant dense<0.000000e+00> : vector<2x8xf32>
    %416 = vector.multi_reduction <add>, %415, %cst_180 [2] : vector<2x8x8xf32> to vector<2x8xf32>
    %417 = vector.shape_cast %416 : vector<2x8xf32> to vector<2x8x1xf32>
    %418 = vector.broadcast %417 : vector<2x8x1xf32> to vector<2x8x8xf32>
    %419 = arith.divf %415, %418 : vector<2x8x8xf32>
    %420 = vector.extract_strided_slice %357 {offsets = [0, 0, 24], sizes = [2, 8, 8], strides = [1, 1, 1]} : vector<2x8x32xf32> to vector<2x8x8xf32>
    "tpu.trace_start"() <{level = 10 : i32, message = "bqk,bkc->bqc"}> : () -> ()
    %cst_181 = arith.constant dense<0.000000e+00> : vector<2x8x8xf32>
    %421 = tpu.matmul %419, %420, %cst_181 {dimension_numbers = #tpu.dot_dimension_numbers<[2], [1], [1], [2], [0, 0, 0, 1, 1, 2], [0], [0]>} : vector<2x8x8xf32>, vector<2x8x8xf32>, vector<2x8x8xf32> -> vector<2x8x8xf32>
    "tpu.trace_stop"() : () -> ()
    %422 = tpu.concatenate %373, %389, %405, %421 in 2 : vector<2x8x8xf32>, vector<2x8x8xf32>, vector<2x8x8xf32>, vector<2x8x8xf32> -> vector<2x8x32xf32>
    %423 = vector.shape_cast %422 : vector<2x8x32xf32> to vector<16x32xf32>
    %cst_182 = arith.constant dense<0.000000e+00> : vector<16x32xf32>
    %424 = tpu.matmul %423, %352, %cst_182 {dimension_numbers = #tpu.dot_dimension_numbers<[1], [0], [0], [1], [0, 0, 1, 1], [], []>} : vector<16x32xf32>, vector<32x32xf32>, vector<16x32xf32> -> vector<16x32xf32>
    %425 = vector.broadcast %354 : vector<1x32xf32> to vector<16x32xf32>
    %426 = arith.addf %424, %425 : vector<16x32xf32>
    %427 = arith.addf %314, %426 : vector<16x32xf32>
    %c1_183 = arith.constant 1 : index
    %c0_184 = arith.constant 0 : index
    %c0_185 = arith.constant 0 : index
    %428 = vector.load %arg8[%c1_183, %c0_184, %c0_185] : memref<2x1x32xf32, #tpu.memory_space<vmem>>, vector<1x1x32xf32>
    %429 = vector.shape_cast %428 : vector<1x1x32xf32> to vector<1x32xf32>
    %c1_186 = arith.constant 1 : index
    %c0_187 = arith.constant 0 : index
    %c0_188 = arith.constant 0 : index
    %430 = vector.load %arg9[%c1_186, %c0_187, %c0_188] : memref<2x1x32xf32, #tpu.memory_space<vmem>>, vector<1x1x32xf32>
    %431 = vector.shape_cast %430 : vector<1x1x32xf32> to vector<1x32xf32>
    %cst_189 = arith.constant dense<0.000000e+00> : vector<16xf32>
    %432 = vector.multi_reduction <add>, %427, %cst_189 [1] : vector<16x32xf32> to vector<16xf32>
    %433 = vector.shape_cast %432 : vector<16xf32> to vector<16x1xf32>
    %cst_190 = arith.constant 3.200000e+01 : f32
    %434 = vector.broadcast %cst_190 : f32 to vector<16x1xf32>
    %435 = arith.divf %433, %434 : vector<16x1xf32>
    %436 = vector.broadcast %435 : vector<16x1xf32> to vector<16x32xf32>
    %437 = arith.subf %427, %436 : vector<16x32xf32>
    %438 = arith.mulf %437, %437 : vector<16x32xf32>
    %cst_191 = arith.constant dense<0.000000e+00> : vector<16xf32>
    %439 = vector.multi_reduction <add>, %438, %cst_191 [1] : vector<16x32xf32> to vector<16xf32>
    %440 = vector.shape_cast %439 : vector<16xf32> to vector<16x1xf32>
    %cst_192 = arith.constant 3.200000e+01 : f32
    %441 = vector.broadcast %cst_192 : f32 to vector<16x1xf32>
    %442 = arith.divf %440, %441 : vector<16x1xf32>
    %443 = vector.broadcast %435 : vector<16x1xf32> to vector<16x32xf32>
    %444 = arith.subf %427, %443 : vector<16x32xf32>
    %cst_193 = arith.constant 9.99999974E-6 : f32
    %445 = vector.broadcast %cst_193 : f32 to vector<16x1xf32>
    %446 = arith.addf %442, %445 : vector<16x1xf32>
    %447 = math.rsqrt %446 : vector<16x1xf32>
    %448 = vector.broadcast %447 : vector<16x1xf32> to vector<16x32xf32>
    %449 = arith.mulf %444, %448 : vector<16x32xf32>
    %450 = vector.broadcast %429 : vector<1x32xf32> to vector<16x32xf32>
    %451 = arith.mulf %449, %450 : vector<16x32xf32>
    %452 = vector.broadcast %431 : vector<1x32xf32> to vector<16x32xf32>
    %453 = arith.addf %451, %452 : vector<16x32xf32>
    %c1_194 = arith.constant 1 : index
    %c0_195 = arith.constant 0 : index
    %c0_196 = arith.constant 0 : index
    %454 = vector.load %arg10[%c1_194, %c0_195, %c0_196] : memref<2x32x32xf32, #tpu.memory_space<vmem>>, vector<1x32x32xf32>
    %455 = vector.shape_cast %454 : vector<1x32x32xf32> to vector<32x32xf32>
    %cst_197 = arith.constant dense<0.000000e+00> : vector<16x32xf32>
    %456 = tpu.matmul %453, %455, %cst_197 {dimension_numbers = #tpu.dot_dimension_numbers<[1], [0], [0], [1], [0, 0, 1, 1], [], []>} : vector<16x32xf32>, vector<32x32xf32>, vector<16x32xf32> -> vector<16x32xf32>
    %c1_198 = arith.constant 1 : index
    %c0_199 = arith.constant 0 : index
    %c0_200 = arith.constant 0 : index
    %457 = vector.load %arg11[%c1_198, %c0_199, %c0_200] : memref<2x1x32xf32, #tpu.memory_space<vmem>>, vector<1x1x32xf32>
    %458 = vector.shape_cast %457 : vector<1x1x32xf32> to vector<1x32xf32>
    %459 = vector.broadcast %458 : vector<1x32xf32> to vector<16x32xf32>
    %460 = arith.addf %456, %459 : vector<16x32xf32>
    %c1_201 = arith.constant 1 : index
    %c0_202 = arith.constant 0 : index
    %c0_203 = arith.constant 0 : index
    %461 = vector.load %arg12[%c1_201, %c0_202, %c0_203] : memref<2x32x64xf32, #tpu.memory_space<vmem>>, vector<1x32x64xf32>
    %462 = vector.shape_cast %461 : vector<1x32x64xf32> to vector<32x64xf32>
    %cst_204 = arith.constant dense<0.000000e+00> : vector<16x64xf32>
    %463 = tpu.matmul %1, %462, %cst_204 {dimension_numbers = #tpu.dot_dimension_numbers<[1], [0], [0], [1], [0, 0, 1, 1], [], []>} : vector<16x32xf32>, vector<32x64xf32>, vector<16x64xf32> -> vector<16x64xf32>
    %c1_205 = arith.constant 1 : index
    %c0_206 = arith.constant 0 : index
    %c0_207 = arith.constant 0 : index
    %464 = vector.load %arg13[%c1_205, %c0_206, %c0_207] : memref<2x1x64xf32, #tpu.memory_space<vmem>>, vector<1x1x64xf32>
    %465 = vector.shape_cast %464 : vector<1x1x64xf32> to vector<1x64xf32>
    %466 = vector.broadcast %465 : vector<1x64xf32> to vector<16x64xf32>
    %467 = arith.addf %463, %466 : vector<16x64xf32>
    %468 = vector.extract_strided_slice %467 {offsets = [0, 0], sizes = [16, 32], strides = [1, 1]} : vector<16x64xf32> to vector<16x32xf32>
    %469 = vector.extract_strided_slice %467 {offsets = [0, 32], sizes = [16, 32], strides = [1, 1]} : vector<16x64xf32> to vector<16x32xf32>
    %c1_208 = arith.constant 1 : index
    %c0_209 = arith.constant 0 : index
    %c0_210 = arith.constant 0 : index
    %470 = vector.load %arg14[%c1_208, %c0_209, %c0_210] : memref<2x32x32xf32, #tpu.memory_space<vmem>>, vector<1x32x32xf32>
    %471 = vector.shape_cast %470 : vector<1x32x32xf32> to vector<32x32xf32>
    %c1_211 = arith.constant 1 : index
    %c0_212 = arith.constant 0 : index
    %c0_213 = arith.constant 0 : index
    %472 = vector.load %arg15[%c1_211, %c0_212, %c0_213] : memref<2x1x32xf32, #tpu.memory_space<vmem>>, vector<1x1x32xf32>
    %473 = vector.shape_cast %472 : vector<1x1x32xf32> to vector<1x32xf32>
    %474 = vector.shape_cast %460 : vector<16x32xf32> to vector<2x8x32xf32>
    %475 = vector.shape_cast %468 : vector<16x32xf32> to vector<2x8x32xf32>
    %476 = vector.shape_cast %469 : vector<16x32xf32> to vector<2x8x32xf32>
    %477 = vector.extract_strided_slice %474 {offsets = [0, 0, 0], sizes = [2, 8, 8], strides = [1, 1, 1]} : vector<2x8x32xf32> to vector<2x8x8xf32>
    %478 = vector.extract_strided_slice %475 {offsets = [0, 0, 0], sizes = [2, 8, 8], strides = [1, 1, 1]} : vector<2x8x32xf32> to vector<2x8x8xf32>
    "tpu.trace_start"() <{level = 10 : i32, message = "bqc,bkc->bqk"}> : () -> ()
    %cst_214 = arith.constant dense<0.000000e+00> : vector<2x8x8xf32>
    %479 = tpu.matmul %477, %478, %cst_214 {dimension_numbers = #tpu.dot_dimension_numbers<[2], [2], [1], [1], [0, 0, 0, 1, 1, 1], [0], [0]>} : vector<2x8x8xf32>, vector<2x8x8xf32>, vector<2x8x8xf32> -> vector<2x8x8xf32>
    "tpu.trace_stop"() : () -> ()
    %cst_215 = arith.constant 0.353553385 : f32
    %480 = vector.broadcast %cst_215 : f32 to vector<2x8x8xf32>
    %481 = arith.mulf %479, %480 : vector<2x8x8xf32>
    %cst_216 = arith.constant dense<0xFF800000> : vector<2x8xf32>
    %482 = vector.multi_reduction <maximumf>, %481, %cst_216 [2] : vector<2x8x8xf32> to vector<2x8xf32>
    %483 = vector.shape_cast %482 : vector<2x8xf32> to vector<2x8x1xf32>
    %484 = vector.broadcast %483 : vector<2x8x1xf32> to vector<2x8x8xf32>
    %485 = arith.subf %481, %484 : vector<2x8x8xf32>
    %486 = math.exp %485 : vector<2x8x8xf32>
    %cst_217 = arith.constant dense<0.000000e+00> : vector<2x8xf32>
    %487 = vector.multi_reduction <add>, %486, %cst_217 [2] : vector<2x8x8xf32> to vector<2x8xf32>
    %488 = vector.shape_cast %487 : vector<2x8xf32> to vector<2x8x1xf32>
    %489 = vector.broadcast %488 : vector<2x8x1xf32> to vector<2x8x8xf32>
    %490 = arith.divf %486, %489 : vector<2x8x8xf32>
    %491 = vector.extract_strided_slice %476 {offsets = [0, 0, 0], sizes = [2, 8, 8], strides = [1, 1, 1]} : vector<2x8x32xf32> to vector<2x8x8xf32>
    "tpu.trace_start"() <{level = 10 : i32, message = "bqk,bkc->bqc"}> : () -> ()
    %cst_218 = arith.constant dense<0.000000e+00> : vector<2x8x8xf32>
    %492 = tpu.matmul %490, %491, %cst_218 {dimension_numbers = #tpu.dot_dimension_numbers<[2], [1], [1], [2], [0, 0, 0, 1, 1, 2], [0], [0]>} : vector<2x8x8xf32>, vector<2x8x8xf32>, vector<2x8x8xf32> -> vector<2x8x8xf32>
    "tpu.trace_stop"() : () -> ()
    %493 = vector.extract_strided_slice %474 {offsets = [0, 0, 8], sizes = [2, 8, 8], strides = [1, 1, 1]} : vector<2x8x32xf32> to vector<2x8x8xf32>
    %494 = vector.extract_strided_slice %475 {offsets = [0, 0, 8], sizes = [2, 8, 8], strides = [1, 1, 1]} : vector<2x8x32xf32> to vector<2x8x8xf32>
    "tpu.trace_start"() <{level = 10 : i32, message = "bqc,bkc->bqk"}> : () -> ()
    %cst_219 = arith.constant dense<0.000000e+00> : vector<2x8x8xf32>
    %495 = tpu.matmul %493, %494, %cst_219 {dimension_numbers = #tpu.dot_dimension_numbers<[2], [2], [1], [1], [0, 0, 0, 1, 1, 1], [0], [0]>} : vector<2x8x8xf32>, vector<2x8x8xf32>, vector<2x8x8xf32> -> vector<2x8x8xf32>
    "tpu.trace_stop"() : () -> ()
    %cst_220 = arith.constant 0.353553385 : f32
    %496 = vector.broadcast %cst_220 : f32 to vector<2x8x8xf32>
    %497 = arith.mulf %495, %496 : vector<2x8x8xf32>
    %cst_221 = arith.constant dense<0xFF800000> : vector<2x8xf32>
    %498 = vector.multi_reduction <maximumf>, %497, %cst_221 [2] : vector<2x8x8xf32> to vector<2x8xf32>
    %499 = vector.shape_cast %498 : vector<2x8xf32> to vector<2x8x1xf32>
    %500 = vector.broadcast %499 : vector<2x8x1xf32> to vector<2x8x8xf32>
    %501 = arith.subf %497, %500 : vector<2x8x8xf32>
    %502 = math.exp %501 : vector<2x8x8xf32>
    %cst_222 = arith.constant dense<0.000000e+00> : vector<2x8xf32>
    %503 = vector.multi_reduction <add>, %502, %cst_222 [2] : vector<2x8x8xf32> to vector<2x8xf32>
    %504 = vector.shape_cast %503 : vector<2x8xf32> to vector<2x8x1xf32>
    %505 = vector.broadcast %504 : vector<2x8x1xf32> to vector<2x8x8xf32>
    %506 = arith.divf %502, %505 : vector<2x8x8xf32>
    %507 = vector.extract_strided_slice %476 {offsets = [0, 0, 8], sizes = [2, 8, 8], strides = [1, 1, 1]} : vector<2x8x32xf32> to vector<2x8x8xf32>
    "tpu.trace_start"() <{level = 10 : i32, message = "bqk,bkc->bqc"}> : () -> ()
    %cst_223 = arith.constant dense<0.000000e+00> : vector<2x8x8xf32>
    %508 = tpu.matmul %506, %507, %cst_223 {dimension_numbers = #tpu.dot_dimension_numbers<[2], [1], [1], [2], [0, 0, 0, 1, 1, 2], [0], [0]>} : vector<2x8x8xf32>, vector<2x8x8xf32>, vector<2x8x8xf32> -> vector<2x8x8xf32>
    "tpu.trace_stop"() : () -> ()
    %509 = vector.extract_strided_slice %474 {offsets = [0, 0, 16], sizes = [2, 8, 8], strides = [1, 1, 1]} : vector<2x8x32xf32> to vector<2x8x8xf32>
    %510 = vector.extract_strided_slice %475 {offsets = [0, 0, 16], sizes = [2, 8, 8], strides = [1, 1, 1]} : vector<2x8x32xf32> to vector<2x8x8xf32>
    "tpu.trace_start"() <{level = 10 : i32, message = "bqc,bkc->bqk"}> : () -> ()
    %cst_224 = arith.constant dense<0.000000e+00> : vector<2x8x8xf32>
    %511 = tpu.matmul %509, %510, %cst_224 {dimension_numbers = #tpu.dot_dimension_numbers<[2], [2], [1], [1], [0, 0, 0, 1, 1, 1], [0], [0]>} : vector<2x8x8xf32>, vector<2x8x8xf32>, vector<2x8x8xf32> -> vector<2x8x8xf32>
    "tpu.trace_stop"() : () -> ()
    %cst_225 = arith.constant 0.353553385 : f32
    %512 = vector.broadcast %cst_225 : f32 to vector<2x8x8xf32>
    %513 = arith.mulf %511, %512 : vector<2x8x8xf32>
    %cst_226 = arith.constant dense<0xFF800000> : vector<2x8xf32>
    %514 = vector.multi_reduction <maximumf>, %513, %cst_226 [2] : vector<2x8x8xf32> to vector<2x8xf32>
    %515 = vector.shape_cast %514 : vector<2x8xf32> to vector<2x8x1xf32>
    %516 = vector.broadcast %515 : vector<2x8x1xf32> to vector<2x8x8xf32>
    %517 = arith.subf %513, %516 : vector<2x8x8xf32>
    %518 = math.exp %517 : vector<2x8x8xf32>
    %cst_227 = arith.constant dense<0.000000e+00> : vector<2x8xf32>
    %519 = vector.multi_reduction <add>, %518, %cst_227 [2] : vector<2x8x8xf32> to vector<2x8xf32>
    %520 = vector.shape_cast %519 : vector<2x8xf32> to vector<2x8x1xf32>
    %521 = vector.broadcast %520 : vector<2x8x1xf32> to vector<2x8x8xf32>
    %522 = arith.divf %518, %521 : vector<2x8x8xf32>
    %523 = vector.extract_strided_slice %476 {offsets = [0, 0, 16], sizes = [2, 8, 8], strides = [1, 1, 1]} : vector<2x8x32xf32> to vector<2x8x8xf32>
    "tpu.trace_start"() <{level = 10 : i32, message = "bqk,bkc->bqc"}> : () -> ()
    %cst_228 = arith.constant dense<0.000000e+00> : vector<2x8x8xf32>
    %524 = tpu.matmul %522, %523, %cst_228 {dimension_numbers = #tpu.dot_dimension_numbers<[2], [1], [1], [2], [0, 0, 0, 1, 1, 2], [0], [0]>} : vector<2x8x8xf32>, vector<2x8x8xf32>, vector<2x8x8xf32> -> vector<2x8x8xf32>
    "tpu.trace_stop"() : () -> ()
    %525 = vector.extract_strided_slice %474 {offsets = [0, 0, 24], sizes = [2, 8, 8], strides = [1, 1, 1]} : vector<2x8x32xf32> to vector<2x8x8xf32>
    %526 = vector.extract_strided_slice %475 {offsets = [0, 0, 24], sizes = [2, 8, 8], strides = [1, 1, 1]} : vector<2x8x32xf32> to vector<2x8x8xf32>
    "tpu.trace_start"() <{level = 10 : i32, message = "bqc,bkc->bqk"}> : () -> ()
    %cst_229 = arith.constant dense<0.000000e+00> : vector<2x8x8xf32>
    %527 = tpu.matmul %525, %526, %cst_229 {dimension_numbers = #tpu.dot_dimension_numbers<[2], [2], [1], [1], [0, 0, 0, 1, 1, 1], [0], [0]>} : vector<2x8x8xf32>, vector<2x8x8xf32>, vector<2x8x8xf32> -> vector<2x8x8xf32>
    "tpu.trace_stop"() : () -> ()
    %cst_230 = arith.constant 0.353553385 : f32
    %528 = vector.broadcast %cst_230 : f32 to vector<2x8x8xf32>
    %529 = arith.mulf %527, %528 : vector<2x8x8xf32>
    %cst_231 = arith.constant dense<0xFF800000> : vector<2x8xf32>
    %530 = vector.multi_reduction <maximumf>, %529, %cst_231 [2] : vector<2x8x8xf32> to vector<2x8xf32>
    %531 = vector.shape_cast %530 : vector<2x8xf32> to vector<2x8x1xf32>
    %532 = vector.broadcast %531 : vector<2x8x1xf32> to vector<2x8x8xf32>
    %533 = arith.subf %529, %532 : vector<2x8x8xf32>
    %534 = math.exp %533 : vector<2x8x8xf32>
    %cst_232 = arith.constant dense<0.000000e+00> : vector<2x8xf32>
    %535 = vector.multi_reduction <add>, %534, %cst_232 [2] : vector<2x8x8xf32> to vector<2x8xf32>
    %536 = vector.shape_cast %535 : vector<2x8xf32> to vector<2x8x1xf32>
    %537 = vector.broadcast %536 : vector<2x8x1xf32> to vector<2x8x8xf32>
    %538 = arith.divf %534, %537 : vector<2x8x8xf32>
    %539 = vector.extract_strided_slice %476 {offsets = [0, 0, 24], sizes = [2, 8, 8], strides = [1, 1, 1]} : vector<2x8x32xf32> to vector<2x8x8xf32>
    "tpu.trace_start"() <{level = 10 : i32, message = "bqk,bkc->bqc"}> : () -> ()
    %cst_233 = arith.constant dense<0.000000e+00> : vector<2x8x8xf32>
    %540 = tpu.matmul %538, %539, %cst_233 {dimension_numbers = #tpu.dot_dimension_numbers<[2], [1], [1], [2], [0, 0, 0, 1, 1, 2], [0], [0]>} : vector<2x8x8xf32>, vector<2x8x8xf32>, vector<2x8x8xf32> -> vector<2x8x8xf32>
    "tpu.trace_stop"() : () -> ()
    %541 = tpu.concatenate %492, %508, %524, %540 in 2 : vector<2x8x8xf32>, vector<2x8x8xf32>, vector<2x8x8xf32>, vector<2x8x8xf32> -> vector<2x8x32xf32>
    %542 = vector.shape_cast %541 : vector<2x8x32xf32> to vector<16x32xf32>
    %cst_234 = arith.constant dense<0.000000e+00> : vector<16x32xf32>
    %543 = tpu.matmul %542, %471, %cst_234 {dimension_numbers = #tpu.dot_dimension_numbers<[1], [0], [0], [1], [0, 0, 1, 1], [], []>} : vector<16x32xf32>, vector<32x32xf32>, vector<16x32xf32> -> vector<16x32xf32>
    %544 = vector.broadcast %473 : vector<1x32xf32> to vector<16x32xf32>
    %545 = arith.addf %543, %544 : vector<16x32xf32>
    %546 = arith.addf %427, %545 : vector<16x32xf32>
    %c1_235 = arith.constant 1 : index
    %c0_236 = arith.constant 0 : index
    %c0_237 = arith.constant 0 : index
    %547 = vector.load %arg16[%c1_235, %c0_236, %c0_237] : memref<2x1x32xf32, #tpu.memory_space<vmem>>, vector<1x1x32xf32>
    %548 = vector.shape_cast %547 : vector<1x1x32xf32> to vector<1x32xf32>
    %c1_238 = arith.constant 1 : index
    %c0_239 = arith.constant 0 : index
    %c0_240 = arith.constant 0 : index
    %549 = vector.load %arg17[%c1_238, %c0_239, %c0_240] : memref<2x1x32xf32, #tpu.memory_space<vmem>>, vector<1x1x32xf32>
    %550 = vector.shape_cast %549 : vector<1x1x32xf32> to vector<1x32xf32>
    %cst_241 = arith.constant dense<0.000000e+00> : vector<16xf32>
    %551 = vector.multi_reduction <add>, %546, %cst_241 [1] : vector<16x32xf32> to vector<16xf32>
    %552 = vector.shape_cast %551 : vector<16xf32> to vector<16x1xf32>
    %cst_242 = arith.constant 3.200000e+01 : f32
    %553 = vector.broadcast %cst_242 : f32 to vector<16x1xf32>
    %554 = arith.divf %552, %553 : vector<16x1xf32>
    %555 = vector.broadcast %554 : vector<16x1xf32> to vector<16x32xf32>
    %556 = arith.subf %546, %555 : vector<16x32xf32>
    %557 = arith.mulf %556, %556 : vector<16x32xf32>
    %cst_243 = arith.constant dense<0.000000e+00> : vector<16xf32>
    %558 = vector.multi_reduction <add>, %557, %cst_243 [1] : vector<16x32xf32> to vector<16xf32>
    %559 = vector.shape_cast %558 : vector<16xf32> to vector<16x1xf32>
    %cst_244 = arith.constant 3.200000e+01 : f32
    %560 = vector.broadcast %cst_244 : f32 to vector<16x1xf32>
    %561 = arith.divf %559, %560 : vector<16x1xf32>
    %562 = vector.broadcast %554 : vector<16x1xf32> to vector<16x32xf32>
    %563 = arith.subf %546, %562 : vector<16x32xf32>
    %cst_245 = arith.constant 9.99999974E-6 : f32
    %564 = vector.broadcast %cst_245 : f32 to vector<16x1xf32>
    %565 = arith.addf %561, %564 : vector<16x1xf32>
    %566 = math.rsqrt %565 : vector<16x1xf32>
    %567 = vector.broadcast %566 : vector<16x1xf32> to vector<16x32xf32>
    %568 = arith.mulf %563, %567 : vector<16x32xf32>
    %569 = vector.broadcast %548 : vector<1x32xf32> to vector<16x32xf32>
    %570 = arith.mulf %568, %569 : vector<16x32xf32>
    %571 = vector.broadcast %550 : vector<1x32xf32> to vector<16x32xf32>
    %572 = arith.addf %570, %571 : vector<16x32xf32>
    %c1_246 = arith.constant 1 : index
    %c0_247 = arith.constant 0 : index
    %c0_248 = arith.constant 0 : index
    %573 = vector.load %arg18[%c1_246, %c0_247, %c0_248] : memref<2x32x128xf32, #tpu.memory_space<vmem>>, vector<1x32x128xf32>
    %574 = vector.shape_cast %573 : vector<1x32x128xf32> to vector<32x128xf32>
    %cst_249 = arith.constant dense<0.000000e+00> : vector<16x128xf32>
    %575 = tpu.matmul %572, %574, %cst_249 {dimension_numbers = #tpu.dot_dimension_numbers<[1], [0], [0], [1], [0, 0, 1, 1], [], []>} : vector<16x32xf32>, vector<32x128xf32>, vector<16x128xf32> -> vector<16x128xf32>
    %c1_250 = arith.constant 1 : index
    %c0_251 = arith.constant 0 : index
    %c0_252 = arith.constant 0 : index
    %576 = vector.load %arg19[%c1_250, %c0_251, %c0_252] : memref<2x1x128xf32, #tpu.memory_space<vmem>>, vector<1x1x128xf32>
    %577 = vector.shape_cast %576 : vector<1x1x128xf32> to vector<1x128xf32>
    %578 = vector.broadcast %577 : vector<1x128xf32> to vector<16x128xf32>
    %579 = arith.addf %575, %578 : vector<16x128xf32>
    %cst_253 = arith.constant 5.000000e-01 : f32
    %580 = vector.broadcast %cst_253 : f32 to vector<16x128xf32>
    %581 = arith.mulf %580, %579 : vector<16x128xf32>
    %cst_254 = arith.constant 0.707106769 : f32
    %582 = vector.broadcast %cst_254 : f32 to vector<16x128xf32>
    %583 = arith.mulf %579, %582 : vector<16x128xf32>
    %584 = math.absf %583 : vector<16x128xf32>
    %cst_255 = arith.constant 0.327591091 : f32
    %585 = vector.broadcast %cst_255 : f32 to vector<16x128xf32>
    %586 = arith.mulf %585, %584 : vector<16x128xf32>
    %cst_256 = arith.constant 1.000000e+00 : f32
    %587 = vector.broadcast %cst_256 : f32 to vector<16x128xf32>
    %588 = arith.addf %587, %586 : vector<16x128xf32>
    %cst_257 = arith.constant 1.000000e+00 : f32
    %589 = vector.broadcast %cst_257 : f32 to vector<16x128xf32>
    %590 = arith.divf %589, %588 : vector<16x128xf32>
    %cst_258 = arith.constant 1.06140542 : f32
    %591 = vector.broadcast %cst_258 : f32 to vector<16x128xf32>
    %592 = arith.mulf %591, %590 : vector<16x128xf32>
    %cst_259 = arith.constant -1.45315206 : f32
    %593 = vector.broadcast %cst_259 : f32 to vector<16x128xf32>
    %594 = arith.addf %592, %593 : vector<16x128xf32>
    %595 = arith.mulf %594, %590 : vector<16x128xf32>
    %cst_260 = arith.constant 1.42141378 : f32
    %596 = vector.broadcast %cst_260 : f32 to vector<16x128xf32>
    %597 = arith.addf %595, %596 : vector<16x128xf32>
    %598 = arith.mulf %597, %590 : vector<16x128xf32>
    %cst_261 = arith.constant -0.284496725 : f32
    %599 = vector.broadcast %cst_261 : f32 to vector<16x128xf32>
    %600 = arith.addf %598, %599 : vector<16x128xf32>
    %601 = arith.mulf %600, %590 : vector<16x128xf32>
    %cst_262 = arith.constant 0.254829586 : f32
    %602 = vector.broadcast %cst_262 : f32 to vector<16x128xf32>
    %603 = arith.addf %601, %602 : vector<16x128xf32>
    %604 = arith.mulf %603, %590 : vector<16x128xf32>
    %cst_263 = arith.constant 0.000000e+00 : f32
    %605 = vector.broadcast %cst_263 : f32 to vector<16x128xf32>
    %606 = arith.subf %605, %584 : vector<16x128xf32>
    %607 = arith.mulf %606, %584 : vector<16x128xf32>
    %608 = math.exp %607 : vector<16x128xf32>
    %609 = arith.mulf %604, %608 : vector<16x128xf32>
    %cst_264 = arith.constant 1.000000e+00 : f32
    %610 = vector.broadcast %cst_264 : f32 to vector<16x128xf32>
    %611 = arith.subf %610, %609 : vector<16x128xf32>
    %cst_265 = arith.constant 0.000000e+00 : f32
    %612 = vector.broadcast %cst_265 : f32 to vector<16x128xf32>
    %613 = arith.cmpf oge, %583, %612 : vector<16x128xf32>
    %cst_266 = arith.constant 0.000000e+00 : f32
    %614 = vector.broadcast %cst_266 : f32 to vector<16x128xf32>
    %615 = arith.subf %614, %611 : vector<16x128xf32>
    %616 = arith.select %613, %611, %615 : vector<16x128xi1>, vector<16x128xf32>
    %cst_267 = arith.constant 1.000000e+00 : f32
    %617 = vector.broadcast %cst_267 : f32 to vector<16x128xf32>
    %618 = arith.addf %617, %616 : vector<16x128xf32>
    %619 = arith.mulf %581, %618 : vector<16x128xf32>
    %c1_268 = arith.constant 1 : index
    %c0_269 = arith.constant 0 : index
    %c0_270 = arith.constant 0 : index
    %620 = vector.load %arg20[%c1_268, %c0_269, %c0_270] : memref<2x128x32xf32, #tpu.memory_space<vmem>>, vector<1x128x32xf32>
    %621 = vector.shape_cast %620 : vector<1x128x32xf32> to vector<128x32xf32>
    %cst_271 = arith.constant dense<0.000000e+00> : vector<16x32xf32>
    %622 = tpu.matmul %619, %621, %cst_271 {dimension_numbers = #tpu.dot_dimension_numbers<[1], [0], [0], [1], [0, 0, 1, 1], [], []>} : vector<16x128xf32>, vector<128x32xf32>, vector<16x32xf32> -> vector<16x32xf32>
    %c1_272 = arith.constant 1 : index
    %c0_273 = arith.constant 0 : index
    %c0_274 = arith.constant 0 : index
    %623 = vector.load %arg21[%c1_272, %c0_273, %c0_274] : memref<2x1x32xf32, #tpu.memory_space<vmem>>, vector<1x1x32xf32>
    %624 = vector.shape_cast %623 : vector<1x1x32xf32> to vector<1x32xf32>
    %625 = vector.broadcast %624 : vector<1x32xf32> to vector<16x32xf32>
    %626 = arith.addf %622, %625 : vector<16x32xf32>
    %627 = arith.addf %546, %626 : vector<16x32xf32>
    %c0_275 = arith.constant 0 : index
    %c0_276 = arith.constant 0 : index
    %628 = vector.load %arg22[%c0_275, %c0_276] : memref<16x32xf32, #tpu.memory_space<vmem>>, vector<16x32xf32>
    tpu.vector_store %arg22[%c0_275, %c0_276], %627 {strides = array<i32>} : memref<16x32xf32, #tpu.memory_space<vmem>>, vector<16x32xf32>,
    return
  }
}

</mosaic_0001>

<llo_original>
// kernel: tpu_custom_call.1
$region0: #{tpu_custom_call.1}
  #allocation0 [shape = 'u32[]', space=smem, size = 0x4, offset = 0x4, fixed_abs, tag = 'smem constant byte address 0x4 - core index']
  #allocation1 [shape = 'u32[144,128]{1,0:T(1,128)}', space=vmem, size = 0x12000, scoped, tag = 'internal scratch']
  %s0 = inlined_call_operand.hbm [shape: f32[16,32], index: 0, kind: input, shape index: {}]
  %s1 = inlined_call_operand.hbm [shape: f32[16,32], index: 1, kind: input, shape index: {}]
  %s2 = inlined_call_operand.vmem [shape: f32[2,1,32], index: 2, kind: input, shape index: {}]
  %s3 = inlined_call_operand.hbm [shape: f32[2,1,32], index: 3, kind: input, shape index: {}]
  %s4 = inlined_call_operand.vmem [shape: f32[2,32,96], index: 4, kind: input, shape index: {}]
  %s5 = inlined_call_operand.vmem [shape: f32[2,1,96], index: 5, kind: input, shape index: {}]
  %s6 = inlined_call_operand.vmem [shape: f32[2,32,32], index: 6, kind: input, shape index: {}]
  %s7 = inlined_call_operand.vmem [shape: f32[2,1,32], index: 7, kind: input, shape index: {}]
  %s8 = inlined_call_operand.vmem [shape: f32[2,1,32], index: 8, kind: input, shape index: {}]
  %s9 = inlined_call_operand.vmem [shape: f32[2,1,32], index: 9, kind: input, shape index: {}]
  %s10 = inlined_call_operand.vmem [shape: f32[2,32,32], index: 10, kind: input, shape index: {}]
  %s11 = inlined_call_operand.vmem [shape: f32[2,1,32], index: 11, kind: input, shape index: {}]
  %s12 = inlined_call_operand.vmem [shape: f32[2,32,64], index: 12, kind: input, shape index: {}]
  %s13 = inlined_call_operand.vmem [shape: f32[2,1,64], index: 13, kind: input, shape index: {}]
  %s14 = inlined_call_operand.vmem [shape: f32[2,32,32], index: 14, kind: input, shape index: {}]
  %s15 = inlined_call_operand.vmem [shape: f32[2,1,32], index: 15, kind: input, shape index: {}]
  %s16 = inlined_call_operand.vmem [shape: f32[2,1,32], index: 16, kind: input, shape index: {}]
  %s17 = inlined_call_operand.vmem [shape: f32[2,1,32], index: 17, kind: input, shape index: {}]
  %s18 = inlined_call_operand.hbm [shape: f32[2,32,128], index: 18, kind: input, shape index: {}]
  %s19 = inlined_call_operand.vmem [shape: f32[2,1,128], index: 19, kind: input, shape index: {}]
  %s20 = inlined_call_operand.vmem [shape: f32[2,128,32], index: 20, kind: input, shape index: {}]
  %s21 = inlined_call_operand.vmem [shape: f32[2,1,32], index: 21, kind: input, shape index: {}]
  %s22 = inlined_call_operand.hbm [shape: f32[16,32], index: 22, kind: output, shape index: {}]
  %s23 = sld [smem:[#allocation0]]
  $region114: #{tpu_custom_call.1} parent=0
    _
  %s25 = ssub.s32 1, %s23
  %s26 = scalar_select 0, %s25, %s23
  $region1: #{tpu_custom_call.1} parent=0
    #allocation2 [shape = 'u8[8192]{0}', space=vmem, size = 0x2000, scoped, tag = 'input window, operand 0, single buffered']
    #allocation3 [shape = 's32[1]{0}', space=sflag, size = 0x4, scoped, tag = 'scoped memory for tpu_custom_call.1']
    #allocation4 [shape = 's32[1]{0}', space=sflag, size = 0x4, scoped, tag = 'scoped memory for tpu_custom_call.1']
    #allocation5 [shape = 'u8[8192]{0}', space=vmem, size = 0x2000, scoped, tag = 'input window, operand 1, single buffered']
    #allocation6 [shape = 's32[1]{0}', space=sflag, size = 0x4, scoped, tag = 'scoped memory for tpu_custom_call.1']
    #allocation7 [shape = 'u8[1024]{0}', space=vmem, size = 0x400, scoped, tag = 'input window, operand 3, single buffered']
    #allocation8 [shape = 'u8[32768]{0}', space=vmem, size = 0x8000, scoped, tag = 'input window, operand 18, single buffered']
    #allocation9 [shape = 's32[1]{0}', space=sflag, size = 0x4, scoped, tag = 'scoped memory for tpu_custom_call.1']
    #allocation10 [shape = 'u8[8192]{0}', space=vmem, size = 0x2000, scoped, tag = 'output window, operand 0, single buffered']
    %27 = vsyncpa [#allocation3], 0
    %28 = vsyncpa [#allocation6], 0
    %29 = vsyncpa [#allocation9], 0
    %30 = vsyncpa [#allocation4], 0
    // Predicated region
    $region2: #{tpu_custom_call.1} parent=1 // pred_check
      _
    $region3: #{tpu_custom_call.1} parent=1 // pred_check_branch
      %32 = sbr.rel (0) target = $region5
    $region4: #{tpu_custom_call.1} parent=1 // pred_region
      %s34 = ssub.s32 256, 256
      %35 = vsyncadd [#allocation3], %s34
      %s36 = sshll.u32 [#allocation2], 4
      %s37 = int_to_ptr.vmem [resolvable:$true] %s36
      %42 = dma.hbm_to_vmem [thread:$0]  %s0, 256, %s37, [#allocation3], 128, 128, 8
    $region5: #{tpu_custom_call.1} parent=1 // pred_fallthru
      _
    // Predicated region
    $region6: #{tpu_custom_call.1} parent=1 // pred_check
      _
    $region7: #{tpu_custom_call.1} parent=1 // pred_check_branch
      %44 = sbr.rel (0) target = $region9
    $region8: #{tpu_custom_call.1} parent=1 // pred_region
      %s46 = ssub.s32 256, 256
      %47 = vsyncadd [#allocation6], %s46
      %s48 = sshll.u32 [#allocation5], 4
      %s49 = int_to_ptr.vmem [resolvable:$true] %s48
      %54 = dma.hbm_to_vmem [thread:$0]  %s1, 256, %s49, [#allocation6], 128, 128, 8
    $region9: #{tpu_custom_call.1} parent=1 // pred_fallthru
      _
    // Predicated region
    $region10: #{tpu_custom_call.1} parent=1 // pred_check
      _
    $region11: #{tpu_custom_call.1} parent=1 // pred_check_branch
      %56 = sbr.rel (0) target = $region13
    $region12: #{tpu_custom_call.1} parent=1 // pred_region
      _
    $region13: #{tpu_custom_call.1} parent=1 // pred_fallthru
      _
    // Predicated region
    $region14: #{tpu_custom_call.1} parent=1 // pred_check
      _
    $region15: #{tpu_custom_call.1} parent=1 // pred_check_branch
      %58 = sbr.rel (0) target = $region17
    $region16: #{tpu_custom_call.1} parent=1 // pred_region
      %s60 = ssub.s32 32, 32
      %61 = vsyncadd [#allocation6], %s60
      %s62 = sshll.u32 [#allocation7], 4
      %s63 = int_to_ptr.vmem [resolvable:$true] %s62
      %68 = dma.hbm_to_vmem [thread:$0]  %s3, 32, %s63, [#allocation6], 16, 16, 1
    $region17: #{tpu_custom_call.1} parent=1 // pred_fallthru
      _
    // Predicated region
    $region18: #{tpu_custom_call.1} parent=1 // pred_check
      _
    $region19: #{tpu_custom_call.1} parent=1 // pred_check_branch
      %70 = sbr.rel (0) target = $region21
    $region20: #{tpu_custom_call.1} parent=1 // pred_region
      _
    $region21: #{tpu_custom_call.1} parent=1 // pred_fallthru
      _
    // Predicated region
    $region22: #{tpu_custom_call.1} parent=1 // pred_check
      _
    $region23: #{tpu_custom_call.1} parent=1 // pred_check_branch
      %72 = sbr.rel (0) target = $region25
    $region24: #{tpu_custom_call.1} parent=1 // pred_region
      _
    $region25: #{tpu_custom_call.1} parent=1 // pred_fallthru
      _
    // Predicated region
    $region26: #{tpu_custom_call.1} parent=1 // pred_check
      _
    $region27: #{tpu_custom_call.1} parent=1 // pred_check_branch
      %74 = sbr.rel (0) target = $region29
    $region28: #{tpu_custom_call.1} parent=1 // pred_region
      _
    $region29: #{tpu_custom_call.1} parent=1 // pred_fallthru
      _
    // Predicated region
    $region30: #{tpu_custom_call.1} parent=1 // pred_check
      _
    $region31: #{tpu_custom_call.1} parent=1 // pred_check_branch
      %76 = sbr.rel (0) target = $region33
    $region32: #{tpu_custom_call.1} parent=1 // pred_region
      _
    $region33: #{tpu_custom_call.1} parent=1 // pred_fallthru
      _
    // Predicated region
    $region34: #{tpu_custom_call.1} parent=1 // pred_check
      _
    $region35: #{tpu_custom_call.1} parent=1 // pred_check_branch
      %78 = sbr.rel (0) target = $region37
    $region36: #{tpu_custom_call.1} parent=1 // pred_region
      _
    $region37: #{tpu_custom_call.1} parent=1 // pred_fallthru
      _
    // Predicated region
    $region38: #{tpu_custom_call.1} parent=1 // pred_check
      _
    $region39: #{tpu_custom_call.1} parent=1 // pred_check_branch
      %80 = sbr.rel (0) target = $region41
    $region40: #{tpu_custom_call.1} parent=1 // pred_region
      _
    $region41: #{tpu_custom_call.1} parent=1 // pred_fallthru
      _
    // Predicated region
    $region42: #{tpu_custom_call.1} parent=1 // pred_check
      _
    $region43: #{tpu_custom_call.1} parent=1 // pred_check_branch
      %82 = sbr.rel (0) target = $region45
    $region44: #{tpu_custom_call.1} parent=1 // pred_region
      _
    $region45: #{tpu_custom_call.1} parent=1 // pred_fallthru
      _
    // Predicated region
    $region46: #{tpu_custom_call.1} parent=1 // pred_check
      _
    $region47: #{tpu_custom_call.1} parent=1 // pred_check_branch
      %84 = sbr.rel (0) target = $region49
    $region48: #{tpu_custom_call.1} parent=1 // pred_region
      _
    $region49: #{tpu_custom_call.1} parent=1 // pred_fallthru
      _
    // Predicated region
    $region50: #{tpu_custom_call.1} parent=1 // pred_check
      _
    $region51: #{tpu_custom_call.1} parent=1 // pred_check_branch
      %86 = sbr.rel (0) target = $region53
    $region52: #{tpu_custom_call.1} parent=1 // pred_region
      _
    $region53: #{tpu_custom_call.1} parent=1 // pred_fallthru
      _
    // Predicated region
    $region54: #{tpu_custom_call.1} parent=1 // pred_check
      _
    $region55: #{tpu_custom_call.1} parent=1 // pred_check_branch
      %88 = sbr.rel (0) target = $region57
    $region56: #{tpu_custom_call.1} parent=1 // pred_region
      _
    $region57: #{tpu_custom_call.1} parent=1 // pred_fallthru
      _
    // Predicated region
    $region58: #{tpu_custom_call.1} parent=1 // pred_check
      _
    $region59: #{tpu_custom_call.1} parent=1 // pred_check_branch
      %90 = sbr.rel (0) target = $region61
    $region60: #{tpu_custom_call.1} parent=1 // pred_region
      _
    $region61: #{tpu_custom_call.1} parent=1 // pred_fallthru
      _
    // Predicated region
    $region62: #{tpu_custom_call.1} parent=1 // pred_check
      _
    $region63: #{tpu_custom_call.1} parent=1 // pred_check_branch
      %92 = sbr.rel (0) target = $region65
    $region64: #{tpu_custom_call.1} parent=1 // pred_region
      _
    $region65: #{tpu_custom_call.1} parent=1 // pred_fallthru
      _
    // Predicated region
    $region66: #{tpu_custom_call.1} parent=1 // pred_check
      _
    $region67: #{tpu_custom_call.1} parent=1 // pred_check_branch
      %94 = sbr.rel (0) target = $region69
    $region68: #{tpu_custom_call.1} parent=1 // pred_region
      _
    $region69: #{tpu_custom_call.1} parent=1 // pred_fallthru
      _
    // Predicated region
    $region70: #{tpu_custom_call.1} parent=1 // pred_check
      _
    $region71: #{tpu_custom_call.1} parent=1 // pred_check_branch
      %96 = sbr.rel (0) target = $region73
    $region72: #{tpu_custom_call.1} parent=1 // pred_region
      _
    $region73: #{tpu_custom_call.1} parent=1 // pred_fallthru
      _
    // Predicated region
    $region74: #{tpu_custom_call.1} parent=1 // pred_check
      _
    $region75: #{tpu_custom_call.1} parent=1 // pred_check_branch
      %98 = sbr.rel (0) target = $region77
    $region76: #{tpu_custom_call.1} parent=1 // pred_region
      %s100 = ssub.s32 1024, 1024
      %101 = vsyncadd [#allocation9], %s100
      %s102 = sshll.u32 [#allocation8], 4
      %s103 = int_to_ptr.vmem [resolvable:$true] %s102
      %108 = dma.hbm_to_vmem [thread:$0]  %s18, 1024, %s103, [#allocation9], 128, 128, 8
    $region77: #{tpu_custom_call.1} parent=1 // pred_fallthru
      _
    // Predicated region
    $region78: #{tpu_custom_call.1} parent=1 // pred_check
      _
    $region79: #{tpu_custom_call.1} parent=1 // pred_check_branch
      %110 = sbr.rel (0) target = $region81
    $region80: #{tpu_custom_call.1} parent=1 // pred_region
      _
    $region81: #{tpu_custom_call.1} parent=1 // pred_fallthru
      _
    // Predicated region
    $region82: #{tpu_custom_call.1} parent=1 // pred_check
      _
    $region83: #{tpu_custom_call.1} parent=1 // pred_check_branch
      %112 = sbr.rel (0) target = $region85
    $region84: #{tpu_custom_call.1} parent=1 // pred_region
      _
    $region85: #{tpu_custom_call.1} parent=1 // pred_fallthru
      _
    // Predicated region
    $region86: #{tpu_custom_call.1} parent=1 // pred_check
      _
    $region87: #{tpu_custom_call.1} parent=1 // pred_check_branch
      %114 = sbr.rel (0) target = $region89
    $region88: #{tpu_custom_call.1} parent=1 // pred_region
      _
    $region89: #{tpu_custom_call.1} parent=1 // pred_fallthru
      _
    // Predicated region
    $region90: #{tpu_custom_call.1} parent=1 // pred_check
      _
    $region91: #{tpu_custom_call.1} parent=1 // pred_check_branch
      %116 = sbr.rel (0) target = $region93
    $region92: #{tpu_custom_call.1} parent=1 // pred_region
      %117 = dma.done [#allocation3], 256
    $region93: #{tpu_custom_call.1} parent=1 // pred_fallthru
      _
    // Predicated region
    $region94: #{tpu_custom_call.1} parent=1 // pred_check
      _
    $region95: #{tpu_custom_call.1} parent=1 // pred_check_branch
      %119 = sbr.rel (0) target = $region97
    $region96: #{tpu_custom_call.1} parent=1 // pred_region
      %120 = dma.done [#allocation6], 256
    $region97: #{tpu_custom_call.1} parent=1 // pred_fallthru
      _
    // Predicated region
    $region98: #{tpu_custom_call.1} parent=1 // pred_check
      _
    $region99: #{tpu_custom_call.1} parent=1 // pred_check_branch
      %122 = sbr.rel (0) target = $region101
    $region100: #{tpu_custom_call.1} parent=1 // pred_region
      %123 = dma.done [#allocation6], 32
    $region101: #{tpu_custom_call.1} parent=1 // pred_fallthru
      _
    // Predicated region
    $region102: #{tpu_custom_call.1} parent=1 // pred_check
      _
    $region103: #{tpu_custom_call.1} parent=1 // pred_check_branch
      %125 = sbr.rel (0) target = $region105
    $region104: #{tpu_custom_call.1} parent=1 // pred_region
      %126 = dma.done [#allocation9], 1024
    $region105: #{tpu_custom_call.1} parent=1 // pred_fallthru
      _
    %v127 = vld [vmem:[#allocation2] sm:$0xff]
    %v128 = vld [vmem:[#allocation2 + $0x8] sm:$0xff]
    %v129 = vld [vmem:[#allocation5] sm:$0xff]
    %v130 = vld [vmem:[#allocation5 + $0x8] sm:$0xff]
    %v131 = vld [vmem:[%s2] sm:$0x1]
    %v132 = vld [vmem:[#allocation7] sm:$0x1]
    %vm133 = vcmask 261120
    %v134 = vsel %vm133, %v127, 0.0
    %135 = vadd.xlane.f32.xlu0 %v134
    %v136 = vpop.xlane.xlu0 %135
    %v137 = vsel %vm133, %v128, 0.0
    %138 = vadd.xlane.f32.xlu0 %v137
    %v139 = vpop.xlane.xlu0 %138
    %v140 = vrcp.pop 32.0
    %v141 = vmul.f32 %v136, %v140
    %v142 = vmul.f32 %v139, %v140
    %v143 = vsub.f32 %v127, %v141
    %v144 = vsub.f32 %v128, %v142
    %v145 = vmul.f32 %v143, %v143
    %v146 = vmul.f32 %v144, %v144
    %v147 = vsel %vm133, %v145, 0.0
    %148 = vadd.xlane.f32.xlu0 %v147
    %v149 = vpop.xlane.xlu0 %148
    %v150 = vsel %vm133, %v146, 0.0
    %151 = vadd.xlane.f32.xlu0 %v150
    %v152 = vpop.xlane.xlu0 %151
    %v153 = vmul.f32 %v149, %v140
    %v154 = vmul.f32 %v152, %v140
    %v155 = vadd.f32 %v153, 1e-05
    %v156 = vadd.f32 %v154, 1e-05
    %v157 = vrsqrt.pop %v155
    %v158 = vrsqrt.pop %v156
    %v159 = vmul.f32 %v143, %v157
    %v160 = vmul.f32 %v144, %v158
    %v162 = vlaneseq
    %v163 = vshrl.u32 %v162, 7
    %v164 = vsub.s32 0, %v163
    %v165 = vrot.slane %v131, %v164
    %v167 = vmul.f32 %v159, %v165
    %v168 = vmul.f32 %v160, %v165
    %v170 = vlaneseq
    %v171 = vshrl.u32 %v170, 7
    %v172 = vsub.s32 0, %v171
    %v173 = vrot.slane %v132, %v172
    %v175 = vadd.f32 %v167, %v173
    %v176 = vadd.f32 %v168, %v173
    %v177 = vld [vmem:[%s4] sm:$0xff]
    %v178 = vld [vmem:[%s4 + $0x8] sm:$0xff]
    %v179 = vld [vmem:[%s4 + $0x10] sm:$0xff]
    %v180 = vld [vmem:[%s4 + $0x18] sm:$0xff]
    %v181 = vld [vmem:[%s5] sm:$0x1]
    %v183 = vlaneseq
    %v184 = vshrl.u32 %v183, 7
    %v185 = vsub.s32 0, %v184
    %v186 = vrot.slane %v181, %v185
    %v189 = vsel %vm133, %v175, 0
    %v192 = vsel %vm133, %v176, 0
    %194 = vmatprep.subr.mxu0 0.0
    %195 = vmatpush1.msra.mxu0 0.0
    %196 = vmatprep.subr.mxu0 0.0
    %197 = vmatpush1.msra.mxu0 0.0
    %198 = vmatprep.subr.mxu0 0.0
    %199 = vmatpush1.msra.mxu0 0.0
    %200 = vmatprep.subr.mxu0 0.0
    %201 = vmatpush1.msra.mxu0 0.0
    %202 = vmatprep.subr.mxu0 0.0
    %203 = vmatpush1.msra.mxu0 0.0
    %204 = vmatprep.subr.mxu0 0.0
    %205 = vmatpush1.msra.mxu0 0.0
    %206 = vmatprep.subr.mxu0 0.0
    %207 = vmatpush1.msra.mxu0 0.0
    %208 = vmatprep.subr.mxu0 0.0
    %209 = vmatpush1.msra.mxu0 0.0
    %210 = vmatprep.subr.mxu0 0.0
    %211 = vmatpush1.msra.mxu0 0.0
    %212 = vmatprep.subr.mxu0 0.0
    %213 = vmatpush1.msra.mxu0 0.0
    %214 = vmatprep.subr.mxu0 0.0
    %215 = vmatpush1.msra.mxu0 0.0
    %216 = vmatprep.subr.mxu0 0.0
    %217 = vmatpush1.msra.mxu0 0.0
    %218 = vmatprep.subr.mxu0 0.0
    %219 = vmatpush1.msra.mxu0 %v180
    %220 = vmatprep.subr.mxu0 0.0
    %221 = vmatpush1.msra.mxu0 %v179
    %222 = vmatprep.subr.mxu0 0.0
    %223 = vmatpush1.msra.mxu0 %v178
    %224 = vmatprep.subr.mxu0 0.0
    %225 = vmatpush1.msra.mxu0 %v177
    %226 = vmatprep.subr.mxu0 0.0
    %227 = vmatpush2.msra.mxu0 0.0
    %228 = vmatprep.subr.mxu0 0.0
    %229 = vmatpush2.msra.mxu0 0.0
    %230 = vmatprep.subr.mxu0 0.0
    %231 = vmatpush2.msra.mxu0 0.0
    %232 = vmatprep.subr.mxu0 0.0
    %233 = vmatpush2.msra.mxu0 0.0
    %234 = vmatprep.subr.mxu0 0.0
    %235 = vmatpush2.msra.mxu0 0.0
    %236 = vmatprep.subr.mxu0 0.0
    %237 = vmatpush2.msra.mxu0 0.0
    %238 = vmatprep.subr.mxu0 0.0
    %239 = vmatpush2.msra.mxu0 0.0
    %240 = vmatprep.subr.mxu0 0.0
    %241 = vmatpush2.msra.mxu0 0.0
    %242 = vmatprep.subr.mxu0 0.0
    %243 = vmatpush2.msra.mxu0 0.0
    %244 = vmatprep.subr.mxu0 0.0
    %245 = vmatpush2.msra.mxu0 0.0
    %246 = vmatprep.subr.mxu0 0.0
    %247 = vmatpush2.msra.mxu0 0.0
    %248 = vmatprep.subr.mxu0 0.0
    %249 = vmatpush2.msra.mxu0 0.0
    %250 = vmatprep.subr.mxu0 0.0
    %251 = vmatpush2.msra.mxu0 0.0
    %252 = vmatprep.subr.mxu0 0.0
    %253 = vmatpush2.msra.mxu0 0.0
    %254 = vmatprep.subr.mxu0 0.0
    %255 = vmatpush2.msra.mxu0 0.0
    %256 = vmatprep.subr.mxu0 0.0
    %257 = vmatpush2.msra.mxu0 0.0
    %258 = vmatprep.mubr.f32.mxu0 0.0
    %259 = vmatmul.mubr.f32.gmra.mxu0 %v189
    %v260 = vpop.f32.mrf.mxu0
    %v261 = vadd.f32 %v186, %v260
    %v262 = vpop.f32.mrf.mxu0
    %263 = vmatprep.mubr.f32.mxu0 0.0
    %264 = vmatmul.mubr.f32.gmra.mxu0 %v192
    %v265 = vpop.f32.mrf.mxu0
    %v266 = vadd.f32 %v186, %v265
    %v267 = vpop.f32.mrf.mxu0
    %268 = vdwg.mxu0
    %v269 = vld [vmem:[%s6] sm:$0xff]
    %v270 = vld [vmem:[%s6 + $0x8] sm:$0xff]
    %v271 = vld [vmem:[%s6 + $0x10] sm:$0xff]
    %v272 = vld [vmem:[%s6 + $0x18] sm:$0xff]
    %v273 = vld [vmem:[%s7] sm:$0x1]
    %275 = vrot.lane.b32.xlu0 %v261, 96
    %v276 = vpop.permute.xlu0 %275
    %vm277 = vcmask 64512
    %v278 = vsel %vm277, %v261, 0
    %v280 = vsel %vm277, %v276, 0
    %282 = vmatprep.subr.mxu0 0.0
    %283 = vmatpush1.xpose.msra.mxu0 0.0
    %284 = vmatprep.subr.mxu0 0.0
    %285 = vmatpush1.xpose.msra.mxu0 0.0
    %286 = vmatprep.subr.mxu0 0.0
    %287 = vmatpush1.xpose.msra.mxu0 0.0
    %288 = vmatprep.subr.mxu0 0.0
    %289 = vmatpush1.xpose.msra.mxu0 0.0
    %290 = vmatprep.subr.mxu0 0.0
    %291 = vmatpush1.xpose.msra.mxu0 0.0
    %292 = vmatprep.subr.mxu0 0.0
    %293 = vmatpush1.xpose.msra.mxu0 0.0
    %294 = vmatprep.subr.mxu0 0.0
    %295 = vmatpush1.xpose.msra.mxu0 0.0
    %296 = vmatprep.subr.mxu0 0.0
    %297 = vmatpush1.xpose.msra.mxu0 0.0
    %298 = vmatprep.subr.mxu0 0.0
    %299 = vmatpush1.xpose.msra.mxu0 0.0
    %300 = vmatprep.subr.mxu0 0.0
    %301 = vmatpush1.xpose.msra.mxu0 0.0
    %302 = vmatprep.subr.mxu0 0.0
    %303 = vmatpush1.xpose.msra.mxu0 0.0
    %304 = vmatprep.subr.mxu0 0.0
    %305 = vmatpush1.xpose.msra.mxu0 0.0
    %306 = vmatprep.subr.mxu0 0.0
    %307 = vmatpush1.xpose.msra.mxu0 0.0
    %308 = vmatprep.subr.mxu0 0.0
    %309 = vmatpush1.xpose.msra.mxu0 0.0
    %310 = vmatprep.subr.mxu0 0.0
    %311 = vmatpush1.xpose.msra.mxu0 0.0
    %312 = vmatprep.subr.mxu0 0.0
    %313 = vmatpush1.xpose.msra.mxu0 %v280
    %314 = vmatprep.subr.mxu0 0.0
    %315 = vmatpush2.xpose.msra.mxu0 0.0
    %316 = vmatprep.subr.mxu0 0.0
    %317 = vmatpush2.xpose.msra.mxu0 0.0
    %318 = vmatprep.subr.mxu0 0.0
    %319 = vmatpush2.xpose.msra.mxu0 0.0
    %320 = vmatprep.subr.mxu0 0.0
    %321 = vmatpush2.xpose.msra.mxu0 0.0
    %322 = vmatprep.subr.mxu0 0.0
    %323 = vmatpush2.xpose.msra.mxu0 0.0
    %324 = vmatprep.subr.mxu0 0.0
    %325 = vmatpush2.xpose.msra.mxu0 0.0
    %326 = vmatprep.subr.mxu0 0.0
    %327 = vmatpush2.xpose.msra.mxu0 0.0
    %328 = vmatprep.subr.mxu0 0.0
    %329 = vmatpush2.xpose.msra.mxu0 0.0
    %330 = vmatprep.subr.mxu0 0.0
    %331 = vmatpush2.xpose.msra.mxu0 0.0
    %332 = vmatprep.subr.mxu0 0.0
    %333 = vmatpush2.xpose.msra.mxu0 0.0
    %334 = vmatprep.subr.mxu0 0.0
    %335 = vmatpush2.xpose.msra.mxu0 0.0
    %336 = vmatprep.subr.mxu0 0.0
    %337 = vmatpush2.xpose.msra.mxu0 0.0
    %338 = vmatprep.subr.mxu0 0.0
    %339 = vmatpush2.xpose.msra.mxu0 0.0
    %340 = vmatprep.subr.mxu0 0.0
    %341 = vmatpush2.xpose.msra.mxu0 0.0
    %342 = vmatprep.subr.mxu0 0.0
    %343 = vmatpush2.xpose.msra.mxu0 0.0
    %344 = vmatprep.subr.mxu0 0.0
    %345 = vmatpush2.xpose.msra.mxu0 0.0
    %346 = vmatprep.mubr.f32.mxu0 0.0
    %347 = vmatmul.mubr.f32.gmra.mxu0 %v278
    %v348 = vpop.f32.mrf.mxu0
    %v349 = vadd.f32 0.0, %v348
    %v350 = vpop.f32.mrf.mxu0
    %351 = vdwg.mxu0
    %353 = vrot.lane.b32.xlu0 %v266, 96
    %v354 = vpop.permute.xlu0 %353
    %v355 = vsel %vm277, %v266, 0
    %v357 = vsel %vm277, %v354, 0
    %359 = vmatprep.subr.mxu0 0.0
    %360 = vmatpush1.xpose.msra.mxu0 0.0
    %361 = vmatprep.subr.mxu0 0.0
    %362 = vmatpush1.xpose.msra.mxu0 0.0
    %363 = vmatprep.subr.mxu0 0.0
    %364 = vmatpush1.xpose.msra.mxu0 0.0
    %365 = vmatprep.subr.mxu0 0.0
    %366 = vmatpush1.xpose.msra.mxu0 0.0
    %367 = vmatprep.subr.mxu0 0.0
    %368 = vmatpush1.xpose.msra.mxu0 0.0
    %369 = vmatprep.subr.mxu0 0.0
    %370 = vmatpush1.xpose.msra.mxu0 0.0
    %371 = vmatprep.subr.mxu0 0.0
    %372 = vmatpush1.xpose.msra.mxu0 0.0
    %373 = vmatprep.subr.mxu0 0.0
    %374 = vmatpush1.xpose.msra.mxu0 0.0
    %375 = vmatprep.subr.mxu0 0.0
    %376 = vmatpush1.xpose.msra.mxu0 0.0
    %377 = vmatprep.subr.mxu0 0.0
    %378 = vmatpush1.xpose.msra.mxu0 0.0
    %379 = vmatprep.subr.mxu0 0.0
    %380 = vmatpush1.xpose.msra.mxu0 0.0
    %381 = vmatprep.subr.mxu0 0.0
    %382 = vmatpush1.xpose.msra.mxu0 0.0
    %383 = vmatprep.subr.mxu0 0.0
    %384 = vmatpush1.xpose.msra.mxu0 0.0
    %385 = vmatprep.subr.mxu0 0.0
    %386 = vmatpush1.xpose.msra.mxu0 0.0
    %387 = vmatprep.subr.mxu0 0.0
    %388 = vmatpush1.xpose.msra.mxu0 0.0
    %389 = vmatprep.subr.mxu0 0.0
    %390 = vmatpush1.xpose.msra.mxu0 %v357
    %391 = vmatprep.subr.mxu0 0.0
    %392 = vmatpush2.xpose.msra.mxu0 0.0
    %393 = vmatprep.subr.mxu0 0.0
    %394 = vmatpush2.xpose.msra.mxu0 0.0
    %395 = vmatprep.subr.mxu0 0.0
    %396 = vmatpush2.xpose.msra.mxu0 0.0
    %397 = vmatprep.subr.mxu0 0.0
    %398 = vmatpush2.xpose.msra.mxu0 0.0
    %399 = vmatprep.subr.mxu0 0.0
    %400 = vmatpush2.xpose.msra.mxu0 0.0
    %401 = vmatprep.subr.mxu0 0.0
    %402 = vmatpush2.xpose.msra.mxu0 0.0
    %403 = vmatprep.subr.mxu0 0.0
    %404 = vmatpush2.xpose.msra.mxu0 0.0
    %405 = vmatprep.subr.mxu0 0.0
    %406 = vmatpush2.xpose.msra.mxu0 0.0
    %407 = vmatprep.subr.mxu0 0.0
    %408 = vmatpush2.xpose.msra.mxu0 0.0
    %409 = vmatprep.subr.mxu0 0.0
    %410 = vmatpush2.xpose.msra.mxu0 0.0
    %411 = vmatprep.subr.mxu0 0.0
    %412 = vmatpush2.xpose.msra.mxu0 0.0
    %413 = vmatprep.subr.mxu0 0.0
    %414 = vmatpush2.xpose.msra.mxu0 0.0
    %415 = vmatprep.subr.mxu0 0.0
    %416 = vmatpush2.xpose.msra.mxu0 0.0
    %417 = vmatprep.subr.mxu0 0.0
    %418 = vmatpush2.xpose.msra.mxu0 0.0
    %419 = vmatprep.subr.mxu0 0.0
    %420 = vmatpush2.xpose.msra.mxu0 0.0
    %421 = vmatprep.subr.mxu0 0.0
    %422 = vmatpush2.xpose.msra.mxu0 0.0
    %423 = vmatprep.mubr.f32.mxu0 0.0
    %424 = vmatmul.mubr.f32.gmra.mxu0 %v355
    %v425 = vpop.f32.mrf.mxu0
    %v426 = vadd.f32 0.0, %v425
    %v427 = vpop.f32.mrf.mxu0
    %428 = vdwg.mxu0
    %v429 = vmul.f32 %v349, 0.35355338
    %v430 = vmul.f32 %v426, 0.35355338
    %v431 = vsel %vm277, %v429, -inf
    %432 = vmax.xlane.f32.xlu0 %v431
    %v433 = vpop.xlane.xlu0 %432
    %v434 = vsel %vm277, %v430, -inf
    %435 = vmax.xlane.f32.xlu0 %v434
    %v436 = vpop.xlane.xlu0 %435
    %v437 = vsub.f32 %v429, %v433
    %v438 = vsub.f32 %v430, %v436
    %v439 = vmul.f32 %v437, 1.442695
    %v440 = vpow.pop %v439
    %v441 = vmul.f32 %v438, 1.442695
    %v442 = vpow.pop %v441
    %v443 = vsel %vm277, %v440, 0.0
    %444 = vadd.xlane.f32.xlu0 %v443
    %v445 = vpop.xlane.xlu0 %444
    %v446 = vsel %vm277, %v442, 0.0
    %447 = vadd.xlane.f32.xlu0 %v446
    %v448 = vpop.xlane.xlu0 %447
    %v449 = vrcp.pop %v445
    %v450 = vmul.f32 %v440, %v449
    %v451 = vrcp.pop %v448
    %v452 = vmul.f32 %v442, %v451
    %453 = vrot.lane.b32.xlu0 %v261, 64
    %v454 = vpop.permute.xlu0 %453
    %v457 = vsel %vm277, %v450, 0
    %459 = vmatprep.subr.mxu0 0.0
    %460 = vmatpush1.msra.mxu0 0.0
    %461 = vmatprep.subr.mxu0 0.0
    %462 = vmatpush1.msra.mxu0 0.0
    %463 = vmatprep.subr.mxu0 0.0
    %464 = vmatpush1.msra.mxu0 0.0
    %465 = vmatprep.subr.mxu0 0.0
    %466 = vmatpush1.msra.mxu0 0.0
    %467 = vmatprep.subr.mxu0 0.0
    %468 = vmatpush1.msra.mxu0 0.0
    %469 = vmatprep.subr.mxu0 0.0
    %470 = vmatpush1.msra.mxu0 0.0
    %471 = vmatprep.subr.mxu0 0.0
    %472 = vmatpush1.msra.mxu0 0.0
    %473 = vmatprep.subr.mxu0 0.0
    %474 = vmatpush1.msra.mxu0 0.0
    %475 = vmatprep.subr.mxu0 0.0
    %476 = vmatpush1.msra.mxu0 0.0
    %477 = vmatprep.subr.mxu0 0.0
    %478 = vmatpush1.msra.mxu0 0.0
    %479 = vmatprep.subr.mxu0 0.0
    %480 = vmatpush1.msra.mxu0 0.0
    %481 = vmatprep.subr.mxu0 0.0
    %482 = vmatpush1.msra.mxu0 0.0
    %483 = vmatprep.subr.mxu0 0.0
    %484 = vmatpush1.msra.mxu0 0.0
    %485 = vmatprep.subr.mxu0 0.0
    %486 = vmatpush1.msra.mxu0 0.0
    %487 = vmatprep.subr.mxu0 0.0
    %488 = vmatpush1.msra.mxu0 0.0
    %489 = vmatprep.subr.mxu0 0.0
    %490 = vmatpush1.msra.mxu0 %v454
    %491 = vmatprep.subr.mxu0 0.0
    %492 = vmatpush2.msra.mxu0 0.0
    %493 = vmatprep.subr.mxu0 0.0
    %494 = vmatpush2.msra.mxu0 0.0
    %495 = vmatprep.subr.mxu0 0.0
    %496 = vmatpush2.msra.mxu0 0.0
    %497 = vmatprep.subr.mxu0 0.0
    %498 = vmatpush2.msra.mxu0 0.0
    %499 = vmatprep.subr.mxu0 0.0
    %500 = vmatpush2.msra.mxu0 0.0
    %501 = vmatprep.subr.mxu0 0.0
    %502 = vmatpush2.msra.mxu0 0.0
    %503 = vmatprep.subr.mxu0 0.0
    %504 = vmatpush2.msra.mxu0 0.0
    %505 = vmatprep.subr.mxu0 0.0
    %506 = vmatpush2.msra.mxu0 0.0
    %507 = vmatprep.subr.mxu0 0.0
    %508 = vmatpush2.msra.mxu0 0.0
    %509 = vmatprep.subr.mxu0 0.0
    %510 = vmatpush2.msra.mxu0 0.0
    %511 = vmatprep.subr.mxu0 0.0
    %512 = vmatpush2.msra.mxu0 0.0
    %513 = vmatprep.subr.mxu0 0.0
    %514 = vmatpush2.msra.mxu0 0.0
    %515 = vmatprep.subr.mxu0 0.0
    %516 = vmatpush2.msra.mxu0 0.0
    %517 = vmatprep.subr.mxu0 0.0
    %518 = vmatpush2.msra.mxu0 0.0
    %519 = vmatprep.subr.mxu0 0.0
    %520 = vmatpush2.msra.mxu0 0.0
    %521 = vmatprep.subr.mxu0 0.0
    %522 = vmatpush2.msra.mxu0 0.0
    %523 = vmatprep.mubr.f32.mxu0 0.0
    %524 = vmatmul.mubr.f32.gmra.mxu0 %v457
    %v525 = vpop.f32.mrf.mxu0
    %v526 = vadd.f32 0.0, %v525
    %v527 = vpop.f32.mrf.mxu0
    %528 = vdwg.mxu0
    %529 = vrot.lane.b32.xlu0 %v266, 64
    %v530 = vpop.permute.xlu0 %529
    %v533 = vsel %vm277, %v452, 0
    %535 = vmatprep.subr.mxu0 0.0
    %536 = vmatpush1.msra.mxu0 0.0
    %537 = vmatprep.subr.mxu0 0.0
    %538 = vmatpush1.msra.mxu0 0.0
    %539 = vmatprep.subr.mxu0 0.0
    %540 = vmatpush1.msra.mxu0 0.0
    %541 = vmatprep.subr.mxu0 0.0
    %542 = vmatpush1.msra.mxu0 0.0
    %543 = vmatprep.subr.mxu0 0.0
    %544 = vmatpush1.msra.mxu0 0.0
    %545 = vmatprep.subr.mxu0 0.0
    %546 = vmatpush1.msra.mxu0 0.0
    %547 = vmatprep.subr.mxu0 0.0
    %548 = vmatpush1.msra.mxu0 0.0
    %549 = vmatprep.subr.mxu0 0.0
    %550 = vmatpush1.msra.mxu0 0.0
    %551 = vmatprep.subr.mxu0 0.0
    %552 = vmatpush1.msra.mxu0 0.0
    %553 = vmatprep.subr.mxu0 0.0
    %554 = vmatpush1.msra.mxu0 0.0
    %555 = vmatprep.subr.mxu0 0.0
    %556 = vmatpush1.msra.mxu0 0.0
    %557 = vmatprep.subr.mxu0 0.0
    %558 = vmatpush1.msra.mxu0 0.0
    %559 = vmatprep.subr.mxu0 0.0
    %560 = vmatpush1.msra.mxu0 0.0
    %561 = vmatprep.subr.mxu0 0.0
    %562 = vmatpush1.msra.mxu0 0.0
    %563 = vmatprep.subr.mxu0 0.0
    %564 = vmatpush1.msra.mxu0 0.0
    %565 = vmatprep.subr.mxu0 0.0
    %566 = vmatpush1.msra.mxu0 %v530
    %567 = vmatprep.subr.mxu0 0.0
    %568 = vmatpush2.msra.mxu0 0.0
    %569 = vmatprep.subr.mxu0 0.0
    %570 = vmatpush2.msra.mxu0 0.0
    %571 = vmatprep.subr.mxu0 0.0
    %572 = vmatpush2.msra.mxu0 0.0
    %573 = vmatprep.subr.mxu0 0.0
    %574 = vmatpush2.msra.mxu0 0.0
    %575 = vmatprep.subr.mxu0 0.0
    %576 = vmatpush2.msra.mxu0 0.0
    %577 = vmatprep.subr.mxu0 0.0
    %578 = vmatpush2.msra.mxu0 0.0
    %579 = vmatprep.subr.mxu0 0.0
    %580 = vmatpush2.msra.mxu0 0.0
    %581 = vmatprep.subr.mxu0 0.0
    %582 = vmatpush2.msra.mxu0 0.0
    %583 = vmatprep.subr.mxu0 0.0
    %584 = vmatpush2.msra.mxu0 0.0
    %585 = vmatprep.subr.mxu0 0.0
    %586 = vmatpush2.msra.mxu0 0.0
    %587 = vmatprep.subr.mxu0 0.0
    %588 = vmatpush2.msra.mxu0 0.0
    %589 = vmatprep.subr.mxu0 0.0
    %590 = vmatpush2.msra.mxu0 0.0
    %591 = vmatprep.subr.mxu0 0.0
    %592 = vmatpush2.msra.mxu0 0.0
    %593 = vmatprep.subr.mxu0 0.0
    %594 = vmatpush2.msra.mxu0 0.0
    %595 = vmatprep.subr.mxu0 0.0
    %596 = vmatpush2.msra.mxu0 0.0
    %597 = vmatprep.subr.mxu0 0.0
    %598 = vmatpush2.msra.mxu0 0.0
    %599 = vmatprep.mubr.f32.mxu0 0.0
    %600 = vmatmul.mubr.f32.gmra.mxu0 %v533
    %v601 = vpop.f32.mrf.mxu0
    %v602 = vadd.f32 0.0, %v601
    %v603 = vpop.f32.mrf.mxu0
    %604 = vdwg.mxu0
    %605 = vrot.lane.b32.xlu0 %v261, 120
    %v606 = vpop.permute.xlu0 %605
    %607 = vrot.lane.b32.xlu0 %v261, 88
    %v608 = vpop.permute.xlu0 %607
    %v609 = vsel %vm277, %v606, 0
    %v611 = vsel %vm277, %v608, 0
    %613 = vmatprep.subr.mxu0 0.0
    %614 = vmatpush1.xpose.msra.mxu0 0.0
    %615 = vmatprep.subr.mxu0 0.0
    %616 = vmatpush1.xpose.msra.mxu0 0.0
    %617 = vmatprep.subr.mxu0 0.0
    %618 = vmatpush1.xpose.msra.mxu0 0.0
    %619 = vmatprep.subr.mxu0 0.0
    %620 = vmatpush1.xpose.msra.mxu0 0.0
    %621 = vmatprep.subr.mxu0 0.0
    %622 = vmatpush1.xpose.msra.mxu0 0.0
    %623 = vmatprep.subr.mxu0 0.0
    %624 = vmatpush1.xpose.msra.mxu0 0.0
    %625 = vmatprep.subr.mxu0 0.0
    %626 = vmatpush1.xpose.msra.mxu0 0.0
    %627 = vmatprep.subr.mxu0 0.0
    %628 = vmatpush1.xpose.msra.mxu0 0.0
    %629 = vmatprep.subr.mxu0 0.0
    %630 = vmatpush1.xpose.msra.mxu0 0.0
    %631 = vmatprep.subr.mxu0 0.0
    %632 = vmatpush1.xpose.msra.mxu0 0.0
    %633 = vmatprep.subr.mxu0 0.0
    %634 = vmatpush1.xpose.msra.mxu0 0.0
    %635 = vmatprep.subr.mxu0 0.0
    %636 = vmatpush1.xpose.msra.mxu0 0.0
    %637 = vmatprep.subr.mxu0 0.0
    %638 = vmatpush1.xpose.msra.mxu0 0.0
    %639 = vmatprep.subr.mxu0 0.0
    %640 = vmatpush1.xpose.msra.mxu0 0.0
    %641 = vmatprep.subr.mxu0 0.0
    %642 = vmatpush1.xpose.msra.mxu0 0.0
    %643 = vmatprep.subr.mxu0 0.0
    %644 = vmatpush1.xpose.msra.mxu0 %v611
    %645 = vmatprep.subr.mxu0 0.0
    %646 = vmatpush2.xpose.msra.mxu0 0.0
    %647 = vmatprep.subr.mxu0 0.0
    %648 = vmatpush2.xpose.msra.mxu0 0.0
    %649 = vmatprep.subr.mxu0 0.0
    %650 = vmatpush2.xpose.msra.mxu0 0.0
    %651 = vmatprep.subr.mxu0 0.0
    %652 = vmatpush2.xpose.msra.mxu0 0.0
    %653 = vmatprep.subr.mxu0 0.0
    %654 = vmatpush2.xpose.msra.mxu0 0.0
    %655 = vmatprep.subr.mxu0 0.0
    %656 = vmatpush2.xpose.msra.mxu0 0.0
    %657 = vmatprep.subr.mxu0 0.0
    %658 = vmatpush2.xpose.msra.mxu0 0.0
    %659 = vmatprep.subr.mxu0 0.0
    %660 = vmatpush2.xpose.msra.mxu0 0.0
    %661 = vmatprep.subr.mxu0 0.0
    %662 = vmatpush2.xpose.msra.mxu0 0.0
    %663 = vmatprep.subr.mxu0 0.0
    %664 = vmatpush2.xpose.msra.mxu0 0.0
    %665 = vmatprep.subr.mxu0 0.0
    %666 = vmatpush2.xpose.msra.mxu0 0.0
    %667 = vmatprep.subr.mxu0 0.0
    %668 = vmatpush2.xpose.msra.mxu0 0.0
    %669 = vmatprep.subr.mxu0 0.0
    %670 = vmatpush2.xpose.msra.mxu0 0.0
    %671 = vmatprep.subr.mxu0 0.0
    %672 = vmatpush2.xpose.msra.mxu0 0.0
    %673 = vmatprep.subr.mxu0 0.0
    %674 = vmatpush2.xpose.msra.mxu0 0.0
    %675 = vmatprep.subr.mxu0 0.0
    %676 = vmatpush2.xpose.msra.mxu0 0.0
    %677 = vmatprep.mubr.f32.mxu0 0.0
    %678 = vmatmul.mubr.f32.gmra.mxu0 %v609
    %v679 = vpop.f32.mrf.mxu0
    %v680 = vadd.f32 0.0, %v679
    %v681 = vpop.f32.mrf.mxu0
    %682 = vdwg.mxu0
    %683 = vrot.lane.b32.xlu0 %v266, 120
    %v684 = vpop.permute.xlu0 %683
    %685 = vrot.lane.b32.xlu0 %v266, 88
    %v686 = vpop.permute.xlu0 %685
    %v687 = vsel %vm277, %v684, 0
    %v689 = vsel %vm277, %v686, 0
    %691 = vmatprep.subr.mxu0 0.0
    %692 = vmatpush1.xpose.msra.mxu0 0.0
    %693 = vmatprep.subr.mxu0 0.0
    %694 = vmatpush1.xpose.msra.mxu0 0.0
    %695 = vmatprep.subr.mxu0 0.0
    %696 = vmatpush1.xpose.msra.mxu0 0.0
    %697 = vmatprep.subr.mxu0 0.0
    %698 = vmatpush1.xpose.msra.mxu0 0.0
    %699 = vmatprep.subr.mxu0 0.0
    %700 = vmatpush1.xpose.msra.mxu0 0.0
    %701 = vmatprep.subr.mxu0 0.0
    %702 = vmatpush1.xpose.msra.mxu0 0.0
    %703 = vmatprep.subr.mxu0 0.0
    %704 = vmatpush1.xpose.msra.mxu0 0.0
    %705 = vmatprep.subr.mxu0 0.0
    %706 = vmatpush1.xpose.msra.mxu0 0.0
    %707 = vmatprep.subr.mxu0 0.0
    %708 = vmatpush1.xpose.msra.mxu0 0.0
    %709 = vmatprep.subr.mxu0 0.0
    %710 = vmatpush1.xpose.msra.mxu0 0.0
    %711 = vmatprep.subr.mxu0 0.0
    %712 = vmatpush1.xpose.msra.mxu0 0.0
    %713 = vmatprep.subr.mxu0 0.0
    %714 = vmatpush1.xpose.msra.mxu0 0.0
    %715 = vmatprep.subr.mxu0 0.0
    %716 = vmatpush1.xpose.msra.mxu0 0.0
    %717 = vmatprep.subr.mxu0 0.0
    %718 = vmatpush1.xpose.msra.mxu0 0.0
    %719 = vmatprep.subr.mxu0 0.0
    %720 = vmatpush1.xpose.msra.mxu0 0.0
    %721 = vmatprep.subr.mxu0 0.0
    %722 = vmatpush1.xpose.msra.mxu0 %v689
    %723 = vmatprep.subr.mxu0 0.0
    %724 = vmatpush2.xpose.msra.mxu0 0.0
    %725 = vmatprep.subr.mxu0 0.0
    %726 = vmatpush2.xpose.msra.mxu0 0.0
    %727 = vmatprep.subr.mxu0 0.0
    %728 = vmatpush2.xpose.msra.mxu0 0.0
    %729 = vmatprep.subr.mxu0 0.0
    %730 = vmatpush2.xpose.msra.mxu0 0.0
    %731 = vmatprep.subr.mxu0 0.0
    %732 = vmatpush2.xpose.msra.mxu0 0.0
    %733 = vmatprep.subr.mxu0 0.0
    %734 = vmatpush2.xpose.msra.mxu0 0.0
    %735 = vmatprep.subr.mxu0 0.0
    %736 = vmatpush2.xpose.msra.mxu0 0.0
    %737 = vmatprep.subr.mxu0 0.0
    %738 = vmatpush2.xpose.msra.mxu0 0.0
    %739 = vmatprep.subr.mxu0 0.0
    %740 = vmatpush2.xpose.msra.mxu0 0.0
    %741 = vmatprep.subr.mxu0 0.0
    %742 = vmatpush2.xpose.msra.mxu0 0.0
    %743 = vmatprep.subr.mxu0 0.0
    %744 = vmatpush2.xpose.msra.mxu0 0.0
    %745 = vmatprep.subr.mxu0 0.0
    %746 = vmatpush2.xpose.msra.mxu0 0.0
    %747 = vmatprep.subr.mxu0 0.0
    %748 = vmatpush2.xpose.msra.mxu0 0.0
    %749 = vmatprep.subr.mxu0 0.0
    %750 = vmatpush2.xpose.msra.mxu0 0.0
    %751 = vmatprep.subr.mxu0 0.0
    %752 = vmatpush2.xpose.msra.mxu0 0.0
    %753 = vmatprep.subr.mxu0 0.0
    %754 = vmatpush2.xpose.msra.mxu0 0.0
    %755 = vmatprep.mubr.f32.mxu0 0.0
    %756 = vmatmul.mubr.f32.gmra.mxu0 %v687
    %v757 = vpop.f32.mrf.mxu0
    %v758 = vadd.f32 0.0, %v757
    %v759 = vpop.f32.mrf.mxu0
    %760 = vdwg.mxu0
    %v761 = vmul.f32 %v680, 0.35355338
    %v762 = vmul.f32 %v758, 0.35355338
    %v763 = vsel %vm277, %v761, -inf
    %764 = vmax.xlane.f32.xlu0 %v763
    %v765 = vpop.xlane.xlu0 %764
    %v766 = vsel %vm277, %v762, -inf
    %767 = vmax.xlane.f32.xlu0 %v766
    %v768 = vpop.xlane.xlu0 %767
    %v769 = vsub.f32 %v761, %v765
    %v770 = vsub.f32 %v762, %v768
    %v771 = vmul.f32 %v769, 1.442695
    %v772 = vpow.pop %v771
    %v773 = vmul.f32 %v770, 1.442695
    %v774 = vpow.pop %v773
    %v775 = vsel %vm277, %v772, 0.0
    %776 = vadd.xlane.f32.xlu0 %v775
    %v777 = vpop.xlane.xlu0 %776
    %v778 = vsel %vm277, %v774, 0.0
    %779 = vadd.xlane.f32.xlu0 %v778
    %v780 = vpop.xlane.xlu0 %779
    %v781 = vrcp.pop %v777
    %v782 = vmul.f32 %v772, %v781
    %v783 = vrcp.pop %v780
    %v784 = vmul.f32 %v774, %v783
    %785 = vrot.lane.b32.xlu0 %v261, 56
    %v786 = vpop.permute.xlu0 %785
    %v789 = vsel %vm277, %v782, 0
    %791 = vmatprep.subr.mxu0 0.0
    %792 = vmatpush1.msra.mxu0 0.0
    %793 = vmatprep.subr.mxu0 0.0
    %794 = vmatpush1.msra.mxu0 0.0
    %795 = vmatprep.subr.mxu0 0.0
    %796 = vmatpush1.msra.mxu0 0.0
    %797 = vmatprep.subr.mxu0 0.0
    %798 = vmatpush1.msra.mxu0 0.0
    %799 = vmatprep.subr.mxu0 0.0
    %800 = vmatpush1.msra.mxu0 0.0
    %801 = vmatprep.subr.mxu0 0.0
    %802 = vmatpush1.msra.mxu0 0.0
    %803 = vmatprep.subr.mxu0 0.0
    %804 = vmatpush1.msra.mxu0 0.0
    %805 = vmatprep.subr.mxu0 0.0
    %806 = vmatpush1.msra.mxu0 0.0
    %807 = vmatprep.subr.mxu0 0.0
    %808 = vmatpush1.msra.mxu0 0.0
    %809 = vmatprep.subr.mxu0 0.0
    %810 = vmatpush1.msra.mxu0 0.0
    %811 = vmatprep.subr.mxu0 0.0
    %812 = vmatpush1.msra.mxu0 0.0
    %813 = vmatprep.subr.mxu0 0.0
    %814 = vmatpush1.msra.mxu0 0.0
    %815 = vmatprep.subr.mxu0 0.0
    %816 = vmatpush1.msra.mxu0 0.0
    %817 = vmatprep.subr.mxu0 0.0
    %818 = vmatpush1.msra.mxu0 0.0
    %819 = vmatprep.subr.mxu0 0.0
    %820 = vmatpush1.msra.mxu0 0.0
    %821 = vmatprep.subr.mxu0 0.0
    %822 = vmatpush1.msra.mxu0 %v786
    %823 = vmatprep.subr.mxu0 0.0
    %824 = vmatpush2.msra.mxu0 0.0
    %825 = vmatprep.subr.mxu0 0.0
    %826 = vmatpush2.msra.mxu0 0.0
    %827 = vmatprep.subr.mxu0 0.0
    %828 = vmatpush2.msra.mxu0 0.0
    %829 = vmatprep.subr.mxu0 0.0
    %830 = vmatpush2.msra.mxu0 0.0
    %831 = vmatprep.subr.mxu0 0.0
    %832 = vmatpush2.msra.mxu0 0.0
    %833 = vmatprep.subr.mxu0 0.0
    %834 = vmatpush2.msra.mxu0 0.0
    %835 = vmatprep.subr.mxu0 0.0
    %836 = vmatpush2.msra.mxu0 0.0
    %837 = vmatprep.subr.mxu0 0.0
    %838 = vmatpush2.msra.mxu0 0.0
    %839 = vmatprep.subr.mxu0 0.0
    %840 = vmatpush2.msra.mxu0 0.0
    %841 = vmatprep.subr.mxu0 0.0
    %842 = vmatpush2.msra.mxu0 0.0
    %843 = vmatprep.subr.mxu0 0.0
    %844 = vmatpush2.msra.mxu0 0.0
    %845 = vmatprep.subr.mxu0 0.0
    %846 = vmatpush2.msra.mxu0 0.0
    %847 = vmatprep.subr.mxu0 0.0
    %848 = vmatpush2.msra.mxu0 0.0
    %849 = vmatprep.subr.mxu0 0.0
    %850 = vmatpush2.msra.mxu0 0.0
    %851 = vmatprep.subr.mxu0 0.0
    %852 = vmatpush2.msra.mxu0 0.0
    %853 = vmatprep.subr.mxu0 0.0
    %854 = vmatpush2.msra.mxu0 0.0
    %855 = vmatprep.mubr.f32.mxu0 0.0
    %856 = vmatmul.mubr.f32.gmra.mxu0 %v789
    %v857 = vpop.f32.mrf.mxu0
    %v858 = vadd.f32 0.0, %v857
    %v859 = vpop.f32.mrf.mxu0
    %860 = vdwg.mxu0
    %861 = vrot.lane.b32.xlu0 %v266, 56
    %v862 = vpop.permute.xlu0 %861
    %v865 = vsel %vm277, %v784, 0
    %867 = vmatprep.subr.mxu0 0.0
    %868 = vmatpush1.msra.mxu0 0.0
    %869 = vmatprep.subr.mxu0 0.0
    %870 = vmatpush1.msra.mxu0 0.0
    %871 = vmatprep.subr.mxu0 0.0
    %872 = vmatpush1.msra.mxu0 0.0
    %873 = vmatprep.subr.mxu0 0.0
    %874 = vmatpush1.msra.mxu0 0.0
    %875 = vmatprep.subr.mxu0 0.0
    %876 = vmatpush1.msra.mxu0 0.0
    %877 = vmatprep.subr.mxu0 0.0
    %878 = vmatpush1.msra.mxu0 0.0
    %879 = vmatprep.subr.mxu0 0.0
    %880 = vmatpush1.msra.mxu0 0.0
    %881 = vmatprep.subr.mxu0 0.0
    %882 = vmatpush1.msra.mxu0 0.0
    %883 = vmatprep.subr.mxu0 0.0
    %884 = vmatpush1.msra.mxu0 0.0
    %885 = vmatprep.subr.mxu0 0.0
    %886 = vmatpush1.msra.mxu0 0.0
    %887 = vmatprep.subr.mxu0 0.0
    %888 = vmatpush1.msra.mxu0 0.0
    %889 = vmatprep.subr.mxu0 0.0
    %890 = vmatpush1.msra.mxu0 0.0
    %891 = vmatprep.subr.mxu0 0.0
    %892 = vmatpush1.msra.mxu0 0.0
    %893 = vmatprep.subr.mxu0 0.0
    %894 = vmatpush1.msra.mxu0 0.0
    %895 = vmatprep.subr.mxu0 0.0
    %896 = vmatpush1.msra.mxu0 0.0
    %897 = vmatprep.subr.mxu0 0.0
    %898 = vmatpush1.msra.mxu0 %v862
    %899 = vmatprep.subr.mxu0 0.0
    %900 = vmatpush2.msra.mxu0 0.0
    %901 = vmatprep.subr.mxu0 0.0
    %902 = vmatpush2.msra.mxu0 0.0
    %903 = vmatprep.subr.mxu0 0.0
    %904 = vmatpush2.msra.mxu0 0.0
    %905 = vmatprep.subr.mxu0 0.0
    %906 = vmatpush2.msra.mxu0 0.0
    %907 = vmatprep.subr.mxu0 0.0
    %908 = vmatpush2.msra.mxu0 0.0
    %909 = vmatprep.subr.mxu0 0.0
    %910 = vmatpush2.msra.mxu0 0.0
    %911 = vmatprep.subr.mxu0 0.0
    %912 = vmatpush2.msra.mxu0 0.0
    %913 = vmatprep.subr.mxu0 0.0
    %914 = vmatpush2.msra.mxu0 0.0
    %915 = vmatprep.subr.mxu0 0.0
    %916 = vmatpush2.msra.mxu0 0.0
    %917 = vmatprep.subr.mxu0 0.0
    %918 = vmatpush2.msra.mxu0 0.0
    %919 = vmatprep.subr.mxu0 0.0
    %920 = vmatpush2.msra.mxu0 0.0
    %921 = vmatprep.subr.mxu0 0.0
    %922 = vmatpush2.msra.mxu0 0.0
    %923 = vmatprep.subr.mxu0 0.0
    %924 = vmatpush2.msra.mxu0 0.0
    %925 = vmatprep.subr.mxu0 0.0
    %926 = vmatpush2.msra.mxu0 0.0
    %927 = vmatprep.subr.mxu0 0.0
    %928 = vmatpush2.msra.mxu0 0.0
    %929 = vmatprep.subr.mxu0 0.0
    %930 = vmatpush2.msra.mxu0 0.0
    %931 = vmatprep.mubr.f32.mxu0 0.0
    %932 = vmatmul.mubr.f32.gmra.mxu0 %v865
    %v933 = vpop.f32.mrf.mxu0
    %v934 = vadd.f32 0.0, %v933
    %v935 = vpop.f32.mrf.mxu0
    %936 = vdwg.mxu0
    %937 = vrot.lane.b32.xlu0 %v261, 112
    %v938 = vpop.permute.xlu0 %937
    %939 = vrot.lane.b32.xlu0 %v261, 80
    %v940 = vpop.permute.xlu0 %939
    %v941 = vsel %vm277, %v938, 0
    %v943 = vsel %vm277, %v940, 0
    %945 = vmatprep.subr.mxu0 0.0
    %946 = vmatpush1.xpose.msra.mxu0 0.0
    %947 = vmatprep.subr.mxu0 0.0
    %948 = vmatpush1.xpose.msra.mxu0 0.0
    %949 = vmatprep.subr.mxu0 0.0
    %950 = vmatpush1.xpose.msra.mxu0 0.0
    %951 = vmatprep.subr.mxu0 0.0
    %952 = vmatpush1.xpose.msra.mxu0 0.0
    %953 = vmatprep.subr.mxu0 0.0
    %954 = vmatpush1.xpose.msra.mxu0 0.0
    %955 = vmatprep.subr.mxu0 0.0
    %956 = vmatpush1.xpose.msra.mxu0 0.0
    %957 = vmatprep.subr.mxu0 0.0
    %958 = vmatpush1.xpose.msra.mxu0 0.0
    %959 = vmatprep.subr.mxu0 0.0
    %960 = vmatpush1.xpose.msra.mxu0 0.0
    %961 = vmatprep.subr.mxu0 0.0
    %962 = vmatpush1.xpose.msra.mxu0 0.0
    %963 = vmatprep.subr.mxu0 0.0
    %964 = vmatpush1.xpose.msra.mxu0 0.0
    %965 = vmatprep.subr.mxu0 0.0
    %966 = vmatpush1.xpose.msra.mxu0 0.0
    %967 = vmatprep.subr.mxu0 0.0
    %968 = vmatpush1.xpose.msra.mxu0 0.0
    %969 = vmatprep.subr.mxu0 0.0
    %970 = vmatpush1.xpose.msra.mxu0 0.0
    %971 = vmatprep.subr.mxu0 0.0
    %972 = vmatpush1.xpose.msra.mxu0 0.0
    %973 = vmatprep.subr.mxu0 0.0
    %974 = vmatpush1.xpose.msra.mxu0 0.0
    %975 = vmatprep.subr.mxu0 0.0
    %976 = vmatpush1.xpose.msra.mxu0 %v943
    %977 = vmatprep.subr.mxu0 0.0
    %978 = vmatpush2.xpose.msra.mxu0 0.0
    %979 = vmatprep.subr.mxu0 0.0
    %980 = vmatpush2.xpose.msra.mxu0 0.0
    %981 = vmatprep.subr.mxu0 0.0
    %982 = vmatpush2.xpose.msra.mxu0 0.0
    %983 = vmatprep.subr.mxu0 0.0
    %984 = vmatpush2.xpose.msra.mxu0 0.0
    %985 = vmatprep.subr.mxu0 0.0
    %986 = vmatpush2.xpose.msra.mxu0 0.0
    %987 = vmatprep.subr.mxu0 0.0
    %988 = vmatpush2.xpose.msra.mxu0 0.0
    %989 = vmatprep.subr.mxu0 0.0
    %990 = vmatpush2.xpose.msra.mxu0 0.0
    %991 = vmatprep.subr.mxu0 0.0
    %992 = vmatpush2.xpose.msra.mxu0 0.0
    %993 = vmatprep.subr.mxu0 0.0
    %994 = vmatpush2.xpose.msra.mxu0 0.0
    %995 = vmatprep.subr.mxu0 0.0
    %996 = vmatpush2.xpose.msra.mxu0 0.0
    %997 = vmatprep.subr.mxu0 0.0
    %998 = vmatpush2.xpose.msra.mxu0 0.0
    %999 = vmatprep.subr.mxu0 0.0
    %1000 = vmatpush2.xpose.msra.mxu0 0.0
    %1001 = vmatprep.subr.mxu0 0.0
    %1002 = vmatpush2.xpose.msra.mxu0 0.0
    %1003 = vmatprep.subr.mxu0 0.0
    %1004 = vmatpush2.xpose.msra.mxu0 0.0
    %1005 = vmatprep.subr.mxu0 0.0
    %1006 = vmatpush2.xpose.msra.mxu0 0.0
    %1007 = vmatprep.subr.mxu0 0.0
    %1008 = vmatpush2.xpose.msra.mxu0 0.0
    %1009 = vmatprep.mubr.f32.mxu0 0.0
    %1010 = vmatmul.mubr.f32.gmra.mxu0 %v941
    %v1011 = vpop.f32.mrf.mxu0
    %v1012 = vadd.f32 0.0, %v1011
    %v1013 = vpop.f32.mrf.mxu0
    %1014 = vdwg.mxu0
    %1015 = vrot.lane.b32.xlu0 %v266, 112
    %v1016 = vpop.permute.xlu0 %1015
    %1017 = vrot.lane.b32.xlu0 %v266, 80
    %v1018 = vpop.permute.xlu0 %1017
    %v1019 = vsel %vm277, %v1016, 0
    %v1021 = vsel %vm277, %v1018, 0
    %1023 = vmatprep.subr.mxu0 0.0
    %1024 = vmatpush1.xpose.msra.mxu0 0.0
    %1025 = vmatprep.subr.mxu0 0.0
    %1026 = vmatpush1.xpose.msra.mxu0 0.0
    %1027 = vmatprep.subr.mxu0 0.0
    %1028 = vmatpush1.xpose.msra.mxu0 0.0
    %1029 = vmatprep.subr.mxu0 0.0
    %1030 = vmatpush1.xpose.msra.mxu0 0.0
    %1031 = vmatprep.subr.mxu0 0.0
    %1032 = vmatpush1.xpose.msra.mxu0 0.0
    %1033 = vmatprep.subr.mxu0 0.0
    %1034 = vmatpush1.xpose.msra.mxu0 0.0
    %1035 = vmatprep.subr.mxu0 0.0
    %1036 = vmatpush1.xpose.msra.mxu0 0.0
    %1037 = vmatprep.subr.mxu0 0.0
    %1038 = vmatpush1.xpose.msra.mxu0 0.0
    %1039 = vmatprep.subr.mxu0 0.0
    %1040 = vmatpush1.xpose.msra.mxu0 0.0
    %1041 = vmatprep.subr.mxu0 0.0
    %1042 = vmatpush1.xpose.msra.mxu0 0.0
    %1043 = vmatprep.subr.mxu0 0.0
    %1044 = vmatpush1.xpose.msra.mxu0 0.0
    %1045 = vmatprep.subr.mxu0 0.0
    %1046 = vmatpush1.xpose.msra.mxu0 0.0
    %1047 = vmatprep.subr.mxu0 0.0
    %1048 = vmatpush1.xpose.msra.mxu0 0.0
    %1049 = vmatprep.subr.mxu0 0.0
    %1050 = vmatpush1.xpose.msra.mxu0 0.0
    %1051 = vmatprep.subr.mxu0 0.0
    %1052 = vmatpush1.xpose.msra.mxu0 0.0
    %1053 = vmatprep.subr.mxu0 0.0
    %1054 = vmatpush1.xpose.msra.mxu0 %v1021
    %1055 = vmatprep.subr.mxu0 0.0
    %1056 = vmatpush2.xpose.msra.mxu0 0.0
    %1057 = vmatprep.subr.mxu0 0.0
    %1058 = vmatpush2.xpose.msra.mxu0 0.0
    %1059 = vmatprep.subr.mxu0 0.0
    %1060 = vmatpush2.xpose.msra.mxu0 0.0
    %1061 = vmatprep.subr.mxu0 0.0
    %1062 = vmatpush2.xpose.msra.mxu0 0.0
    %1063 = vmatprep.subr.mxu0 0.0
    %1064 = vmatpush2.xpose.msra.mxu0 0.0
    %1065 = vmatprep.subr.mxu0 0.0
    %1066 = vmatpush2.xpose.msra.mxu0 0.0
    %1067 = vmatprep.subr.mxu0 0.0
    %1068 = vmatpush2.xpose.msra.mxu0 0.0
    %1069 = vmatprep.subr.mxu0 0.0
    %1070 = vmatpush2.xpose.msra.mxu0 0.0
    %1071 = vmatprep.subr.mxu0 0.0
    %1072 = vmatpush2.xpose.msra.mxu0 0.0
    %1073 = vmatprep.subr.mxu0 0.0
    %1074 = vmatpush2.xpose.msra.mxu0 0.0
    %1075 = vmatprep.subr.mxu0 0.0
    %1076 = vmatpush2.xpose.msra.mxu0 0.0
    %1077 = vmatprep.subr.mxu0 0.0
    %1078 = vmatpush2.xpose.msra.mxu0 0.0
    %1079 = vmatprep.subr.mxu0 0.0
    %1080 = vmatpush2.xpose.msra.mxu0 0.0
    %1081 = vmatprep.subr.mxu0 0.0
    %1082 = vmatpush2.xpose.msra.mxu0 0.0
    %1083 = vmatprep.subr.mxu0 0.0
    %1084 = vmatpush2.xpose.msra.mxu0 0.0
    %1085 = vmatprep.subr.mxu0 0.0
    %1086 = vmatpush2.xpose.msra.mxu0 0.0
    %1087 = vmatprep.mubr.f32.mxu0 0.0
    %1088 = vmatmul.mubr.f32.gmra.mxu0 %v1019
    %v1089 = vpop.f32.mrf.mxu0
    %v1090 = vadd.f32 0.0, %v1089
    %v1091 = vpop.f32.mrf.mxu0
    %1092 = vdwg.mxu0
    %v1093 = vmul.f32 %v1012, 0.35355338
    %v1094 = vmul.f32 %v1090, 0.35355338
    %v1095 = vsel %vm277, %v1093, -inf
    %1096 = vmax.xlane.f32.xlu0 %v1095
    %v1097 = vpop.xlane.xlu0 %1096
    %v1098 = vsel %vm277, %v1094, -inf
    %1099 = vmax.xlane.f32.xlu0 %v1098
    %v1100 = vpop.xlane.xlu0 %1099
    %v1101 = vsub.f32 %v1093, %v1097
    %v1102 = vsub.f32 %v1094, %v1100
    %v1103 = vmul.f32 %v1101, 1.442695
    %v1104 = vpow.pop %v1103
    %v1105 = vmul.f32 %v1102, 1.442695
    %v1106 = vpow.pop %v1105
    %v1107 = vsel %vm277, %v1104, 0.0
    %1108 = vadd.xlane.f32.xlu0 %v1107
    %v1109 = vpop.xlane.xlu0 %1108
    %v1110 = vsel %vm277, %v1106, 0.0
    %1111 = vadd.xlane.f32.xlu0 %v1110
    %v1112 = vpop.xlane.xlu0 %1111
    %v1113 = vrcp.pop %v1109
    %v1114 = vmul.f32 %v1104, %v1113
    %v1115 = vrcp.pop %v1112
    %v1116 = vmul.f32 %v1106, %v1115
    %1117 = vrot.lane.b32.xlu0 %v261, 48
    %v1118 = vpop.permute.xlu0 %1117
    %v1121 = vsel %vm277, %v1114, 0
    %1123 = vmatprep.subr.mxu0 0.0
    %1124 = vmatpush1.msra.mxu0 0.0
    %1125 = vmatprep.subr.mxu0 0.0
    %1126 = vmatpush1.msra.mxu0 0.0
    %1127 = vmatprep.subr.mxu0 0.0
    %1128 = vmatpush1.msra.mxu0 0.0
    %1129 = vmatprep.subr.mxu0 0.0
    %1130 = vmatpush1.msra.mxu0 0.0
    %1131 = vmatprep.subr.mxu0 0.0
    %1132 = vmatpush1.msra.mxu0 0.0
    %1133 = vmatprep.subr.mxu0 0.0
    %1134 = vmatpush1.msra.mxu0 0.0
    %1135 = vmatprep.subr.mxu0 0.0
    %1136 = vmatpush1.msra.mxu0 0.0
    %1137 = vmatprep.subr.mxu0 0.0
    %1138 = vmatpush1.msra.mxu0 0.0
    %1139 = vmatprep.subr.mxu0 0.0
    %1140 = vmatpush1.msra.mxu0 0.0
    %1141 = vmatprep.subr.mxu0 0.0
    %1142 = vmatpush1.msra.mxu0 0.0
    %1143 = vmatprep.subr.mxu0 0.0
    %1144 = vmatpush1.msra.mxu0 0.0
    %1145 = vmatprep.subr.mxu0 0.0
    %1146 = vmatpush1.msra.mxu0 0.0
    %1147 = vmatprep.subr.mxu0 0.0
    %1148 = vmatpush1.msra.mxu0 0.0
    %1149 = vmatprep.subr.mxu0 0.0
    %1150 = vmatpush1.msra.mxu0 0.0
    %1151 = vmatprep.subr.mxu0 0.0
    %1152 = vmatpush1.msra.mxu0 0.0
    %1153 = vmatprep.subr.mxu0 0.0
    %1154 = vmatpush1.msra.mxu0 %v1118
    %1155 = vmatprep.subr.mxu0 0.0
    %1156 = vmatpush2.msra.mxu0 0.0
    %1157 = vmatprep.subr.mxu0 0.0
    %1158 = vmatpush2.msra.mxu0 0.0
    %1159 = vmatprep.subr.mxu0 0.0
    %1160 = vmatpush2.msra.mxu0 0.0
    %1161 = vmatprep.subr.mxu0 0.0
    %1162 = vmatpush2.msra.mxu0 0.0
    %1163 = vmatprep.subr.mxu0 0.0
    %1164 = vmatpush2.msra.mxu0 0.0
    %1165 = vmatprep.subr.mxu0 0.0
    %1166 = vmatpush2.msra.mxu0 0.0
    %1167 = vmatprep.subr.mxu0 0.0
    %1168 = vmatpush2.msra.mxu0 0.0
    %1169 = vmatprep.subr.mxu0 0.0
    %1170 = vmatpush2.msra.mxu0 0.0
    %1171 = vmatprep.subr.mxu0 0.0
    %1172 = vmatpush2.msra.mxu0 0.0
    %1173 = vmatprep.subr.mxu0 0.0
    %1174 = vmatpush2.msra.mxu0 0.0
    %1175 = vmatprep.subr.mxu0 0.0
    %1176 = vmatpush2.msra.mxu0 0.0
    %1177 = vmatprep.subr.mxu0 0.0
    %1178 = vmatpush2.msra.mxu0 0.0
    %1179 = vmatprep.subr.mxu0 0.0
    %1180 = vmatpush2.msra.mxu0 0.0
    %1181 = vmatprep.subr.mxu0 0.0
    %1182 = vmatpush2.msra.mxu0 0.0
    %1183 = vmatprep.subr.mxu0 0.0
    %1184 = vmatpush2.msra.mxu0 0.0
    %1185 = vmatprep.subr.mxu0 0.0
    %1186 = vmatpush2.msra.mxu0 0.0
    %1187 = vmatprep.mubr.f32.mxu0 0.0
    %1188 = vmatmul.mubr.f32.gmra.mxu0 %v1121
    %v1189 = vpop.f32.mrf.mxu0
    %v1190 = vadd.f32 0.0, %v1189
    %v1191 = vpop.f32.mrf.mxu0
    %1192 = vdwg.mxu0
    %1193 = vrot.lane.b32.xlu0 %v266, 48
    %v1194 = vpop.permute.xlu0 %1193
    %v1197 = vsel %vm277, %v1116, 0
    %1199 = vmatprep.subr.mxu0 0.0
    %1200 = vmatpush1.msra.mxu0 0.0
    %1201 = vmatprep.subr.mxu0 0.0
    %1202 = vmatpush1.msra.mxu0 0.0
    %1203 = vmatprep.subr.mxu0 0.0
    %1204 = vmatpush1.msra.mxu0 0.0
    %1205 = vmatprep.subr.mxu0 0.0
    %1206 = vmatpush1.msra.mxu0 0.0
    %1207 = vmatprep.subr.mxu0 0.0
    %1208 = vmatpush1.msra.mxu0 0.0
    %1209 = vmatprep.subr.mxu0 0.0
    %1210 = vmatpush1.msra.mxu0 0.0
    %1211 = vmatprep.subr.mxu0 0.0
    %1212 = vmatpush1.msra.mxu0 0.0
    %1213 = vmatprep.subr.mxu0 0.0
    %1214 = vmatpush1.msra.mxu0 0.0
    %1215 = vmatprep.subr.mxu0 0.0
    %1216 = vmatpush1.msra.mxu0 0.0
    %1217 = vmatprep.subr.mxu0 0.0
    %1218 = vmatpush1.msra.mxu0 0.0
    %1219 = vmatprep.subr.mxu0 0.0
    %1220 = vmatpush1.msra.mxu0 0.0
    %1221 = vmatprep.subr.mxu0 0.0
    %1222 = vmatpush1.msra.mxu0 0.0
    %1223 = vmatprep.subr.mxu0 0.0
    %1224 = vmatpush1.msra.mxu0 0.0
    %1225 = vmatprep.subr.mxu0 0.0
    %1226 = vmatpush1.msra.mxu0 0.0
    %1227 = vmatprep.subr.mxu0 0.0
    %1228 = vmatpush1.msra.mxu0 0.0
    %1229 = vmatprep.subr.mxu0 0.0
    %1230 = vmatpush1.msra.mxu0 %v1194
    %1231 = vmatprep.subr.mxu0 0.0
    %1232 = vmatpush2.msra.mxu0 0.0
    %1233 = vmatprep.subr.mxu0 0.0
    %1234 = vmatpush2.msra.mxu0 0.0
    %1235 = vmatprep.subr.mxu0 0.0
    %1236 = vmatpush2.msra.mxu0 0.0
    %1237 = vmatprep.subr.mxu0 0.0
    %1238 = vmatpush2.msra.mxu0 0.0
    %1239 = vmatprep.subr.mxu0 0.0
    %1240 = vmatpush2.msra.mxu0 0.0
    %1241 = vmatprep.subr.mxu0 0.0
    %1242 = vmatpush2.msra.mxu0 0.0
    %1243 = vmatprep.subr.mxu0 0.0
    %1244 = vmatpush2.msra.mxu0 0.0
    %1245 = vmatprep.subr.mxu0 0.0
    %1246 = vmatpush2.msra.mxu0 0.0
    %1247 = vmatprep.subr.mxu0 0.0
    %1248 = vmatpush2.msra.mxu0 0.0
    %1249 = vmatprep.subr.mxu0 0.0
    %1250 = vmatpush2.msra.mxu0 0.0
    %1251 = vmatprep.subr.mxu0 0.0
    %1252 = vmatpush2.msra.mxu0 0.0
    %1253 = vmatprep.subr.mxu0 0.0
    %1254 = vmatpush2.msra.mxu0 0.0
    %1255 = vmatprep.subr.mxu0 0.0
    %1256 = vmatpush2.msra.mxu0 0.0
    %1257 = vmatprep.subr.mxu0 0.0
    %1258 = vmatpush2.msra.mxu0 0.0
    %1259 = vmatprep.subr.mxu0 0.0
    %1260 = vmatpush2.msra.mxu0 0.0
    %1261 = vmatprep.subr.mxu0 0.0
    %1262 = vmatpush2.msra.mxu0 0.0
    %1263 = vmatprep.mubr.f32.mxu0 0.0
    %1264 = vmatmul.mubr.f32.gmra.mxu0 %v1197
    %v1265 = vpop.f32.mrf.mxu0
    %v1266 = vadd.f32 0.0, %v1265
    %v1267 = vpop.f32.mrf.mxu0
    %1268 = vdwg.mxu0
    %1269 = vrot.lane.b32.xlu0 %v261, 104
    %v1270 = vpop.permute.xlu0 %1269
    %1271 = vrot.lane.b32.xlu0 %v261, 72
    %v1272 = vpop.permute.xlu0 %1271
    %v1273 = vsel %vm277, %v1270, 0
    %v1275 = vsel %vm277, %v1272, 0
    %1277 = vmatprep.subr.mxu0 0.0
    %1278 = vmatpush1.xpose.msra.mxu0 0.0
    %1279 = vmatprep.subr.mxu0 0.0
    %1280 = vmatpush1.xpose.msra.mxu0 0.0
    %1281 = vmatprep.subr.mxu0 0.0
    %1282 = vmatpush1.xpose.msra.mxu0 0.0
    %1283 = vmatprep.subr.mxu0 0.0
    %1284 = vmatpush1.xpose.msra.mxu0 0.0
    %1285 = vmatprep.subr.mxu0 0.0
    %1286 = vmatpush1.xpose.msra.mxu0 0.0
    %1287 = vmatprep.subr.mxu0 0.0
    %1288 = vmatpush1.xpose.msra.mxu0 0.0
    %1289 = vmatprep.subr.mxu0 0.0
    %1290 = vmatpush1.xpose.msra.mxu0 0.0
    %1291 = vmatprep.subr.mxu0 0.0
    %1292 = vmatpush1.xpose.msra.mxu0 0.0
    %1293 = vmatprep.subr.mxu0 0.0
    %1294 = vmatpush1.xpose.msra.mxu0 0.0
    %1295 = vmatprep.subr.mxu0 0.0
    %1296 = vmatpush1.xpose.msra.mxu0 0.0
    %1297 = vmatprep.subr.mxu0 0.0
    %1298 = vmatpush1.xpose.msra.mxu0 0.0
    %1299 = vmatprep.subr.mxu0 0.0
    %1300 = vmatpush1.xpose.msra.mxu0 0.0
    %1301 = vmatprep.subr.mxu0 0.0
    %1302 = vmatpush1.xpose.msra.mxu0 0.0
    %1303 = vmatprep.subr.mxu0 0.0
    %1304 = vmatpush1.xpose.msra.mxu0 0.0
    %1305 = vmatprep.subr.mxu0 0.0
    %1306 = vmatpush1.xpose.msra.mxu0 0.0
    %1307 = vmatprep.subr.mxu0 0.0
    %1308 = vmatpush1.xpose.msra.mxu0 %v1275
    %1309 = vmatprep.subr.mxu0 0.0
    %1310 = vmatpush2.xpose.msra.mxu0 0.0
    %1311 = vmatprep.subr.mxu0 0.0
    %1312 = vmatpush2.xpose.msra.mxu0 0.0
    %1313 = vmatprep.subr.mxu0 0.0
    %1314 = vmatpush2.xpose.msra.mxu0 0.0
    %1315 = vmatprep.subr.mxu0 0.0
    %1316 = vmatpush2.xpose.msra.mxu0 0.0
    %1317 = vmatprep.subr.mxu0 0.0
    %1318 = vmatpush2.xpose.msra.mxu0 0.0
    %1319 = vmatprep.subr.mxu0 0.0
    %1320 = vmatpush2.xpose.msra.mxu0 0.0
    %1321 = vmatprep.subr.mxu0 0.0
    %1322 = vmatpush2.xpose.msra.mxu0 0.0
    %1323 = vmatprep.subr.mxu0 0.0
    %1324 = vmatpush2.xpose.msra.mxu0 0.0
    %1325 = vmatprep.subr.mxu0 0.0
    %1326 = vmatpush2.xpose.msra.mxu0 0.0
    %1327 = vmatprep.subr.mxu0 0.0
    %1328 = vmatpush2.xpose.msra.mxu0 0.0
    %1329 = vmatprep.subr.mxu0 0.0
    %1330 = vmatpush2.xpose.msra.mxu0 0.0
    %1331 = vmatprep.subr.mxu0 0.0
    %1332 = vmatpush2.xpose.msra.mxu0 0.0
    %1333 = vmatprep.subr.mxu0 0.0
    %1334 = vmatpush2.xpose.msra.mxu0 0.0
    %1335 = vmatprep.subr.mxu0 0.0
    %1336 = vmatpush2.xpose.msra.mxu0 0.0
    %1337 = vmatprep.subr.mxu0 0.0
    %1338 = vmatpush2.xpose.msra.mxu0 0.0
    %1339 = vmatprep.subr.mxu0 0.0
    %1340 = vmatpush2.xpose.msra.mxu0 0.0
    %1341 = vmatprep.mubr.f32.mxu0 0.0
    %1342 = vmatmul.mubr.f32.gmra.mxu0 %v1273
    %v1343 = vpop.f32.mrf.mxu0
    %v1344 = vadd.f32 0.0, %v1343
    %v1345 = vpop.f32.mrf.mxu0
    %1346 = vdwg.mxu0
    %1347 = vrot.lane.b32.xlu0 %v266, 104
    %v1348 = vpop.permute.xlu0 %1347
    %1349 = vrot.lane.b32.xlu0 %v266, 72
    %v1350 = vpop.permute.xlu0 %1349
    %v1351 = vsel %vm277, %v1348, 0
    %v1353 = vsel %vm277, %v1350, 0
    %1355 = vmatprep.subr.mxu0 0.0
    %1356 = vmatpush1.xpose.msra.mxu0 0.0
    %1357 = vmatprep.subr.mxu0 0.0
    %1358 = vmatpush1.xpose.msra.mxu0 0.0
    %1359 = vmatprep.subr.mxu0 0.0
    %1360 = vmatpush1.xpose.msra.mxu0 0.0
    %1361 = vmatprep.subr.mxu0 0.0
    %1362 = vmatpush1.xpose.msra.mxu0 0.0
    %1363 = vmatprep.subr.mxu0 0.0
    %1364 = vmatpush1.xpose.msra.mxu0 0.0
    %1365 = vmatprep.subr.mxu0 0.0
    %1366 = vmatpush1.xpose.msra.mxu0 0.0
    %1367 = vmatprep.subr.mxu0 0.0
    %1368 = vmatpush1.xpose.msra.mxu0 0.0
    %1369 = vmatprep.subr.mxu0 0.0
    %1370 = vmatpush1.xpose.msra.mxu0 0.0
    %1371 = vmatprep.subr.mxu0 0.0
    %1372 = vmatpush1.xpose.msra.mxu0 0.0
    %1373 = vmatprep.subr.mxu0 0.0
    %1374 = vmatpush1.xpose.msra.mxu0 0.0
    %1375 = vmatprep.subr.mxu0 0.0
    %1376 = vmatpush1.xpose.msra.mxu0 0.0
    %1377 = vmatprep.subr.mxu0 0.0
    %1378 = vmatpush1.xpose.msra.mxu0 0.0
    %1379 = vmatprep.subr.mxu0 0.0
    %1380 = vmatpush1.xpose.msra.mxu0 0.0
    %1381 = vmatprep.subr.mxu0 0.0
    %1382 = vmatpush1.xpose.msra.mxu0 0.0
    %1383 = vmatprep.subr.mxu0 0.0
    %1384 = vmatpush1.xpose.msra.mxu0 0.0
    %1385 = vmatprep.subr.mxu0 0.0
    %1386 = vmatpush1.xpose.msra.mxu0 %v1353
    %1387 = vmatprep.subr.mxu0 0.0
    %1388 = vmatpush2.xpose.msra.mxu0 0.0
    %1389 = vmatprep.subr.mxu0 0.0
    %1390 = vmatpush2.xpose.msra.mxu0 0.0
    %1391 = vmatprep.subr.mxu0 0.0
    %1392 = vmatpush2.xpose.msra.mxu0 0.0
    %1393 = vmatprep.subr.mxu0 0.0
    %1394 = vmatpush2.xpose.msra.mxu0 0.0
    %1395 = vmatprep.subr.mxu0 0.0
    %1396 = vmatpush2.xpose.msra.mxu0 0.0
    %1397 = vmatprep.subr.mxu0 0.0
    %1398 = vmatpush2.xpose.msra.mxu0 0.0
    %1399 = vmatprep.subr.mxu0 0.0
    %1400 = vmatpush2.xpose.msra.mxu0 0.0
    %1401 = vmatprep.subr.mxu0 0.0
    %1402 = vmatpush2.xpose.msra.mxu0 0.0
    %1403 = vmatprep.subr.mxu0 0.0
    %1404 = vmatpush2.xpose.msra.mxu0 0.0
    %1405 = vmatprep.subr.mxu0 0.0
    %1406 = vmatpush2.xpose.msra.mxu0 0.0
    %1407 = vmatprep.subr.mxu0 0.0
    %1408 = vmatpush2.xpose.msra.mxu0 0.0
    %1409 = vmatprep.subr.mxu0 0.0
    %1410 = vmatpush2.xpose.msra.mxu0 0.0
    %1411 = vmatprep.subr.mxu0 0.0
    %1412 = vmatpush2.xpose.msra.mxu0 0.0
    %1413 = vmatprep.subr.mxu0 0.0
    %1414 = vmatpush2.xpose.msra.mxu0 0.0
    %1415 = vmatprep.subr.mxu0 0.0
    %1416 = vmatpush2.xpose.msra.mxu0 0.0
    %1417 = vmatprep.subr.mxu0 0.0
    %1418 = vmatpush2.xpose.msra.mxu0 0.0
    %1419 = vmatprep.mubr.f32.mxu0 0.0
    %1420 = vmatmul.mubr.f32.gmra.mxu0 %v1351
    %v1421 = vpop.f32.mrf.mxu0
    %v1422 = vadd.f32 0.0, %v1421
    %v1423 = vpop.f32.mrf.mxu0
    %1424 = vdwg.mxu0
    %v1425 = vmul.f32 %v1344, 0.35355338
    %v1426 = vmul.f32 %v1422, 0.35355338
    %v1427 = vsel %vm277, %v1425, -inf
    %1428 = vmax.xlane.f32.xlu0 %v1427
    %v1429 = vpop.xlane.xlu0 %1428
    %v1430 = vsel %vm277, %v1426, -inf
    %1431 = vmax.xlane.f32.xlu0 %v1430
    %v1432 = vpop.xlane.xlu0 %1431
    %v1433 = vsub.f32 %v1425, %v1429
    %v1434 = vsub.f32 %v1426, %v1432
    %v1435 = vmul.f32 %v1433, 1.442695
    %v1436 = vpow.pop %v1435
    %v1437 = vmul.f32 %v1434, 1.442695
    %v1438 = vpow.pop %v1437
    %v1439 = vsel %vm277, %v1436, 0.0
    %1440 = vadd.xlane.f32.xlu0 %v1439
    %v1441 = vpop.xlane.xlu0 %1440
    %v1442 = vsel %vm277, %v1438, 0.0
    %1443 = vadd.xlane.f32.xlu0 %v1442
    %v1444 = vpop.xlane.xlu0 %1443
    %v1445 = vrcp.pop %v1441
    %v1446 = vmul.f32 %v1436, %v1445
    %v1447 = vrcp.pop %v1444
    %v1448 = vmul.f32 %v1438, %v1447
    %1449 = vrot.lane.b32.xlu0 %v261, 40
    %v1450 = vpop.permute.xlu0 %1449
    %v1453 = vsel %vm277, %v1446, 0
    %1455 = vmatprep.subr.mxu0 0.0
    %1456 = vmatpush1.msra.mxu0 0.0
    %1457 = vmatprep.subr.mxu0 0.0
    %1458 = vmatpush1.msra.mxu0 0.0
    %1459 = vmatprep.subr.mxu0 0.0
    %1460 = vmatpush1.msra.mxu0 0.0
    %1461 = vmatprep.subr.mxu0 0.0
    %1462 = vmatpush1.msra.mxu0 0.0
    %1463 = vmatprep.subr.mxu0 0.0
    %1464 = vmatpush1.msra.mxu0 0.0
    %1465 = vmatprep.subr.mxu0 0.0
    %1466 = vmatpush1.msra.mxu0 0.0
    %1467 = vmatprep.subr.mxu0 0.0
    %1468 = vmatpush1.msra.mxu0 0.0
    %1469 = vmatprep.subr.mxu0 0.0
    %1470 = vmatpush1.msra.mxu0 0.0
    %1471 = vmatprep.subr.mxu0 0.0
    %1472 = vmatpush1.msra.mxu0 0.0
    %1473 = vmatprep.subr.mxu0 0.0
    %1474 = vmatpush1.msra.mxu0 0.0
    %1475 = vmatprep.subr.mxu0 0.0
    %1476 = vmatpush1.msra.mxu0 0.0
    %1477 = vmatprep.subr.mxu0 0.0
    %1478 = vmatpush1.msra.mxu0 0.0
    %1479 = vmatprep.subr.mxu0 0.0
    %1480 = vmatpush1.msra.mxu0 0.0
    %1481 = vmatprep.subr.mxu0 0.0
    %1482 = vmatpush1.msra.mxu0 0.0
    %1483 = vmatprep.subr.mxu0 0.0
    %1484 = vmatpush1.msra.mxu0 0.0
    %1485 = vmatprep.subr.mxu0 0.0
    %1486 = vmatpush1.msra.mxu0 %v1450
    %1487 = vmatprep.subr.mxu0 0.0
    %1488 = vmatpush2.msra.mxu0 0.0
    %1489 = vmatprep.subr.mxu0 0.0
    %1490 = vmatpush2.msra.mxu0 0.0
    %1491 = vmatprep.subr.mxu0 0.0
    %1492 = vmatpush2.msra.mxu0 0.0
    %1493 = vmatprep.subr.mxu0 0.0
    %1494 = vmatpush2.msra.mxu0 0.0
    %1495 = vmatprep.subr.mxu0 0.0
    %1496 = vmatpush2.msra.mxu0 0.0
    %1497 = vmatprep.subr.mxu0 0.0
    %1498 = vmatpush2.msra.mxu0 0.0
    %1499 = vmatprep.subr.mxu0 0.0
    %1500 = vmatpush2.msra.mxu0 0.0
    %1501 = vmatprep.subr.mxu0 0.0
    %1502 = vmatpush2.msra.mxu0 0.0
    %1503 = vmatprep.subr.mxu0 0.0
    %1504 = vmatpush2.msra.mxu0 0.0
    %1505 = vmatprep.subr.mxu0 0.0
    %1506 = vmatpush2.msra.mxu0 0.0
    %1507 = vmatprep.subr.mxu0 0.0
    %1508 = vmatpush2.msra.mxu0 0.0
    %1509 = vmatprep.subr.mxu0 0.0
    %1510 = vmatpush2.msra.mxu0 0.0
    %1511 = vmatprep.subr.mxu0 0.0
    %1512 = vmatpush2.msra.mxu0 0.0
    %1513 = vmatprep.subr.mxu0 0.0
    %1514 = vmatpush2.msra.mxu0 0.0
    %1515 = vmatprep.subr.mxu0 0.0
    %1516 = vmatpush2.msra.mxu0 0.0
    %1517 = vmatprep.subr.mxu0 0.0
    %1518 = vmatpush2.msra.mxu0 0.0
    %1519 = vmatprep.mubr.f32.mxu0 0.0
    %1520 = vmatmul.mubr.f32.gmra.mxu0 %v1453
    %v1521 = vpop.f32.mrf.mxu0
    %v1522 = vadd.f32 0.0, %v1521
    %v1523 = vpop.f32.mrf.mxu0
    %1524 = vdwg.mxu0
    %1525 = vrot.lane.b32.xlu0 %v266, 40
    %v1526 = vpop.permute.xlu0 %1525
    %v1529 = vsel %vm277, %v1448, 0
    %1531 = vmatprep.subr.mxu0 0.0
    %1532 = vmatpush1.msra.mxu0 0.0
    %1533 = vmatprep.subr.mxu0 0.0
    %1534 = vmatpush1.msra.mxu0 0.0
    %1535 = vmatprep.subr.mxu0 0.0
    %1536 = vmatpush1.msra.mxu0 0.0
    %1537 = vmatprep.subr.mxu0 0.0
    %1538 = vmatpush1.msra.mxu0 0.0
    %1539 = vmatprep.subr.mxu0 0.0
    %1540 = vmatpush1.msra.mxu0 0.0
    %1541 = vmatprep.subr.mxu0 0.0
    %1542 = vmatpush1.msra.mxu0 0.0
    %1543 = vmatprep.subr.mxu0 0.0
    %1544 = vmatpush1.msra.mxu0 0.0
    %1545 = vmatprep.subr.mxu0 0.0
    %1546 = vmatpush1.msra.mxu0 0.0
    %1547 = vmatprep.subr.mxu0 0.0
    %1548 = vmatpush1.msra.mxu0 0.0
    %1549 = vmatprep.subr.mxu0 0.0
    %1550 = vmatpush1.msra.mxu0 0.0
    %1551 = vmatprep.subr.mxu0 0.0
    %1552 = vmatpush1.msra.mxu0 0.0
    %1553 = vmatprep.subr.mxu0 0.0
    %1554 = vmatpush1.msra.mxu0 0.0
    %1555 = vmatprep.subr.mxu0 0.0
    %1556 = vmatpush1.msra.mxu0 0.0
    %1557 = vmatprep.subr.mxu0 0.0
    %1558 = vmatpush1.msra.mxu0 0.0
    %1559 = vmatprep.subr.mxu0 0.0
    %1560 = vmatpush1.msra.mxu0 0.0
    %1561 = vmatprep.subr.mxu0 0.0
    %1562 = vmatpush1.msra.mxu0 %v1526
    %1563 = vmatprep.subr.mxu0 0.0
    %1564 = vmatpush2.msra.mxu0 0.0
    %1565 = vmatprep.subr.mxu0 0.0
    %1566 = vmatpush2.msra.mxu0 0.0
    %1567 = vmatprep.subr.mxu0 0.0
    %1568 = vmatpush2.msra.mxu0 0.0
    %1569 = vmatprep.subr.mxu0 0.0
    %1570 = vmatpush2.msra.mxu0 0.0
    %1571 = vmatprep.subr.mxu0 0.0
    %1572 = vmatpush2.msra.mxu0 0.0
    %1573 = vmatprep.subr.mxu0 0.0
    %1574 = vmatpush2.msra.mxu0 0.0
    %1575 = vmatprep.subr.mxu0 0.0
    %1576 = vmatpush2.msra.mxu0 0.0
    %1577 = vmatprep.subr.mxu0 0.0
    %1578 = vmatpush2.msra.mxu0 0.0
    %1579 = vmatprep.subr.mxu0 0.0
    %1580 = vmatpush2.msra.mxu0 0.0
    %1581 = vmatprep.subr.mxu0 0.0
    %1582 = vmatpush2.msra.mxu0 0.0
    %1583 = vmatprep.subr.mxu0 0.0
    %1584 = vmatpush2.msra.mxu0 0.0
    %1585 = vmatprep.subr.mxu0 0.0
    %1586 = vmatpush2.msra.mxu0 0.0
    %1587 = vmatprep.subr.mxu0 0.0
    %1588 = vmatpush2.msra.mxu0 0.0
    %1589 = vmatprep.subr.mxu0 0.0
    %1590 = vmatpush2.msra.mxu0 0.0
    %1591 = vmatprep.subr.mxu0 0.0
    %1592 = vmatpush2.msra.mxu0 0.0
    %1593 = vmatprep.subr.mxu0 0.0
    %1594 = vmatpush2.msra.mxu0 0.0
    %1595 = vmatprep.mubr.f32.mxu0 0.0
    %1596 = vmatmul.mubr.f32.gmra.mxu0 %v1529
    %v1597 = vpop.f32.mrf.mxu0
    %v1598 = vadd.f32 0.0, %v1597
    %v1599 = vpop.f32.mrf.mxu0
    %1600 = vdwg.mxu0
    %1603 = vrot.lane.b32.xlu0 %v858, 8
    %v1604 = vpop.permute.xlu0 %1603
    %1605 = vrot.lane.b32.xlu0 %v934, 8
    %v1606 = vpop.permute.xlu0 %1605
    %1611 = vrot.lane.b32.xlu0 %v1190, 16
    %v1612 = vpop.permute.xlu0 %1611
    %1613 = vrot.lane.b32.xlu0 %v1266, 16
    %v1614 = vpop.permute.xlu0 %1613
    %1619 = vrot.lane.b32.xlu0 %v1522, 24
    %v1620 = vpop.permute.xlu0 %1619
    %1621 = vrot.lane.b32.xlu0 %v1598, 24
    %v1622 = vpop.permute.xlu0 %1621
    %v1625 = vsel %vm277, %v526, %v1604
    %v1626 = vsel %vm277, %v602, %v1606
    %vm1627 = vcmask 130048
    %v1628 = vsel %vm1627, %v1625, %v1612
    %v1629 = vsel %vm1627, %v1626, %v1614
    %vm1630 = vcmask 195584
    %v1631 = vsel %vm1630, %v1628, %v1620
    %v1632 = vsel %vm1630, %v1629, %v1622
    %v1634 = vlaneseq
    %v1635 = vshrl.u32 %v1634, 7
    %v1636 = vsub.s32 0, %v1635
    %v1637 = vrot.slane %v273, %v1636
    %v1640 = vsel %vm133, %v1631, 0
    %v1643 = vsel %vm133, %v1632, 0
    %1645 = vmatprep.subr.mxu0 0.0
    %1646 = vmatpush1.msra.mxu0 0.0
    %1647 = vmatprep.subr.mxu0 0.0
    %1648 = vmatpush1.msra.mxu0 0.0
    %1649 = vmatprep.subr.mxu0 0.0
    %1650 = vmatpush1.msra.mxu0 0.0
    %1651 = vmatprep.subr.mxu0 0.0
    %1652 = vmatpush1.msra.mxu0 0.0
    %1653 = vmatprep.subr.mxu0 0.0
    %1654 = vmatpush1.msra.mxu0 0.0
    %1655 = vmatprep.subr.mxu0 0.0
    %1656 = vmatpush1.msra.mxu0 0.0
    %1657 = vmatprep.subr.mxu0 0.0
    %1658 = vmatpush1.msra.mxu0 0.0
    %1659 = vmatprep.subr.mxu0 0.0
    %1660 = vmatpush1.msra.mxu0 0.0
    %1661 = vmatprep.subr.mxu0 0.0
    %1662 = vmatpush1.msra.mxu0 0.0
    %1663 = vmatprep.subr.mxu0 0.0
    %1664 = vmatpush1.msra.mxu0 0.0
    %1665 = vmatprep.subr.mxu0 0.0
    %1666 = vmatpush1.msra.mxu0 0.0
    %1667 = vmatprep.subr.mxu0 0.0
    %1668 = vmatpush1.msra.mxu0 0.0
    %1669 = vmatprep.subr.mxu0 0.0
    %1670 = vmatpush1.msra.mxu0 %v272
    %1671 = vmatprep.subr.mxu0 0.0
    %1672 = vmatpush1.msra.mxu0 %v271
    %1673 = vmatprep.subr.mxu0 0.0
    %1674 = vmatpush1.msra.mxu0 %v270
    %1675 = vmatprep.subr.mxu0 0.0
    %1676 = vmatpush1.msra.mxu0 %v269
    %1677 = vmatprep.subr.mxu0 0.0
    %1678 = vmatpush2.msra.mxu0 0.0
    %1679 = vmatprep.subr.mxu0 0.0
    %1680 = vmatpush2.msra.mxu0 0.0
    %1681 = vmatprep.subr.mxu0 0.0
    %1682 = vmatpush2.msra.mxu0 0.0
    %1683 = vmatprep.subr.mxu0 0.0
    %1684 = vmatpush2.msra.mxu0 0.0
    %1685 = vmatprep.subr.mxu0 0.0
    %1686 = vmatpush2.msra.mxu0 0.0
    %1687 = vmatprep.subr.mxu0 0.0
    %1688 = vmatpush2.msra.mxu0 0.0
    %1689 = vmatprep.subr.mxu0 0.0
    %1690 = vmatpush2.msra.mxu0 0.0
    %1691 = vmatprep.subr.mxu0 0.0
    %1692 = vmatpush2.msra.mxu0 0.0
    %1693 = vmatprep.subr.mxu0 0.0
    %1694 = vmatpush2.msra.mxu0 0.0
    %1695 = vmatprep.subr.mxu0 0.0
    %1696 = vmatpush2.msra.mxu0 0.0
    %1697 = vmatprep.subr.mxu0 0.0
    %1698 = vmatpush2.msra.mxu0 0.0
    %1699 = vmatprep.subr.mxu0 0.0
    %1700 = vmatpush2.msra.mxu0 0.0
    %1701 = vmatprep.subr.mxu0 0.0
    %1702 = vmatpush2.msra.mxu0 0.0
    %1703 = vmatprep.subr.mxu0 0.0
    %1704 = vmatpush2.msra.mxu0 0.0
    %1705 = vmatprep.subr.mxu0 0.0
    %1706 = vmatpush2.msra.mxu0 0.0
    %1707 = vmatprep.subr.mxu0 0.0
    %1708 = vmatpush2.msra.mxu0 0.0
    %1709 = vmatprep.mubr.f32.mxu0 0.0
    %1710 = vmatmul.mubr.f32.gmra.mxu0 %v1640
    %v1711 = vpop.f32.mrf.mxu0
    %v1712 = vadd.f32 %v1637, %v1711
    %v1713 = vpop.f32.mrf.mxu0
    %1714 = vmatprep.mubr.f32.mxu0 0.0
    %1715 = vmatmul.mubr.f32.gmra.mxu0 %v1643
    %v1716 = vpop.f32.mrf.mxu0
    %v1717 = vadd.f32 %v1637, %v1716
    %v1718 = vpop.f32.mrf.mxu0
    %1719 = vdwg.mxu0
    %v1720 = vadd.f32 %v127, %v1712
    %v1721 = vadd.f32 %v128, %v1717
    %v1722 = vld [vmem:[%s8] sm:$0x1]
    %v1723 = vld [vmem:[%s9] sm:$0x1]
    %v1724 = vsel %vm133, %v1720, 0.0
    %1725 = vadd.xlane.f32.xlu0 %v1724
    %v1726 = vpop.xlane.xlu0 %1725
    %v1727 = vsel %vm133, %v1721, 0.0
    %1728 = vadd.xlane.f32.xlu0 %v1727
    %v1729 = vpop.xlane.xlu0 %1728
    %v1730 = vmul.f32 %v1726, %v140
    %v1731 = vmul.f32 %v1729, %v140
    %v1732 = vsub.f32 %v1720, %v1730
    %v1733 = vsub.f32 %v1721, %v1731
    %v1734 = vmul.f32 %v1732, %v1732
    %v1735 = vmul.f32 %v1733, %v1733
    %v1736 = vsel %vm133, %v1734, 0.0
    %1737 = vadd.xlane.f32.xlu0 %v1736
    %v1738 = vpop.xlane.xlu0 %1737
    %v1739 = vsel %vm133, %v1735, 0.0
    %1740 = vadd.xlane.f32.xlu0 %v1739
    %v1741 = vpop.xlane.xlu0 %1740
    %v1742 = vmul.f32 %v1738, %v140
    %v1743 = vmul.f32 %v1741, %v140
    %v1744 = vadd.f32 %v1742, 1e-05
    %v1745 = vadd.f32 %v1743, 1e-05
    %v1746 = vrsqrt.pop %v1744
    %v1747 = vrsqrt.pop %v1745
    %v1748 = vmul.f32 %v1732, %v1746
    %v1749 = vmul.f32 %v1733, %v1747
    %v1751 = vlaneseq
    %v1752 = vshrl.u32 %v1751, 7
    %v1753 = vsub.s32 0, %v1752
    %v1754 = vrot.slane %v1722, %v1753
    %v1756 = vmul.f32 %v1748, %v1754
    %v1757 = vmul.f32 %v1749, %v1754
    %v1759 = vlaneseq
    %v1760 = vshrl.u32 %v1759, 7
    %v1761 = vsub.s32 0, %v1760
    %v1762 = vrot.slane %v1723, %v1761
    %v1764 = vadd.f32 %v1756, %v1762
    %v1765 = vadd.f32 %v1757, %v1762
    %v1766 = vld [vmem:[%s10] sm:$0xff]
    %v1767 = vld [vmem:[%s10 + $0x8] sm:$0xff]
    %v1768 = vld [vmem:[%s10 + $0x10] sm:$0xff]
    %v1769 = vld [vmem:[%s10 + $0x18] sm:$0xff]
    %v1770 = vld [vmem:[%s11] sm:$0x1]
    %v1772 = vlaneseq
    %v1773 = vshrl.u32 %v1772, 7
    %v1774 = vsub.s32 0, %v1773
    %v1775 = vrot.slane %v1770, %v1774
    %v1778 = vsel %vm133, %v1764, 0
    %v1781 = vsel %vm133, %v1765, 0
    %1783 = vmatprep.subr.mxu0 0.0
    %1784 = vmatpush1.msra.mxu0 0.0
    %1785 = vmatprep.subr.mxu0 0.0
    %1786 = vmatpush1.msra.mxu0 0.0
    %1787 = vmatprep.subr.mxu0 0.0
    %1788 = vmatpush1.msra.mxu0 0.0
    %1789 = vmatprep.subr.mxu0 0.0
    %1790 = vmatpush1.msra.mxu0 0.0
    %1791 = vmatprep.subr.mxu0 0.0
    %1792 = vmatpush1.msra.mxu0 0.0
    %1793 = vmatprep.subr.mxu0 0.0
    %1794 = vmatpush1.msra.mxu0 0.0
    %1795 = vmatprep.subr.mxu0 0.0
    %1796 = vmatpush1.msra.mxu0 0.0
    %1797 = vmatprep.subr.mxu0 0.0
    %1798 = vmatpush1.msra.mxu0 0.0
    %1799 = vmatprep.subr.mxu0 0.0
    %1800 = vmatpush1.msra.mxu0 0.0
    %1801 = vmatprep.subr.mxu0 0.0
    %1802 = vmatpush1.msra.mxu0 0.0
    %1803 = vmatprep.subr.mxu0 0.0
    %1804 = vmatpush1.msra.mxu0 0.0
    %1805 = vmatprep.subr.mxu0 0.0
    %1806 = vmatpush1.msra.mxu0 0.0
    %1807 = vmatprep.subr.mxu0 0.0
    %1808 = vmatpush1.msra.mxu0 %v1769
    %1809 = vmatprep.subr.mxu0 0.0
    %1810 = vmatpush1.msra.mxu0 %v1768
    %1811 = vmatprep.subr.mxu0 0.0
    %1812 = vmatpush1.msra.mxu0 %v1767
    %1813 = vmatprep.subr.mxu0 0.0
    %1814 = vmatpush1.msra.mxu0 %v1766
    %1815 = vmatprep.subr.mxu0 0.0
    %1816 = vmatpush2.msra.mxu0 0.0
    %1817 = vmatprep.subr.mxu0 0.0
    %1818 = vmatpush2.msra.mxu0 0.0
    %1819 = vmatprep.subr.mxu0 0.0
    %1820 = vmatpush2.msra.mxu0 0.0
    %1821 = vmatprep.subr.mxu0 0.0
    %1822 = vmatpush2.msra.mxu0 0.0
    %1823 = vmatprep.subr.mxu0 0.0
    %1824 = vmatpush2.msra.mxu0 0.0
    %1825 = vmatprep.subr.mxu0 0.0
    %1826 = vmatpush2.msra.mxu0 0.0
    %1827 = vmatprep.subr.mxu0 0.0
    %1828 = vmatpush2.msra.mxu0 0.0
    %1829 = vmatprep.subr.mxu0 0.0
    %1830 = vmatpush2.msra.mxu0 0.0
    %1831 = vmatprep.subr.mxu0 0.0
    %1832 = vmatpush2.msra.mxu0 0.0
    %1833 = vmatprep.subr.mxu0 0.0
    %1834 = vmatpush2.msra.mxu0 0.0
    %1835 = vmatprep.subr.mxu0 0.0
    %1836 = vmatpush2.msra.mxu0 0.0
    %1837 = vmatprep.subr.mxu0 0.0
    %1838 = vmatpush2.msra.mxu0 0.0
    %1839 = vmatprep.subr.mxu0 0.0
    %1840 = vmatpush2.msra.mxu0 0.0
    %1841 = vmatprep.subr.mxu0 0.0
    %1842 = vmatpush2.msra.mxu0 0.0
    %1843 = vmatprep.subr.mxu0 0.0
    %1844 = vmatpush2.msra.mxu0 0.0
    %1845 = vmatprep.subr.mxu0 0.0
    %1846 = vmatpush2.msra.mxu0 0.0
    %1847 = vmatprep.mubr.f32.mxu0 0.0
    %1848 = vmatmul.mubr.f32.gmra.mxu0 %v1778
    %v1849 = vpop.f32.mrf.mxu0
    %v1850 = vadd.f32 %v1775, %v1849
    %v1851 = vpop.f32.mrf.mxu0
    %1852 = vmatprep.mubr.f32.mxu0 0.0
    %1853 = vmatmul.mubr.f32.gmra.mxu0 %v1781
    %v1854 = vpop.f32.mrf.mxu0
    %v1855 = vadd.f32 %v1775, %v1854
    %v1856 = vpop.f32.mrf.mxu0
    %1857 = vdwg.mxu0
    %v1858 = vld [vmem:[%s12] sm:$0xff]
    %v1859 = vld [vmem:[%s12 + $0x8] sm:$0xff]
    %v1860 = vld [vmem:[%s12 + $0x10] sm:$0xff]
    %v1861 = vld [vmem:[%s12 + $0x18] sm:$0xff]
    %v1862 = vld [vmem:[%s13] sm:$0x1]
    %v1864 = vlaneseq
    %v1865 = vshrl.u32 %v1864, 7
    %v1866 = vsub.s32 0, %v1865
    %v1867 = vrot.slane %v1862, %v1866
    %v1870 = vsel %vm133, %v129, 0
    %v1873 = vsel %vm133, %v130, 0
    %1875 = vmatprep.subr.mxu0 0.0
    %1876 = vmatpush1.msra.mxu0 0.0
    %1877 = vmatprep.subr.mxu0 0.0
    %1878 = vmatpush1.msra.mxu0 0.0
    %1879 = vmatprep.subr.mxu0 0.0
    %1880 = vmatpush1.msra.mxu0 0.0
    %1881 = vmatprep.subr.mxu0 0.0
    %1882 = vmatpush1.msra.mxu0 0.0
    %1883 = vmatprep.subr.mxu0 0.0
    %1884 = vmatpush1.msra.mxu0 0.0
    %1885 = vmatprep.subr.mxu0 0.0
    %1886 = vmatpush1.msra.mxu0 0.0
    %1887 = vmatprep.subr.mxu0 0.0
    %1888 = vmatpush1.msra.mxu0 0.0
    %1889 = vmatprep.subr.mxu0 0.0
    %1890 = vmatpush1.msra.mxu0 0.0
    %1891 = vmatprep.subr.mxu0 0.0
    %1892 = vmatpush1.msra.mxu0 0.0
    %1893 = vmatprep.subr.mxu0 0.0
    %1894 = vmatpush1.msra.mxu0 0.0
    %1895 = vmatprep.subr.mxu0 0.0
    %1896 = vmatpush1.msra.mxu0 0.0
    %1897 = vmatprep.subr.mxu0 0.0
    %1898 = vmatpush1.msra.mxu0 0.0
    %1899 = vmatprep.subr.mxu0 0.0
    %1900 = vmatpush1.msra.mxu0 %v1861
    %1901 = vmatprep.subr.mxu0 0.0
    %1902 = vmatpush1.msra.mxu0 %v1860
    %1903 = vmatprep.subr.mxu0 0.0
    %1904 = vmatpush1.msra.mxu0 %v1859
    %1905 = vmatprep.subr.mxu0 0.0
    %1906 = vmatpush1.msra.mxu0 %v1858
    %1907 = vmatprep.subr.mxu0 0.0
    %1908 = vmatpush2.msra.mxu0 0.0
    %1909 = vmatprep.subr.mxu0 0.0
    %1910 = vmatpush2.msra.mxu0 0.0
    %1911 = vmatprep.subr.mxu0 0.0
    %1912 = vmatpush2.msra.mxu0 0.0
    %1913 = vmatprep.subr.mxu0 0.0
    %1914 = vmatpush2.msra.mxu0 0.0
    %1915 = vmatprep.subr.mxu0 0.0
    %1916 = vmatpush2.msra.mxu0 0.0
    %1917 = vmatprep.subr.mxu0 0.0
    %1918 = vmatpush2.msra.mxu0 0.0
    %1919 = vmatprep.subr.mxu0 0.0
    %1920 = vmatpush2.msra.mxu0 0.0
    %1921 = vmatprep.subr.mxu0 0.0
    %1922 = vmatpush2.msra.mxu0 0.0
    %1923 = vmatprep.subr.mxu0 0.0
    %1924 = vmatpush2.msra.mxu0 0.0
    %1925 = vmatprep.subr.mxu0 0.0
    %1926 = vmatpush2.msra.mxu0 0.0
    %1927 = vmatprep.subr.mxu0 0.0
    %1928 = vmatpush2.msra.mxu0 0.0
    %1929 = vmatprep.subr.mxu0 0.0
    %1930 = vmatpush2.msra.mxu0 0.0
    %1931 = vmatprep.subr.mxu0 0.0
    %1932 = vmatpush2.msra.mxu0 0.0
    %1933 = vmatprep.subr.mxu0 0.0
    %1934 = vmatpush2.msra.mxu0 0.0
    %1935 = vmatprep.subr.mxu0 0.0
    %1936 = vmatpush2.msra.mxu0 0.0
    %1937 = vmatprep.subr.mxu0 0.0
    %1938 = vmatpush2.msra.mxu0 0.0
    %1939 = vmatprep.mubr.f32.mxu0 0.0
    %1940 = vmatmul.mubr.f32.gmra.mxu0 %v1870
    %v1941 = vpop.f32.mrf.mxu0
    %v1942 = vadd.f32 %v1867, %v1941
    %v1943 = vpop.f32.mrf.mxu0
    %1944 = vmatprep.mubr.f32.mxu0 0.0
    %1945 = vmatmul.mubr.f32.gmra.mxu0 %v1873
    %v1946 = vpop.f32.mrf.mxu0
    %v1947 = vadd.f32 %v1867, %v1946
    %v1948 = vpop.f32.mrf.mxu0
    %1949 = vdwg.mxu0
    %v1950 = vld [vmem:[%s14] sm:$0xff]
    %v1951 = vld [vmem:[%s14 + $0x8] sm:$0xff]
    %v1952 = vld [vmem:[%s14 + $0x10] sm:$0xff]
    %v1953 = vld [vmem:[%s14 + $0x18] sm:$0xff]
    %v1954 = vld [vmem:[%s15] sm:$0x1]
    %v1956 = vsel %vm277, %v1850, 0
    %v1959 = vsel %vm277, %v1942, 0
    %1961 = vmatprep.subr.mxu0 0.0
    %1962 = vmatpush1.xpose.msra.mxu0 0.0
    %1963 = vmatprep.subr.mxu0 0.0
    %1964 = vmatpush1.xpose.msra.mxu0 0.0
    %1965 = vmatprep.subr.mxu0 0.0
    %1966 = vmatpush1.xpose.msra.mxu0 0.0
    %1967 = vmatprep.subr.mxu0 0.0
    %1968 = vmatpush1.xpose.msra.mxu0 0.0
    %1969 = vmatprep.subr.mxu0 0.0
    %1970 = vmatpush1.xpose.msra.mxu0 0.0
    %1971 = vmatprep.subr.mxu0 0.0
    %1972 = vmatpush1.xpose.msra.mxu0 0.0
    %1973 = vmatprep.subr.mxu0 0.0
    %1974 = vmatpush1.xpose.msra.mxu0 0.0
    %1975 = vmatprep.subr.mxu0 0.0
    %1976 = vmatpush1.xpose.msra.mxu0 0.0
    %1977 = vmatprep.subr.mxu0 0.0
    %1978 = vmatpush1.xpose.msra.mxu0 0.0
    %1979 = vmatprep.subr.mxu0 0.0
    %1980 = vmatpush1.xpose.msra.mxu0 0.0
    %1981 = vmatprep.subr.mxu0 0.0
    %1982 = vmatpush1.xpose.msra.mxu0 0.0
    %1983 = vmatprep.subr.mxu0 0.0
    %1984 = vmatpush1.xpose.msra.mxu0 0.0
    %1985 = vmatprep.subr.mxu0 0.0
    %1986 = vmatpush1.xpose.msra.mxu0 0.0
    %1987 = vmatprep.subr.mxu0 0.0
    %1988 = vmatpush1.xpose.msra.mxu0 0.0
    %1989 = vmatprep.subr.mxu0 0.0
    %1990 = vmatpush1.xpose.msra.mxu0 0.0
    %1991 = vmatprep.subr.mxu0 0.0
    %1992 = vmatpush1.xpose.msra.mxu0 %v1959
    %1993 = vmatprep.subr.mxu0 0.0
    %1994 = vmatpush2.xpose.msra.mxu0 0.0
    %1995 = vmatprep.subr.mxu0 0.0
    %1996 = vmatpush2.xpose.msra.mxu0 0.0
    %1997 = vmatprep.subr.mxu0 0.0
    %1998 = vmatpush2.xpose.msra.mxu0 0.0
    %1999 = vmatprep.subr.mxu0 0.0
    %2000 = vmatpush2.xpose.msra.mxu0 0.0
    %2001 = vmatprep.subr.mxu0 0.0
    %2002 = vmatpush2.xpose.msra.mxu0 0.0
    %2003 = vmatprep.subr.mxu0 0.0
    %2004 = vmatpush2.xpose.msra.mxu0 0.0
    %2005 = vmatprep.subr.mxu0 0.0
    %2006 = vmatpush2.xpose.msra.mxu0 0.0
    %2007 = vmatprep.subr.mxu0 0.0
    %2008 = vmatpush2.xpose.msra.mxu0 0.0
    %2009 = vmatprep.subr.mxu0 0.0
    %2010 = vmatpush2.xpose.msra.mxu0 0.0
    %2011 = vmatprep.subr.mxu0 0.0
    %2012 = vmatpush2.xpose.msra.mxu0 0.0
    %2013 = vmatprep.subr.mxu0 0.0
    %2014 = vmatpush2.xpose.msra.mxu0 0.0
    %2015 = vmatprep.subr.mxu0 0.0
    %2016 = vmatpush2.xpose.msra.mxu0 0.0
    %2017 = vmatprep.subr.mxu0 0.0
    %2018 = vmatpush2.xpose.msra.mxu0 0.0
    %2019 = vmatprep.subr.mxu0 0.0
    %2020 = vmatpush2.xpose.msra.mxu0 0.0
    %2021 = vmatprep.subr.mxu0 0.0
    %2022 = vmatpush2.xpose.msra.mxu0 0.0
    %2023 = vmatprep.subr.mxu0 0.0
    %2024 = vmatpush2.xpose.msra.mxu0 0.0
    %2025 = vmatprep.mubr.f32.mxu0 0.0
    %2026 = vmatmul.mubr.f32.gmra.mxu0 %v1956
    %v2027 = vpop.f32.mrf.mxu0
    %v2028 = vadd.f32 0.0, %v2027
    %v2029 = vpop.f32.mrf.mxu0
    %2030 = vdwg.mxu0
    %v2032 = vsel %vm277, %v1855, 0
    %v2035 = vsel %vm277, %v1947, 0
    %2037 = vmatprep.subr.mxu0 0.0
    %2038 = vmatpush1.xpose.msra.mxu0 0.0
    %2039 = vmatprep.subr.mxu0 0.0
    %2040 = vmatpush1.xpose.msra.mxu0 0.0
    %2041 = vmatprep.subr.mxu0 0.0
    %2042 = vmatpush1.xpose.msra.mxu0 0.0
    %2043 = vmatprep.subr.mxu0 0.0
    %2044 = vmatpush1.xpose.msra.mxu0 0.0
    %2045 = vmatprep.subr.mxu0 0.0
    %2046 = vmatpush1.xpose.msra.mxu0 0.0
    %2047 = vmatprep.subr.mxu0 0.0
    %2048 = vmatpush1.xpose.msra.mxu0 0.0
    %2049 = vmatprep.subr.mxu0 0.0
    %2050 = vmatpush1.xpose.msra.mxu0 0.0
    %2051 = vmatprep.subr.mxu0 0.0
    %2052 = vmatpush1.xpose.msra.mxu0 0.0
    %2053 = vmatprep.subr.mxu0 0.0
    %2054 = vmatpush1.xpose.msra.mxu0 0.0
    %2055 = vmatprep.subr.mxu0 0.0
    %2056 = vmatpush1.xpose.msra.mxu0 0.0
    %2057 = vmatprep.subr.mxu0 0.0
    %2058 = vmatpush1.xpose.msra.mxu0 0.0
    %2059 = vmatprep.subr.mxu0 0.0
    %2060 = vmatpush1.xpose.msra.mxu0 0.0
    %2061 = vmatprep.subr.mxu0 0.0
    %2062 = vmatpush1.xpose.msra.mxu0 0.0
    %2063 = vmatprep.subr.mxu0 0.0
    %2064 = vmatpush1.xpose.msra.mxu0 0.0
    %2065 = vmatprep.subr.mxu0 0.0
    %2066 = vmatpush1.xpose.msra.mxu0 0.0
    %2067 = vmatprep.subr.mxu0 0.0
    %2068 = vmatpush1.xpose.msra.mxu0 %v2035
    %2069 = vmatprep.subr.mxu0 0.0
    %2070 = vmatpush2.xpose.msra.mxu0 0.0
    %2071 = vmatprep.subr.mxu0 0.0
    %2072 = vmatpush2.xpose.msra.mxu0 0.0
    %2073 = vmatprep.subr.mxu0 0.0
    %2074 = vmatpush2.xpose.msra.mxu0 0.0
    %2075 = vmatprep.subr.mxu0 0.0
    %2076 = vmatpush2.xpose.msra.mxu0 0.0
    %2077 = vmatprep.subr.mxu0 0.0
    %2078 = vmatpush2.xpose.msra.mxu0 0.0
    %2079 = vmatprep.subr.mxu0 0.0
    %2080 = vmatpush2.xpose.msra.mxu0 0.0
    %2081 = vmatprep.subr.mxu0 0.0
    %2082 = vmatpush2.xpose.msra.mxu0 0.0
    %2083 = vmatprep.subr.mxu0 0.0
    %2084 = vmatpush2.xpose.msra.mxu0 0.0
    %2085 = vmatprep.subr.mxu0 0.0
    %2086 = vmatpush2.xpose.msra.mxu0 0.0
    %2087 = vmatprep.subr.mxu0 0.0
    %2088 = vmatpush2.xpose.msra.mxu0 0.0
    %2089 = vmatprep.subr.mxu0 0.0
    %2090 = vmatpush2.xpose.msra.mxu0 0.0
    %2091 = vmatprep.subr.mxu0 0.0
    %2092 = vmatpush2.xpose.msra.mxu0 0.0
    %2093 = vmatprep.subr.mxu0 0.0
    %2094 = vmatpush2.xpose.msra.mxu0 0.0
    %2095 = vmatprep.subr.mxu0 0.0
    %2096 = vmatpush2.xpose.msra.mxu0 0.0
    %2097 = vmatprep.subr.mxu0 0.0
    %2098 = vmatpush2.xpose.msra.mxu0 0.0
    %2099 = vmatprep.subr.mxu0 0.0
    %2100 = vmatpush2.xpose.msra.mxu0 0.0
    %2101 = vmatprep.mubr.f32.mxu0 0.0
    %2102 = vmatmul.mubr.f32.gmra.mxu0 %v2032
    %v2103 = vpop.f32.mrf.mxu0
    %v2104 = vadd.f32 0.0, %v2103
    %v2105 = vpop.f32.mrf.mxu0
    %2106 = vdwg.mxu0
    %v2107 = vmul.f32 %v2028, 0.35355338
    %v2108 = vmul.f32 %v2104, 0.35355338
    %v2109 = vsel %vm277, %v2107, -inf
    %2110 = vmax.xlane.f32.xlu0 %v2109
    %v2111 = vpop.xlane.xlu0 %2110
    %v2112 = vsel %vm277, %v2108, -inf
    %2113 = vmax.xlane.f32.xlu0 %v2112
    %v2114 = vpop.xlane.xlu0 %2113
    %v2115 = vsub.f32 %v2107, %v2111
    %v2116 = vsub.f32 %v2108, %v2114
    %v2117 = vmul.f32 %v2115, 1.442695
    %v2118 = vpow.pop %v2117
    %v2119 = vmul.f32 %v2116, 1.442695
    %v2120 = vpow.pop %v2119
    %v2121 = vsel %vm277, %v2118, 0.0
    %2122 = vadd.xlane.f32.xlu0 %v2121
    %v2123 = vpop.xlane.xlu0 %2122
    %v2124 = vsel %vm277, %v2120, 0.0
    %2125 = vadd.xlane.f32.xlu0 %v2124
    %v2126 = vpop.xlane.xlu0 %2125
    %v2127 = vrcp.pop %v2123
    %v2128 = vmul.f32 %v2118, %v2127
    %v2129 = vrcp.pop %v2126
    %v2130 = vmul.f32 %v2120, %v2129
    %2131 = vrot.lane.b32.xlu0 %v1942, 96
    %v2132 = vpop.permute.xlu0 %2131
    %v2135 = vsel %vm277, %v2128, 0
    %2137 = vmatprep.subr.mxu0 0.0
    %2138 = vmatpush1.msra.mxu0 0.0
    %2139 = vmatprep.subr.mxu0 0.0
    %2140 = vmatpush1.msra.mxu0 0.0
    %2141 = vmatprep.subr.mxu0 0.0
    %2142 = vmatpush1.msra.mxu0 0.0
    %2143 = vmatprep.subr.mxu0 0.0
    %2144 = vmatpush1.msra.mxu0 0.0
    %2145 = vmatprep.subr.mxu0 0.0
    %2146 = vmatpush1.msra.mxu0 0.0
    %2147 = vmatprep.subr.mxu0 0.0
    %2148 = vmatpush1.msra.mxu0 0.0
    %2149 = vmatprep.subr.mxu0 0.0
    %2150 = vmatpush1.msra.mxu0 0.0
    %2151 = vmatprep.subr.mxu0 0.0
    %2152 = vmatpush1.msra.mxu0 0.0
    %2153 = vmatprep.subr.mxu0 0.0
    %2154 = vmatpush1.msra.mxu0 0.0
    %2155 = vmatprep.subr.mxu0 0.0
    %2156 = vmatpush1.msra.mxu0 0.0
    %2157 = vmatprep.subr.mxu0 0.0
    %2158 = vmatpush1.msra.mxu0 0.0
    %2159 = vmatprep.subr.mxu0 0.0
    %2160 = vmatpush1.msra.mxu0 0.0
    %2161 = vmatprep.subr.mxu0 0.0
    %2162 = vmatpush1.msra.mxu0 0.0
    %2163 = vmatprep.subr.mxu0 0.0
    %2164 = vmatpush1.msra.mxu0 0.0
    %2165 = vmatprep.subr.mxu0 0.0
    %2166 = vmatpush1.msra.mxu0 0.0
    %2167 = vmatprep.subr.mxu0 0.0
    %2168 = vmatpush1.msra.mxu0 %v2132
    %2169 = vmatprep.subr.mxu0 0.0
    %2170 = vmatpush2.msra.mxu0 0.0
    %2171 = vmatprep.subr.mxu0 0.0
    %2172 = vmatpush2.msra.mxu0 0.0
    %2173 = vmatprep.subr.mxu0 0.0
    %2174 = vmatpush2.msra.mxu0 0.0
    %2175 = vmatprep.subr.mxu0 0.0
    %2176 = vmatpush2.msra.mxu0 0.0
    %2177 = vmatprep.subr.mxu0 0.0
    %2178 = vmatpush2.msra.mxu0 0.0
    %2179 = vmatprep.subr.mxu0 0.0
    %2180 = vmatpush2.msra.mxu0 0.0
    %2181 = vmatprep.subr.mxu0 0.0
    %2182 = vmatpush2.msra.mxu0 0.0
    %2183 = vmatprep.subr.mxu0 0.0
    %2184 = vmatpush2.msra.mxu0 0.0
    %2185 = vmatprep.subr.mxu0 0.0
    %2186 = vmatpush2.msra.mxu0 0.0
    %2187 = vmatprep.subr.mxu0 0.0
    %2188 = vmatpush2.msra.mxu0 0.0
    %2189 = vmatprep.subr.mxu0 0.0
    %2190 = vmatpush2.msra.mxu0 0.0
    %2191 = vmatprep.subr.mxu0 0.0
    %2192 = vmatpush2.msra.mxu0 0.0
    %2193 = vmatprep.subr.mxu0 0.0
    %2194 = vmatpush2.msra.mxu0 0.0
    %2195 = vmatprep.subr.mxu0 0.0
    %2196 = vmatpush2.msra.mxu0 0.0
    %2197 = vmatprep.subr.mxu0 0.0
    %2198 = vmatpush2.msra.mxu0 0.0
    %2199 = vmatprep.subr.mxu0 0.0
    %2200 = vmatpush2.msra.mxu0 0.0
    %2201 = vmatprep.mubr.f32.mxu0 0.0
    %2202 = vmatmul.mubr.f32.gmra.mxu0 %v2135
    %v2203 = vpop.f32.mrf.mxu0
    %v2204 = vadd.f32 0.0, %v2203
    %v2205 = vpop.f32.mrf.mxu0
    %2206 = vdwg.mxu0
    %2207 = vrot.lane.b32.xlu0 %v1947, 96
    %v2208 = vpop.permute.xlu0 %2207
    %v2211 = vsel %vm277, %v2130, 0
    %2213 = vmatprep.subr.mxu0 0.0
    %2214 = vmatpush1.msra.mxu0 0.0
    %2215 = vmatprep.subr.mxu0 0.0
    %2216 = vmatpush1.msra.mxu0 0.0
    %2217 = vmatprep.subr.mxu0 0.0
    %2218 = vmatpush1.msra.mxu0 0.0
    %2219 = vmatprep.subr.mxu0 0.0
    %2220 = vmatpush1.msra.mxu0 0.0
    %2221 = vmatprep.subr.mxu0 0.0
    %2222 = vmatpush1.msra.mxu0 0.0
    %2223 = vmatprep.subr.mxu0 0.0
    %2224 = vmatpush1.msra.mxu0 0.0
    %2225 = vmatprep.subr.mxu0 0.0
    %2226 = vmatpush1.msra.mxu0 0.0
    %2227 = vmatprep.subr.mxu0 0.0
    %2228 = vmatpush1.msra.mxu0 0.0
    %2229 = vmatprep.subr.mxu0 0.0
    %2230 = vmatpush1.msra.mxu0 0.0
    %2231 = vmatprep.subr.mxu0 0.0
    %2232 = vmatpush1.msra.mxu0 0.0
    %2233 = vmatprep.subr.mxu0 0.0
    %2234 = vmatpush1.msra.mxu0 0.0
    %2235 = vmatprep.subr.mxu0 0.0
    %2236 = vmatpush1.msra.mxu0 0.0
    %2237 = vmatprep.subr.mxu0 0.0
    %2238 = vmatpush1.msra.mxu0 0.0
    %2239 = vmatprep.subr.mxu0 0.0
    %2240 = vmatpush1.msra.mxu0 0.0
    %2241 = vmatprep.subr.mxu0 0.0
    %2242 = vmatpush1.msra.mxu0 0.0
    %2243 = vmatprep.subr.mxu0 0.0
    %2244 = vmatpush1.msra.mxu0 %v2208
    %2245 = vmatprep.subr.mxu0 0.0
    %2246 = vmatpush2.msra.mxu0 0.0
    %2247 = vmatprep.subr.mxu0 0.0
    %2248 = vmatpush2.msra.mxu0 0.0
    %2249 = vmatprep.subr.mxu0 0.0
    %2250 = vmatpush2.msra.mxu0 0.0
    %2251 = vmatprep.subr.mxu0 0.0
    %2252 = vmatpush2.msra.mxu0 0.0
    %2253 = vmatprep.subr.mxu0 0.0
    %2254 = vmatpush2.msra.mxu0 0.0
    %2255 = vmatprep.subr.mxu0 0.0
    %2256 = vmatpush2.msra.mxu0 0.0
    %2257 = vmatprep.subr.mxu0 0.0
    %2258 = vmatpush2.msra.mxu0 0.0
    %2259 = vmatprep.subr.mxu0 0.0
    %2260 = vmatpush2.msra.mxu0 0.0
    %2261 = vmatprep.subr.mxu0 0.0
    %2262 = vmatpush2.msra.mxu0 0.0
    %2263 = vmatprep.subr.mxu0 0.0
    %2264 = vmatpush2.msra.mxu0 0.0
    %2265 = vmatprep.subr.mxu0 0.0
    %2266 = vmatpush2.msra.mxu0 0.0
    %2267 = vmatprep.subr.mxu0 0.0
    %2268 = vmatpush2.msra.mxu0 0.0
    %2269 = vmatprep.subr.mxu0 0.0
    %2270 = vmatpush2.msra.mxu0 0.0
    %2271 = vmatprep.subr.mxu0 0.0
    %2272 = vmatpush2.msra.mxu0 0.0
    %2273 = vmatprep.subr.mxu0 0.0
    %2274 = vmatpush2.msra.mxu0 0.0
    %2275 = vmatprep.subr.mxu0 0.0
    %2276 = vmatpush2.msra.mxu0 0.0
    %2277 = vmatprep.mubr.f32.mxu0 0.0
    %2278 = vmatmul.mubr.f32.gmra.mxu0 %v2211
    %v2279 = vpop.f32.mrf.mxu0
    %v2280 = vadd.f32 0.0, %v2279
    %v2281 = vpop.f32.mrf.mxu0
    %2282 = vdwg.mxu0
    %2283 = vrot.lane.b32.xlu0 %v1850, 120
    %v2284 = vpop.permute.xlu0 %2283
    %2285 = vrot.lane.b32.xlu0 %v1942, 120
    %v2286 = vpop.permute.xlu0 %2285
    %v2287 = vsel %vm277, %v2284, 0
    %v2289 = vsel %vm277, %v2286, 0
    %2291 = vmatprep.subr.mxu0 0.0
    %2292 = vmatpush1.xpose.msra.mxu0 0.0
    %2293 = vmatprep.subr.mxu0 0.0
    %2294 = vmatpush1.xpose.msra.mxu0 0.0
    %2295 = vmatprep.subr.mxu0 0.0
    %2296 = vmatpush1.xpose.msra.mxu0 0.0
    %2297 = vmatprep.subr.mxu0 0.0
    %2298 = vmatpush1.xpose.msra.mxu0 0.0
    %2299 = vmatprep.subr.mxu0 0.0
    %2300 = vmatpush1.xpose.msra.mxu0 0.0
    %2301 = vmatprep.subr.mxu0 0.0
    %2302 = vmatpush1.xpose.msra.mxu0 0.0
    %2303 = vmatprep.subr.mxu0 0.0
    %2304 = vmatpush1.xpose.msra.mxu0 0.0
    %2305 = vmatprep.subr.mxu0 0.0
    %2306 = vmatpush1.xpose.msra.mxu0 0.0
    %2307 = vmatprep.subr.mxu0 0.0
    %2308 = vmatpush1.xpose.msra.mxu0 0.0
    %2309 = vmatprep.subr.mxu0 0.0
    %2310 = vmatpush1.xpose.msra.mxu0 0.0
    %2311 = vmatprep.subr.mxu0 0.0
    %2312 = vmatpush1.xpose.msra.mxu0 0.0
    %2313 = vmatprep.subr.mxu0 0.0
    %2314 = vmatpush1.xpose.msra.mxu0 0.0
    %2315 = vmatprep.subr.mxu0 0.0
    %2316 = vmatpush1.xpose.msra.mxu0 0.0
    %2317 = vmatprep.subr.mxu0 0.0
    %2318 = vmatpush1.xpose.msra.mxu0 0.0
    %2319 = vmatprep.subr.mxu0 0.0
    %2320 = vmatpush1.xpose.msra.mxu0 0.0
    %2321 = vmatprep.subr.mxu0 0.0
    %2322 = vmatpush1.xpose.msra.mxu0 %v2289
    %2323 = vmatprep.subr.mxu0 0.0
    %2324 = vmatpush2.xpose.msra.mxu0 0.0
    %2325 = vmatprep.subr.mxu0 0.0
    %2326 = vmatpush2.xpose.msra.mxu0 0.0
    %2327 = vmatprep.subr.mxu0 0.0
    %2328 = vmatpush2.xpose.msra.mxu0 0.0
    %2329 = vmatprep.subr.mxu0 0.0
    %2330 = vmatpush2.xpose.msra.mxu0 0.0
    %2331 = vmatprep.subr.mxu0 0.0
    %2332 = vmatpush2.xpose.msra.mxu0 0.0
    %2333 = vmatprep.subr.mxu0 0.0
    %2334 = vmatpush2.xpose.msra.mxu0 0.0
    %2335 = vmatprep.subr.mxu0 0.0
    %2336 = vmatpush2.xpose.msra.mxu0 0.0
    %2337 = vmatprep.subr.mxu0 0.0
    %2338 = vmatpush2.xpose.msra.mxu0 0.0
    %2339 = vmatprep.subr.mxu0 0.0
    %2340 = vmatpush2.xpose.msra.mxu0 0.0
    %2341 = vmatprep.subr.mxu0 0.0
    %2342 = vmatpush2.xpose.msra.mxu0 0.0
    %2343 = vmatprep.subr.mxu0 0.0
    %2344 = vmatpush2.xpose.msra.mxu0 0.0
    %2345 = vmatprep.subr.mxu0 0.0
    %2346 = vmatpush2.xpose.msra.mxu0 0.0
    %2347 = vmatprep.subr.mxu0 0.0
    %2348 = vmatpush2.xpose.msra.mxu0 0.0
    %2349 = vmatprep.subr.mxu0 0.0
    %2350 = vmatpush2.xpose.msra.mxu0 0.0
    %2351 = vmatprep.subr.mxu0 0.0
    %2352 = vmatpush2.xpose.msra.mxu0 0.0
    %2353 = vmatprep.subr.mxu0 0.0
    %2354 = vmatpush2.xpose.msra.mxu0 0.0
    %2355 = vmatprep.mubr.f32.mxu0 0.0
    %2356 = vmatmul.mubr.f32.gmra.mxu0 %v2287
    %v2357 = vpop.f32.mrf.mxu0
    %v2358 = vadd.f32 0.0, %v2357
    %v2359 = vpop.f32.mrf.mxu0
    %2360 = vdwg.mxu0
    %2361 = vrot.lane.b32.xlu0 %v1855, 120
    %v2362 = vpop.permute.xlu0 %2361
    %2363 = vrot.lane.b32.xlu0 %v1947, 120
    %v2364 = vpop.permute.xlu0 %2363
    %v2365 = vsel %vm277, %v2362, 0
    %v2367 = vsel %vm277, %v2364, 0
    %2369 = vmatprep.subr.mxu0 0.0
    %2370 = vmatpush1.xpose.msra.mxu0 0.0
    %2371 = vmatprep.subr.mxu0 0.0
    %2372 = vmatpush1.xpose.msra.mxu0 0.0
    %2373 = vmatprep.subr.mxu0 0.0
    %2374 = vmatpush1.xpose.msra.mxu0 0.0
    %2375 = vmatprep.subr.mxu0 0.0
    %2376 = vmatpush1.xpose.msra.mxu0 0.0
    %2377 = vmatprep.subr.mxu0 0.0
    %2378 = vmatpush1.xpose.msra.mxu0 0.0
    %2379 = vmatprep.subr.mxu0 0.0
    %2380 = vmatpush1.xpose.msra.mxu0 0.0
    %2381 = vmatprep.subr.mxu0 0.0
    %2382 = vmatpush1.xpose.msra.mxu0 0.0
    %2383 = vmatprep.subr.mxu0 0.0
    %2384 = vmatpush1.xpose.msra.mxu0 0.0
    %2385 = vmatprep.subr.mxu0 0.0
    %2386 = vmatpush1.xpose.msra.mxu0 0.0
    %2387 = vmatprep.subr.mxu0 0.0
    %2388 = vmatpush1.xpose.msra.mxu0 0.0
    %2389 = vmatprep.subr.mxu0 0.0
    %2390 = vmatpush1.xpose.msra.mxu0 0.0
    %2391 = vmatprep.subr.mxu0 0.0
    %2392 = vmatpush1.xpose.msra.mxu0 0.0
    %2393 = vmatprep.subr.mxu0 0.0
    %2394 = vmatpush1.xpose.msra.mxu0 0.0
    %2395 = vmatprep.subr.mxu0 0.0
    %2396 = vmatpush1.xpose.msra.mxu0 0.0
    %2397 = vmatprep.subr.mxu0 0.0
    %2398 = vmatpush1.xpose.msra.mxu0 0.0
    %2399 = vmatprep.subr.mxu0 0.0
    %2400 = vmatpush1.xpose.msra.mxu0 %v2367
    %2401 = vmatprep.subr.mxu0 0.0
    %2402 = vmatpush2.xpose.msra.mxu0 0.0
    %2403 = vmatprep.subr.mxu0 0.0
    %2404 = vmatpush2.xpose.msra.mxu0 0.0
    %2405 = vmatprep.subr.mxu0 0.0
    %2406 = vmatpush2.xpose.msra.mxu0 0.0
    %2407 = vmatprep.subr.mxu0 0.0
    %2408 = vmatpush2.xpose.msra.mxu0 0.0
    %2409 = vmatprep.subr.mxu0 0.0
    %2410 = vmatpush2.xpose.msra.mxu0 0.0
    %2411 = vmatprep.subr.mxu0 0.0
    %2412 = vmatpush2.xpose.msra.mxu0 0.0
    %2413 = vmatprep.subr.mxu0 0.0
    %2414 = vmatpush2.xpose.msra.mxu0 0.0
    %2415 = vmatprep.subr.mxu0 0.0
    %2416 = vmatpush2.xpose.msra.mxu0 0.0
    %2417 = vmatprep.subr.mxu0 0.0
    %2418 = vmatpush2.xpose.msra.mxu0 0.0
    %2419 = vmatprep.subr.mxu0 0.0
    %2420 = vmatpush2.xpose.msra.mxu0 0.0
    %2421 = vmatprep.subr.mxu0 0.0
    %2422 = vmatpush2.xpose.msra.mxu0 0.0
    %2423 = vmatprep.subr.mxu0 0.0
    %2424 = vmatpush2.xpose.msra.mxu0 0.0
    %2425 = vmatprep.subr.mxu0 0.0
    %2426 = vmatpush2.xpose.msra.mxu0 0.0
    %2427 = vmatprep.subr.mxu0 0.0
    %2428 = vmatpush2.xpose.msra.mxu0 0.0
    %2429 = vmatprep.subr.mxu0 0.0
    %2430 = vmatpush2.xpose.msra.mxu0 0.0
    %2431 = vmatprep.subr.mxu0 0.0
    %2432 = vmatpush2.xpose.msra.mxu0 0.0
    %2433 = vmatprep.mubr.f32.mxu0 0.0
    %2434 = vmatmul.mubr.f32.gmra.mxu0 %v2365
    %v2435 = vpop.f32.mrf.mxu0
    %v2436 = vadd.f32 0.0, %v2435
    %v2437 = vpop.f32.mrf.mxu0
    %2438 = vdwg.mxu0
    %v2439 = vmul.f32 %v2358, 0.35355338
    %v2440 = vmul.f32 %v2436, 0.35355338
    %v2441 = vsel %vm277, %v2439, -inf
    %2442 = vmax.xlane.f32.xlu0 %v2441
    %v2443 = vpop.xlane.xlu0 %2442
    %v2444 = vsel %vm277, %v2440, -inf
    %2445 = vmax.xlane.f32.xlu0 %v2444
    %v2446 = vpop.xlane.xlu0 %2445
    %v2447 = vsub.f32 %v2439, %v2443
    %v2448 = vsub.f32 %v2440, %v2446
    %v2449 = vmul.f32 %v2447, 1.442695
    %v2450 = vpow.pop %v2449
    %v2451 = vmul.f32 %v2448, 1.442695
    %v2452 = vpow.pop %v2451
    %v2453 = vsel %vm277, %v2450, 0.0
    %2454 = vadd.xlane.f32.xlu0 %v2453
    %v2455 = vpop.xlane.xlu0 %2454
    %v2456 = vsel %vm277, %v2452, 0.0
    %2457 = vadd.xlane.f32.xlu0 %v2456
    %v2458 = vpop.xlane.xlu0 %2457
    %v2459 = vrcp.pop %v2455
    %v2460 = vmul.f32 %v2450, %v2459
    %v2461 = vrcp.pop %v2458
    %v2462 = vmul.f32 %v2452, %v2461
    %2463 = vrot.lane.b32.xlu0 %v1942, 88
    %v2464 = vpop.permute.xlu0 %2463
    %v2467 = vsel %vm277, %v2460, 0
    %2469 = vmatprep.subr.mxu0 0.0
    %2470 = vmatpush1.msra.mxu0 0.0
    %2471 = vmatprep.subr.mxu0 0.0
    %2472 = vmatpush1.msra.mxu0 0.0
    %2473 = vmatprep.subr.mxu0 0.0
    %2474 = vmatpush1.msra.mxu0 0.0
    %2475 = vmatprep.subr.mxu0 0.0
    %2476 = vmatpush1.msra.mxu0 0.0
    %2477 = vmatprep.subr.mxu0 0.0
    %2478 = vmatpush1.msra.mxu0 0.0
    %2479 = vmatprep.subr.mxu0 0.0
    %2480 = vmatpush1.msra.mxu0 0.0
    %2481 = vmatprep.subr.mxu0 0.0
    %2482 = vmatpush1.msra.mxu0 0.0
    %2483 = vmatprep.subr.mxu0 0.0
    %2484 = vmatpush1.msra.mxu0 0.0
    %2485 = vmatprep.subr.mxu0 0.0
    %2486 = vmatpush1.msra.mxu0 0.0
    %2487 = vmatprep.subr.mxu0 0.0
    %2488 = vmatpush1.msra.mxu0 0.0
    %2489 = vmatprep.subr.mxu0 0.0
    %2490 = vmatpush1.msra.mxu0 0.0
    %2491 = vmatprep.subr.mxu0 0.0
    %2492 = vmatpush1.msra.mxu0 0.0
    %2493 = vmatprep.subr.mxu0 0.0
    %2494 = vmatpush1.msra.mxu0 0.0
    %2495 = vmatprep.subr.mxu0 0.0
    %2496 = vmatpush1.msra.mxu0 0.0
    %2497 = vmatprep.subr.mxu0 0.0
    %2498 = vmatpush1.msra.mxu0 0.0
    %2499 = vmatprep.subr.mxu0 0.0
    %2500 = vmatpush1.msra.mxu0 %v2464
    %2501 = vmatprep.subr.mxu0 0.0
    %2502 = vmatpush2.msra.mxu0 0.0
    %2503 = vmatprep.subr.mxu0 0.0
    %2504 = vmatpush2.msra.mxu0 0.0
    %2505 = vmatprep.subr.mxu0 0.0
    %2506 = vmatpush2.msra.mxu0 0.0
    %2507 = vmatprep.subr.mxu0 0.0
    %2508 = vmatpush2.msra.mxu0 0.0
    %2509 = vmatprep.subr.mxu0 0.0
    %2510 = vmatpush2.msra.mxu0 0.0
    %2511 = vmatprep.subr.mxu0 0.0
    %2512 = vmatpush2.msra.mxu0 0.0
    %2513 = vmatprep.subr.mxu0 0.0
    %2514 = vmatpush2.msra.mxu0 0.0
    %2515 = vmatprep.subr.mxu0 0.0
    %2516 = vmatpush2.msra.mxu0 0.0
    %2517 = vmatprep.subr.mxu0 0.0
    %2518 = vmatpush2.msra.mxu0 0.0
    %2519 = vmatprep.subr.mxu0 0.0
    %2520 = vmatpush2.msra.mxu0 0.0
    %2521 = vmatprep.subr.mxu0 0.0
    %2522 = vmatpush2.msra.mxu0 0.0
    %2523 = vmatprep.subr.mxu0 0.0
    %2524 = vmatpush2.msra.mxu0 0.0
    %2525 = vmatprep.subr.mxu0 0.0
    %2526 = vmatpush2.msra.mxu0 0.0
    %2527 = vmatprep.subr.mxu0 0.0
    %2528 = vmatpush2.msra.mxu0 0.0
    %2529 = vmatprep.subr.mxu0 0.0
    %2530 = vmatpush2.msra.mxu0 0.0
    %2531 = vmatprep.subr.mxu0 0.0
    %2532 = vmatpush2.msra.mxu0 0.0
    %2533 = vmatprep.mubr.f32.mxu0 0.0
    %2534 = vmatmul.mubr.f32.gmra.mxu0 %v2467
    %v2535 = vpop.f32.mrf.mxu0
    %v2536 = vadd.f32 0.0, %v2535
    %v2537 = vpop.f32.mrf.mxu0
    %2538 = vdwg.mxu0
    %2539 = vrot.lane.b32.xlu0 %v1947, 88
    %v2540 = vpop.permute.xlu0 %2539
    %v2543 = vsel %vm277, %v2462, 0
    %2545 = vmatprep.subr.mxu0 0.0
    %2546 = vmatpush1.msra.mxu0 0.0
    %2547 = vmatprep.subr.mxu0 0.0
    %2548 = vmatpush1.msra.mxu0 0.0
    %2549 = vmatprep.subr.mxu0 0.0
    %2550 = vmatpush1.msra.mxu0 0.0
    %2551 = vmatprep.subr.mxu0 0.0
    %2552 = vmatpush1.msra.mxu0 0.0
    %2553 = vmatprep.subr.mxu0 0.0
    %2554 = vmatpush1.msra.mxu0 0.0
    %2555 = vmatprep.subr.mxu0 0.0
    %2556 = vmatpush1.msra.mxu0 0.0
    %2557 = vmatprep.subr.mxu0 0.0
    %2558 = vmatpush1.msra.mxu0 0.0
    %2559 = vmatprep.subr.mxu0 0.0
    %2560 = vmatpush1.msra.mxu0 0.0
    %2561 = vmatprep.subr.mxu0 0.0
    %2562 = vmatpush1.msra.mxu0 0.0
    %2563 = vmatprep.subr.mxu0 0.0
    %2564 = vmatpush1.msra.mxu0 0.0
    %2565 = vmatprep.subr.mxu0 0.0
    %2566 = vmatpush1.msra.mxu0 0.0
    %2567 = vmatprep.subr.mxu0 0.0
    %2568 = vmatpush1.msra.mxu0 0.0
    %2569 = vmatprep.subr.mxu0 0.0
    %2570 = vmatpush1.msra.mxu0 0.0
    %2571 = vmatprep.subr.mxu0 0.0
    %2572 = vmatpush1.msra.mxu0 0.0
    %2573 = vmatprep.subr.mxu0 0.0
    %2574 = vmatpush1.msra.mxu0 0.0
    %2575 = vmatprep.subr.mxu0 0.0
    %2576 = vmatpush1.msra.mxu0 %v2540
    %2577 = vmatprep.subr.mxu0 0.0
    %2578 = vmatpush2.msra.mxu0 0.0
    %2579 = vmatprep.subr.mxu0 0.0
    %2580 = vmatpush2.msra.mxu0 0.0
    %2581 = vmatprep.subr.mxu0 0.0
    %2582 = vmatpush2.msra.mxu0 0.0
    %2583 = vmatprep.subr.mxu0 0.0
    %2584 = vmatpush2.msra.mxu0 0.0
    %2585 = vmatprep.subr.mxu0 0.0
    %2586 = vmatpush2.msra.mxu0 0.0
    %2587 = vmatprep.subr.mxu0 0.0
    %2588 = vmatpush2.msra.mxu0 0.0
    %2589 = vmatprep.subr.mxu0 0.0
    %2590 = vmatpush2.msra.mxu0 0.0
    %2591 = vmatprep.subr.mxu0 0.0
    %2592 = vmatpush2.msra.mxu0 0.0
    %2593 = vmatprep.subr.mxu0 0.0
    %2594 = vmatpush2.msra.mxu0 0.0
    %2595 = vmatprep.subr.mxu0 0.0
    %2596 = vmatpush2.msra.mxu0 0.0
    %2597 = vmatprep.subr.mxu0 0.0
    %2598 = vmatpush2.msra.mxu0 0.0
    %2599 = vmatprep.subr.mxu0 0.0
    %2600 = vmatpush2.msra.mxu0 0.0
    %2601 = vmatprep.subr.mxu0 0.0
    %2602 = vmatpush2.msra.mxu0 0.0
    %2603 = vmatprep.subr.mxu0 0.0
    %2604 = vmatpush2.msra.mxu0 0.0
    %2605 = vmatprep.subr.mxu0 0.0
    %2606 = vmatpush2.msra.mxu0 0.0
    %2607 = vmatprep.subr.mxu0 0.0
    %2608 = vmatpush2.msra.mxu0 0.0
    %2609 = vmatprep.mubr.f32.mxu0 0.0
    %2610 = vmatmul.mubr.f32.gmra.mxu0 %v2543
    %v2611 = vpop.f32.mrf.mxu0
    %v2612 = vadd.f32 0.0, %v2611
    %v2613 = vpop.f32.mrf.mxu0
    %2614 = vdwg.mxu0
    %2615 = vrot.lane.b32.xlu0 %v1850, 112
    %v2616 = vpop.permute.xlu0 %2615
    %2617 = vrot.lane.b32.xlu0 %v1942, 112
    %v2618 = vpop.permute.xlu0 %2617
    %v2619 = vsel %vm277, %v2616, 0
    %v2621 = vsel %vm277, %v2618, 0
    %2623 = vmatprep.subr.mxu0 0.0
    %2624 = vmatpush1.xpose.msra.mxu0 0.0
    %2625 = vmatprep.subr.mxu0 0.0
    %2626 = vmatpush1.xpose.msra.mxu0 0.0
    %2627 = vmatprep.subr.mxu0 0.0
    %2628 = vmatpush1.xpose.msra.mxu0 0.0
    %2629 = vmatprep.subr.mxu0 0.0
    %2630 = vmatpush1.xpose.msra.mxu0 0.0
    %2631 = vmatprep.subr.mxu0 0.0
    %2632 = vmatpush1.xpose.msra.mxu0 0.0
    %2633 = vmatprep.subr.mxu0 0.0
    %2634 = vmatpush1.xpose.msra.mxu0 0.0
    %2635 = vmatprep.subr.mxu0 0.0
    %2636 = vmatpush1.xpose.msra.mxu0 0.0
    %2637 = vmatprep.subr.mxu0 0.0
    %2638 = vmatpush1.xpose.msra.mxu0 0.0
    %2639 = vmatprep.subr.mxu0 0.0
    %2640 = vmatpush1.xpose.msra.mxu0 0.0
    %2641 = vmatprep.subr.mxu0 0.0
    %2642 = vmatpush1.xpose.msra.mxu0 0.0
    %2643 = vmatprep.subr.mxu0 0.0
    %2644 = vmatpush1.xpose.msra.mxu0 0.0
    %2645 = vmatprep.subr.mxu0 0.0
    %2646 = vmatpush1.xpose.msra.mxu0 0.0
    %2647 = vmatprep.subr.mxu0 0.0
    %2648 = vmatpush1.xpose.msra.mxu0 0.0
    %2649 = vmatprep.subr.mxu0 0.0
    %2650 = vmatpush1.xpose.msra.mxu0 0.0
    %2651 = vmatprep.subr.mxu0 0.0
    %2652 = vmatpush1.xpose.msra.mxu0 0.0
    %2653 = vmatprep.subr.mxu0 0.0
    %2654 = vmatpush1.xpose.msra.mxu0 %v2621
    %2655 = vmatprep.subr.mxu0 0.0
    %2656 = vmatpush2.xpose.msra.mxu0 0.0
    %2657 = vmatprep.subr.mxu0 0.0
    %2658 = vmatpush2.xpose.msra.mxu0 0.0
    %2659 = vmatprep.subr.mxu0 0.0
    %2660 = vmatpush2.xpose.msra.mxu0 0.0
    %2661 = vmatprep.subr.mxu0 0.0
    %2662 = vmatpush2.xpose.msra.mxu0 0.0
    %2663 = vmatprep.subr.mxu0 0.0
    %2664 = vmatpush2.xpose.msra.mxu0 0.0
    %2665 = vmatprep.subr.mxu0 0.0
    %2666 = vmatpush2.xpose.msra.mxu0 0.0
    %2667 = vmatprep.subr.mxu0 0.0
    %2668 = vmatpush2.xpose.msra.mxu0 0.0
    %2669 = vmatprep.subr.mxu0 0.0
    %2670 = vmatpush2.xpose.msra.mxu0 0.0
    %2671 = vmatprep.subr.mxu0 0.0
    %2672 = vmatpush2.xpose.msra.mxu0 0.0
    %2673 = vmatprep.subr.mxu0 0.0
    %2674 = vmatpush2.xpose.msra.mxu0 0.0
    %2675 = vmatprep.subr.mxu0 0.0
    %2676 = vmatpush2.xpose.msra.mxu0 0.0
    %2677 = vmatprep.subr.mxu0 0.0
    %2678 = vmatpush2.xpose.msra.mxu0 0.0
    %2679 = vmatprep.subr.mxu0 0.0
    %2680 = vmatpush2.xpose.msra.mxu0 0.0
    %2681 = vmatprep.subr.mxu0 0.0
    %2682 = vmatpush2.xpose.msra.mxu0 0.0
    %2683 = vmatprep.subr.mxu0 0.0
    %2684 = vmatpush2.xpose.msra.mxu0 0.0
    %2685 = vmatprep.subr.mxu0 0.0
    %2686 = vmatpush2.xpose.msra.mxu0 0.0
    %2687 = vmatprep.mubr.f32.mxu0 0.0
    %2688 = vmatmul.mubr.f32.gmra.mxu0 %v2619
    %v2689 = vpop.f32.mrf.mxu0
    %v2690 = vadd.f32 0.0, %v2689
    %v2691 = vpop.f32.mrf.mxu0
    %2692 = vdwg.mxu0
    %2693 = vrot.lane.b32.xlu0 %v1855, 112
    %v2694 = vpop.permute.xlu0 %2693
    %2695 = vrot.lane.b32.xlu0 %v1947, 112
    %v2696 = vpop.permute.xlu0 %2695
    %v2697 = vsel %vm277, %v2694, 0
    %v2699 = vsel %vm277, %v2696, 0
    %2701 = vmatprep.subr.mxu0 0.0
    %2702 = vmatpush1.xpose.msra.mxu0 0.0
    %2703 = vmatprep.subr.mxu0 0.0
    %2704 = vmatpush1.xpose.msra.mxu0 0.0
    %2705 = vmatprep.subr.mxu0 0.0
    %2706 = vmatpush1.xpose.msra.mxu0 0.0
    %2707 = vmatprep.subr.mxu0 0.0
    %2708 = vmatpush1.xpose.msra.mxu0 0.0
    %2709 = vmatprep.subr.mxu0 0.0
    %2710 = vmatpush1.xpose.msra.mxu0 0.0
    %2711 = vmatprep.subr.mxu0 0.0
    %2712 = vmatpush1.xpose.msra.mxu0 0.0
    %2713 = vmatprep.subr.mxu0 0.0
    %2714 = vmatpush1.xpose.msra.mxu0 0.0
    %2715 = vmatprep.subr.mxu0 0.0
    %2716 = vmatpush1.xpose.msra.mxu0 0.0
    %2717 = vmatprep.subr.mxu0 0.0
    %2718 = vmatpush1.xpose.msra.mxu0 0.0
    %2719 = vmatprep.subr.mxu0 0.0
    %2720 = vmatpush1.xpose.msra.mxu0 0.0
    %2721 = vmatprep.subr.mxu0 0.0
    %2722 = vmatpush1.xpose.msra.mxu0 0.0
    %2723 = vmatprep.subr.mxu0 0.0
    %2724 = vmatpush1.xpose.msra.mxu0 0.0
    %2725 = vmatprep.subr.mxu0 0.0
    %2726 = vmatpush1.xpose.msra.mxu0 0.0
    %2727 = vmatprep.subr.mxu0 0.0
    %2728 = vmatpush1.xpose.msra.mxu0 0.0
    %2729 = vmatprep.subr.mxu0 0.0
    %2730 = vmatpush1.xpose.msra.mxu0 0.0
    %2731 = vmatprep.subr.mxu0 0.0
    %2732 = vmatpush1.xpose.msra.mxu0 %v2699
    %2733 = vmatprep.subr.mxu0 0.0
    %2734 = vmatpush2.xpose.msra.mxu0 0.0
    %2735 = vmatprep.subr.mxu0 0.0
    %2736 = vmatpush2.xpose.msra.mxu0 0.0
    %2737 = vmatprep.subr.mxu0 0.0
    %2738 = vmatpush2.xpose.msra.mxu0 0.0
    %2739 = vmatprep.subr.mxu0 0.0
    %2740 = vmatpush2.xpose.msra.mxu0 0.0
    %2741 = vmatprep.subr.mxu0 0.0
    %2742 = vmatpush2.xpose.msra.mxu0 0.0
    %2743 = vmatprep.subr.mxu0 0.0
    %2744 = vmatpush2.xpose.msra.mxu0 0.0
    %2745 = vmatprep.subr.mxu0 0.0
    %2746 = vmatpush2.xpose.msra.mxu0 0.0
    %2747 = vmatprep.subr.mxu0 0.0
    %2748 = vmatpush2.xpose.msra.mxu0 0.0
    %2749 = vmatprep.subr.mxu0 0.0
    %2750 = vmatpush2.xpose.msra.mxu0 0.0
    %2751 = vmatprep.subr.mxu0 0.0
    %2752 = vmatpush2.xpose.msra.mxu0 0.0
    %2753 = vmatprep.subr.mxu0 0.0
    %2754 = vmatpush2.xpose.msra.mxu0 0.0
    %2755 = vmatprep.subr.mxu0 0.0
    %2756 = vmatpush2.xpose.msra.mxu0 0.0
    %2757 = vmatprep.subr.mxu0 0.0
    %2758 = vmatpush2.xpose.msra.mxu0 0.0
    %2759 = vmatprep.subr.mxu0 0.0
    %2760 = vmatpush2.xpose.msra.mxu0 0.0
    %2761 = vmatprep.subr.mxu0 0.0
    %2762 = vmatpush2.xpose.msra.mxu0 0.0
    %2763 = vmatprep.subr.mxu0 0.0
    %2764 = vmatpush2.xpose.msra.mxu0 0.0
    %2765 = vmatprep.mubr.f32.mxu0 0.0
    %2766 = vmatmul.mubr.f32.gmra.mxu0 %v2697
    %v2767 = vpop.f32.mrf.mxu0
    %v2768 = vadd.f32 0.0, %v2767
    %v2769 = vpop.f32.mrf.mxu0
    %2770 = vdwg.mxu0
    %v2771 = vmul.f32 %v2690, 0.35355338
    %v2772 = vmul.f32 %v2768, 0.35355338
    %v2773 = vsel %vm277, %v2771, -inf
    %2774 = vmax.xlane.f32.xlu0 %v2773
    %v2775 = vpop.xlane.xlu0 %2774
    %v2776 = vsel %vm277, %v2772, -inf
    %2777 = vmax.xlane.f32.xlu0 %v2776
    %v2778 = vpop.xlane.xlu0 %2777
    %v2779 = vsub.f32 %v2771, %v2775
    %v2780 = vsub.f32 %v2772, %v2778
    %v2781 = vmul.f32 %v2779, 1.442695
    %v2782 = vpow.pop %v2781
    %v2783 = vmul.f32 %v2780, 1.442695
    %v2784 = vpow.pop %v2783
    %v2785 = vsel %vm277, %v2782, 0.0
    %2786 = vadd.xlane.f32.xlu0 %v2785
    %v2787 = vpop.xlane.xlu0 %2786
    %v2788 = vsel %vm277, %v2784, 0.0
    %2789 = vadd.xlane.f32.xlu0 %v2788
    %v2790 = vpop.xlane.xlu0 %2789
    %v2791 = vrcp.pop %v2787
    %v2792 = vmul.f32 %v2782, %v2791
    %v2793 = vrcp.pop %v2790
    %v2794 = vmul.f32 %v2784, %v2793
    %2795 = vrot.lane.b32.xlu0 %v1942, 80
    %v2796 = vpop.permute.xlu0 %2795
    %v2799 = vsel %vm277, %v2792, 0
    %2801 = vmatprep.subr.mxu0 0.0
    %2802 = vmatpush1.msra.mxu0 0.0
    %2803 = vmatprep.subr.mxu0 0.0
    %2804 = vmatpush1.msra.mxu0 0.0
    %2805 = vmatprep.subr.mxu0 0.0
    %2806 = vmatpush1.msra.mxu0 0.0
    %2807 = vmatprep.subr.mxu0 0.0
    %2808 = vmatpush1.msra.mxu0 0.0
    %2809 = vmatprep.subr.mxu0 0.0
    %2810 = vmatpush1.msra.mxu0 0.0
    %2811 = vmatprep.subr.mxu0 0.0
    %2812 = vmatpush1.msra.mxu0 0.0
    %2813 = vmatprep.subr.mxu0 0.0
    %2814 = vmatpush1.msra.mxu0 0.0
    %2815 = vmatprep.subr.mxu0 0.0
    %2816 = vmatpush1.msra.mxu0 0.0
    %2817 = vmatprep.subr.mxu0 0.0
    %2818 = vmatpush1.msra.mxu0 0.0
    %2819 = vmatprep.subr.mxu0 0.0
    %2820 = vmatpush1.msra.mxu0 0.0
    %2821 = vmatprep.subr.mxu0 0.0
    %2822 = vmatpush1.msra.mxu0 0.0
    %2823 = vmatprep.subr.mxu0 0.0
    %2824 = vmatpush1.msra.mxu0 0.0
    %2825 = vmatprep.subr.mxu0 0.0
    %2826 = vmatpush1.msra.mxu0 0.0
    %2827 = vmatprep.subr.mxu0 0.0
    %2828 = vmatpush1.msra.mxu0 0.0
    %2829 = vmatprep.subr.mxu0 0.0
    %2830 = vmatpush1.msra.mxu0 0.0
    %2831 = vmatprep.subr.mxu0 0.0
    %2832 = vmatpush1.msra.mxu0 %v2796
    %2833 = vmatprep.subr.mxu0 0.0
    %2834 = vmatpush2.msra.mxu0 0.0
    %2835 = vmatprep.subr.mxu0 0.0
    %2836 = vmatpush2.msra.mxu0 0.0
    %2837 = vmatprep.subr.mxu0 0.0
    %2838 = vmatpush2.msra.mxu0 0.0
    %2839 = vmatprep.subr.mxu0 0.0
    %2840 = vmatpush2.msra.mxu0 0.0
    %2841 = vmatprep.subr.mxu0 0.0
    %2842 = vmatpush2.msra.mxu0 0.0
    %2843 = vmatprep.subr.mxu0 0.0
    %2844 = vmatpush2.msra.mxu0 0.0
    %2845 = vmatprep.subr.mxu0 0.0
    %2846 = vmatpush2.msra.mxu0 0.0
    %2847 = vmatprep.subr.mxu0 0.0
    %2848 = vmatpush2.msra.mxu0 0.0
    %2849 = vmatprep.subr.mxu0 0.0
    %2850 = vmatpush2.msra.mxu0 0.0
    %2851 = vmatprep.subr.mxu0 0.0
    %2852 = vmatpush2.msra.mxu0 0.0
    %2853 = vmatprep.subr.mxu0 0.0
    %2854 = vmatpush2.msra.mxu0 0.0
    %2855 = vmatprep.subr.mxu0 0.0
    %2856 = vmatpush2.msra.mxu0 0.0
    %2857 = vmatprep.subr.mxu0 0.0
    %2858 = vmatpush2.msra.mxu0 0.0
    %2859 = vmatprep.subr.mxu0 0.0
    %2860 = vmatpush2.msra.mxu0 0.0
    %2861 = vmatprep.subr.mxu0 0.0
    %2862 = vmatpush2.msra.mxu0 0.0
    %2863 = vmatprep.subr.mxu0 0.0
    %2864 = vmatpush2.msra.mxu0 0.0
    %2865 = vmatprep.mubr.f32.mxu0 0.0
    %2866 = vmatmul.mubr.f32.gmra.mxu0 %v2799
    %v2867 = vpop.f32.mrf.mxu0
    %v2868 = vadd.f32 0.0, %v2867
    %v2869 = vpop.f32.mrf.mxu0
    %2870 = vdwg.mxu0
    %2871 = vrot.lane.b32.xlu0 %v1947, 80
    %v2872 = vpop.permute.xlu0 %2871
    %v2875 = vsel %vm277, %v2794, 0
    %2877 = vmatprep.subr.mxu0 0.0
    %2878 = vmatpush1.msra.mxu0 0.0
    %2879 = vmatprep.subr.mxu0 0.0
    %2880 = vmatpush1.msra.mxu0 0.0
    %2881 = vmatprep.subr.mxu0 0.0
    %2882 = vmatpush1.msra.mxu0 0.0
    %2883 = vmatprep.subr.mxu0 0.0
    %2884 = vmatpush1.msra.mxu0 0.0
    %2885 = vmatprep.subr.mxu0 0.0
    %2886 = vmatpush1.msra.mxu0 0.0
    %2887 = vmatprep.subr.mxu0 0.0
    %2888 = vmatpush1.msra.mxu0 0.0
    %2889 = vmatprep.subr.mxu0 0.0
    %2890 = vmatpush1.msra.mxu0 0.0
    %2891 = vmatprep.subr.mxu0 0.0
    %2892 = vmatpush1.msra.mxu0 0.0
    %2893 = vmatprep.subr.mxu0 0.0
    %2894 = vmatpush1.msra.mxu0 0.0
    %2895 = vmatprep.subr.mxu0 0.0
    %2896 = vmatpush1.msra.mxu0 0.0
    %2897 = vmatprep.subr.mxu0 0.0
    %2898 = vmatpush1.msra.mxu0 0.0
    %2899 = vmatprep.subr.mxu0 0.0
    %2900 = vmatpush1.msra.mxu0 0.0
    %2901 = vmatprep.subr.mxu0 0.0
    %2902 = vmatpush1.msra.mxu0 0.0
    %2903 = vmatprep.subr.mxu0 0.0
    %2904 = vmatpush1.msra.mxu0 0.0
    %2905 = vmatprep.subr.mxu0 0.0
    %2906 = vmatpush1.msra.mxu0 0.0
    %2907 = vmatprep.subr.mxu0 0.0
    %2908 = vmatpush1.msra.mxu0 %v2872
    %2909 = vmatprep.subr.mxu0 0.0
    %2910 = vmatpush2.msra.mxu0 0.0
    %2911 = vmatprep.subr.mxu0 0.0
    %2912 = vmatpush2.msra.mxu0 0.0
    %2913 = vmatprep.subr.mxu0 0.0
    %2914 = vmatpush2.msra.mxu0 0.0
    %2915 = vmatprep.subr.mxu0 0.0
    %2916 = vmatpush2.msra.mxu0 0.0
    %2917 = vmatprep.subr.mxu0 0.0
    %2918 = vmatpush2.msra.mxu0 0.0
    %2919 = vmatprep.subr.mxu0 0.0
    %2920 = vmatpush2.msra.mxu0 0.0
    %2921 = vmatprep.subr.mxu0 0.0
    %2922 = vmatpush2.msra.mxu0 0.0
    %2923 = vmatprep.subr.mxu0 0.0
    %2924 = vmatpush2.msra.mxu0 0.0
    %2925 = vmatprep.subr.mxu0 0.0
    %2926 = vmatpush2.msra.mxu0 0.0
    %2927 = vmatprep.subr.mxu0 0.0
    %2928 = vmatpush2.msra.mxu0 0.0
    %2929 = vmatprep.subr.mxu0 0.0
    %2930 = vmatpush2.msra.mxu0 0.0
    %2931 = vmatprep.subr.mxu0 0.0
    %2932 = vmatpush2.msra.mxu0 0.0
    %2933 = vmatprep.subr.mxu0 0.0
    %2934 = vmatpush2.msra.mxu0 0.0
    %2935 = vmatprep.subr.mxu0 0.0
    %2936 = vmatpush2.msra.mxu0 0.0
    %2937 = vmatprep.subr.mxu0 0.0
    %2938 = vmatpush2.msra.mxu0 0.0
    %2939 = vmatprep.subr.mxu0 0.0
    %2940 = vmatpush2.msra.mxu0 0.0
    %2941 = vmatprep.mubr.f32.mxu0 0.0
    %2942 = vmatmul.mubr.f32.gmra.mxu0 %v2875
    %v2943 = vpop.f32.mrf.mxu0
    %v2944 = vadd.f32 0.0, %v2943
    %v2945 = vpop.f32.mrf.mxu0
    %2946 = vdwg.mxu0
    %2947 = vrot.lane.b32.xlu0 %v1850, 104
    %v2948 = vpop.permute.xlu0 %2947
    %2949 = vrot.lane.b32.xlu0 %v1942, 104
    %v2950 = vpop.permute.xlu0 %2949
    %v2951 = vsel %vm277, %v2948, 0
    %v2953 = vsel %vm277, %v2950, 0
    %2955 = vmatprep.subr.mxu0 0.0
    %2956 = vmatpush1.xpose.msra.mxu0 0.0
    %2957 = vmatprep.subr.mxu0 0.0
    %2958 = vmatpush1.xpose.msra.mxu0 0.0
    %2959 = vmatprep.subr.mxu0 0.0
    %2960 = vmatpush1.xpose.msra.mxu0 0.0
    %2961 = vmatprep.subr.mxu0 0.0
    %2962 = vmatpush1.xpose.msra.mxu0 0.0
    %2963 = vmatprep.subr.mxu0 0.0
    %2964 = vmatpush1.xpose.msra.mxu0 0.0
    %2965 = vmatprep.subr.mxu0 0.0
    %2966 = vmatpush1.xpose.msra.mxu0 0.0
    %2967 = vmatprep.subr.mxu0 0.0
    %2968 = vmatpush1.xpose.msra.mxu0 0.0
    %2969 = vmatprep.subr.mxu0 0.0
    %2970 = vmatpush1.xpose.msra.mxu0 0.0
    %2971 = vmatprep.subr.mxu0 0.0
    %2972 = vmatpush1.xpose.msra.mxu0 0.0
    %2973 = vmatprep.subr.mxu0 0.0
    %2974 = vmatpush1.xpose.msra.mxu0 0.0
    %2975 = vmatprep.subr.mxu0 0.0
    %2976 = vmatpush1.xpose.msra.mxu0 0.0
    %2977 = vmatprep.subr.mxu0 0.0
    %2978 = vmatpush1.xpose.msra.mxu0 0.0
    %2979 = vmatprep.subr.mxu0 0.0
    %2980 = vmatpush1.xpose.msra.mxu0 0.0
    %2981 = vmatprep.subr.mxu0 0.0
    %2982 = vmatpush1.xpose.msra.mxu0 0.0
    %2983 = vmatprep.subr.mxu0 0.0
    %2984 = vmatpush1.xpose.msra.mxu0 0.0
    %2985 = vmatprep.subr.mxu0 0.0
    %2986 = vmatpush1.xpose.msra.mxu0 %v2953
    %2987 = vmatprep.subr.mxu0 0.0
    %2988 = vmatpush2.xpose.msra.mxu0 0.0
    %2989 = vmatprep.subr.mxu0 0.0
    %2990 = vmatpush2.xpose.msra.mxu0 0.0
    %2991 = vmatprep.subr.mxu0 0.0
    %2992 = vmatpush2.xpose.msra.mxu0 0.0
    %2993 = vmatprep.subr.mxu0 0.0
    %2994 = vmatpush2.xpose.msra.mxu0 0.0
    %2995 = vmatprep.subr.mxu0 0.0
    %2996 = vmatpush2.xpose.msra.mxu0 0.0
    %2997 = vmatprep.subr.mxu0 0.0
    %2998 = vmatpush2.xpose.msra.mxu0 0.0
    %2999 = vmatprep.subr.mxu0 0.0
    %3000 = vmatpush2.xpose.msra.mxu0 0.0
    %3001 = vmatprep.subr.mxu0 0.0
    %3002 = vmatpush2.xpose.msra.mxu0 0.0
    %3003 = vmatprep.subr.mxu0 0.0
    %3004 = vmatpush2.xpose.msra.mxu0 0.0
    %3005 = vmatprep.subr.mxu0 0.0
    %3006 = vmatpush2.xpose.msra.mxu0 0.0
    %3007 = vmatprep.subr.mxu0 0.0
    %3008 = vmatpush2.xpose.msra.mxu0 0.0
    %3009 = vmatprep.subr.mxu0 0.0
    %3010 = vmatpush2.xpose.msra.mxu0 0.0
    %3011 = vmatprep.subr.mxu0 0.0
    %3012 = vmatpush2.xpose.msra.mxu0 0.0
    %3013 = vmatprep.subr.mxu0 0.0
    %3014 = vmatpush2.xpose.msra.mxu0 0.0
    %3015 = vmatprep.subr.mxu0 0.0
    %3016 = vmatpush2.xpose.msra.mxu0 0.0
    %3017 = vmatprep.subr.mxu0 0.0
    %3018 = vmatpush2.xpose.msra.mxu0 0.0
    %3019 = vmatprep.mubr.f32.mxu0 0.0
    %3020 = vmatmul.mubr.f32.gmra.mxu0 %v2951
    %v3021 = vpop.f32.mrf.mxu0
    %v3022 = vadd.f32 0.0, %v3021
    %v3023 = vpop.f32.mrf.mxu0
    %3024 = vdwg.mxu0
    %3025 = vrot.lane.b32.xlu0 %v1855, 104
    %v3026 = vpop.permute.xlu0 %3025
    %3027 = vrot.lane.b32.xlu0 %v1947, 104
    %v3028 = vpop.permute.xlu0 %3027
    %v3029 = vsel %vm277, %v3026, 0
    %v3031 = vsel %vm277, %v3028, 0
    %3033 = vmatprep.subr.mxu0 0.0
    %3034 = vmatpush1.xpose.msra.mxu0 0.0
    %3035 = vmatprep.subr.mxu0 0.0
    %3036 = vmatpush1.xpose.msra.mxu0 0.0
    %3037 = vmatprep.subr.mxu0 0.0
    %3038 = vmatpush1.xpose.msra.mxu0 0.0
    %3039 = vmatprep.subr.mxu0 0.0
    %3040 = vmatpush1.xpose.msra.mxu0 0.0
    %3041 = vmatprep.subr.mxu0 0.0
    %3042 = vmatpush1.xpose.msra.mxu0 0.0
    %3043 = vmatprep.subr.mxu0 0.0
    %3044 = vmatpush1.xpose.msra.mxu0 0.0
    %3045 = vmatprep.subr.mxu0 0.0
    %3046 = vmatpush1.xpose.msra.mxu0 0.0
    %3047 = vmatprep.subr.mxu0 0.0
    %3048 = vmatpush1.xpose.msra.mxu0 0.0
    %3049 = vmatprep.subr.mxu0 0.0
    %3050 = vmatpush1.xpose.msra.mxu0 0.0
    %3051 = vmatprep.subr.mxu0 0.0
    %3052 = vmatpush1.xpose.msra.mxu0 0.0
    %3053 = vmatprep.subr.mxu0 0.0
    %3054 = vmatpush1.xpose.msra.mxu0 0.0
    %3055 = vmatprep.subr.mxu0 0.0
    %3056 = vmatpush1.xpose.msra.mxu0 0.0
    %3057 = vmatprep.subr.mxu0 0.0
    %3058 = vmatpush1.xpose.msra.mxu0 0.0
    %3059 = vmatprep.subr.mxu0 0.0
    %3060 = vmatpush1.xpose.msra.mxu0 0.0
    %3061 = vmatprep.subr.mxu0 0.0
    %3062 = vmatpush1.xpose.msra.mxu0 0.0
    %3063 = vmatprep.subr.mxu0 0.0
    %3064 = vmatpush1.xpose.msra.mxu0 %v3031
    %3065 = vmatprep.subr.mxu0 0.0
    %3066 = vmatpush2.xpose.msra.mxu0 0.0
    %3067 = vmatprep.subr.mxu0 0.0
    %3068 = vmatpush2.xpose.msra.mxu0 0.0
    %3069 = vmatprep.subr.mxu0 0.0
    %3070 = vmatpush2.xpose.msra.mxu0 0.0
    %3071 = vmatprep.subr.mxu0 0.0
    %3072 = vmatpush2.xpose.msra.mxu0 0.0
    %3073 = vmatprep.subr.mxu0 0.0
    %3074 = vmatpush2.xpose.msra.mxu0 0.0
    %3075 = vmatprep.subr.mxu0 0.0
    %3076 = vmatpush2.xpose.msra.mxu0 0.0
    %3077 = vmatprep.subr.mxu0 0.0
    %3078 = vmatpush2.xpose.msra.mxu0 0.0
    %3079 = vmatprep.subr.mxu0 0.0
    %3080 = vmatpush2.xpose.msra.mxu0 0.0
    %3081 = vmatprep.subr.mxu0 0.0
    %3082 = vmatpush2.xpose.msra.mxu0 0.0
    %3083 = vmatprep.subr.mxu0 0.0
    %3084 = vmatpush2.xpose.msra.mxu0 0.0
    %3085 = vmatprep.subr.mxu0 0.0
    %3086 = vmatpush2.xpose.msra.mxu0 0.0
    %3087 = vmatprep.subr.mxu0 0.0
    %3088 = vmatpush2.xpose.msra.mxu0 0.0
    %3089 = vmatprep.subr.mxu0 0.0
    %3090 = vmatpush2.xpose.msra.mxu0 0.0
    %3091 = vmatprep.subr.mxu0 0.0
    %3092 = vmatpush2.xpose.msra.mxu0 0.0
    %3093 = vmatprep.subr.mxu0 0.0
    %3094 = vmatpush2.xpose.msra.mxu0 0.0
    %3095 = vmatprep.subr.mxu0 0.0
    %3096 = vmatpush2.xpose.msra.mxu0 0.0
    %3097 = vmatprep.mubr.f32.mxu0 0.0
    %3098 = vmatmul.mubr.f32.gmra.mxu0 %v3029
    %v3099 = vpop.f32.mrf.mxu0
    %v3100 = vadd.f32 0.0, %v3099
    %v3101 = vpop.f32.mrf.mxu0
    %3102 = vdwg.mxu0
    %v3103 = vmul.f32 %v3022, 0.35355338
    %v3104 = vmul.f32 %v3100, 0.35355338
    %v3105 = vsel %vm277, %v3103, -inf
    %3106 = vmax.xlane.f32.xlu0 %v3105
    %v3107 = vpop.xlane.xlu0 %3106
    %v3108 = vsel %vm277, %v3104, -inf
    %3109 = vmax.xlane.f32.xlu0 %v3108
    %v3110 = vpop.xlane.xlu0 %3109
    %v3111 = vsub.f32 %v3103, %v3107
    %v3112 = vsub.f32 %v3104, %v3110
    %v3113 = vmul.f32 %v3111, 1.442695
    %v3114 = vpow.pop %v3113
    %v3115 = vmul.f32 %v3112, 1.442695
    %v3116 = vpow.pop %v3115
    %v3117 = vsel %vm277, %v3114, 0.0
    %3118 = vadd.xlane.f32.xlu0 %v3117
    %v3119 = vpop.xlane.xlu0 %3118
    %v3120 = vsel %vm277, %v3116, 0.0
    %3121 = vadd.xlane.f32.xlu0 %v3120
    %v3122 = vpop.xlane.xlu0 %3121
    %v3123 = vrcp.pop %v3119
    %v3124 = vmul.f32 %v3114, %v3123
    %v3125 = vrcp.pop %v3122
    %v3126 = vmul.f32 %v3116, %v3125
    %3127 = vrot.lane.b32.xlu0 %v1942, 72
    %v3128 = vpop.permute.xlu0 %3127
    %v3131 = vsel %vm277, %v3124, 0
    %3133 = vmatprep.subr.mxu0 0.0
    %3134 = vmatpush1.msra.mxu0 0.0
    %3135 = vmatprep.subr.mxu0 0.0
    %3136 = vmatpush1.msra.mxu0 0.0
    %3137 = vmatprep.subr.mxu0 0.0
    %3138 = vmatpush1.msra.mxu0 0.0
    %3139 = vmatprep.subr.mxu0 0.0
    %3140 = vmatpush1.msra.mxu0 0.0
    %3141 = vmatprep.subr.mxu0 0.0
    %3142 = vmatpush1.msra.mxu0 0.0
    %3143 = vmatprep.subr.mxu0 0.0
    %3144 = vmatpush1.msra.mxu0 0.0
    %3145 = vmatprep.subr.mxu0 0.0
    %3146 = vmatpush1.msra.mxu0 0.0
    %3147 = vmatprep.subr.mxu0 0.0
    %3148 = vmatpush1.msra.mxu0 0.0
    %3149 = vmatprep.subr.mxu0 0.0
    %3150 = vmatpush1.msra.mxu0 0.0
    %3151 = vmatprep.subr.mxu0 0.0
    %3152 = vmatpush1.msra.mxu0 0.0
    %3153 = vmatprep.subr.mxu0 0.0
    %3154 = vmatpush1.msra.mxu0 0.0
    %3155 = vmatprep.subr.mxu0 0.0
    %3156 = vmatpush1.msra.mxu0 0.0
    %3157 = vmatprep.subr.mxu0 0.0
    %3158 = vmatpush1.msra.mxu0 0.0
    %3159 = vmatprep.subr.mxu0 0.0
    %3160 = vmatpush1.msra.mxu0 0.0
    %3161 = vmatprep.subr.mxu0 0.0
    %3162 = vmatpush1.msra.mxu0 0.0
    %3163 = vmatprep.subr.mxu0 0.0
    %3164 = vmatpush1.msra.mxu0 %v3128
    %3165 = vmatprep.subr.mxu0 0.0
    %3166 = vmatpush2.msra.mxu0 0.0
    %3167 = vmatprep.subr.mxu0 0.0
    %3168 = vmatpush2.msra.mxu0 0.0
    %3169 = vmatprep.subr.mxu0 0.0
    %3170 = vmatpush2.msra.mxu0 0.0
    %3171 = vmatprep.subr.mxu0 0.0
    %3172 = vmatpush2.msra.mxu0 0.0
    %3173 = vmatprep.subr.mxu0 0.0
    %3174 = vmatpush2.msra.mxu0 0.0
    %3175 = vmatprep.subr.mxu0 0.0
    %3176 = vmatpush2.msra.mxu0 0.0
    %3177 = vmatprep.subr.mxu0 0.0
    %3178 = vmatpush2.msra.mxu0 0.0
    %3179 = vmatprep.subr.mxu0 0.0
    %3180 = vmatpush2.msra.mxu0 0.0
    %3181 = vmatprep.subr.mxu0 0.0
    %3182 = vmatpush2.msra.mxu0 0.0
    %3183 = vmatprep.subr.mxu0 0.0
    %3184 = vmatpush2.msra.mxu0 0.0
    %3185 = vmatprep.subr.mxu0 0.0
    %3186 = vmatpush2.msra.mxu0 0.0
    %3187 = vmatprep.subr.mxu0 0.0
    %3188 = vmatpush2.msra.mxu0 0.0
    %3189 = vmatprep.subr.mxu0 0.0
    %3190 = vmatpush2.msra.mxu0 0.0
    %3191 = vmatprep.subr.mxu0 0.0
    %3192 = vmatpush2.msra.mxu0 0.0
    %3193 = vmatprep.subr.mxu0 0.0
    %3194 = vmatpush2.msra.mxu0 0.0
    %3195 = vmatprep.subr.mxu0 0.0
    %3196 = vmatpush2.msra.mxu0 0.0
    %3197 = vmatprep.mubr.f32.mxu0 0.0
    %3198 = vmatmul.mubr.f32.gmra.mxu0 %v3131
    %v3199 = vpop.f32.mrf.mxu0
    %v3200 = vadd.f32 0.0, %v3199
    %v3201 = vpop.f32.mrf.mxu0
    %3202 = vdwg.mxu0
    %3203 = vrot.lane.b32.xlu0 %v1947, 72
    %v3204 = vpop.permute.xlu0 %3203
    %v3207 = vsel %vm277, %v3126, 0
    %3209 = vmatprep.subr.mxu0 0.0
    %3210 = vmatpush1.msra.mxu0 0.0
    %3211 = vmatprep.subr.mxu0 0.0
    %3212 = vmatpush1.msra.mxu0 0.0
    %3213 = vmatprep.subr.mxu0 0.0
    %3214 = vmatpush1.msra.mxu0 0.0
    %3215 = vmatprep.subr.mxu0 0.0
    %3216 = vmatpush1.msra.mxu0 0.0
    %3217 = vmatprep.subr.mxu0 0.0
    %3218 = vmatpush1.msra.mxu0 0.0
    %3219 = vmatprep.subr.mxu0 0.0
    %3220 = vmatpush1.msra.mxu0 0.0
    %3221 = vmatprep.subr.mxu0 0.0
    %3222 = vmatpush1.msra.mxu0 0.0
    %3223 = vmatprep.subr.mxu0 0.0
    %3224 = vmatpush1.msra.mxu0 0.0
    %3225 = vmatprep.subr.mxu0 0.0
    %3226 = vmatpush1.msra.mxu0 0.0
    %3227 = vmatprep.subr.mxu0 0.0
    %3228 = vmatpush1.msra.mxu0 0.0
    %3229 = vmatprep.subr.mxu0 0.0
    %3230 = vmatpush1.msra.mxu0 0.0
    %3231 = vmatprep.subr.mxu0 0.0
    %3232 = vmatpush1.msra.mxu0 0.0
    %3233 = vmatprep.subr.mxu0 0.0
    %3234 = vmatpush1.msra.mxu0 0.0
    %3235 = vmatprep.subr.mxu0 0.0
    %3236 = vmatpush1.msra.mxu0 0.0
    %3237 = vmatprep.subr.mxu0 0.0
    %3238 = vmatpush1.msra.mxu0 0.0
    %3239 = vmatprep.subr.mxu0 0.0
    %3240 = vmatpush1.msra.mxu0 %v3204
    %3241 = vmatprep.subr.mxu0 0.0
    %3242 = vmatpush2.msra.mxu0 0.0
    %3243 = vmatprep.subr.mxu0 0.0
    %3244 = vmatpush2.msra.mxu0 0.0
    %3245 = vmatprep.subr.mxu0 0.0
    %3246 = vmatpush2.msra.mxu0 0.0
    %3247 = vmatprep.subr.mxu0 0.0
    %3248 = vmatpush2.msra.mxu0 0.0
    %3249 = vmatprep.subr.mxu0 0.0
    %3250 = vmatpush2.msra.mxu0 0.0
    %3251 = vmatprep.subr.mxu0 0.0
    %3252 = vmatpush2.msra.mxu0 0.0
    %3253 = vmatprep.subr.mxu0 0.0
    %3254 = vmatpush2.msra.mxu0 0.0
    %3255 = vmatprep.subr.mxu0 0.0
    %3256 = vmatpush2.msra.mxu0 0.0
    %3257 = vmatprep.subr.mxu0 0.0
    %3258 = vmatpush2.msra.mxu0 0.0
    %3259 = vmatprep.subr.mxu0 0.0
    %3260 = vmatpush2.msra.mxu0 0.0
    %3261 = vmatprep.subr.mxu0 0.0
    %3262 = vmatpush2.msra.mxu0 0.0
    %3263 = vmatprep.subr.mxu0 0.0
    %3264 = vmatpush2.msra.mxu0 0.0
    %3265 = vmatprep.subr.mxu0 0.0
    %3266 = vmatpush2.msra.mxu0 0.0
    %3267 = vmatprep.subr.mxu0 0.0
    %3268 = vmatpush2.msra.mxu0 0.0
    %3269 = vmatprep.subr.mxu0 0.0
    %3270 = vmatpush2.msra.mxu0 0.0
    %3271 = vmatprep.subr.mxu0 0.0
    %3272 = vmatpush2.msra.mxu0 0.0
    %3273 = vmatprep.mubr.f32.mxu0 0.0
    %3274 = vmatmul.mubr.f32.gmra.mxu0 %v3207
    %v3275 = vpop.f32.mrf.mxu0
    %v3276 = vadd.f32 0.0, %v3275
    %v3277 = vpop.f32.mrf.mxu0
    %3278 = vdwg.mxu0
    %3281 = vrot.lane.b32.xlu0 %v2536, 8
    %v3282 = vpop.permute.xlu0 %3281
    %3283 = vrot.lane.b32.xlu0 %v2612, 8
    %v3284 = vpop.permute.xlu0 %3283
    %3289 = vrot.lane.b32.xlu0 %v2868, 16
    %v3290 = vpop.permute.xlu0 %3289
    %3291 = vrot.lane.b32.xlu0 %v2944, 16
    %v3292 = vpop.permute.xlu0 %3291
    %3297 = vrot.lane.b32.xlu0 %v3200, 24
    %v3298 = vpop.permute.xlu0 %3297
    %3299 = vrot.lane.b32.xlu0 %v3276, 24
    %v3300 = vpop.permute.xlu0 %3299
    %v3303 = vsel %vm277, %v2204, %v3282
    %v3304 = vsel %vm277, %v2280, %v3284
    %v3305 = vsel %vm1627, %v3303, %v3290
    %v3306 = vsel %vm1627, %v3304, %v3292
    %v3307 = vsel %vm1630, %v3305, %v3298
    %v3308 = vsel %vm1630, %v3306, %v3300
    %v3310 = vlaneseq
    %v3311 = vshrl.u32 %v3310, 7
    %v3312 = vsub.s32 0, %v3311
    %v3313 = vrot.slane %v1954, %v3312
    %v3316 = vsel %vm133, %v3307, 0
    %v3319 = vsel %vm133, %v3308, 0
    %3321 = vmatprep.subr.mxu0 0.0
    %3322 = vmatpush1.msra.mxu0 0.0
    %3323 = vmatprep.subr.mxu0 0.0
    %3324 = vmatpush1.msra.mxu0 0.0
    %3325 = vmatprep.subr.mxu0 0.0
    %3326 = vmatpush1.msra.mxu0 0.0
    %3327 = vmatprep.subr.mxu0 0.0
    %3328 = vmatpush1.msra.mxu0 0.0
    %3329 = vmatprep.subr.mxu0 0.0
    %3330 = vmatpush1.msra.mxu0 0.0
    %3331 = vmatprep.subr.mxu0 0.0
    %3332 = vmatpush1.msra.mxu0 0.0
    %3333 = vmatprep.subr.mxu0 0.0
    %3334 = vmatpush1.msra.mxu0 0.0
    %3335 = vmatprep.subr.mxu0 0.0
    %3336 = vmatpush1.msra.mxu0 0.0
    %3337 = vmatprep.subr.mxu0 0.0
    %3338 = vmatpush1.msra.mxu0 0.0
    %3339 = vmatprep.subr.mxu0 0.0
    %3340 = vmatpush1.msra.mxu0 0.0
    %3341 = vmatprep.subr.mxu0 0.0
    %3342 = vmatpush1.msra.mxu0 0.0
    %3343 = vmatprep.subr.mxu0 0.0
    %3344 = vmatpush1.msra.mxu0 0.0
    %3345 = vmatprep.subr.mxu0 0.0
    %3346 = vmatpush1.msra.mxu0 %v1953
    %3347 = vmatprep.subr.mxu0 0.0
    %3348 = vmatpush1.msra.mxu0 %v1952
    %3349 = vmatprep.subr.mxu0 0.0
    %3350 = vmatpush1.msra.mxu0 %v1951
    %3351 = vmatprep.subr.mxu0 0.0
    %3352 = vmatpush1.msra.mxu0 %v1950
    %3353 = vmatprep.subr.mxu0 0.0
    %3354 = vmatpush2.msra.mxu0 0.0
    %3355 = vmatprep.subr.mxu0 0.0
    %3356 = vmatpush2.msra.mxu0 0.0
    %3357 = vmatprep.subr.mxu0 0.0
    %3358 = vmatpush2.msra.mxu0 0.0
    %3359 = vmatprep.subr.mxu0 0.0
    %3360 = vmatpush2.msra.mxu0 0.0
    %3361 = vmatprep.subr.mxu0 0.0
    %3362 = vmatpush2.msra.mxu0 0.0
    %3363 = vmatprep.subr.mxu0 0.0
    %3364 = vmatpush2.msra.mxu0 0.0
    %3365 = vmatprep.subr.mxu0 0.0
    %3366 = vmatpush2.msra.mxu0 0.0
    %3367 = vmatprep.subr.mxu0 0.0
    %3368 = vmatpush2.msra.mxu0 0.0
    %3369 = vmatprep.subr.mxu0 0.0
    %3370 = vmatpush2.msra.mxu0 0.0
    %3371 = vmatprep.subr.mxu0 0.0
    %3372 = vmatpush2.msra.mxu0 0.0
    %3373 = vmatprep.subr.mxu0 0.0
    %3374 = vmatpush2.msra.mxu0 0.0
    %3375 = vmatprep.subr.mxu0 0.0
    %3376 = vmatpush2.msra.mxu0 0.0
    %3377 = vmatprep.subr.mxu0 0.0
    %3378 = vmatpush2.msra.mxu0 0.0
    %3379 = vmatprep.subr.mxu0 0.0
    %3380 = vmatpush2.msra.mxu0 0.0
    %3381 = vmatprep.subr.mxu0 0.0
    %3382 = vmatpush2.msra.mxu0 0.0
    %3383 = vmatprep.subr.mxu0 0.0
    %3384 = vmatpush2.msra.mxu0 0.0
    %3385 = vmatprep.mubr.f32.mxu0 0.0
    %3386 = vmatmul.mubr.f32.gmra.mxu0 %v3316
    %v3387 = vpop.f32.mrf.mxu0
    %v3388 = vadd.f32 %v3313, %v3387
    %v3389 = vpop.f32.mrf.mxu0
    %3390 = vmatprep.mubr.f32.mxu0 0.0
    %3391 = vmatmul.mubr.f32.gmra.mxu0 %v3319
    %v3392 = vpop.f32.mrf.mxu0
    %v3393 = vadd.f32 %v3313, %v3392
    %v3394 = vpop.f32.mrf.mxu0
    %3395 = vdwg.mxu0
    %v3396 = vadd.f32 %v1720, %v3388
    %v3397 = vadd.f32 %v1721, %v3393
    %v3398 = vld [vmem:[%s16] sm:$0x1]
    %v3399 = vld [vmem:[%s17] sm:$0x1]
    %v3400 = vsel %vm133, %v3396, 0.0
    %3401 = vadd.xlane.f32.xlu0 %v3400
    %v3402 = vpop.xlane.xlu0 %3401
    %v3403 = vsel %vm133, %v3397, 0.0
    %3404 = vadd.xlane.f32.xlu0 %v3403
    %v3405 = vpop.xlane.xlu0 %3404
    %v3406 = vmul.f32 %v3402, %v140
    %v3407 = vmul.f32 %v3405, %v140
    %v3408 = vsub.f32 %v3396, %v3406
    %v3409 = vsub.f32 %v3397, %v3407
    %v3410 = vmul.f32 %v3408, %v3408
    %v3411 = vmul.f32 %v3409, %v3409
    %v3412 = vsel %vm133, %v3410, 0.0
    %3413 = vadd.xlane.f32.xlu0 %v3412
    %v3414 = vpop.xlane.xlu0 %3413
    %v3415 = vsel %vm133, %v3411, 0.0
    %3416 = vadd.xlane.f32.xlu0 %v3415
    %v3417 = vpop.xlane.xlu0 %3416
    %v3418 = vmul.f32 %v3414, %v140
    %v3419 = vmul.f32 %v3417, %v140
    %v3420 = vadd.f32 %v3418, 1e-05
    %v3421 = vadd.f32 %v3419, 1e-05
    %v3422 = vrsqrt.pop %v3420
    %v3423 = vrsqrt.pop %v3421
    %v3424 = vmul.f32 %v3408, %v3422
    %v3425 = vmul.f32 %v3409, %v3423
    %v3427 = vlaneseq
    %v3428 = vshrl.u32 %v3427, 7
    %v3429 = vsub.s32 0, %v3428
    %v3430 = vrot.slane %v3398, %v3429
    %v3432 = vmul.f32 %v3424, %v3430
    %v3433 = vmul.f32 %v3425, %v3430
    %v3435 = vlaneseq
    %v3436 = vshrl.u32 %v3435, 7
    %v3437 = vsub.s32 0, %v3436
    %v3438 = vrot.slane %v3399, %v3437
    %v3440 = vadd.f32 %v3432, %v3438
    %v3441 = vadd.f32 %v3433, %v3438
    %v3442 = vld [vmem:[#allocation8] sm:$0xff]
    %v3443 = vld [vmem:[#allocation8 + $0x8] sm:$0xff]
    %v3444 = vld [vmem:[#allocation8 + $0x10] sm:$0xff]
    %v3445 = vld [vmem:[#allocation8 + $0x18] sm:$0xff]
    %v3446 = vld [vmem:[%s19] sm:$0x1]
    %v3448 = vlaneseq
    %v3449 = vshrl.u32 %v3448, 7
    %v3450 = vsub.s32 0, %v3449
    %v3451 = vrot.slane %v3446, %v3450
    %v3454 = vsel %vm133, %v3440, 0
    %v3457 = vsel %vm133, %v3441, 0
    %3459 = vmatprep.subr.mxu0 0.0
    %3460 = vmatpush1.msra.mxu0 0.0
    %3461 = vmatprep.subr.mxu0 0.0
    %3462 = vmatpush1.msra.mxu0 0.0
    %3463 = vmatprep.subr.mxu0 0.0
    %3464 = vmatpush1.msra.mxu0 0.0
    %3465 = vmatprep.subr.mxu0 0.0
    %3466 = vmatpush1.msra.mxu0 0.0
    %3467 = vmatprep.subr.mxu0 0.0
    %3468 = vmatpush1.msra.mxu0 0.0
    %3469 = vmatprep.subr.mxu0 0.0
    %3470 = vmatpush1.msra.mxu0 0.0
    %3471 = vmatprep.subr.mxu0 0.0
    %3472 = vmatpush1.msra.mxu0 0.0
    %3473 = vmatprep.subr.mxu0 0.0
    %3474 = vmatpush1.msra.mxu0 0.0
    %3475 = vmatprep.subr.mxu0 0.0
    %3476 = vmatpush1.msra.mxu0 0.0
    %3477 = vmatprep.subr.mxu0 0.0
    %3478 = vmatpush1.msra.mxu0 0.0
    %3479 = vmatprep.subr.mxu0 0.0
    %3480 = vmatpush1.msra.mxu0 0.0
    %3481 = vmatprep.subr.mxu0 0.0
    %3482 = vmatpush1.msra.mxu0 0.0
    %3483 = vmatprep.subr.mxu0 0.0
    %3484 = vmatpush1.msra.mxu0 %v3445
    %3485 = vmatprep.subr.mxu0 0.0
    %3486 = vmatpush1.msra.mxu0 %v3444
    %3487 = vmatprep.subr.mxu0 0.0
    %3488 = vmatpush1.msra.mxu0 %v3443
    %3489 = vmatprep.subr.mxu0 0.0
    %3490 = vmatpush1.msra.mxu0 %v3442
    %3491 = vmatprep.subr.mxu0 0.0
    %3492 = vmatpush2.msra.mxu0 0.0
    %3493 = vmatprep.subr.mxu0 0.0
    %3494 = vmatpush2.msra.mxu0 0.0
    %3495 = vmatprep.subr.mxu0 0.0
    %3496 = vmatpush2.msra.mxu0 0.0
    %3497 = vmatprep.subr.mxu0 0.0
    %3498 = vmatpush2.msra.mxu0 0.0
    %3499 = vmatprep.subr.mxu0 0.0
    %3500 = vmatpush2.msra.mxu0 0.0
    %3501 = vmatprep.subr.mxu0 0.0
    %3502 = vmatpush2.msra.mxu0 0.0
    %3503 = vmatprep.subr.mxu0 0.0
    %3504 = vmatpush2.msra.mxu0 0.0
    %3505 = vmatprep.subr.mxu0 0.0
    %3506 = vmatpush2.msra.mxu0 0.0
    %3507 = vmatprep.subr.mxu0 0.0
    %3508 = vmatpush2.msra.mxu0 0.0
    %3509 = vmatprep.subr.mxu0 0.0
    %3510 = vmatpush2.msra.mxu0 0.0
    %3511 = vmatprep.subr.mxu0 0.0
    %3512 = vmatpush2.msra.mxu0 0.0
    %3513 = vmatprep.subr.mxu0 0.0
    %3514 = vmatpush2.msra.mxu0 0.0
    %3515 = vmatprep.subr.mxu0 0.0
    %3516 = vmatpush2.msra.mxu0 0.0
    %3517 = vmatprep.subr.mxu0 0.0
    %3518 = vmatpush2.msra.mxu0 0.0
    %3519 = vmatprep.subr.mxu0 0.0
    %3520 = vmatpush2.msra.mxu0 0.0
    %3521 = vmatprep.subr.mxu0 0.0
    %3522 = vmatpush2.msra.mxu0 0.0
    %3523 = vmatprep.mubr.f32.mxu0 0.0
    %3524 = vmatmul.mubr.f32.gmra.mxu0 %v3454
    %v3525 = vpop.f32.mrf.mxu0
    %v3526 = vadd.f32 %v3451, %v3525
    %v3527 = vpop.f32.mrf.mxu0
    %3528 = vmatprep.mubr.f32.mxu0 0.0
    %3529 = vmatmul.mubr.f32.gmra.mxu0 %v3457
    %v3530 = vpop.f32.mrf.mxu0
    %v3531 = vadd.f32 %v3451, %v3530
    %v3532 = vpop.f32.mrf.mxu0
    %3533 = vdwg.mxu0
    %v3534 = vmul.f32 %v3526, 0.5
    %v3535 = vmul.f32 %v3531, 0.5
    %v3536 = vmul.f32 %v3526, 0.70710677
    %v3537 = vmul.f32 %v3531, 0.70710677
    %v3538 = vand.u32 2147483647, %v3536
    %v3539 = vand.u32 2147483647, %v3537
    %v3540 = vmul.f32 %v3538, 0.3275911
    %v3541 = vmul.f32 %v3539, 0.3275911
    %v3542 = vadd.f32 %v3540, 1.0
    %v3543 = vadd.f32 %v3541, 1.0
    %v3544 = vrcp.pop %v3542
    %v3545 = vmul.f32 1.0, %v3544
    %v3546 = vrcp.pop %v3543
    %v3547 = vmul.f32 1.0, %v3546
    %v3548 = vmul.f32 %v3545, 1.0614054
    %v3549 = vmul.f32 %v3547, 1.0614054
    %v3550 = vadd.f32 %v3548, -1.4531521
    %v3551 = vadd.f32 %v3549, -1.4531521
    %v3552 = vmul.f32 %v3550, %v3545
    %v3553 = vmul.f32 %v3551, %v3547
    %v3554 = vadd.f32 %v3552, 1.4214138
    %v3555 = vadd.f32 %v3553, 1.4214138
    %v3556 = vmul.f32 %v3554, %v3545
    %v3557 = vmul.f32 %v3555, %v3547
    %v3558 = vadd.f32 %v3556, -0.28449672
    %v3559 = vadd.f32 %v3557, -0.28449672
    %v3560 = vmul.f32 %v3558, %v3545
    %v3561 = vmul.f32 %v3559, %v3547
    %v3562 = vadd.f32 %v3560, 0.2548296
    %v3563 = vadd.f32 %v3561, 0.2548296
    %v3564 = vmul.f32 %v3562, %v3545
    %v3565 = vmul.f32 %v3563, %v3547
    %v3566 = vsub.f32 0.0, %v3538
    %v3567 = vsub.f32 0.0, %v3539
    %v3568 = vmul.f32 %v3566, %v3538
    %v3569 = vmul.f32 %v3567, %v3539
    %v3570 = vmul.f32 %v3568, 1.442695
    %v3571 = vpow.pop %v3570
    %v3572 = vmul.f32 %v3569, 1.442695
    %v3573 = vpow.pop %v3572
    %v3574 = vmul.f32 %v3564, %v3571
    %v3575 = vmul.f32 %v3565, %v3573
    %v3576 = vsub.f32 1.0, %v3574
    %v3577 = vsub.f32 1.0, %v3575
    %vm3578 = vcmp.ge.f32.partialorder %v3536, 0.0
    %vm3579 = vcmp.ge.f32.partialorder %v3537, 0.0
    %v3580 = vsub.f32 0.0, %v3576
    %v3581 = vsub.f32 0.0, %v3577
    %v3582 = vsel %vm3578, %v3576, %v3580
    %v3583 = vsel %vm3579, %v3577, %v3581
    %v3584 = vadd.f32 %v3582, 1.0
    %v3585 = vadd.f32 %v3583, 1.0
    %v3586 = vmul.f32 %v3534, %v3584
    %v3587 = vmul.f32 %v3535, %v3585
    %v3588 = vld [vmem:[%s20] sm:$0xff]
    %v3589 = vld [vmem:[%s20 + $0x8] sm:$0xff]
    %v3590 = vld [vmem:[%s20 + $0x10] sm:$0xff]
    %v3591 = vld [vmem:[%s20 + $0x18] sm:$0xff]
    %v3592 = vld [vmem:[%s20 + $0x20] sm:$0xff]
    %v3593 = vld [vmem:[%s20 + $0x28] sm:$0xff]
    %v3594 = vld [vmem:[%s20 + $0x30] sm:$0xff]
    %v3595 = vld [vmem:[%s20 + $0x38] sm:$0xff]
    %v3596 = vld [vmem:[%s20 + $0x40] sm:$0xff]
    %v3597 = vld [vmem:[%s20 + $0x48] sm:$0xff]
    %v3598 = vld [vmem:[%s20 + $0x50] sm:$0xff]
    %v3599 = vld [vmem:[%s20 + $0x58] sm:$0xff]
    %v3600 = vld [vmem:[%s20 + $0x60] sm:$0xff]
    %v3601 = vld [vmem:[%s20 + $0x68] sm:$0xff]
    %v3602 = vld [vmem:[%s20 + $0x70] sm:$0xff]
    %v3603 = vld [vmem:[%s20 + $0x78] sm:$0xff]
    %v3604 = vld [vmem:[%s21] sm:$0x1]
    %v3606 = vlaneseq
    %v3607 = vshrl.u32 %v3606, 7
    %v3608 = vsub.s32 0, %v3607
    %v3609 = vrot.slane %v3604, %v3608
    %3611 = vmatprep.subr.mxu0 0.0
    %3612 = vmatpush1.msra.mxu0 %v3603
    %3613 = vmatprep.subr.mxu0 0.0
    %3614 = vmatpush1.msra.mxu0 %v3602
    %3615 = vmatprep.subr.mxu0 0.0
    %3616 = vmatpush1.msra.mxu0 %v3601
    %3617 = vmatprep.subr.mxu0 0.0
    %3618 = vmatpush1.msra.mxu0 %v3600
    %3619 = vmatprep.subr.mxu0 0.0
    %3620 = vmatpush1.msra.mxu0 %v3599
    %3621 = vmatprep.subr.mxu0 0.0
    %3622 = vmatpush1.msra.mxu0 %v3598
    %3623 = vmatprep.subr.mxu0 0.0
    %3624 = vmatpush1.msra.mxu0 %v3597
    %3625 = vmatprep.subr.mxu0 0.0
    %3626 = vmatpush1.msra.mxu0 %v3596
    %3627 = vmatprep.subr.mxu0 0.0
    %3628 = vmatpush1.msra.mxu0 %v3595
    %3629 = vmatprep.subr.mxu0 0.0
    %3630 = vmatpush1.msra.mxu0 %v3594
    %3631 = vmatprep.subr.mxu0 0.0
    %3632 = vmatpush1.msra.mxu0 %v3593
    %3633 = vmatprep.subr.mxu0 0.0
    %3634 = vmatpush1.msra.mxu0 %v3592
    %3635 = vmatprep.subr.mxu0 0.0
    %3636 = vmatpush1.msra.mxu0 %v3591
    %3637 = vmatprep.subr.mxu0 0.0
    %3638 = vmatpush1.msra.mxu0 %v3590
    %3639 = vmatprep.subr.mxu0 0.0
    %3640 = vmatpush1.msra.mxu0 %v3589
    %3641 = vmatprep.subr.mxu0 0.0
    %3642 = vmatpush1.msra.mxu0 %v3588
    %3643 = vmatprep.subr.mxu0 0.0
    %3644 = vmatpush2.msra.mxu0 0.0
    %3645 = vmatprep.subr.mxu0 0.0
    %3646 = vmatpush2.msra.mxu0 0.0
    %3647 = vmatprep.subr.mxu0 0.0
    %3648 = vmatpush2.msra.mxu0 0.0
    %3649 = vmatprep.subr.mxu0 0.0
    %3650 = vmatpush2.msra.mxu0 0.0
    %3651 = vmatprep.subr.mxu0 0.0
    %3652 = vmatpush2.msra.mxu0 0.0
    %3653 = vmatprep.subr.mxu0 0.0
    %3654 = vmatpush2.msra.mxu0 0.0
    %3655 = vmatprep.subr.mxu0 0.0
    %3656 = vmatpush2.msra.mxu0 0.0
    %3657 = vmatprep.subr.mxu0 0.0
    %3658 = vmatpush2.msra.mxu0 0.0
    %3659 = vmatprep.subr.mxu0 0.0
    %3660 = vmatpush2.msra.mxu0 0.0
    %3661 = vmatprep.subr.mxu0 0.0
    %3662 = vmatpush2.msra.mxu0 0.0
    %3663 = vmatprep.subr.mxu0 0.0
    %3664 = vmatpush2.msra.mxu0 0.0
    %3665 = vmatprep.subr.mxu0 0.0
    %3666 = vmatpush2.msra.mxu0 0.0
    %3667 = vmatprep.subr.mxu0 0.0
    %3668 = vmatpush2.msra.mxu0 0.0
    %3669 = vmatprep.subr.mxu0 0.0
    %3670 = vmatpush2.msra.mxu0 0.0
    %3671 = vmatprep.subr.mxu0 0.0
    %3672 = vmatpush2.msra.mxu0 0.0
    %3673 = vmatprep.subr.mxu0 0.0
    %3674 = vmatpush2.msra.mxu0 0.0
    %3675 = vmatprep.mubr.f32.mxu0 0.0
    %3676 = vmatmul.mubr.f32.gmra.mxu0 %v3586
    %v3677 = vpop.f32.mrf.mxu0
    %v3678 = vadd.f32 %v3609, %v3677
    %v3679 = vpop.f32.mrf.mxu0
    %3680 = vmatprep.mubr.f32.mxu0 0.0
    %3681 = vmatmul.mubr.f32.gmra.mxu0 %v3587
    %v3682 = vpop.f32.mrf.mxu0
    %v3683 = vadd.f32 %v3609, %v3682
    %v3684 = vpop.f32.mrf.mxu0
    %3685 = vdwg.mxu0
    %v3686 = vadd.f32 %v3396, %v3678
    %v3687 = vadd.f32 %v3397, %v3683
    %s3688 = scalar_lea.vmem %s2, 1
    %v3689 = vld [vmem:[%s3688] sm:$0x1]
    %s3690 = scalar_lea.vmem [#allocation7], 1
    %v3691 = vld [vmem:[%s3690] sm:$0x1]
    %v3692 = vsel %vm133, %v3686, 0.0
    %3693 = vadd.xlane.f32.xlu0 %v3692
    %v3694 = vpop.xlane.xlu0 %3693
    %v3695 = vsel %vm133, %v3687, 0.0
    %3696 = vadd.xlane.f32.xlu0 %v3695
    %v3697 = vpop.xlane.xlu0 %3696
    %v3698 = vmul.f32 %v3694, %v140
    %v3699 = vmul.f32 %v3697, %v140
    %v3700 = vsub.f32 %v3686, %v3698
    %v3701 = vsub.f32 %v3687, %v3699
    %v3702 = vmul.f32 %v3700, %v3700
    %v3703 = vmul.f32 %v3701, %v3701
    %v3704 = vsel %vm133, %v3702, 0.0
    %3705 = vadd.xlane.f32.xlu0 %v3704
    %v3706 = vpop.xlane.xlu0 %3705
    %v3707 = vsel %vm133, %v3703, 0.0
    %3708 = vadd.xlane.f32.xlu0 %v3707
    %v3709 = vpop.xlane.xlu0 %3708
    %v3710 = vmul.f32 %v3706, %v140
    %v3711 = vmul.f32 %v3709, %v140
    %v3712 = vadd.f32 %v3710, 1e-05
    %v3713 = vadd.f32 %v3711, 1e-05
    %v3714 = vrsqrt.pop %v3712
    %v3715 = vrsqrt.pop %v3713
    %v3716 = vmul.f32 %v3700, %v3714
    %v3717 = vmul.f32 %v3701, %v3715
    %v3719 = vlaneseq
    %v3720 = vshrl.u32 %v3719, 7
    %v3721 = vsub.s32 0, %v3720
    %v3722 = vrot.slane %v3689, %v3721
    %v3724 = vmul.f32 %v3716, %v3722
    %v3725 = vmul.f32 %v3717, %v3722
    %v3727 = vlaneseq
    %v3728 = vshrl.u32 %v3727, 7
    %v3729 = vsub.s32 0, %v3728
    %v3730 = vrot.slane %v3691, %v3729
    %v3732 = vadd.f32 %v3724, %v3730
    %v3733 = vadd.f32 %v3725, %v3730
    %s3734 = scalar_lea.vmem %s4, 32
    %v3735 = vld [vmem:[%s3734] sm:$0xff]
    %v3736 = vld [vmem:[%s3734 + $0x8] sm:$0xff]
    %v3737 = vld [vmem:[%s3734 + $0x10] sm:$0xff]
    %v3738 = vld [vmem:[%s3734 + $0x18] sm:$0xff]
    %s3739 = scalar_lea.vmem %s5, 1
    %v3740 = vld [vmem:[%s3739] sm:$0x1]
    %v3742 = vlaneseq
    %v3743 = vshrl.u32 %v3742, 7
    %v3744 = vsub.s32 0, %v3743
    %v3745 = vrot.slane %v3740, %v3744
    %v3748 = vsel %vm133, %v3732, 0
    %v3751 = vsel %vm133, %v3733, 0
    %3753 = vmatprep.subr.mxu0 0.0
    %3754 = vmatpush1.msra.mxu0 0.0
    %3755 = vmatprep.subr.mxu0 0.0
    %3756 = vmatpush1.msra.mxu0 0.0
    %3757 = vmatprep.subr.mxu0 0.0
    %3758 = vmatpush1.msra.mxu0 0.0
    %3759 = vmatprep.subr.mxu0 0.0
    %3760 = vmatpush1.msra.mxu0 0.0
    %3761 = vmatprep.subr.mxu0 0.0
    %3762 = vmatpush1.msra.mxu0 0.0
    %3763 = vmatprep.subr.mxu0 0.0
    %3764 = vmatpush1.msra.mxu0 0.0
    %3765 = vmatprep.subr.mxu0 0.0
    %3766 = vmatpush1.msra.mxu0 0.0
    %3767 = vmatprep.subr.mxu0 0.0
    %3768 = vmatpush1.msra.mxu0 0.0
    %3769 = vmatprep.subr.mxu0 0.0
    %3770 = vmatpush1.msra.mxu0 0.0
    %3771 = vmatprep.subr.mxu0 0.0
    %3772 = vmatpush1.msra.mxu0 0.0
    %3773 = vmatprep.subr.mxu0 0.0
    %3774 = vmatpush1.msra.mxu0 0.0
    %3775 = vmatprep.subr.mxu0 0.0
    %3776 = vmatpush1.msra.mxu0 0.0
    %3777 = vmatprep.subr.mxu0 0.0
    %3778 = vmatpush1.msra.mxu0 %v3738
    %3779 = vmatprep.subr.mxu0 0.0
    %3780 = vmatpush1.msra.mxu0 %v3737
    %3781 = vmatprep.subr.mxu0 0.0
    %3782 = vmatpush1.msra.mxu0 %v3736
    %3783 = vmatprep.subr.mxu0 0.0
    %3784 = vmatpush1.msra.mxu0 %v3735
    %3785 = vmatprep.subr.mxu0 0.0
    %3786 = vmatpush2.msra.mxu0 0.0
    %3787 = vmatprep.subr.mxu0 0.0
    %3788 = vmatpush2.msra.mxu0 0.0
    %3789 = vmatprep.subr.mxu0 0.0
    %3790 = vmatpush2.msra.mxu0 0.0
    %3791 = vmatprep.subr.mxu0 0.0
    %3792 = vmatpush2.msra.mxu0 0.0
    %3793 = vmatprep.subr.mxu0 0.0
    %3794 = vmatpush2.msra.mxu0 0.0
    %3795 = vmatprep.subr.mxu0 0.0
    %3796 = vmatpush2.msra.mxu0 0.0
    %3797 = vmatprep.subr.mxu0 0.0
    %3798 = vmatpush2.msra.mxu0 0.0
    %3799 = vmatprep.subr.mxu0 0.0
    %3800 = vmatpush2.msra.mxu0 0.0
    %3801 = vmatprep.subr.mxu0 0.0
    %3802 = vmatpush2.msra.mxu0 0.0
    %3803 = vmatprep.subr.mxu0 0.0
    %3804 = vmatpush2.msra.mxu0 0.0
    %3805 = vmatprep.subr.mxu0 0.0
    %3806 = vmatpush2.msra.mxu0 0.0
    %3807 = vmatprep.subr.mxu0 0.0
    %3808 = vmatpush2.msra.mxu0 0.0
    %3809 = vmatprep.subr.mxu0 0.0
    %3810 = vmatpush2.msra.mxu0 0.0
    %3811 = vmatprep.subr.mxu0 0.0
    %3812 = vmatpush2.msra.mxu0 0.0
    %3813 = vmatprep.subr.mxu0 0.0
    %3814 = vmatpush2.msra.mxu0 0.0
    %3815 = vmatprep.subr.mxu0 0.0
    %3816 = vmatpush2.msra.mxu0 0.0
    %3817 = vmatprep.mubr.f32.mxu0 0.0
    %3818 = vmatmul.mubr.f32.gmra.mxu0 %v3748
    %v3819 = vpop.f32.mrf.mxu0
    %v3820 = vadd.f32 %v3745, %v3819
    %v3821 = vpop.f32.mrf.mxu0
    %3822 = vmatprep.mubr.f32.mxu0 0.0
    %3823 = vmatmul.mubr.f32.gmra.mxu0 %v3751
    %v3824 = vpop.f32.mrf.mxu0
    %v3825 = vadd.f32 %v3745, %v3824
    %v3826 = vpop.f32.mrf.mxu0
    %3827 = vdwg.mxu0
    %s3828 = scalar_lea.vmem %s6, 32
    %v3829 = vld [vmem:[%s3828] sm:$0xff]
    %v3830 = vld [vmem:[%s3828 + $0x8] sm:$0xff]
    %v3831 = vld [vmem:[%s3828 + $0x10] sm:$0xff]
    %v3832 = vld [vmem:[%s3828 + $0x18] sm:$0xff]
    %s3833 = scalar_lea.vmem %s7, 1
    %v3834 = vld [vmem:[%s3833] sm:$0x1]
    %3836 = vrot.lane.b32.xlu0 %v3820, 96
    %v3837 = vpop.permute.xlu0 %3836
    %v3838 = vsel %vm277, %v3820, 0
    %v3840 = vsel %vm277, %v3837, 0
    %3842 = vmatprep.subr.mxu0 0.0
    %3843 = vmatpush1.xpose.msra.mxu0 0.0
    %3844 = vmatprep.subr.mxu0 0.0
    %3845 = vmatpush1.xpose.msra.mxu0 0.0
    %3846 = vmatprep.subr.mxu0 0.0
    %3847 = vmatpush1.xpose.msra.mxu0 0.0
    %3848 = vmatprep.subr.mxu0 0.0
    %3849 = vmatpush1.xpose.msra.mxu0 0.0
    %3850 = vmatprep.subr.mxu0 0.0
    %3851 = vmatpush1.xpose.msra.mxu0 0.0
    %3852 = vmatprep.subr.mxu0 0.0
    %3853 = vmatpush1.xpose.msra.mxu0 0.0
    %3854 = vmatprep.subr.mxu0 0.0
    %3855 = vmatpush1.xpose.msra.mxu0 0.0
    %3856 = vmatprep.subr.mxu0 0.0
    %3857 = vmatpush1.xpose.msra.mxu0 0.0
    %3858 = vmatprep.subr.mxu0 0.0
    %3859 = vmatpush1.xpose.msra.mxu0 0.0
    %3860 = vmatprep.subr.mxu0 0.0
    %3861 = vmatpush1.xpose.msra.mxu0 0.0
    %3862 = vmatprep.subr.mxu0 0.0
    %3863 = vmatpush1.xpose.msra.mxu0 0.0
    %3864 = vmatprep.subr.mxu0 0.0
    %3865 = vmatpush1.xpose.msra.mxu0 0.0
    %3866 = vmatprep.subr.mxu0 0.0
    %3867 = vmatpush1.xpose.msra.mxu0 0.0
    %3868 = vmatprep.subr.mxu0 0.0
    %3869 = vmatpush1.xpose.msra.mxu0 0.0
    %3870 = vmatprep.subr.mxu0 0.0
    %3871 = vmatpush1.xpose.msra.mxu0 0.0
    %3872 = vmatprep.subr.mxu0 0.0
    %3873 = vmatpush1.xpose.msra.mxu0 %v3840
    %3874 = vmatprep.subr.mxu0 0.0
    %3875 = vmatpush2.xpose.msra.mxu0 0.0
    %3876 = vmatprep.subr.mxu0 0.0
    %3877 = vmatpush2.xpose.msra.mxu0 0.0
    %3878 = vmatprep.subr.mxu0 0.0
    %3879 = vmatpush2.xpose.msra.mxu0 0.0
    %3880 = vmatprep.subr.mxu0 0.0
    %3881 = vmatpush2.xpose.msra.mxu0 0.0
    %3882 = vmatprep.subr.mxu0 0.0
    %3883 = vmatpush2.xpose.msra.mxu0 0.0
    %3884 = vmatprep.subr.mxu0 0.0
    %3885 = vmatpush2.xpose.msra.mxu0 0.0
    %3886 = vmatprep.subr.mxu0 0.0
    %3887 = vmatpush2.xpose.msra.mxu0 0.0
    %3888 = vmatprep.subr.mxu0 0.0
    %3889 = vmatpush2.xpose.msra.mxu0 0.0
    %3890 = vmatprep.subr.mxu0 0.0
    %3891 = vmatpush2.xpose.msra.mxu0 0.0
    %3892 = vmatprep.subr.mxu0 0.0
    %3893 = vmatpush2.xpose.msra.mxu0 0.0
    %3894 = vmatprep.subr.mxu0 0.0
    %3895 = vmatpush2.xpose.msra.mxu0 0.0
    %3896 = vmatprep.subr.mxu0 0.0
    %3897 = vmatpush2.xpose.msra.mxu0 0.0
    %3898 = vmatprep.subr.mxu0 0.0
    %3899 = vmatpush2.xpose.msra.mxu0 0.0
    %3900 = vmatprep.subr.mxu0 0.0
    %3901 = vmatpush2.xpose.msra.mxu0 0.0
    %3902 = vmatprep.subr.mxu0 0.0
    %3903 = vmatpush2.xpose.msra.mxu0 0.0
    %3904 = vmatprep.subr.mxu0 0.0
    %3905 = vmatpush2.xpose.msra.mxu0 0.0
    %3906 = vmatprep.mubr.f32.mxu0 0.0
    %3907 = vmatmul.mubr.f32.gmra.mxu0 %v3838
    %v3908 = vpop.f32.mrf.mxu0
    %v3909 = vadd.f32 0.0, %v3908
    %v3910 = vpop.f32.mrf.mxu0
    %3911 = vdwg.mxu0
    %3913 = vrot.lane.b32.xlu0 %v3825, 96
    %v3914 = vpop.permute.xlu0 %3913
    %v3915 = vsel %vm277, %v3825, 0
    %v3917 = vsel %vm277, %v3914, 0
    %3919 = vmatprep.subr.mxu0 0.0
    %3920 = vmatpush1.xpose.msra.mxu0 0.0
    %3921 = vmatprep.subr.mxu0 0.0
    %3922 = vmatpush1.xpose.msra.mxu0 0.0
    %3923 = vmatprep.subr.mxu0 0.0
    %3924 = vmatpush1.xpose.msra.mxu0 0.0
    %3925 = vmatprep.subr.mxu0 0.0
    %3926 = vmatpush1.xpose.msra.mxu0 0.0
    %3927 = vmatprep.subr.mxu0 0.0
    %3928 = vmatpush1.xpose.msra.mxu0 0.0
    %3929 = vmatprep.subr.mxu0 0.0
    %3930 = vmatpush1.xpose.msra.mxu0 0.0
    %3931 = vmatprep.subr.mxu0 0.0
    %3932 = vmatpush1.xpose.msra.mxu0 0.0
    %3933 = vmatprep.subr.mxu0 0.0
    %3934 = vmatpush1.xpose.msra.mxu0 0.0
    %3935 = vmatprep.subr.mxu0 0.0
    %3936 = vmatpush1.xpose.msra.mxu0 0.0
    %3937 = vmatprep.subr.mxu0 0.0
    %3938 = vmatpush1.xpose.msra.mxu0 0.0
    %3939 = vmatprep.subr.mxu0 0.0
    %3940 = vmatpush1.xpose.msra.mxu0 0.0
    %3941 = vmatprep.subr.mxu0 0.0
    %3942 = vmatpush1.xpose.msra.mxu0 0.0
    %3943 = vmatprep.subr.mxu0 0.0
    %3944 = vmatpush1.xpose.msra.mxu0 0.0
    %3945 = vmatprep.subr.mxu0 0.0
    %3946 = vmatpush1.xpose.msra.mxu0 0.0
    %3947 = vmatprep.subr.mxu0 0.0
    %3948 = vmatpush1.xpose.msra.mxu0 0.0
    %3949 = vmatprep.subr.mxu0 0.0
    %3950 = vmatpush1.xpose.msra.mxu0 %v3917
    %3951 = vmatprep.subr.mxu0 0.0
    %3952 = vmatpush2.xpose.msra.mxu0 0.0
    %3953 = vmatprep.subr.mxu0 0.0
    %3954 = vmatpush2.xpose.msra.mxu0 0.0
    %3955 = vmatprep.subr.mxu0 0.0
    %3956 = vmatpush2.xpose.msra.mxu0 0.0
    %3957 = vmatprep.subr.mxu0 0.0
    %3958 = vmatpush2.xpose.msra.mxu0 0.0
    %3959 = vmatprep.subr.mxu0 0.0
    %3960 = vmatpush2.xpose.msra.mxu0 0.0
    %3961 = vmatprep.subr.mxu0 0.0
    %3962 = vmatpush2.xpose.msra.mxu0 0.0
    %3963 = vmatprep.subr.mxu0 0.0
    %3964 = vmatpush2.xpose.msra.mxu0 0.0
    %3965 = vmatprep.subr.mxu0 0.0
    %3966 = vmatpush2.xpose.msra.mxu0 0.0
    %3967 = vmatprep.subr.mxu0 0.0
    %3968 = vmatpush2.xpose.msra.mxu0 0.0
    %3969 = vmatprep.subr.mxu0 0.0
    %3970 = vmatpush2.xpose.msra.mxu0 0.0
    %3971 = vmatprep.subr.mxu0 0.0
    %3972 = vmatpush2.xpose.msra.mxu0 0.0
    %3973 = vmatprep.subr.mxu0 0.0
    %3974 = vmatpush2.xpose.msra.mxu0 0.0
    %3975 = vmatprep.subr.mxu0 0.0
    %3976 = vmatpush2.xpose.msra.mxu0 0.0
    %3977 = vmatprep.subr.mxu0 0.0
    %3978 = vmatpush2.xpose.msra.mxu0 0.0
    %3979 = vmatprep.subr.mxu0 0.0
    %3980 = vmatpush2.xpose.msra.mxu0 0.0
    %3981 = vmatprep.subr.mxu0 0.0
    %3982 = vmatpush2.xpose.msra.mxu0 0.0
    %3983 = vmatprep.mubr.f32.mxu0 0.0
    %3984 = vmatmul.mubr.f32.gmra.mxu0 %v3915
    %v3985 = vpop.f32.mrf.mxu0
    %v3986 = vadd.f32 0.0, %v3985
    %v3987 = vpop.f32.mrf.mxu0
    %3988 = vdwg.mxu0
    %v3989 = vmul.f32 %v3909, 0.35355338
    %v3990 = vmul.f32 %v3986, 0.35355338
    %v3991 = vsel %vm277, %v3989, -inf
    %3992 = vmax.xlane.f32.xlu0 %v3991
    %v3993 = vpop.xlane.xlu0 %3992
    %v3994 = vsel %vm277, %v3990, -inf
    %3995 = vmax.xlane.f32.xlu0 %v3994
    %v3996 = vpop.xlane.xlu0 %3995
    %v3997 = vsub.f32 %v3989, %v3993
    %v3998 = vsub.f32 %v3990, %v3996
    %v3999 = vmul.f32 %v3997, 1.442695
    %v4000 = vpow.pop %v3999
    %v4001 = vmul.f32 %v3998, 1.442695
    %v4002 = vpow.pop %v4001
    %v4003 = vsel %vm277, %v4000, 0.0
    %4004 = vadd.xlane.f32.xlu0 %v4003
    %v4005 = vpop.xlane.xlu0 %4004
    %v4006 = vsel %vm277, %v4002, 0.0
    %4007 = vadd.xlane.f32.xlu0 %v4006
    %v4008 = vpop.xlane.xlu0 %4007
    %v4009 = vrcp.pop %v4005
    %v4010 = vmul.f32 %v4000, %v4009
    %v4011 = vrcp.pop %v4008
    %v4012 = vmul.f32 %v4002, %v4011
    %4013 = vrot.lane.b32.xlu0 %v3820, 64
    %v4014 = vpop.permute.xlu0 %4013
    %v4017 = vsel %vm277, %v4010, 0
    %4019 = vmatprep.subr.mxu0 0.0
    %4020 = vmatpush1.msra.mxu0 0.0
    %4021 = vmatprep.subr.mxu0 0.0
    %4022 = vmatpush1.msra.mxu0 0.0
    %4023 = vmatprep.subr.mxu0 0.0
    %4024 = vmatpush1.msra.mxu0 0.0
    %4025 = vmatprep.subr.mxu0 0.0
    %4026 = vmatpush1.msra.mxu0 0.0
    %4027 = vmatprep.subr.mxu0 0.0
    %4028 = vmatpush1.msra.mxu0 0.0
    %4029 = vmatprep.subr.mxu0 0.0
    %4030 = vmatpush1.msra.mxu0 0.0
    %4031 = vmatprep.subr.mxu0 0.0
    %4032 = vmatpush1.msra.mxu0 0.0
    %4033 = vmatprep.subr.mxu0 0.0
    %4034 = vmatpush1.msra.mxu0 0.0
    %4035 = vmatprep.subr.mxu0 0.0
    %4036 = vmatpush1.msra.mxu0 0.0
    %4037 = vmatprep.subr.mxu0 0.0
    %4038 = vmatpush1.msra.mxu0 0.0
    %4039 = vmatprep.subr.mxu0 0.0
    %4040 = vmatpush1.msra.mxu0 0.0
    %4041 = vmatprep.subr.mxu0 0.0
    %4042 = vmatpush1.msra.mxu0 0.0
    %4043 = vmatprep.subr.mxu0 0.0
    %4044 = vmatpush1.msra.mxu0 0.0
    %4045 = vmatprep.subr.mxu0 0.0
    %4046 = vmatpush1.msra.mxu0 0.0
    %4047 = vmatprep.subr.mxu0 0.0
    %4048 = vmatpush1.msra.mxu0 0.0
    %4049 = vmatprep.subr.mxu0 0.0
    %4050 = vmatpush1.msra.mxu0 %v4014
    %4051 = vmatprep.subr.mxu0 0.0
    %4052 = vmatpush2.msra.mxu0 0.0
    %4053 = vmatprep.subr.mxu0 0.0
    %4054 = vmatpush2.msra.mxu0 0.0
    %4055 = vmatprep.subr.mxu0 0.0
    %4056 = vmatpush2.msra.mxu0 0.0
    %4057 = vmatprep.subr.mxu0 0.0
    %4058 = vmatpush2.msra.mxu0 0.0
    %4059 = vmatprep.subr.mxu0 0.0
    %4060 = vmatpush2.msra.mxu0 0.0
    %4061 = vmatprep.subr.mxu0 0.0
    %4062 = vmatpush2.msra.mxu0 0.0
    %4063 = vmatprep.subr.mxu0 0.0
    %4064 = vmatpush2.msra.mxu0 0.0
    %4065 = vmatprep.subr.mxu0 0.0
    %4066 = vmatpush2.msra.mxu0 0.0
    %4067 = vmatprep.subr.mxu0 0.0
    %4068 = vmatpush2.msra.mxu0 0.0
    %4069 = vmatprep.subr.mxu0 0.0
    %4070 = vmatpush2.msra.mxu0 0.0
    %4071 = vmatprep.subr.mxu0 0.0
    %4072 = vmatpush2.msra.mxu0 0.0
    %4073 = vmatprep.subr.mxu0 0.0
    %4074 = vmatpush2.msra.mxu0 0.0
    %4075 = vmatprep.subr.mxu0 0.0
    %4076 = vmatpush2.msra.mxu0 0.0
    %4077 = vmatprep.subr.mxu0 0.0
    %4078 = vmatpush2.msra.mxu0 0.0
    %4079 = vmatprep.subr.mxu0 0.0
    %4080 = vmatpush2.msra.mxu0 0.0
    %4081 = vmatprep.subr.mxu0 0.0
    %4082 = vmatpush2.msra.mxu0 0.0
    %4083 = vmatprep.mubr.f32.mxu0 0.0
    %4084 = vmatmul.mubr.f32.gmra.mxu0 %v4017
    %v4085 = vpop.f32.mrf.mxu0
    %v4086 = vadd.f32 0.0, %v4085
    %v4087 = vpop.f32.mrf.mxu0
    %4088 = vdwg.mxu0
    %4089 = vrot.lane.b32.xlu0 %v3825, 64
    %v4090 = vpop.permute.xlu0 %4089
    %v4093 = vsel %vm277, %v4012, 0
    %4095 = vmatprep.subr.mxu0 0.0
    %4096 = vmatpush1.msra.mxu0 0.0
    %4097 = vmatprep.subr.mxu0 0.0
    %4098 = vmatpush1.msra.mxu0 0.0
    %4099 = vmatprep.subr.mxu0 0.0
    %4100 = vmatpush1.msra.mxu0 0.0
    %4101 = vmatprep.subr.mxu0 0.0
    %4102 = vmatpush1.msra.mxu0 0.0
    %4103 = vmatprep.subr.mxu0 0.0
    %4104 = vmatpush1.msra.mxu0 0.0
    %4105 = vmatprep.subr.mxu0 0.0
    %4106 = vmatpush1.msra.mxu0 0.0
    %4107 = vmatprep.subr.mxu0 0.0
    %4108 = vmatpush1.msra.mxu0 0.0
    %4109 = vmatprep.subr.mxu0 0.0
    %4110 = vmatpush1.msra.mxu0 0.0
    %4111 = vmatprep.subr.mxu0 0.0
    %4112 = vmatpush1.msra.mxu0 0.0
    %4113 = vmatprep.subr.mxu0 0.0
    %4114 = vmatpush1.msra.mxu0 0.0
    %4115 = vmatprep.subr.mxu0 0.0
    %4116 = vmatpush1.msra.mxu0 0.0
    %4117 = vmatprep.subr.mxu0 0.0
    %4118 = vmatpush1.msra.mxu0 0.0
    %4119 = vmatprep.subr.mxu0 0.0
    %4120 = vmatpush1.msra.mxu0 0.0
    %4121 = vmatprep.subr.mxu0 0.0
    %4122 = vmatpush1.msra.mxu0 0.0
    %4123 = vmatprep.subr.mxu0 0.0
    %4124 = vmatpush1.msra.mxu0 0.0
    %4125 = vmatprep.subr.mxu0 0.0
    %4126 = vmatpush1.msra.mxu0 %v4090
    %4127 = vmatprep.subr.mxu0 0.0
    %4128 = vmatpush2.msra.mxu0 0.0
    %4129 = vmatprep.subr.mxu0 0.0
    %4130 = vmatpush2.msra.mxu0 0.0
    %4131 = vmatprep.subr.mxu0 0.0
    %4132 = vmatpush2.msra.mxu0 0.0
    %4133 = vmatprep.subr.mxu0 0.0
    %4134 = vmatpush2.msra.mxu0 0.0
    %4135 = vmatprep.subr.mxu0 0.0
    %4136 = vmatpush2.msra.mxu0 0.0
    %4137 = vmatprep.subr.mxu0 0.0
    %4138 = vmatpush2.msra.mxu0 0.0
    %4139 = vmatprep.subr.mxu0 0.0
    %4140 = vmatpush2.msra.mxu0 0.0
    %4141 = vmatprep.subr.mxu0 0.0
    %4142 = vmatpush2.msra.mxu0 0.0
    %4143 = vmatprep.subr.mxu0 0.0
    %4144 = vmatpush2.msra.mxu0 0.0
    %4145 = vmatprep.subr.mxu0 0.0
    %4146 = vmatpush2.msra.mxu0 0.0
    %4147 = vmatprep.subr.mxu0 0.0
    %4148 = vmatpush2.msra.mxu0 0.0
    %4149 = vmatprep.subr.mxu0 0.0
    %4150 = vmatpush2.msra.mxu0 0.0
    %4151 = vmatprep.subr.mxu0 0.0
    %4152 = vmatpush2.msra.mxu0 0.0
    %4153 = vmatprep.subr.mxu0 0.0
    %4154 = vmatpush2.msra.mxu0 0.0
    %4155 = vmatprep.subr.mxu0 0.0
    %4156 = vmatpush2.msra.mxu0 0.0
    %4157 = vmatprep.subr.mxu0 0.0
    %4158 = vmatpush2.msra.mxu0 0.0
    %4159 = vmatprep.mubr.f32.mxu0 0.0
    %4160 = vmatmul.mubr.f32.gmra.mxu0 %v4093
    %v4161 = vpop.f32.mrf.mxu0
    %v4162 = vadd.f32 0.0, %v4161
    %v4163 = vpop.f32.mrf.mxu0
    %4164 = vdwg.mxu0
    %4165 = vrot.lane.b32.xlu0 %v3820, 120
    %v4166 = vpop.permute.xlu0 %4165
    %4167 = vrot.lane.b32.xlu0 %v3820, 88
    %v4168 = vpop.permute.xlu0 %4167
    %v4169 = vsel %vm277, %v4166, 0
    %v4171 = vsel %vm277, %v4168, 0
    %4173 = vmatprep.subr.mxu0 0.0
    %4174 = vmatpush1.xpose.msra.mxu0 0.0
    %4175 = vmatprep.subr.mxu0 0.0
    %4176 = vmatpush1.xpose.msra.mxu0 0.0
    %4177 = vmatprep.subr.mxu0 0.0
    %4178 = vmatpush1.xpose.msra.mxu0 0.0
    %4179 = vmatprep.subr.mxu0 0.0
    %4180 = vmatpush1.xpose.msra.mxu0 0.0
    %4181 = vmatprep.subr.mxu0 0.0
    %4182 = vmatpush1.xpose.msra.mxu0 0.0
    %4183 = vmatprep.subr.mxu0 0.0
    %4184 = vmatpush1.xpose.msra.mxu0 0.0
    %4185 = vmatprep.subr.mxu0 0.0
    %4186 = vmatpush1.xpose.msra.mxu0 0.0
    %4187 = vmatprep.subr.mxu0 0.0
    %4188 = vmatpush1.xpose.msra.mxu0 0.0
    %4189 = vmatprep.subr.mxu0 0.0
    %4190 = vmatpush1.xpose.msra.mxu0 0.0
    %4191 = vmatprep.subr.mxu0 0.0
    %4192 = vmatpush1.xpose.msra.mxu0 0.0
    %4193 = vmatprep.subr.mxu0 0.0
    %4194 = vmatpush1.xpose.msra.mxu0 0.0
    %4195 = vmatprep.subr.mxu0 0.0
    %4196 = vmatpush1.xpose.msra.mxu0 0.0
    %4197 = vmatprep.subr.mxu0 0.0
    %4198 = vmatpush1.xpose.msra.mxu0 0.0
    %4199 = vmatprep.subr.mxu0 0.0
    %4200 = vmatpush1.xpose.msra.mxu0 0.0
    %4201 = vmatprep.subr.mxu0 0.0
    %4202 = vmatpush1.xpose.msra.mxu0 0.0
    %4203 = vmatprep.subr.mxu0 0.0
    %4204 = vmatpush1.xpose.msra.mxu0 %v4171
    %4205 = vmatprep.subr.mxu0 0.0
    %4206 = vmatpush2.xpose.msra.mxu0 0.0
    %4207 = vmatprep.subr.mxu0 0.0
    %4208 = vmatpush2.xpose.msra.mxu0 0.0
    %4209 = vmatprep.subr.mxu0 0.0
    %4210 = vmatpush2.xpose.msra.mxu0 0.0
    %4211 = vmatprep.subr.mxu0 0.0
    %4212 = vmatpush2.xpose.msra.mxu0 0.0
    %4213 = vmatprep.subr.mxu0 0.0
    %4214 = vmatpush2.xpose.msra.mxu0 0.0
    %4215 = vmatprep.subr.mxu0 0.0
    %4216 = vmatpush2.xpose.msra.mxu0 0.0
    %4217 = vmatprep.subr.mxu0 0.0
    %4218 = vmatpush2.xpose.msra.mxu0 0.0
    %4219 = vmatprep.subr.mxu0 0.0
    %4220 = vmatpush2.xpose.msra.mxu0 0.0
    %4221 = vmatprep.subr.mxu0 0.0
    %4222 = vmatpush2.xpose.msra.mxu0 0.0
    %4223 = vmatprep.subr.mxu0 0.0
    %4224 = vmatpush2.xpose.msra.mxu0 0.0
    %4225 = vmatprep.subr.mxu0 0.0
    %4226 = vmatpush2.xpose.msra.mxu0 0.0
    %4227 = vmatprep.subr.mxu0 0.0
    %4228 = vmatpush2.xpose.msra.mxu0 0.0
    %4229 = vmatprep.subr.mxu0 0.0
    %4230 = vmatpush2.xpose.msra.mxu0 0.0
    %4231 = vmatprep.subr.mxu0 0.0
    %4232 = vmatpush2.xpose.msra.mxu0 0.0
    %4233 = vmatprep.subr.mxu0 0.0
    %4234 = vmatpush2.xpose.msra.mxu0 0.0
    %4235 = vmatprep.subr.mxu0 0.0
    %4236 = vmatpush2.xpose.msra.mxu0 0.0
    %4237 = vmatprep.mubr.f32.mxu0 0.0
    %4238 = vmatmul.mubr.f32.gmra.mxu0 %v4169
    %v4239 = vpop.f32.mrf.mxu0
    %v4240 = vadd.f32 0.0, %v4239
    %v4241 = vpop.f32.mrf.mxu0
    %4242 = vdwg.mxu0
    %4243 = vrot.lane.b32.xlu0 %v3825, 120
    %v4244 = vpop.permute.xlu0 %4243
    %4245 = vrot.lane.b32.xlu0 %v3825, 88
    %v4246 = vpop.permute.xlu0 %4245
    %v4247 = vsel %vm277, %v4244, 0
    %v4249 = vsel %vm277, %v4246, 0
    %4251 = vmatprep.subr.mxu0 0.0
    %4252 = vmatpush1.xpose.msra.mxu0 0.0
    %4253 = vmatprep.subr.mxu0 0.0
    %4254 = vmatpush1.xpose.msra.mxu0 0.0
    %4255 = vmatprep.subr.mxu0 0.0
    %4256 = vmatpush1.xpose.msra.mxu0 0.0
    %4257 = vmatprep.subr.mxu0 0.0
    %4258 = vmatpush1.xpose.msra.mxu0 0.0
    %4259 = vmatprep.subr.mxu0 0.0
    %4260 = vmatpush1.xpose.msra.mxu0 0.0
    %4261 = vmatprep.subr.mxu0 0.0
    %4262 = vmatpush1.xpose.msra.mxu0 0.0
    %4263 = vmatprep.subr.mxu0 0.0
    %4264 = vmatpush1.xpose.msra.mxu0 0.0
    %4265 = vmatprep.subr.mxu0 0.0
    %4266 = vmatpush1.xpose.msra.mxu0 0.0
    %4267 = vmatprep.subr.mxu0 0.0
    %4268 = vmatpush1.xpose.msra.mxu0 0.0
    %4269 = vmatprep.subr.mxu0 0.0
    %4270 = vmatpush1.xpose.msra.mxu0 0.0
    %4271 = vmatprep.subr.mxu0 0.0
    %4272 = vmatpush1.xpose.msra.mxu0 0.0
    %4273 = vmatprep.subr.mxu0 0.0
    %4274 = vmatpush1.xpose.msra.mxu0 0.0
    %4275 = vmatprep.subr.mxu0 0.0
    %4276 = vmatpush1.xpose.msra.mxu0 0.0
    %4277 = vmatprep.subr.mxu0 0.0
    %4278 = vmatpush1.xpose.msra.mxu0 0.0
    %4279 = vmatprep.subr.mxu0 0.0
    %4280 = vmatpush1.xpose.msra.mxu0 0.0
    %4281 = vmatprep.subr.mxu0 0.0
    %4282 = vmatpush1.xpose.msra.mxu0 %v4249
    %4283 = vmatprep.subr.mxu0 0.0
    %4284 = vmatpush2.xpose.msra.mxu0 0.0
    %4285 = vmatprep.subr.mxu0 0.0
    %4286 = vmatpush2.xpose.msra.mxu0 0.0
    %4287 = vmatprep.subr.mxu0 0.0
    %4288 = vmatpush2.xpose.msra.mxu0 0.0
    %4289 = vmatprep.subr.mxu0 0.0
    %4290 = vmatpush2.xpose.msra.mxu0 0.0
    %4291 = vmatprep.subr.mxu0 0.0
    %4292 = vmatpush2.xpose.msra.mxu0 0.0
    %4293 = vmatprep.subr.mxu0 0.0
    %4294 = vmatpush2.xpose.msra.mxu0 0.0
    %4295 = vmatprep.subr.mxu0 0.0
    %4296 = vmatpush2.xpose.msra.mxu0 0.0
    %4297 = vmatprep.subr.mxu0 0.0
    %4298 = vmatpush2.xpose.msra.mxu0 0.0
    %4299 = vmatprep.subr.mxu0 0.0
    %4300 = vmatpush2.xpose.msra.mxu0 0.0
    %4301 = vmatprep.subr.mxu0 0.0
    %4302 = vmatpush2.xpose.msra.mxu0 0.0
    %4303 = vmatprep.subr.mxu0 0.0
    %4304 = vmatpush2.xpose.msra.mxu0 0.0
    %4305 = vmatprep.subr.mxu0 0.0
    %4306 = vmatpush2.xpose.msra.mxu0 0.0
    %4307 = vmatprep.subr.mxu0 0.0
    %4308 = vmatpush2.xpose.msra.mxu0 0.0
    %4309 = vmatprep.subr.mxu0 0.0
    %4310 = vmatpush2.xpose.msra.mxu0 0.0
    %4311 = vmatprep.subr.mxu0 0.0
    %4312 = vmatpush2.xpose.msra.mxu0 0.0
    %4313 = vmatprep.subr.mxu0 0.0
    %4314 = vmatpush2.xpose.msra.mxu0 0.0
    %4315 = vmatprep.mubr.f32.mxu0 0.0
    %4316 = vmatmul.mubr.f32.gmra.mxu0 %v4247
    %v4317 = vpop.f32.mrf.mxu0
    %v4318 = vadd.f32 0.0, %v4317
    %v4319 = vpop.f32.mrf.mxu0
    %4320 = vdwg.mxu0
    %v4321 = vmul.f32 %v4240, 0.35355338
    %v4322 = vmul.f32 %v4318, 0.35355338
    %v4323 = vsel %vm277, %v4321, -inf
    %4324 = vmax.xlane.f32.xlu0 %v4323
    %v4325 = vpop.xlane.xlu0 %4324
    %v4326 = vsel %vm277, %v4322, -inf
    %4327 = vmax.xlane.f32.xlu0 %v4326
    %v4328 = vpop.xlane.xlu0 %4327
    %v4329 = vsub.f32 %v4321, %v4325
    %v4330 = vsub.f32 %v4322, %v4328
    %v4331 = vmul.f32 %v4329, 1.442695
    %v4332 = vpow.pop %v4331
    %v4333 = vmul.f32 %v4330, 1.442695
    %v4334 = vpow.pop %v4333
    %v4335 = vsel %vm277, %v4332, 0.0
    %4336 = vadd.xlane.f32.xlu0 %v4335
    %v4337 = vpop.xlane.xlu0 %4336
    %v4338 = vsel %vm277, %v4334, 0.0
    %4339 = vadd.xlane.f32.xlu0 %v4338
    %v4340 = vpop.xlane.xlu0 %4339
    %v4341 = vrcp.pop %v4337
    %v4342 = vmul.f32 %v4332, %v4341
    %v4343 = vrcp.pop %v4340
    %v4344 = vmul.f32 %v4334, %v4343
    %4345 = vrot.lane.b32.xlu0 %v3820, 56
    %v4346 = vpop.permute.xlu0 %4345
    %v4349 = vsel %vm277, %v4342, 0
    %4351 = vmatprep.subr.mxu0 0.0
    %4352 = vmatpush1.msra.mxu0 0.0
    %4353 = vmatprep.subr.mxu0 0.0
    %4354 = vmatpush1.msra.mxu0 0.0
    %4355 = vmatprep.subr.mxu0 0.0
    %4356 = vmatpush1.msra.mxu0 0.0
    %4357 = vmatprep.subr.mxu0 0.0
    %4358 = vmatpush1.msra.mxu0 0.0
    %4359 = vmatprep.subr.mxu0 0.0
    %4360 = vmatpush1.msra.mxu0 0.0
    %4361 = vmatprep.subr.mxu0 0.0
    %4362 = vmatpush1.msra.mxu0 0.0
    %4363 = vmatprep.subr.mxu0 0.0
    %4364 = vmatpush1.msra.mxu0 0.0
    %4365 = vmatprep.subr.mxu0 0.0
    %4366 = vmatpush1.msra.mxu0 0.0
    %4367 = vmatprep.subr.mxu0 0.0
    %4368 = vmatpush1.msra.mxu0 0.0
    %4369 = vmatprep.subr.mxu0 0.0
    %4370 = vmatpush1.msra.mxu0 0.0
    %4371 = vmatprep.subr.mxu0 0.0
    %4372 = vmatpush1.msra.mxu0 0.0
    %4373 = vmatprep.subr.mxu0 0.0
    %4374 = vmatpush1.msra.mxu0 0.0
    %4375 = vmatprep.subr.mxu0 0.0
    %4376 = vmatpush1.msra.mxu0 0.0
    %4377 = vmatprep.subr.mxu0 0.0
    %4378 = vmatpush1.msra.mxu0 0.0
    %4379 = vmatprep.subr.mxu0 0.0
    %4380 = vmatpush1.msra.mxu0 0.0
    %4381 = vmatprep.subr.mxu0 0.0
    %4382 = vmatpush1.msra.mxu0 %v4346
    %4383 = vmatprep.subr.mxu0 0.0
    %4384 = vmatpush2.msra.mxu0 0.0
    %4385 = vmatprep.subr.mxu0 0.0
    %4386 = vmatpush2.msra.mxu0 0.0
    %4387 = vmatprep.subr.mxu0 0.0
    %4388 = vmatpush2.msra.mxu0 0.0
    %4389 = vmatprep.subr.mxu0 0.0
    %4390 = vmatpush2.msra.mxu0 0.0
    %4391 = vmatprep.subr.mxu0 0.0
    %4392 = vmatpush2.msra.mxu0 0.0
    %4393 = vmatprep.subr.mxu0 0.0
    %4394 = vmatpush2.msra.mxu0 0.0
    %4395 = vmatprep.subr.mxu0 0.0
    %4396 = vmatpush2.msra.mxu0 0.0
    %4397 = vmatprep.subr.mxu0 0.0
    %4398 = vmatpush2.msra.mxu0 0.0
    %4399 = vmatprep.subr.mxu0 0.0
    %4400 = vmatpush2.msra.mxu0 0.0
    %4401 = vmatprep.subr.mxu0 0.0
    %4402 = vmatpush2.msra.mxu0 0.0
    %4403 = vmatprep.subr.mxu0 0.0
    %4404 = vmatpush2.msra.mxu0 0.0
    %4405 = vmatprep.subr.mxu0 0.0
    %4406 = vmatpush2.msra.mxu0 0.0
    %4407 = vmatprep.subr.mxu0 0.0
    %4408 = vmatpush2.msra.mxu0 0.0
    %4409 = vmatprep.subr.mxu0 0.0
    %4410 = vmatpush2.msra.mxu0 0.0
    %4411 = vmatprep.subr.mxu0 0.0
    %4412 = vmatpush2.msra.mxu0 0.0
    %4413 = vmatprep.subr.mxu0 0.0
    %4414 = vmatpush2.msra.mxu0 0.0
    %4415 = vmatprep.mubr.f32.mxu0 0.0
    %4416 = vmatmul.mubr.f32.gmra.mxu0 %v4349
    %v4417 = vpop.f32.mrf.mxu0
    %v4418 = vadd.f32 0.0, %v4417
    %v4419 = vpop.f32.mrf.mxu0
    %4420 = vdwg.mxu0
    %4421 = vrot.lane.b32.xlu0 %v3825, 56
    %v4422 = vpop.permute.xlu0 %4421
    %v4425 = vsel %vm277, %v4344, 0
    %4427 = vmatprep.subr.mxu0 0.0
    %4428 = vmatpush1.msra.mxu0 0.0
    %4429 = vmatprep.subr.mxu0 0.0
    %4430 = vmatpush1.msra.mxu0 0.0
    %4431 = vmatprep.subr.mxu0 0.0
    %4432 = vmatpush1.msra.mxu0 0.0
    %4433 = vmatprep.subr.mxu0 0.0
    %4434 = vmatpush1.msra.mxu0 0.0
    %4435 = vmatprep.subr.mxu0 0.0
    %4436 = vmatpush1.msra.mxu0 0.0
    %4437 = vmatprep.subr.mxu0 0.0
    %4438 = vmatpush1.msra.mxu0 0.0
    %4439 = vmatprep.subr.mxu0 0.0
    %4440 = vmatpush1.msra.mxu0 0.0
    %4441 = vmatprep.subr.mxu0 0.0
    %4442 = vmatpush1.msra.mxu0 0.0
    %4443 = vmatprep.subr.mxu0 0.0
    %4444 = vmatpush1.msra.mxu0 0.0
    %4445 = vmatprep.subr.mxu0 0.0
    %4446 = vmatpush1.msra.mxu0 0.0
    %4447 = vmatprep.subr.mxu0 0.0
    %4448 = vmatpush1.msra.mxu0 0.0
    %4449 = vmatprep.subr.mxu0 0.0
    %4450 = vmatpush1.msra.mxu0 0.0
    %4451 = vmatprep.subr.mxu0 0.0
    %4452 = vmatpush1.msra.mxu0 0.0
    %4453 = vmatprep.subr.mxu0 0.0
    %4454 = vmatpush1.msra.mxu0 0.0
    %4455 = vmatprep.subr.mxu0 0.0
    %4456 = vmatpush1.msra.mxu0 0.0
    %4457 = vmatprep.subr.mxu0 0.0
    %4458 = vmatpush1.msra.mxu0 %v4422
    %4459 = vmatprep.subr.mxu0 0.0
    %4460 = vmatpush2.msra.mxu0 0.0
    %4461 = vmatprep.subr.mxu0 0.0
    %4462 = vmatpush2.msra.mxu0 0.0
    %4463 = vmatprep.subr.mxu0 0.0
    %4464 = vmatpush2.msra.mxu0 0.0
    %4465 = vmatprep.subr.mxu0 0.0
    %4466 = vmatpush2.msra.mxu0 0.0
    %4467 = vmatprep.subr.mxu0 0.0
    %4468 = vmatpush2.msra.mxu0 0.0
    %4469 = vmatprep.subr.mxu0 0.0
    %4470 = vmatpush2.msra.mxu0 0.0
    %4471 = vmatprep.subr.mxu0 0.0
    %4472 = vmatpush2.msra.mxu0 0.0
    %4473 = vmatprep.subr.mxu0 0.0
    %4474 = vmatpush2.msra.mxu0 0.0
    %4475 = vmatprep.subr.mxu0 0.0
    %4476 = vmatpush2.msra.mxu0 0.0
    %4477 = vmatprep.subr.mxu0 0.0
    %4478 = vmatpush2.msra.mxu0 0.0
    %4479 = vmatprep.subr.mxu0 0.0
    %4480 = vmatpush2.msra.mxu0 0.0
    %4481 = vmatprep.subr.mxu0 0.0
    %4482 = vmatpush2.msra.mxu0 0.0
    %4483 = vmatprep.subr.mxu0 0.0
    %4484 = vmatpush2.msra.mxu0 0.0
    %4485 = vmatprep.subr.mxu0 0.0
    %4486 = vmatpush2.msra.mxu0 0.0
    %4487 = vmatprep.subr.mxu0 0.0
    %4488 = vmatpush2.msra.mxu0 0.0
    %4489 = vmatprep.subr.mxu0 0.0
    %4490 = vmatpush2.msra.mxu0 0.0
    %4491 = vmatprep.mubr.f32.mxu0 0.0
    %4492 = vmatmul.mubr.f32.gmra.mxu0 %v4425
    %v4493 = vpop.f32.mrf.mxu0
    %v4494 = vadd.f32 0.0, %v4493
    %v4495 = vpop.f32.mrf.mxu0
    %4496 = vdwg.mxu0
    %4497 = vrot.lane.b32.xlu0 %v3820, 112
    %v4498 = vpop.permute.xlu0 %4497
    %4499 = vrot.lane.b32.xlu0 %v3820, 80
    %v4500 = vpop.permute.xlu0 %4499
    %v4501 = vsel %vm277, %v4498, 0
    %v4503 = vsel %vm277, %v4500, 0
    %4505 = vmatprep.subr.mxu0 0.0
    %4506 = vmatpush1.xpose.msra.mxu0 0.0
    %4507 = vmatprep.subr.mxu0 0.0
    %4508 = vmatpush1.xpose.msra.mxu0 0.0
    %4509 = vmatprep.subr.mxu0 0.0
    %4510 = vmatpush1.xpose.msra.mxu0 0.0
    %4511 = vmatprep.subr.mxu0 0.0
    %4512 = vmatpush1.xpose.msra.mxu0 0.0
    %4513 = vmatprep.subr.mxu0 0.0
    %4514 = vmatpush1.xpose.msra.mxu0 0.0
    %4515 = vmatprep.subr.mxu0 0.0
    %4516 = vmatpush1.xpose.msra.mxu0 0.0
    %4517 = vmatprep.subr.mxu0 0.0
    %4518 = vmatpush1.xpose.msra.mxu0 0.0
    %4519 = vmatprep.subr.mxu0 0.0
    %4520 = vmatpush1.xpose.msra.mxu0 0.0
    %4521 = vmatprep.subr.mxu0 0.0
    %4522 = vmatpush1.xpose.msra.mxu0 0.0
    %4523 = vmatprep.subr.mxu0 0.0
    %4524 = vmatpush1.xpose.msra.mxu0 0.0
    %4525 = vmatprep.subr.mxu0 0.0
    %4526 = vmatpush1.xpose.msra.mxu0 0.0
    %4527 = vmatprep.subr.mxu0 0.0
    %4528 = vmatpush1.xpose.msra.mxu0 0.0
    %4529 = vmatprep.subr.mxu0 0.0
    %4530 = vmatpush1.xpose.msra.mxu0 0.0
    %4531 = vmatprep.subr.mxu0 0.0
    %4532 = vmatpush1.xpose.msra.mxu0 0.0
    %4533 = vmatprep.subr.mxu0 0.0
    %4534 = vmatpush1.xpose.msra.mxu0 0.0
    %4535 = vmatprep.subr.mxu0 0.0
    %4536 = vmatpush1.xpose.msra.mxu0 %v4503
    %4537 = vmatprep.subr.mxu0 0.0
    %4538 = vmatpush2.xpose.msra.mxu0 0.0
    %4539 = vmatprep.subr.mxu0 0.0
    %4540 = vmatpush2.xpose.msra.mxu0 0.0
    %4541 = vmatprep.subr.mxu0 0.0
    %4542 = vmatpush2.xpose.msra.mxu0 0.0
    %4543 = vmatprep.subr.mxu0 0.0
    %4544 = vmatpush2.xpose.msra.mxu0 0.0
    %4545 = vmatprep.subr.mxu0 0.0
    %4546 = vmatpush2.xpose.msra.mxu0 0.0
    %4547 = vmatprep.subr.mxu0 0.0
    %4548 = vmatpush2.xpose.msra.mxu0 0.0
    %4549 = vmatprep.subr.mxu0 0.0
    %4550 = vmatpush2.xpose.msra.mxu0 0.0
    %4551 = vmatprep.subr.mxu0 0.0
    %4552 = vmatpush2.xpose.msra.mxu0 0.0
    %4553 = vmatprep.subr.mxu0 0.0
    %4554 = vmatpush2.xpose.msra.mxu0 0.0
    %4555 = vmatprep.subr.mxu0 0.0
    %4556 = vmatpush2.xpose.msra.mxu0 0.0
    %4557 = vmatprep.subr.mxu0 0.0
    %4558 = vmatpush2.xpose.msra.mxu0 0.0
    %4559 = vmatprep.subr.mxu0 0.0
    %4560 = vmatpush2.xpose.msra.mxu0 0.0
    %4561 = vmatprep.subr.mxu0 0.0
    %4562 = vmatpush2.xpose.msra.mxu0 0.0
    %4563 = vmatprep.subr.mxu0 0.0
    %4564 = vmatpush2.xpose.msra.mxu0 0.0
    %4565 = vmatprep.subr.mxu0 0.0
    %4566 = vmatpush2.xpose.msra.mxu0 0.0
    %4567 = vmatprep.subr.mxu0 0.0
    %4568 = vmatpush2.xpose.msra.mxu0 0.0
    %4569 = vmatprep.mubr.f32.mxu0 0.0
    %4570 = vmatmul.mubr.f32.gmra.mxu0 %v4501
    %v4571 = vpop.f32.mrf.mxu0
    %v4572 = vadd.f32 0.0, %v4571
    %v4573 = vpop.f32.mrf.mxu0
    %4574 = vdwg.mxu0
    %4575 = vrot.lane.b32.xlu0 %v3825, 112
    %v4576 = vpop.permute.xlu0 %4575
    %4577 = vrot.lane.b32.xlu0 %v3825, 80
    %v4578 = vpop.permute.xlu0 %4577
    %v4579 = vsel %vm277, %v4576, 0
    %v4581 = vsel %vm277, %v4578, 0
    %4583 = vmatprep.subr.mxu0 0.0
    %4584 = vmatpush1.xpose.msra.mxu0 0.0
    %4585 = vmatprep.subr.mxu0 0.0
    %4586 = vmatpush1.xpose.msra.mxu0 0.0
    %4587 = vmatprep.subr.mxu0 0.0
    %4588 = vmatpush1.xpose.msra.mxu0 0.0
    %4589 = vmatprep.subr.mxu0 0.0
    %4590 = vmatpush1.xpose.msra.mxu0 0.0
    %4591 = vmatprep.subr.mxu0 0.0
    %4592 = vmatpush1.xpose.msra.mxu0 0.0
    %4593 = vmatprep.subr.mxu0 0.0
    %4594 = vmatpush1.xpose.msra.mxu0 0.0
    %4595 = vmatprep.subr.mxu0 0.0
    %4596 = vmatpush1.xpose.msra.mxu0 0.0
    %4597 = vmatprep.subr.mxu0 0.0
    %4598 = vmatpush1.xpose.msra.mxu0 0.0
    %4599 = vmatprep.subr.mxu0 0.0
    %4600 = vmatpush1.xpose.msra.mxu0 0.0
    %4601 = vmatprep.subr.mxu0 0.0
    %4602 = vmatpush1.xpose.msra.mxu0 0.0
    %4603 = vmatprep.subr.mxu0 0.0
    %4604 = vmatpush1.xpose.msra.mxu0 0.0
    %4605 = vmatprep.subr.mxu0 0.0
    %4606 = vmatpush1.xpose.msra.mxu0 0.0
    %4607 = vmatprep.subr.mxu0 0.0
    %4608 = vmatpush1.xpose.msra.mxu0 0.0
    %4609 = vmatprep.subr.mxu0 0.0
    %4610 = vmatpush1.xpose.msra.mxu0 0.0
    %4611 = vmatprep.subr.mxu0 0.0
    %4612 = vmatpush1.xpose.msra.mxu0 0.0
    %4613 = vmatprep.subr.mxu0 0.0
    %4614 = vmatpush1.xpose.msra.mxu0 %v4581
    %4615 = vmatprep.subr.mxu0 0.0
    %4616 = vmatpush2.xpose.msra.mxu0 0.0
    %4617 = vmatprep.subr.mxu0 0.0
    %4618 = vmatpush2.xpose.msra.mxu0 0.0
    %4619 = vmatprep.subr.mxu0 0.0
    %4620 = vmatpush2.xpose.msra.mxu0 0.0
    %4621 = vmatprep.subr.mxu0 0.0
    %4622 = vmatpush2.xpose.msra.mxu0 0.0
    %4623 = vmatprep.subr.mxu0 0.0
    %4624 = vmatpush2.xpose.msra.mxu0 0.0
    %4625 = vmatprep.subr.mxu0 0.0
    %4626 = vmatpush2.xpose.msra.mxu0 0.0
    %4627 = vmatprep.subr.mxu0 0.0
    %4628 = vmatpush2.xpose.msra.mxu0 0.0
    %4629 = vmatprep.subr.mxu0 0.0
    %4630 = vmatpush2.xpose.msra.mxu0 0.0
    %4631 = vmatprep.subr.mxu0 0.0
    %4632 = vmatpush2.xpose.msra.mxu0 0.0
    %4633 = vmatprep.subr.mxu0 0.0
    %4634 = vmatpush2.xpose.msra.mxu0 0.0
    %4635 = vmatprep.subr.mxu0 0.0
    %4636 = vmatpush2.xpose.msra.mxu0 0.0
    %4637 = vmatprep.subr.mxu0 0.0
    %4638 = vmatpush2.xpose.msra.mxu0 0.0
    %4639 = vmatprep.subr.mxu0 0.0
    %4640 = vmatpush2.xpose.msra.mxu0 0.0
    %4641 = vmatprep.subr.mxu0 0.0
    %4642 = vmatpush2.xpose.msra.mxu0 0.0
    %4643 = vmatprep.subr.mxu0 0.0
    %4644 = vmatpush2.xpose.msra.mxu0 0.0
    %4645 = vmatprep.subr.mxu0 0.0
    %4646 = vmatpush2.xpose.msra.mxu0 0.0
    %4647 = vmatprep.mubr.f32.mxu0 0.0
    %4648 = vmatmul.mubr.f32.gmra.mxu0 %v4579
    %v4649 = vpop.f32.mrf.mxu0
    %v4650 = vadd.f32 0.0, %v4649
    %v4651 = vpop.f32.mrf.mxu0
    %4652 = vdwg.mxu0
    %v4653 = vmul.f32 %v4572, 0.35355338
    %v4654 = vmul.f32 %v4650, 0.35355338
    %v4655 = vsel %vm277, %v4653, -inf
    %4656 = vmax.xlane.f32.xlu0 %v4655
    %v4657 = vpop.xlane.xlu0 %4656
    %v4658 = vsel %vm277, %v4654, -inf
    %4659 = vmax.xlane.f32.xlu0 %v4658
    %v4660 = vpop.xlane.xlu0 %4659
    %v4661 = vsub.f32 %v4653, %v4657
    %v4662 = vsub.f32 %v4654, %v4660
    %v4663 = vmul.f32 %v4661, 1.442695
    %v4664 = vpow.pop %v4663
    %v4665 = vmul.f32 %v4662, 1.442695
    %v4666 = vpow.pop %v4665
    %v4667 = vsel %vm277, %v4664, 0.0
    %4668 = vadd.xlane.f32.xlu0 %v4667
    %v4669 = vpop.xlane.xlu0 %4668
    %v4670 = vsel %vm277, %v4666, 0.0
    %4671 = vadd.xlane.f32.xlu0 %v4670
    %v4672 = vpop.xlane.xlu0 %4671
    %v4673 = vrcp.pop %v4669
    %v4674 = vmul.f32 %v4664, %v4673
    %v4675 = vrcp.pop %v4672
    %v4676 = vmul.f32 %v4666, %v4675
    %4677 = vrot.lane.b32.xlu0 %v3820, 48
    %v4678 = vpop.permute.xlu0 %4677
    %v4681 = vsel %vm277, %v4674, 0
    %4683 = vmatprep.subr.mxu0 0.0
    %4684 = vmatpush1.msra.mxu0 0.0
    %4685 = vmatprep.subr.mxu0 0.0
    %4686 = vmatpush1.msra.mxu0 0.0
    %4687 = vmatprep.subr.mxu0 0.0
    %4688 = vmatpush1.msra.mxu0 0.0
    %4689 = vmatprep.subr.mxu0 0.0
    %4690 = vmatpush1.msra.mxu0 0.0
    %4691 = vmatprep.subr.mxu0 0.0
    %4692 = vmatpush1.msra.mxu0 0.0
    %4693 = vmatprep.subr.mxu0 0.0
    %4694 = vmatpush1.msra.mxu0 0.0
    %4695 = vmatprep.subr.mxu0 0.0
    %4696 = vmatpush1.msra.mxu0 0.0
    %4697 = vmatprep.subr.mxu0 0.0
    %4698 = vmatpush1.msra.mxu0 0.0
    %4699 = vmatprep.subr.mxu0 0.0
    %4700 = vmatpush1.msra.mxu0 0.0
    %4701 = vmatprep.subr.mxu0 0.0
    %4702 = vmatpush1.msra.mxu0 0.0
    %4703 = vmatprep.subr.mxu0 0.0
    %4704 = vmatpush1.msra.mxu0 0.0
    %4705 = vmatprep.subr.mxu0 0.0
    %4706 = vmatpush1.msra.mxu0 0.0
    %4707 = vmatprep.subr.mxu0 0.0
    %4708 = vmatpush1.msra.mxu0 0.0
    %4709 = vmatprep.subr.mxu0 0.0
    %4710 = vmatpush1.msra.mxu0 0.0
    %4711 = vmatprep.subr.mxu0 0.0
    %4712 = vmatpush1.msra.mxu0 0.0
    %4713 = vmatprep.subr.mxu0 0.0
    %4714 = vmatpush1.msra.mxu0 %v4678
    %4715 = vmatprep.subr.mxu0 0.0
    %4716 = vmatpush2.msra.mxu0 0.0
    %4717 = vmatprep.subr.mxu0 0.0
    %4718 = vmatpush2.msra.mxu0 0.0
    %4719 = vmatprep.subr.mxu0 0.0
    %4720 = vmatpush2.msra.mxu0 0.0
    %4721 = vmatprep.subr.mxu0 0.0
    %4722 = vmatpush2.msra.mxu0 0.0
    %4723 = vmatprep.subr.mxu0 0.0
    %4724 = vmatpush2.msra.mxu0 0.0
    %4725 = vmatprep.subr.mxu0 0.0
    %4726 = vmatpush2.msra.mxu0 0.0
    %4727 = vmatprep.subr.mxu0 0.0
    %4728 = vmatpush2.msra.mxu0 0.0
    %4729 = vmatprep.subr.mxu0 0.0
    %4730 = vmatpush2.msra.mxu0 0.0
    %4731 = vmatprep.subr.mxu0 0.0
    %4732 = vmatpush2.msra.mxu0 0.0
    %4733 = vmatprep.subr.mxu0 0.0
    %4734 = vmatpush2.msra.mxu0 0.0
    %4735 = vmatprep.subr.mxu0 0.0
    %4736 = vmatpush2.msra.mxu0 0.0
    %4737 = vmatprep.subr.mxu0 0.0
    %4738 = vmatpush2.msra.mxu0 0.0
    %4739 = vmatprep.subr.mxu0 0.0
    %4740 = vmatpush2.msra.mxu0 0.0
    %4741 = vmatprep.subr.mxu0 0.0
    %4742 = vmatpush2.msra.mxu0 0.0
    %4743 = vmatprep.subr.mxu0 0.0
    %4744 = vmatpush2.msra.mxu0 0.0
    %4745 = vmatprep.subr.mxu0 0.0
    %4746 = vmatpush2.msra.mxu0 0.0
    %4747 = vmatprep.mubr.f32.mxu0 0.0
    %4748 = vmatmul.mubr.f32.gmra.mxu0 %v4681
    %v4749 = vpop.f32.mrf.mxu0
    %v4750 = vadd.f32 0.0, %v4749
    %v4751 = vpop.f32.mrf.mxu0
    %4752 = vdwg.mxu0
    %4753 = vrot.lane.b32.xlu0 %v3825, 48
    %v4754 = vpop.permute.xlu0 %4753
    %v4757 = vsel %vm277, %v4676, 0
    %4759 = vmatprep.subr.mxu0 0.0
    %4760 = vmatpush1.msra.mxu0 0.0
    %4761 = vmatprep.subr.mxu0 0.0
    %4762 = vmatpush1.msra.mxu0 0.0
    %4763 = vmatprep.subr.mxu0 0.0
    %4764 = vmatpush1.msra.mxu0 0.0
    %4765 = vmatprep.subr.mxu0 0.0
    %4766 = vmatpush1.msra.mxu0 0.0
    %4767 = vmatprep.subr.mxu0 0.0
    %4768 = vmatpush1.msra.mxu0 0.0
    %4769 = vmatprep.subr.mxu0 0.0
    %4770 = vmatpush1.msra.mxu0 0.0
    %4771 = vmatprep.subr.mxu0 0.0
    %4772 = vmatpush1.msra.mxu0 0.0
    %4773 = vmatprep.subr.mxu0 0.0
    %4774 = vmatpush1.msra.mxu0 0.0
    %4775 = vmatprep.subr.mxu0 0.0
    %4776 = vmatpush1.msra.mxu0 0.0
    %4777 = vmatprep.subr.mxu0 0.0
    %4778 = vmatpush1.msra.mxu0 0.0
    %4779 = vmatprep.subr.mxu0 0.0
    %4780 = vmatpush1.msra.mxu0 0.0
    %4781 = vmatprep.subr.mxu0 0.0
    %4782 = vmatpush1.msra.mxu0 0.0
    %4783 = vmatprep.subr.mxu0 0.0
    %4784 = vmatpush1.msra.mxu0 0.0
    %4785 = vmatprep.subr.mxu0 0.0
    %4786 = vmatpush1.msra.mxu0 0.0
    %4787 = vmatprep.subr.mxu0 0.0
    %4788 = vmatpush1.msra.mxu0 0.0
    %4789 = vmatprep.subr.mxu0 0.0
    %4790 = vmatpush1.msra.mxu0 %v4754
    %4791 = vmatprep.subr.mxu0 0.0
    %4792 = vmatpush2.msra.mxu0 0.0
    %4793 = vmatprep.subr.mxu0 0.0
    %4794 = vmatpush2.msra.mxu0 0.0
    %4795 = vmatprep.subr.mxu0 0.0
    %4796 = vmatpush2.msra.mxu0 0.0
    %4797 = vmatprep.subr.mxu0 0.0
    %4798 = vmatpush2.msra.mxu0 0.0
    %4799 = vmatprep.subr.mxu0 0.0
    %4800 = vmatpush2.msra.mxu0 0.0
    %4801 = vmatprep.subr.mxu0 0.0
    %4802 = vmatpush2.msra.mxu0 0.0
    %4803 = vmatprep.subr.mxu0 0.0
    %4804 = vmatpush2.msra.mxu0 0.0
    %4805 = vmatprep.subr.mxu0 0.0
    %4806 = vmatpush2.msra.mxu0 0.0
    %4807 = vmatprep.subr.mxu0 0.0
    %4808 = vmatpush2.msra.mxu0 0.0
    %4809 = vmatprep.subr.mxu0 0.0
    %4810 = vmatpush2.msra.mxu0 0.0
    %4811 = vmatprep.subr.mxu0 0.0
    %4812 = vmatpush2.msra.mxu0 0.0
    %4813 = vmatprep.subr.mxu0 0.0
    %4814 = vmatpush2.msra.mxu0 0.0
    %4815 = vmatprep.subr.mxu0 0.0
    %4816 = vmatpush2.msra.mxu0 0.0
    %4817 = vmatprep.subr.mxu0 0.0
    %4818 = vmatpush2.msra.mxu0 0.0
    %4819 = vmatprep.subr.mxu0 0.0
    %4820 = vmatpush2.msra.mxu0 0.0
    %4821 = vmatprep.subr.mxu0 0.0
    %4822 = vmatpush2.msra.mxu0 0.0
    %4823 = vmatprep.mubr.f32.mxu0 0.0
    %4824 = vmatmul.mubr.f32.gmra.mxu0 %v4757
    %v4825 = vpop.f32.mrf.mxu0
    %v4826 = vadd.f32 0.0, %v4825
    %v4827 = vpop.f32.mrf.mxu0
    %4828 = vdwg.mxu0
    %4829 = vrot.lane.b32.xlu0 %v3820, 104
    %v4830 = vpop.permute.xlu0 %4829
    %4831 = vrot.lane.b32.xlu0 %v3820, 72
    %v4832 = vpop.permute.xlu0 %4831
    %v4833 = vsel %vm277, %v4830, 0
    %v4835 = vsel %vm277, %v4832, 0
    %4837 = vmatprep.subr.mxu0 0.0
    %4838 = vmatpush1.xpose.msra.mxu0 0.0
    %4839 = vmatprep.subr.mxu0 0.0
    %4840 = vmatpush1.xpose.msra.mxu0 0.0
    %4841 = vmatprep.subr.mxu0 0.0
    %4842 = vmatpush1.xpose.msra.mxu0 0.0
    %4843 = vmatprep.subr.mxu0 0.0
    %4844 = vmatpush1.xpose.msra.mxu0 0.0
    %4845 = vmatprep.subr.mxu0 0.0
    %4846 = vmatpush1.xpose.msra.mxu0 0.0
    %4847 = vmatprep.subr.mxu0 0.0
    %4848 = vmatpush1.xpose.msra.mxu0 0.0
    %4849 = vmatprep.subr.mxu0 0.0
    %4850 = vmatpush1.xpose.msra.mxu0 0.0
    %4851 = vmatprep.subr.mxu0 0.0
    %4852 = vmatpush1.xpose.msra.mxu0 0.0
    %4853 = vmatprep.subr.mxu0 0.0
    %4854 = vmatpush1.xpose.msra.mxu0 0.0
    %4855 = vmatprep.subr.mxu0 0.0
    %4856 = vmatpush1.xpose.msra.mxu0 0.0
    %4857 = vmatprep.subr.mxu0 0.0
    %4858 = vmatpush1.xpose.msra.mxu0 0.0
    %4859 = vmatprep.subr.mxu0 0.0
    %4860 = vmatpush1.xpose.msra.mxu0 0.0
    %4861 = vmatprep.subr.mxu0 0.0
    %4862 = vmatpush1.xpose.msra.mxu0 0.0
    %4863 = vmatprep.subr.mxu0 0.0
    %4864 = vmatpush1.xpose.msra.mxu0 0.0
    %4865 = vmatprep.subr.mxu0 0.0
    %4866 = vmatpush1.xpose.msra.mxu0 0.0
    %4867 = vmatprep.subr.mxu0 0.0
    %4868 = vmatpush1.xpose.msra.mxu0 %v4835
    %4869 = vmatprep.subr.mxu0 0.0
    %4870 = vmatpush2.xpose.msra.mxu0 0.0
    %4871 = vmatprep.subr.mxu0 0.0
    %4872 = vmatpush2.xpose.msra.mxu0 0.0
    %4873 = vmatprep.subr.mxu0 0.0
    %4874 = vmatpush2.xpose.msra.mxu0 0.0
    %4875 = vmatprep.subr.mxu0 0.0
    %4876 = vmatpush2.xpose.msra.mxu0 0.0
    %4877 = vmatprep.subr.mxu0 0.0
    %4878 = vmatpush2.xpose.msra.mxu0 0.0
    %4879 = vmatprep.subr.mxu0 0.0
    %4880 = vmatpush2.xpose.msra.mxu0 0.0
    %4881 = vmatprep.subr.mxu0 0.0
    %4882 = vmatpush2.xpose.msra.mxu0 0.0
    %4883 = vmatprep.subr.mxu0 0.0
    %4884 = vmatpush2.xpose.msra.mxu0 0.0
    %4885 = vmatprep.subr.mxu0 0.0
    %4886 = vmatpush2.xpose.msra.mxu0 0.0
    %4887 = vmatprep.subr.mxu0 0.0
    %4888 = vmatpush2.xpose.msra.mxu0 0.0
    %4889 = vmatprep.subr.mxu0 0.0
    %4890 = vmatpush2.xpose.msra.mxu0 0.0
    %4891 = vmatprep.subr.mxu0 0.0
    %4892 = vmatpush2.xpose.msra.mxu0 0.0
    %4893 = vmatprep.subr.mxu0 0.0
    %4894 = vmatpush2.xpose.msra.mxu0 0.0
    %4895 = vmatprep.subr.mxu0 0.0
    %4896 = vmatpush2.xpose.msra.mxu0 0.0
    %4897 = vmatprep.subr.mxu0 0.0
    %4898 = vmatpush2.xpose.msra.mxu0 0.0
    %4899 = vmatprep.subr.mxu0 0.0
    %4900 = vmatpush2.xpose.msra.mxu0 0.0
    %4901 = vmatprep.mubr.f32.mxu0 0.0
    %4902 = vmatmul.mubr.f32.gmra.mxu0 %v4833
    %v4903 = vpop.f32.mrf.mxu0
    %v4904 = vadd.f32 0.0, %v4903
    %v4905 = vpop.f32.mrf.mxu0
    %4906 = vdwg.mxu0
    %4907 = vrot.lane.b32.xlu0 %v3825, 104
    %v4908 = vpop.permute.xlu0 %4907
    %4909 = vrot.lane.b32.xlu0 %v3825, 72
    %v4910 = vpop.permute.xlu0 %4909
    %v4911 = vsel %vm277, %v4908, 0
    %v4913 = vsel %vm277, %v4910, 0
    %4915 = vmatprep.subr.mxu0 0.0
    %4916 = vmatpush1.xpose.msra.mxu0 0.0
    %4917 = vmatprep.subr.mxu0 0.0
    %4918 = vmatpush1.xpose.msra.mxu0 0.0
    %4919 = vmatprep.subr.mxu0 0.0
    %4920 = vmatpush1.xpose.msra.mxu0 0.0
    %4921 = vmatprep.subr.mxu0 0.0
    %4922 = vmatpush1.xpose.msra.mxu0 0.0
    %4923 = vmatprep.subr.mxu0 0.0
    %4924 = vmatpush1.xpose.msra.mxu0 0.0
    %4925 = vmatprep.subr.mxu0 0.0
    %4926 = vmatpush1.xpose.msra.mxu0 0.0
    %4927 = vmatprep.subr.mxu0 0.0
    %4928 = vmatpush1.xpose.msra.mxu0 0.0
    %4929 = vmatprep.subr.mxu0 0.0
    %4930 = vmatpush1.xpose.msra.mxu0 0.0
    %4931 = vmatprep.subr.mxu0 0.0
    %4932 = vmatpush1.xpose.msra.mxu0 0.0
    %4933 = vmatprep.subr.mxu0 0.0
    %4934 = vmatpush1.xpose.msra.mxu0 0.0
    %4935 = vmatprep.subr.mxu0 0.0
    %4936 = vmatpush1.xpose.msra.mxu0 0.0
    %4937 = vmatprep.subr.mxu0 0.0
    %4938 = vmatpush1.xpose.msra.mxu0 0.0
    %4939 = vmatprep.subr.mxu0 0.0
    %4940 = vmatpush1.xpose.msra.mxu0 0.0
    %4941 = vmatprep.subr.mxu0 0.0
    %4942 = vmatpush1.xpose.msra.mxu0 0.0
    %4943 = vmatprep.subr.mxu0 0.0
    %4944 = vmatpush1.xpose.msra.mxu0 0.0
    %4945 = vmatprep.subr.mxu0 0.0
    %4946 = vmatpush1.xpose.msra.mxu0 %v4913
    %4947 = vmatprep.subr.mxu0 0.0
    %4948 = vmatpush2.xpose.msra.mxu0 0.0
    %4949 = vmatprep.subr.mxu0 0.0
    %4950 = vmatpush2.xpose.msra.mxu0 0.0
    %4951 = vmatprep.subr.mxu0 0.0
    %4952 = vmatpush2.xpose.msra.mxu0 0.0
    %4953 = vmatprep.subr.mxu0 0.0
    %4954 = vmatpush2.xpose.msra.mxu0 0.0
    %4955 = vmatprep.subr.mxu0 0.0
    %4956 = vmatpush2.xpose.msra.mxu0 0.0
    %4957 = vmatprep.subr.mxu0 0.0
    %4958 = vmatpush2.xpose.msra.mxu0 0.0
    %4959 = vmatprep.subr.mxu0 0.0
    %4960 = vmatpush2.xpose.msra.mxu0 0.0
    %4961 = vmatprep.subr.mxu0 0.0
    %4962 = vmatpush2.xpose.msra.mxu0 0.0
    %4963 = vmatprep.subr.mxu0 0.0
    %4964 = vmatpush2.xpose.msra.mxu0 0.0
    %4965 = vmatprep.subr.mxu0 0.0
    %4966 = vmatpush2.xpose.msra.mxu0 0.0
    %4967 = vmatprep.subr.mxu0 0.0
    %4968 = vmatpush2.xpose.msra.mxu0 0.0
    %4969 = vmatprep.subr.mxu0 0.0
    %4970 = vmatpush2.xpose.msra.mxu0 0.0
    %4971 = vmatprep.subr.mxu0 0.0
    %4972 = vmatpush2.xpose.msra.mxu0 0.0
    %4973 = vmatprep.subr.mxu0 0.0
    %4974 = vmatpush2.xpose.msra.mxu0 0.0
    %4975 = vmatprep.subr.mxu0 0.0
    %4976 = vmatpush2.xpose.msra.mxu0 0.0
    %4977 = vmatprep.subr.mxu0 0.0
    %4978 = vmatpush2.xpose.msra.mxu0 0.0
    %4979 = vmatprep.mubr.f32.mxu0 0.0
    %4980 = vmatmul.mubr.f32.gmra.mxu0 %v4911
    %v4981 = vpop.f32.mrf.mxu0
    %v4982 = vadd.f32 0.0, %v4981
    %v4983 = vpop.f32.mrf.mxu0
    %4984 = vdwg.mxu0
    %v4985 = vmul.f32 %v4904, 0.35355338
    %v4986 = vmul.f32 %v4982, 0.35355338
    %v4987 = vsel %vm277, %v4985, -inf
    %4988 = vmax.xlane.f32.xlu0 %v4987
    %v4989 = vpop.xlane.xlu0 %4988
    %v4990 = vsel %vm277, %v4986, -inf
    %4991 = vmax.xlane.f32.xlu0 %v4990
    %v4992 = vpop.xlane.xlu0 %4991
    %v4993 = vsub.f32 %v4985, %v4989
    %v4994 = vsub.f32 %v4986, %v4992
    %v4995 = vmul.f32 %v4993, 1.442695
    %v4996 = vpow.pop %v4995
    %v4997 = vmul.f32 %v4994, 1.442695
    %v4998 = vpow.pop %v4997
    %v4999 = vsel %vm277, %v4996, 0.0
    %5000 = vadd.xlane.f32.xlu0 %v4999
    %v5001 = vpop.xlane.xlu0 %5000
    %v5002 = vsel %vm277, %v4998, 0.0
    %5003 = vadd.xlane.f32.xlu0 %v5002
    %v5004 = vpop.xlane.xlu0 %5003
    %v5005 = vrcp.pop %v5001
    %v5006 = vmul.f32 %v4996, %v5005
    %v5007 = vrcp.pop %v5004
    %v5008 = vmul.f32 %v4998, %v5007
    %5009 = vrot.lane.b32.xlu0 %v3820, 40
    %v5010 = vpop.permute.xlu0 %5009
    %v5013 = vsel %vm277, %v5006, 0
    %5015 = vmatprep.subr.mxu0 0.0
    %5016 = vmatpush1.msra.mxu0 0.0
    %5017 = vmatprep.subr.mxu0 0.0
    %5018 = vmatpush1.msra.mxu0 0.0
    %5019 = vmatprep.subr.mxu0 0.0
    %5020 = vmatpush1.msra.mxu0 0.0
    %5021 = vmatprep.subr.mxu0 0.0
    %5022 = vmatpush1.msra.mxu0 0.0
    %5023 = vmatprep.subr.mxu0 0.0
    %5024 = vmatpush1.msra.mxu0 0.0
    %5025 = vmatprep.subr.mxu0 0.0
    %5026 = vmatpush1.msra.mxu0 0.0
    %5027 = vmatprep.subr.mxu0 0.0
    %5028 = vmatpush1.msra.mxu0 0.0
    %5029 = vmatprep.subr.mxu0 0.0
    %5030 = vmatpush1.msra.mxu0 0.0
    %5031 = vmatprep.subr.mxu0 0.0
    %5032 = vmatpush1.msra.mxu0 0.0
    %5033 = vmatprep.subr.mxu0 0.0
    %5034 = vmatpush1.msra.mxu0 0.0
    %5035 = vmatprep.subr.mxu0 0.0
    %5036 = vmatpush1.msra.mxu0 0.0
    %5037 = vmatprep.subr.mxu0 0.0
    %5038 = vmatpush1.msra.mxu0 0.0
    %5039 = vmatprep.subr.mxu0 0.0
    %5040 = vmatpush1.msra.mxu0 0.0
    %5041 = vmatprep.subr.mxu0 0.0
    %5042 = vmatpush1.msra.mxu0 0.0
    %5043 = vmatprep.subr.mxu0 0.0
    %5044 = vmatpush1.msra.mxu0 0.0
    %5045 = vmatprep.subr.mxu0 0.0
    %5046 = vmatpush1.msra.mxu0 %v5010
    %5047 = vmatprep.subr.mxu0 0.0
    %5048 = vmatpush2.msra.mxu0 0.0
    %5049 = vmatprep.subr.mxu0 0.0
    %5050 = vmatpush2.msra.mxu0 0.0
    %5051 = vmatprep.subr.mxu0 0.0
    %5052 = vmatpush2.msra.mxu0 0.0
    %5053 = vmatprep.subr.mxu0 0.0
    %5054 = vmatpush2.msra.mxu0 0.0
    %5055 = vmatprep.subr.mxu0 0.0
    %5056 = vmatpush2.msra.mxu0 0.0
    %5057 = vmatprep.subr.mxu0 0.0
    %5058 = vmatpush2.msra.mxu0 0.0
    %5059 = vmatprep.subr.mxu0 0.0
    %5060 = vmatpush2.msra.mxu0 0.0
    %5061 = vmatprep.subr.mxu0 0.0
    %5062 = vmatpush2.msra.mxu0 0.0
    %5063 = vmatprep.subr.mxu0 0.0
    %5064 = vmatpush2.msra.mxu0 0.0
    %5065 = vmatprep.subr.mxu0 0.0
    %5066 = vmatpush2.msra.mxu0 0.0
    %5067 = vmatprep.subr.mxu0 0.0
    %5068 = vmatpush2.msra.mxu0 0.0
    %5069 = vmatprep.subr.mxu0 0.0
    %5070 = vmatpush2.msra.mxu0 0.0
    %5071 = vmatprep.subr.mxu0 0.0
    %5072 = vmatpush2.msra.mxu0 0.0
    %5073 = vmatprep.subr.mxu0 0.0
    %5074 = vmatpush2.msra.mxu0 0.0
    %5075 = vmatprep.subr.mxu0 0.0
    %5076 = vmatpush2.msra.mxu0 0.0
    %5077 = vmatprep.subr.mxu0 0.0
    %5078 = vmatpush2.msra.mxu0 0.0
    %5079 = vmatprep.mubr.f32.mxu0 0.0
    %5080 = vmatmul.mubr.f32.gmra.mxu0 %v5013
    %v5081 = vpop.f32.mrf.mxu0
    %v5082 = vadd.f32 0.0, %v5081
    %v5083 = vpop.f32.mrf.mxu0
    %5084 = vdwg.mxu0
    %5085 = vrot.lane.b32.xlu0 %v3825, 40
    %v5086 = vpop.permute.xlu0 %5085
    %v5089 = vsel %vm277, %v5008, 0
    %5091 = vmatprep.subr.mxu0 0.0
    %5092 = vmatpush1.msra.mxu0 0.0
    %5093 = vmatprep.subr.mxu0 0.0
    %5094 = vmatpush1.msra.mxu0 0.0
    %5095 = vmatprep.subr.mxu0 0.0
    %5096 = vmatpush1.msra.mxu0 0.0
    %5097 = vmatprep.subr.mxu0 0.0
    %5098 = vmatpush1.msra.mxu0 0.0
    %5099 = vmatprep.subr.mxu0 0.0
    %5100 = vmatpush1.msra.mxu0 0.0
    %5101 = vmatprep.subr.mxu0 0.0
    %5102 = vmatpush1.msra.mxu0 0.0
    %5103 = vmatprep.subr.mxu0 0.0
    %5104 = vmatpush1.msra.mxu0 0.0
    %5105 = vmatprep.subr.mxu0 0.0
    %5106 = vmatpush1.msra.mxu0 0.0
    %5107 = vmatprep.subr.mxu0 0.0
    %5108 = vmatpush1.msra.mxu0 0.0
    %5109 = vmatprep.subr.mxu0 0.0
    %5110 = vmatpush1.msra.mxu0 0.0
    %5111 = vmatprep.subr.mxu0 0.0
    %5112 = vmatpush1.msra.mxu0 0.0
    %5113 = vmatprep.subr.mxu0 0.0
    %5114 = vmatpush1.msra.mxu0 0.0
    %5115 = vmatprep.subr.mxu0 0.0
    %5116 = vmatpush1.msra.mxu0 0.0
    %5117 = vmatprep.subr.mxu0 0.0
    %5118 = vmatpush1.msra.mxu0 0.0
    %5119 = vmatprep.subr.mxu0 0.0
    %5120 = vmatpush1.msra.mxu0 0.0
    %5121 = vmatprep.subr.mxu0 0.0
    %5122 = vmatpush1.msra.mxu0 %v5086
    %5123 = vmatprep.subr.mxu0 0.0
    %5124 = vmatpush2.msra.mxu0 0.0
    %5125 = vmatprep.subr.mxu0 0.0
    %5126 = vmatpush2.msra.mxu0 0.0
    %5127 = vmatprep.subr.mxu0 0.0
    %5128 = vmatpush2.msra.mxu0 0.0
    %5129 = vmatprep.subr.mxu0 0.0
    %5130 = vmatpush2.msra.mxu0 0.0
    %5131 = vmatprep.subr.mxu0 0.0
    %5132 = vmatpush2.msra.mxu0 0.0
    %5133 = vmatprep.subr.mxu0 0.0
    %5134 = vmatpush2.msra.mxu0 0.0
    %5135 = vmatprep.subr.mxu0 0.0
    %5136 = vmatpush2.msra.mxu0 0.0
    %5137 = vmatprep.subr.mxu0 0.0
    %5138 = vmatpush2.msra.mxu0 0.0
    %5139 = vmatprep.subr.mxu0 0.0
    %5140 = vmatpush2.msra.mxu0 0.0
    %5141 = vmatprep.subr.mxu0 0.0
    %5142 = vmatpush2.msra.mxu0 0.0
    %5143 = vmatprep.subr.mxu0 0.0
    %5144 = vmatpush2.msra.mxu0 0.0
    %5145 = vmatprep.subr.mxu0 0.0
    %5146 = vmatpush2.msra.mxu0 0.0
    %5147 = vmatprep.subr.mxu0 0.0
    %5148 = vmatpush2.msra.mxu0 0.0
    %5149 = vmatprep.subr.mxu0 0.0
    %5150 = vmatpush2.msra.mxu0 0.0
    %5151 = vmatprep.subr.mxu0 0.0
    %5152 = vmatpush2.msra.mxu0 0.0
    %5153 = vmatprep.subr.mxu0 0.0
    %5154 = vmatpush2.msra.mxu0 0.0
    %5155 = vmatprep.mubr.f32.mxu0 0.0
    %5156 = vmatmul.mubr.f32.gmra.mxu0 %v5089
    %v5157 = vpop.f32.mrf.mxu0
    %v5158 = vadd.f32 0.0, %v5157
    %v5159 = vpop.f32.mrf.mxu0
    %5160 = vdwg.mxu0
    %5163 = vrot.lane.b32.xlu0 %v4418, 8
    %v5164 = vpop.permute.xlu0 %5163
    %5165 = vrot.lane.b32.xlu0 %v4494, 8
    %v5166 = vpop.permute.xlu0 %5165
    %5171 = vrot.lane.b32.xlu0 %v4750, 16
    %v5172 = vpop.permute.xlu0 %5171
    %5173 = vrot.lane.b32.xlu0 %v4826, 16
    %v5174 = vpop.permute.xlu0 %5173
    %5179 = vrot.lane.b32.xlu0 %v5082, 24
    %v5180 = vpop.permute.xlu0 %5179
    %5181 = vrot.lane.b32.xlu0 %v5158, 24
    %v5182 = vpop.permute.xlu0 %5181
    %v5185 = vsel %vm277, %v4086, %v5164
    %v5186 = vsel %vm277, %v4162, %v5166
    %v5187 = vsel %vm1627, %v5185, %v5172
    %v5188 = vsel %vm1627, %v5186, %v5174
    %v5189 = vsel %vm1630, %v5187, %v5180
    %v5190 = vsel %vm1630, %v5188, %v5182
    %v5192 = vlaneseq
    %v5193 = vshrl.u32 %v5192, 7
    %v5194 = vsub.s32 0, %v5193
    %v5195 = vrot.slane %v3834, %v5194
    %v5198 = vsel %vm133, %v5189, 0
    %v5201 = vsel %vm133, %v5190, 0
    %5203 = vmatprep.subr.mxu0 0.0
    %5204 = vmatpush1.msra.mxu0 0.0
    %5205 = vmatprep.subr.mxu0 0.0
    %5206 = vmatpush1.msra.mxu0 0.0
    %5207 = vmatprep.subr.mxu0 0.0
    %5208 = vmatpush1.msra.mxu0 0.0
    %5209 = vmatprep.subr.mxu0 0.0
    %5210 = vmatpush1.msra.mxu0 0.0
    %5211 = vmatprep.subr.mxu0 0.0
    %5212 = vmatpush1.msra.mxu0 0.0
    %5213 = vmatprep.subr.mxu0 0.0
    %5214 = vmatpush1.msra.mxu0 0.0
    %5215 = vmatprep.subr.mxu0 0.0
    %5216 = vmatpush1.msra.mxu0 0.0
    %5217 = vmatprep.subr.mxu0 0.0
    %5218 = vmatpush1.msra.mxu0 0.0
    %5219 = vmatprep.subr.mxu0 0.0
    %5220 = vmatpush1.msra.mxu0 0.0
    %5221 = vmatprep.subr.mxu0 0.0
    %5222 = vmatpush1.msra.mxu0 0.0
    %5223 = vmatprep.subr.mxu0 0.0
    %5224 = vmatpush1.msra.mxu0 0.0
    %5225 = vmatprep.subr.mxu0 0.0
    %5226 = vmatpush1.msra.mxu0 0.0
    %5227 = vmatprep.subr.mxu0 0.0
    %5228 = vmatpush1.msra.mxu0 %v3832
    %5229 = vmatprep.subr.mxu0 0.0
    %5230 = vmatpush1.msra.mxu0 %v3831
    %5231 = vmatprep.subr.mxu0 0.0
    %5232 = vmatpush1.msra.mxu0 %v3830
    %5233 = vmatprep.subr.mxu0 0.0
    %5234 = vmatpush1.msra.mxu0 %v3829
    %5235 = vmatprep.subr.mxu0 0.0
    %5236 = vmatpush2.msra.mxu0 0.0
    %5237 = vmatprep.subr.mxu0 0.0
    %5238 = vmatpush2.msra.mxu0 0.0
    %5239 = vmatprep.subr.mxu0 0.0
    %5240 = vmatpush2.msra.mxu0 0.0
    %5241 = vmatprep.subr.mxu0 0.0
    %5242 = vmatpush2.msra.mxu0 0.0
    %5243 = vmatprep.subr.mxu0 0.0
    %5244 = vmatpush2.msra.mxu0 0.0
    %5245 = vmatprep.subr.mxu0 0.0
    %5246 = vmatpush2.msra.mxu0 0.0
    %5247 = vmatprep.subr.mxu0 0.0
    %5248 = vmatpush2.msra.mxu0 0.0
    %5249 = vmatprep.subr.mxu0 0.0
    %5250 = vmatpush2.msra.mxu0 0.0
    %5251 = vmatprep.subr.mxu0 0.0
    %5252 = vmatpush2.msra.mxu0 0.0
    %5253 = vmatprep.subr.mxu0 0.0
    %5254 = vmatpush2.msra.mxu0 0.0
    %5255 = vmatprep.subr.mxu0 0.0
    %5256 = vmatpush2.msra.mxu0 0.0
    %5257 = vmatprep.subr.mxu0 0.0
    %5258 = vmatpush2.msra.mxu0 0.0
    %5259 = vmatprep.subr.mxu0 0.0
    %5260 = vmatpush2.msra.mxu0 0.0
    %5261 = vmatprep.subr.mxu0 0.0
    %5262 = vmatpush2.msra.mxu0 0.0
    %5263 = vmatprep.subr.mxu0 0.0
    %5264 = vmatpush2.msra.mxu0 0.0
    %5265 = vmatprep.subr.mxu0 0.0
    %5266 = vmatpush2.msra.mxu0 0.0
    %5267 = vmatprep.mubr.f32.mxu0 0.0
    %5268 = vmatmul.mubr.f32.gmra.mxu0 %v5198
    %v5269 = vpop.f32.mrf.mxu0
    %v5270 = vadd.f32 %v5195, %v5269
    %v5271 = vpop.f32.mrf.mxu0
    %5272 = vmatprep.mubr.f32.mxu0 0.0
    %5273 = vmatmul.mubr.f32.gmra.mxu0 %v5201
    %v5274 = vpop.f32.mrf.mxu0
    %v5275 = vadd.f32 %v5195, %v5274
    %v5276 = vpop.f32.mrf.mxu0
    %5277 = vdwg.mxu0
    %v5278 = vadd.f32 %v3686, %v5270
    %v5279 = vadd.f32 %v3687, %v5275
    %s5280 = scalar_lea.vmem %s8, 1
    %v5281 = vld [vmem:[%s5280] sm:$0x1]
    %s5282 = scalar_lea.vmem %s9, 1
    %v5283 = vld [vmem:[%s5282] sm:$0x1]
    %v5284 = vsel %vm133, %v5278, 0.0
    %5285 = vadd.xlane.f32.xlu0 %v5284
    %v5286 = vpop.xlane.xlu0 %5285
    %v5287 = vsel %vm133, %v5279, 0.0
    %5288 = vadd.xlane.f32.xlu0 %v5287
    %v5289 = vpop.xlane.xlu0 %5288
    %v5290 = vmul.f32 %v5286, %v140
    %v5291 = vmul.f32 %v5289, %v140
    %v5292 = vsub.f32 %v5278, %v5290
    %v5293 = vsub.f32 %v5279, %v5291
    %v5294 = vmul.f32 %v5292, %v5292
    %v5295 = vmul.f32 %v5293, %v5293
    %v5296 = vsel %vm133, %v5294, 0.0
    %5297 = vadd.xlane.f32.xlu0 %v5296
    %v5298 = vpop.xlane.xlu0 %5297
    %v5299 = vsel %vm133, %v5295, 0.0
    %5300 = vadd.xlane.f32.xlu0 %v5299
    %v5301 = vpop.xlane.xlu0 %5300
    %v5302 = vmul.f32 %v5298, %v140
    %v5303 = vmul.f32 %v5301, %v140
    %v5304 = vadd.f32 %v5302, 1e-05
    %v5305 = vadd.f32 %v5303, 1e-05
    %v5306 = vrsqrt.pop %v5304
    %v5307 = vrsqrt.pop %v5305
    %v5308 = vmul.f32 %v5292, %v5306
    %v5309 = vmul.f32 %v5293, %v5307
    %v5311 = vlaneseq
    %v5312 = vshrl.u32 %v5311, 7
    %v5313 = vsub.s32 0, %v5312
    %v5314 = vrot.slane %v5281, %v5313
    %v5316 = vmul.f32 %v5308, %v5314
    %v5317 = vmul.f32 %v5309, %v5314
    %v5319 = vlaneseq
    %v5320 = vshrl.u32 %v5319, 7
    %v5321 = vsub.s32 0, %v5320
    %v5322 = vrot.slane %v5283, %v5321
    %v5324 = vadd.f32 %v5316, %v5322
    %v5325 = vadd.f32 %v5317, %v5322
    %s5326 = scalar_lea.vmem %s10, 32
    %v5327 = vld [vmem:[%s5326] sm:$0xff]
    %v5328 = vld [vmem:[%s5326 + $0x8] sm:$0xff]
    %v5329 = vld [vmem:[%s5326 + $0x10] sm:$0xff]
    %v5330 = vld [vmem:[%s5326 + $0x18] sm:$0xff]
    %s5331 = scalar_lea.vmem %s11, 1
    %v5332 = vld [vmem:[%s5331] sm:$0x1]
    %v5334 = vlaneseq
    %v5335 = vshrl.u32 %v5334, 7
    %v5336 = vsub.s32 0, %v5335
    %v5337 = vrot.slane %v5332, %v5336
    %v5340 = vsel %vm133, %v5324, 0
    %v5343 = vsel %vm133, %v5325, 0
    %5345 = vmatprep.subr.mxu0 0.0
    %5346 = vmatpush1.msra.mxu0 0.0
    %5347 = vmatprep.subr.mxu0 0.0
    %5348 = vmatpush1.msra.mxu0 0.0
    %5349 = vmatprep.subr.mxu0 0.0
    %5350 = vmatpush1.msra.mxu0 0.0
    %5351 = vmatprep.subr.mxu0 0.0
    %5352 = vmatpush1.msra.mxu0 0.0
    %5353 = vmatprep.subr.mxu0 0.0
    %5354 = vmatpush1.msra.mxu0 0.0
    %5355 = vmatprep.subr.mxu0 0.0
    %5356 = vmatpush1.msra.mxu0 0.0
    %5357 = vmatprep.subr.mxu0 0.0
    %5358 = vmatpush1.msra.mxu0 0.0
    %5359 = vmatprep.subr.mxu0 0.0
    %5360 = vmatpush1.msra.mxu0 0.0
    %5361 = vmatprep.subr.mxu0 0.0
    %5362 = vmatpush1.msra.mxu0 0.0
    %5363 = vmatprep.subr.mxu0 0.0
    %5364 = vmatpush1.msra.mxu0 0.0
    %5365 = vmatprep.subr.mxu0 0.0
    %5366 = vmatpush1.msra.mxu0 0.0
    %5367 = vmatprep.subr.mxu0 0.0
    %5368 = vmatpush1.msra.mxu0 0.0
    %5369 = vmatprep.subr.mxu0 0.0
    %5370 = vmatpush1.msra.mxu0 %v5330
    %5371 = vmatprep.subr.mxu0 0.0
    %5372 = vmatpush1.msra.mxu0 %v5329
    %5373 = vmatprep.subr.mxu0 0.0
    %5374 = vmatpush1.msra.mxu0 %v5328
    %5375 = vmatprep.subr.mxu0 0.0
    %5376 = vmatpush1.msra.mxu0 %v5327
    %5377 = vmatprep.subr.mxu0 0.0
    %5378 = vmatpush2.msra.mxu0 0.0
    %5379 = vmatprep.subr.mxu0 0.0
    %5380 = vmatpush2.msra.mxu0 0.0
    %5381 = vmatprep.subr.mxu0 0.0
    %5382 = vmatpush2.msra.mxu0 0.0
    %5383 = vmatprep.subr.mxu0 0.0
    %5384 = vmatpush2.msra.mxu0 0.0
    %5385 = vmatprep.subr.mxu0 0.0
    %5386 = vmatpush2.msra.mxu0 0.0
    %5387 = vmatprep.subr.mxu0 0.0
    %5388 = vmatpush2.msra.mxu0 0.0
    %5389 = vmatprep.subr.mxu0 0.0
    %5390 = vmatpush2.msra.mxu0 0.0
    %5391 = vmatprep.subr.mxu0 0.0
    %5392 = vmatpush2.msra.mxu0 0.0
    %5393 = vmatprep.subr.mxu0 0.0
    %5394 = vmatpush2.msra.mxu0 0.0
    %5395 = vmatprep.subr.mxu0 0.0
    %5396 = vmatpush2.msra.mxu0 0.0
    %5397 = vmatprep.subr.mxu0 0.0
    %5398 = vmatpush2.msra.mxu0 0.0
    %5399 = vmatprep.subr.mxu0 0.0
    %5400 = vmatpush2.msra.mxu0 0.0
    %5401 = vmatprep.subr.mxu0 0.0
    %5402 = vmatpush2.msra.mxu0 0.0
    %5403 = vmatprep.subr.mxu0 0.0
    %5404 = vmatpush2.msra.mxu0 0.0
    %5405 = vmatprep.subr.mxu0 0.0
    %5406 = vmatpush2.msra.mxu0 0.0
    %5407 = vmatprep.subr.mxu0 0.0
    %5408 = vmatpush2.msra.mxu0 0.0
    %5409 = vmatprep.mubr.f32.mxu0 0.0
    %5410 = vmatmul.mubr.f32.gmra.mxu0 %v5340
    %v5411 = vpop.f32.mrf.mxu0
    %v5412 = vadd.f32 %v5337, %v5411
    %v5413 = vpop.f32.mrf.mxu0
    %5414 = vmatprep.mubr.f32.mxu0 0.0
    %5415 = vmatmul.mubr.f32.gmra.mxu0 %v5343
    %v5416 = vpop.f32.mrf.mxu0
    %v5417 = vadd.f32 %v5337, %v5416
    %v5418 = vpop.f32.mrf.mxu0
    %5419 = vdwg.mxu0
    %s5420 = scalar_lea.vmem %s12, 32
    %v5421 = vld [vmem:[%s5420] sm:$0xff]
    %v5422 = vld [vmem:[%s5420 + $0x8] sm:$0xff]
    %v5423 = vld [vmem:[%s5420 + $0x10] sm:$0xff]
    %v5424 = vld [vmem:[%s5420 + $0x18] sm:$0xff]
    %s5425 = scalar_lea.vmem %s13, 1
    %v5426 = vld [vmem:[%s5425] sm:$0x1]
    %v5428 = vlaneseq
    %v5429 = vshrl.u32 %v5428, 7
    %v5430 = vsub.s32 0, %v5429
    %v5431 = vrot.slane %v5426, %v5430
    %5433 = vmatprep.subr.mxu0 0.0
    %5434 = vmatpush1.msra.mxu0 0.0
    %5435 = vmatprep.subr.mxu0 0.0
    %5436 = vmatpush1.msra.mxu0 0.0
    %5437 = vmatprep.subr.mxu0 0.0
    %5438 = vmatpush1.msra.mxu0 0.0
    %5439 = vmatprep.subr.mxu0 0.0
    %5440 = vmatpush1.msra.mxu0 0.0
    %5441 = vmatprep.subr.mxu0 0.0
    %5442 = vmatpush1.msra.mxu0 0.0
    %5443 = vmatprep.subr.mxu0 0.0
    %5444 = vmatpush1.msra.mxu0 0.0
    %5445 = vmatprep.subr.mxu0 0.0
    %5446 = vmatpush1.msra.mxu0 0.0
    %5447 = vmatprep.subr.mxu0 0.0
    %5448 = vmatpush1.msra.mxu0 0.0
    %5449 = vmatprep.subr.mxu0 0.0
    %5450 = vmatpush1.msra.mxu0 0.0
    %5451 = vmatprep.subr.mxu0 0.0
    %5452 = vmatpush1.msra.mxu0 0.0
    %5453 = vmatprep.subr.mxu0 0.0
    %5454 = vmatpush1.msra.mxu0 0.0
    %5455 = vmatprep.subr.mxu0 0.0
    %5456 = vmatpush1.msra.mxu0 0.0
    %5457 = vmatprep.subr.mxu0 0.0
    %5458 = vmatpush1.msra.mxu0 %v5424
    %5459 = vmatprep.subr.mxu0 0.0
    %5460 = vmatpush1.msra.mxu0 %v5423
    %5461 = vmatprep.subr.mxu0 0.0
    %5462 = vmatpush1.msra.mxu0 %v5422
    %5463 = vmatprep.subr.mxu0 0.0
    %5464 = vmatpush1.msra.mxu0 %v5421
    %5465 = vmatprep.subr.mxu0 0.0
    %5466 = vmatpush2.msra.mxu0 0.0
    %5467 = vmatprep.subr.mxu0 0.0
    %5468 = vmatpush2.msra.mxu0 0.0
    %5469 = vmatprep.subr.mxu0 0.0
    %5470 = vmatpush2.msra.mxu0 0.0
    %5471 = vmatprep.subr.mxu0 0.0
    %5472 = vmatpush2.msra.mxu0 0.0
    %5473 = vmatprep.subr.mxu0 0.0
    %5474 = vmatpush2.msra.mxu0 0.0
    %5475 = vmatprep.subr.mxu0 0.0
    %5476 = vmatpush2.msra.mxu0 0.0
    %5477 = vmatprep.subr.mxu0 0.0
    %5478 = vmatpush2.msra.mxu0 0.0
    %5479 = vmatprep.subr.mxu0 0.0
    %5480 = vmatpush2.msra.mxu0 0.0
    %5481 = vmatprep.subr.mxu0 0.0
    %5482 = vmatpush2.msra.mxu0 0.0
    %5483 = vmatprep.subr.mxu0 0.0
    %5484 = vmatpush2.msra.mxu0 0.0
    %5485 = vmatprep.subr.mxu0 0.0
    %5486 = vmatpush2.msra.mxu0 0.0
    %5487 = vmatprep.subr.mxu0 0.0
    %5488 = vmatpush2.msra.mxu0 0.0
    %5489 = vmatprep.subr.mxu0 0.0
    %5490 = vmatpush2.msra.mxu0 0.0
    %5491 = vmatprep.subr.mxu0 0.0
    %5492 = vmatpush2.msra.mxu0 0.0
    %5493 = vmatprep.subr.mxu0 0.0
    %5494 = vmatpush2.msra.mxu0 0.0
    %5495 = vmatprep.subr.mxu0 0.0
    %5496 = vmatpush2.msra.mxu0 0.0
    %5497 = vmatprep.mubr.f32.mxu0 0.0
    %5498 = vmatmul.mubr.f32.gmra.mxu0 %v1870
    %v5499 = vpop.f32.mrf.mxu0
    %v5500 = vadd.f32 %v5431, %v5499
    %v5501 = vpop.f32.mrf.mxu0
    %5502 = vmatprep.mubr.f32.mxu0 0.0
    %5503 = vmatmul.mubr.f32.gmra.mxu0 %v1873
    %v5504 = vpop.f32.mrf.mxu0
    %v5505 = vadd.f32 %v5431, %v5504
    %v5506 = vpop.f32.mrf.mxu0
    %5507 = vdwg.mxu0
    %s5508 = scalar_lea.vmem %s14, 32
    %v5509 = vld [vmem:[%s5508] sm:$0xff]
    %v5510 = vld [vmem:[%s5508 + $0x8] sm:$0xff]
    %v5511 = vld [vmem:[%s5508 + $0x10] sm:$0xff]
    %v5512 = vld [vmem:[%s5508 + $0x18] sm:$0xff]
    %s5513 = scalar_lea.vmem %s15, 1
    %v5514 = vld [vmem:[%s5513] sm:$0x1]
    %v5516 = vsel %vm277, %v5412, 0
    %v5519 = vsel %vm277, %v5500, 0
    %5521 = vmatprep.subr.mxu0 0.0
    %5522 = vmatpush1.xpose.msra.mxu0 0.0
    %5523 = vmatprep.subr.mxu0 0.0
    %5524 = vmatpush1.xpose.msra.mxu0 0.0
    %5525 = vmatprep.subr.mxu0 0.0
    %5526 = vmatpush1.xpose.msra.mxu0 0.0
    %5527 = vmatprep.subr.mxu0 0.0
    %5528 = vmatpush1.xpose.msra.mxu0 0.0
    %5529 = vmatprep.subr.mxu0 0.0
    %5530 = vmatpush1.xpose.msra.mxu0 0.0
    %5531 = vmatprep.subr.mxu0 0.0
    %5532 = vmatpush1.xpose.msra.mxu0 0.0
    %5533 = vmatprep.subr.mxu0 0.0
    %5534 = vmatpush1.xpose.msra.mxu0 0.0
    %5535 = vmatprep.subr.mxu0 0.0
    %5536 = vmatpush1.xpose.msra.mxu0 0.0
    %5537 = vmatprep.subr.mxu0 0.0
    %5538 = vmatpush1.xpose.msra.mxu0 0.0
    %5539 = vmatprep.subr.mxu0 0.0
    %5540 = vmatpush1.xpose.msra.mxu0 0.0
    %5541 = vmatprep.subr.mxu0 0.0
    %5542 = vmatpush1.xpose.msra.mxu0 0.0
    %5543 = vmatprep.subr.mxu0 0.0
    %5544 = vmatpush1.xpose.msra.mxu0 0.0
    %5545 = vmatprep.subr.mxu0 0.0
    %5546 = vmatpush1.xpose.msra.mxu0 0.0
    %5547 = vmatprep.subr.mxu0 0.0
    %5548 = vmatpush1.xpose.msra.mxu0 0.0
    %5549 = vmatprep.subr.mxu0 0.0
    %5550 = vmatpush1.xpose.msra.mxu0 0.0
    %5551 = vmatprep.subr.mxu0 0.0
    %5552 = vmatpush1.xpose.msra.mxu0 %v5519
    %5553 = vmatprep.subr.mxu0 0.0
    %5554 = vmatpush2.xpose.msra.mxu0 0.0
    %5555 = vmatprep.subr.mxu0 0.0
    %5556 = vmatpush2.xpose.msra.mxu0 0.0
    %5557 = vmatprep.subr.mxu0 0.0
    %5558 = vmatpush2.xpose.msra.mxu0 0.0
    %5559 = vmatprep.subr.mxu0 0.0
    %5560 = vmatpush2.xpose.msra.mxu0 0.0
    %5561 = vmatprep.subr.mxu0 0.0
    %5562 = vmatpush2.xpose.msra.mxu0 0.0
    %5563 = vmatprep.subr.mxu0 0.0
    %5564 = vmatpush2.xpose.msra.mxu0 0.0
    %5565 = vmatprep.subr.mxu0 0.0
    %5566 = vmatpush2.xpose.msra.mxu0 0.0
    %5567 = vmatprep.subr.mxu0 0.0
    %5568 = vmatpush2.xpose.msra.mxu0 0.0
    %5569 = vmatprep.subr.mxu0 0.0
    %5570 = vmatpush2.xpose.msra.mxu0 0.0
    %5571 = vmatprep.subr.mxu0 0.0
    %5572 = vmatpush2.xpose.msra.mxu0 0.0
    %5573 = vmatprep.subr.mxu0 0.0
    %5574 = vmatpush2.xpose.msra.mxu0 0.0
    %5575 = vmatprep.subr.mxu0 0.0
    %5576 = vmatpush2.xpose.msra.mxu0 0.0
    %5577 = vmatprep.subr.mxu0 0.0
    %5578 = vmatpush2.xpose.msra.mxu0 0.0
    %5579 = vmatprep.subr.mxu0 0.0
    %5580 = vmatpush2.xpose.msra.mxu0 0.0
    %5581 = vmatprep.subr.mxu0 0.0
    %5582 = vmatpush2.xpose.msra.mxu0 0.0
    %5583 = vmatprep.subr.mxu0 0.0
    %5584 = vmatpush2.xpose.msra.mxu0 0.0
    %5585 = vmatprep.mubr.f32.mxu0 0.0
    %5586 = vmatmul.mubr.f32.gmra.mxu0 %v5516
    %v5587 = vpop.f32.mrf.mxu0
    %v5588 = vadd.f32 0.0, %v5587
    %v5589 = vpop.f32.mrf.mxu0
    %5590 = vdwg.mxu0
    %v5592 = vsel %vm277, %v5417, 0
    %v5595 = vsel %vm277, %v5505, 0
    %5597 = vmatprep.subr.mxu0 0.0
    %5598 = vmatpush1.xpose.msra.mxu0 0.0
    %5599 = vmatprep.subr.mxu0 0.0
    %5600 = vmatpush1.xpose.msra.mxu0 0.0
    %5601 = vmatprep.subr.mxu0 0.0
    %5602 = vmatpush1.xpose.msra.mxu0 0.0
    %5603 = vmatprep.subr.mxu0 0.0
    %5604 = vmatpush1.xpose.msra.mxu0 0.0
    %5605 = vmatprep.subr.mxu0 0.0
    %5606 = vmatpush1.xpose.msra.mxu0 0.0
    %5607 = vmatprep.subr.mxu0 0.0
    %5608 = vmatpush1.xpose.msra.mxu0 0.0
    %5609 = vmatprep.subr.mxu0 0.0
    %5610 = vmatpush1.xpose.msra.mxu0 0.0
    %5611 = vmatprep.subr.mxu0 0.0
    %5612 = vmatpush1.xpose.msra.mxu0 0.0
    %5613 = vmatprep.subr.mxu0 0.0
    %5614 = vmatpush1.xpose.msra.mxu0 0.0
    %5615 = vmatprep.subr.mxu0 0.0
    %5616 = vmatpush1.xpose.msra.mxu0 0.0
    %5617 = vmatprep.subr.mxu0 0.0
    %5618 = vmatpush1.xpose.msra.mxu0 0.0
    %5619 = vmatprep.subr.mxu0 0.0
    %5620 = vmatpush1.xpose.msra.mxu0 0.0
    %5621 = vmatprep.subr.mxu0 0.0
    %5622 = vmatpush1.xpose.msra.mxu0 0.0
    %5623 = vmatprep.subr.mxu0 0.0
    %5624 = vmatpush1.xpose.msra.mxu0 0.0
    %5625 = vmatprep.subr.mxu0 0.0
    %5626 = vmatpush1.xpose.msra.mxu0 0.0
    %5627 = vmatprep.subr.mxu0 0.0
    %5628 = vmatpush1.xpose.msra.mxu0 %v5595
    %5629 = vmatprep.subr.mxu0 0.0
    %5630 = vmatpush2.xpose.msra.mxu0 0.0
    %5631 = vmatprep.subr.mxu0 0.0
    %5632 = vmatpush2.xpose.msra.mxu0 0.0
    %5633 = vmatprep.subr.mxu0 0.0
    %5634 = vmatpush2.xpose.msra.mxu0 0.0
    %5635 = vmatprep.subr.mxu0 0.0
    %5636 = vmatpush2.xpose.msra.mxu0 0.0
    %5637 = vmatprep.subr.mxu0 0.0
    %5638 = vmatpush2.xpose.msra.mxu0 0.0
    %5639 = vmatprep.subr.mxu0 0.0
    %5640 = vmatpush2.xpose.msra.mxu0 0.0
    %5641 = vmatprep.subr.mxu0 0.0
    %5642 = vmatpush2.xpose.msra.mxu0 0.0
    %5643 = vmatprep.subr.mxu0 0.0
    %5644 = vmatpush2.xpose.msra.mxu0 0.0
    %5645 = vmatprep.subr.mxu0 0.0
    %5646 = vmatpush2.xpose.msra.mxu0 0.0
    %5647 = vmatprep.subr.mxu0 0.0
    %5648 = vmatpush2.xpose.msra.mxu0 0.0
    %5649 = vmatprep.subr.mxu0 0.0
    %5650 = vmatpush2.xpose.msra.mxu0 0.0
    %5651 = vmatprep.subr.mxu0 0.0
    %5652 = vmatpush2.xpose.msra.mxu0 0.0
    %5653 = vmatprep.subr.mxu0 0.0
    %5654 = vmatpush2.xpose.msra.mxu0 0.0
    %5655 = vmatprep.subr.mxu0 0.0
    %5656 = vmatpush2.xpose.msra.mxu0 0.0
    %5657 = vmatprep.subr.mxu0 0.0
    %5658 = vmatpush2.xpose.msra.mxu0 0.0
    %5659 = vmatprep.subr.mxu0 0.0
    %5660 = vmatpush2.xpose.msra.mxu0 0.0
    %5661 = vmatprep.mubr.f32.mxu0 0.0
    %5662 = vmatmul.mubr.f32.gmra.mxu0 %v5592
    %v5663 = vpop.f32.mrf.mxu0
    %v5664 = vadd.f32 0.0, %v5663
    %v5665 = vpop.f32.mrf.mxu0
    %5666 = vdwg.mxu0
    %v5667 = vmul.f32 %v5588, 0.35355338
    %v5668 = vmul.f32 %v5664, 0.35355338
    %v5669 = vsel %vm277, %v5667, -inf
    %5670 = vmax.xlane.f32.xlu0 %v5669
    %v5671 = vpop.xlane.xlu0 %5670
    %v5672 = vsel %vm277, %v5668, -inf
    %5673 = vmax.xlane.f32.xlu0 %v5672
    %v5674 = vpop.xlane.xlu0 %5673
    %v5675 = vsub.f32 %v5667, %v5671
    %v5676 = vsub.f32 %v5668, %v5674
    %v5677 = vmul.f32 %v5675, 1.442695
    %v5678 = vpow.pop %v5677
    %v5679 = vmul.f32 %v5676, 1.442695
    %v5680 = vpow.pop %v5679
    %v5681 = vsel %vm277, %v5678, 0.0
    %5682 = vadd.xlane.f32.xlu0 %v5681
    %v5683 = vpop.xlane.xlu0 %5682
    %v5684 = vsel %vm277, %v5680, 0.0
    %5685 = vadd.xlane.f32.xlu0 %v5684
    %v5686 = vpop.xlane.xlu0 %5685
    %v5687 = vrcp.pop %v5683
    %v5688 = vmul.f32 %v5678, %v5687
    %v5689 = vrcp.pop %v5686
    %v5690 = vmul.f32 %v5680, %v5689
    %5691 = vrot.lane.b32.xlu0 %v5500, 96
    %v5692 = vpop.permute.xlu0 %5691
    %v5695 = vsel %vm277, %v5688, 0
    %5697 = vmatprep.subr.mxu0 0.0
    %5698 = vmatpush1.msra.mxu0 0.0
    %5699 = vmatprep.subr.mxu0 0.0
    %5700 = vmatpush1.msra.mxu0 0.0
    %5701 = vmatprep.subr.mxu0 0.0
    %5702 = vmatpush1.msra.mxu0 0.0
    %5703 = vmatprep.subr.mxu0 0.0
    %5704 = vmatpush1.msra.mxu0 0.0
    %5705 = vmatprep.subr.mxu0 0.0
    %5706 = vmatpush1.msra.mxu0 0.0
    %5707 = vmatprep.subr.mxu0 0.0
    %5708 = vmatpush1.msra.mxu0 0.0
    %5709 = vmatprep.subr.mxu0 0.0
    %5710 = vmatpush1.msra.mxu0 0.0
    %5711 = vmatprep.subr.mxu0 0.0
    %5712 = vmatpush1.msra.mxu0 0.0
    %5713 = vmatprep.subr.mxu0 0.0
    %5714 = vmatpush1.msra.mxu0 0.0
    %5715 = vmatprep.subr.mxu0 0.0
    %5716 = vmatpush1.msra.mxu0 0.0
    %5717 = vmatprep.subr.mxu0 0.0
    %5718 = vmatpush1.msra.mxu0 0.0
    %5719 = vmatprep.subr.mxu0 0.0
    %5720 = vmatpush1.msra.mxu0 0.0
    %5721 = vmatprep.subr.mxu0 0.0
    %5722 = vmatpush1.msra.mxu0 0.0
    %5723 = vmatprep.subr.mxu0 0.0
    %5724 = vmatpush1.msra.mxu0 0.0
    %5725 = vmatprep.subr.mxu0 0.0
    %5726 = vmatpush1.msra.mxu0 0.0
    %5727 = vmatprep.subr.mxu0 0.0
    %5728 = vmatpush1.msra.mxu0 %v5692
    %5729 = vmatprep.subr.mxu0 0.0
    %5730 = vmatpush2.msra.mxu0 0.0
    %5731 = vmatprep.subr.mxu0 0.0
    %5732 = vmatpush2.msra.mxu0 0.0
    %5733 = vmatprep.subr.mxu0 0.0
    %5734 = vmatpush2.msra.mxu0 0.0
    %5735 = vmatprep.subr.mxu0 0.0
    %5736 = vmatpush2.msra.mxu0 0.0
    %5737 = vmatprep.subr.mxu0 0.0
    %5738 = vmatpush2.msra.mxu0 0.0
    %5739 = vmatprep.subr.mxu0 0.0
    %5740 = vmatpush2.msra.mxu0 0.0
    %5741 = vmatprep.subr.mxu0 0.0
    %5742 = vmatpush2.msra.mxu0 0.0
    %5743 = vmatprep.subr.mxu0 0.0
    %5744 = vmatpush2.msra.mxu0 0.0
    %5745 = vmatprep.subr.mxu0 0.0
    %5746 = vmatpush2.msra.mxu0 0.0
    %5747 = vmatprep.subr.mxu0 0.0
    %5748 = vmatpush2.msra.mxu0 0.0
    %5749 = vmatprep.subr.mxu0 0.0
    %5750 = vmatpush2.msra.mxu0 0.0
    %5751 = vmatprep.subr.mxu0 0.0
    %5752 = vmatpush2.msra.mxu0 0.0
    %5753 = vmatprep.subr.mxu0 0.0
    %5754 = vmatpush2.msra.mxu0 0.0
    %5755 = vmatprep.subr.mxu0 0.0
    %5756 = vmatpush2.msra.mxu0 0.0
    %5757 = vmatprep.subr.mxu0 0.0
    %5758 = vmatpush2.msra.mxu0 0.0
    %5759 = vmatprep.subr.mxu0 0.0
    %5760 = vmatpush2.msra.mxu0 0.0
    %5761 = vmatprep.mubr.f32.mxu0 0.0
    %5762 = vmatmul.mubr.f32.gmra.mxu0 %v5695
    %v5763 = vpop.f32.mrf.mxu0
    %v5764 = vadd.f32 0.0, %v5763
    %v5765 = vpop.f32.mrf.mxu0
    %5766 = vdwg.mxu0
    %5767 = vrot.lane.b32.xlu0 %v5505, 96
    %v5768 = vpop.permute.xlu0 %5767
    %v5771 = vsel %vm277, %v5690, 0
    %5773 = vmatprep.subr.mxu0 0.0
    %5774 = vmatpush1.msra.mxu0 0.0
    %5775 = vmatprep.subr.mxu0 0.0
    %5776 = vmatpush1.msra.mxu0 0.0
    %5777 = vmatprep.subr.mxu0 0.0
    %5778 = vmatpush1.msra.mxu0 0.0
    %5779 = vmatprep.subr.mxu0 0.0
    %5780 = vmatpush1.msra.mxu0 0.0
    %5781 = vmatprep.subr.mxu0 0.0
    %5782 = vmatpush1.msra.mxu0 0.0
    %5783 = vmatprep.subr.mxu0 0.0
    %5784 = vmatpush1.msra.mxu0 0.0
    %5785 = vmatprep.subr.mxu0 0.0
    %5786 = vmatpush1.msra.mxu0 0.0
    %5787 = vmatprep.subr.mxu0 0.0
    %5788 = vmatpush1.msra.mxu0 0.0
    %5789 = vmatprep.subr.mxu0 0.0
    %5790 = vmatpush1.msra.mxu0 0.0
    %5791 = vmatprep.subr.mxu0 0.0
    %5792 = vmatpush1.msra.mxu0 0.0
    %5793 = vmatprep.subr.mxu0 0.0
    %5794 = vmatpush1.msra.mxu0 0.0
    %5795 = vmatprep.subr.mxu0 0.0
    %5796 = vmatpush1.msra.mxu0 0.0
    %5797 = vmatprep.subr.mxu0 0.0
    %5798 = vmatpush1.msra.mxu0 0.0
    %5799 = vmatprep.subr.mxu0 0.0
    %5800 = vmatpush1.msra.mxu0 0.0
    %5801 = vmatprep.subr.mxu0 0.0
    %5802 = vmatpush1.msra.mxu0 0.0
    %5803 = vmatprep.subr.mxu0 0.0
    %5804 = vmatpush1.msra.mxu0 %v5768
    %5805 = vmatprep.subr.mxu0 0.0
    %5806 = vmatpush2.msra.mxu0 0.0
    %5807 = vmatprep.subr.mxu0 0.0
    %5808 = vmatpush2.msra.mxu0 0.0
    %5809 = vmatprep.subr.mxu0 0.0
    %5810 = vmatpush2.msra.mxu0 0.0
    %5811 = vmatprep.subr.mxu0 0.0
    %5812 = vmatpush2.msra.mxu0 0.0
    %5813 = vmatprep.subr.mxu0 0.0
    %5814 = vmatpush2.msra.mxu0 0.0
    %5815 = vmatprep.subr.mxu0 0.0
    %5816 = vmatpush2.msra.mxu0 0.0
    %5817 = vmatprep.subr.mxu0 0.0
    %5818 = vmatpush2.msra.mxu0 0.0
    %5819 = vmatprep.subr.mxu0 0.0
    %5820 = vmatpush2.msra.mxu0 0.0
    %5821 = vmatprep.subr.mxu0 0.0
    %5822 = vmatpush2.msra.mxu0 0.0
    %5823 = vmatprep.subr.mxu0 0.0
    %5824 = vmatpush2.msra.mxu0 0.0
    %5825 = vmatprep.subr.mxu0 0.0
    %5826 = vmatpush2.msra.mxu0 0.0
    %5827 = vmatprep.subr.mxu0 0.0
    %5828 = vmatpush2.msra.mxu0 0.0
    %5829 = vmatprep.subr.mxu0 0.0
    %5830 = vmatpush2.msra.mxu0 0.0
    %5831 = vmatprep.subr.mxu0 0.0
    %5832 = vmatpush2.msra.mxu0 0.0
    %5833 = vmatprep.subr.mxu0 0.0
    %5834 = vmatpush2.msra.mxu0 0.0
    %5835 = vmatprep.subr.mxu0 0.0
    %5836 = vmatpush2.msra.mxu0 0.0
    %5837 = vmatprep.mubr.f32.mxu0 0.0
    %5838 = vmatmul.mubr.f32.gmra.mxu0 %v5771
    %v5839 = vpop.f32.mrf.mxu0
    %v5840 = vadd.f32 0.0, %v5839
    %v5841 = vpop.f32.mrf.mxu0
    %5842 = vdwg.mxu0
    %5843 = vrot.lane.b32.xlu0 %v5412, 120
    %v5844 = vpop.permute.xlu0 %5843
    %5845 = vrot.lane.b32.xlu0 %v5500, 120
    %v5846 = vpop.permute.xlu0 %5845
    %v5847 = vsel %vm277, %v5844, 0
    %v5849 = vsel %vm277, %v5846, 0
    %5851 = vmatprep.subr.mxu0 0.0
    %5852 = vmatpush1.xpose.msra.mxu0 0.0
    %5853 = vmatprep.subr.mxu0 0.0
    %5854 = vmatpush1.xpose.msra.mxu0 0.0
    %5855 = vmatprep.subr.mxu0 0.0
    %5856 = vmatpush1.xpose.msra.mxu0 0.0
    %5857 = vmatprep.subr.mxu0 0.0
    %5858 = vmatpush1.xpose.msra.mxu0 0.0
    %5859 = vmatprep.subr.mxu0 0.0
    %5860 = vmatpush1.xpose.msra.mxu0 0.0
    %5861 = vmatprep.subr.mxu0 0.0
    %5862 = vmatpush1.xpose.msra.mxu0 0.0
    %5863 = vmatprep.subr.mxu0 0.0
    %5864 = vmatpush1.xpose.msra.mxu0 0.0
    %5865 = vmatprep.subr.mxu0 0.0
    %5866 = vmatpush1.xpose.msra.mxu0 0.0
    %5867 = vmatprep.subr.mxu0 0.0
    %5868 = vmatpush1.xpose.msra.mxu0 0.0
    %5869 = vmatprep.subr.mxu0 0.0
    %5870 = vmatpush1.xpose.msra.mxu0 0.0
    %5871 = vmatprep.subr.mxu0 0.0
    %5872 = vmatpush1.xpose.msra.mxu0 0.0
    %5873 = vmatprep.subr.mxu0 0.0
    %5874 = vmatpush1.xpose.msra.mxu0 0.0
    %5875 = vmatprep.subr.mxu0 0.0
    %5876 = vmatpush1.xpose.msra.mxu0 0.0
    %5877 = vmatprep.subr.mxu0 0.0
    %5878 = vmatpush1.xpose.msra.mxu0 0.0
    %5879 = vmatprep.subr.mxu0 0.0
    %5880 = vmatpush1.xpose.msra.mxu0 0.0
    %5881 = vmatprep.subr.mxu0 0.0
    %5882 = vmatpush1.xpose.msra.mxu0 %v5849
    %5883 = vmatprep.subr.mxu0 0.0
    %5884 = vmatpush2.xpose.msra.mxu0 0.0
    %5885 = vmatprep.subr.mxu0 0.0
    %5886 = vmatpush2.xpose.msra.mxu0 0.0
    %5887 = vmatprep.subr.mxu0 0.0
    %5888 = vmatpush2.xpose.msra.mxu0 0.0
    %5889 = vmatprep.subr.mxu0 0.0
    %5890 = vmatpush2.xpose.msra.mxu0 0.0
    %5891 = vmatprep.subr.mxu0 0.0
    %5892 = vmatpush2.xpose.msra.mxu0 0.0
    %5893 = vmatprep.subr.mxu0 0.0
    %5894 = vmatpush2.xpose.msra.mxu0 0.0
    %5895 = vmatprep.subr.mxu0 0.0
    %5896 = vmatpush2.xpose.msra.mxu0 0.0
    %5897 = vmatprep.subr.mxu0 0.0
    %5898 = vmatpush2.xpose.msra.mxu0 0.0
    %5899 = vmatprep.subr.mxu0 0.0
    %5900 = vmatpush2.xpose.msra.mxu0 0.0
    %5901 = vmatprep.subr.mxu0 0.0
    %5902 = vmatpush2.xpose.msra.mxu0 0.0
    %5903 = vmatprep.subr.mxu0 0.0
    %5904 = vmatpush2.xpose.msra.mxu0 0.0
    %5905 = vmatprep.subr.mxu0 0.0
    %5906 = vmatpush2.xpose.msra.mxu0 0.0
    %5907 = vmatprep.subr.mxu0 0.0
    %5908 = vmatpush2.xpose.msra.mxu0 0.0
    %5909 = vmatprep.subr.mxu0 0.0
    %5910 = vmatpush2.xpose.msra.mxu0 0.0
    %5911 = vmatprep.subr.mxu0 0.0
    %5912 = vmatpush2.xpose.msra.mxu0 0.0
    %5913 = vmatprep.subr.mxu0 0.0
    %5914 = vmatpush2.xpose.msra.mxu0 0.0
    %5915 = vmatprep.mubr.f32.mxu0 0.0
    %5916 = vmatmul.mubr.f32.gmra.mxu0 %v5847
    %v5917 = vpop.f32.mrf.mxu0
    %v5918 = vadd.f32 0.0, %v5917
    %v5919 = vpop.f32.mrf.mxu0
    %5920 = vdwg.mxu0
    %5921 = vrot.lane.b32.xlu0 %v5417, 120
    %v5922 = vpop.permute.xlu0 %5921
    %5923 = vrot.lane.b32.xlu0 %v5505, 120
    %v5924 = vpop.permute.xlu0 %5923
    %v5925 = vsel %vm277, %v5922, 0
    %v5927 = vsel %vm277, %v5924, 0
    %5929 = vmatprep.subr.mxu0 0.0
    %5930 = vmatpush1.xpose.msra.mxu0 0.0
    %5931 = vmatprep.subr.mxu0 0.0
    %5932 = vmatpush1.xpose.msra.mxu0 0.0
    %5933 = vmatprep.subr.mxu0 0.0
    %5934 = vmatpush1.xpose.msra.mxu0 0.0
    %5935 = vmatprep.subr.mxu0 0.0
    %5936 = vmatpush1.xpose.msra.mxu0 0.0
    %5937 = vmatprep.subr.mxu0 0.0
    %5938 = vmatpush1.xpose.msra.mxu0 0.0
    %5939 = vmatprep.subr.mxu0 0.0
    %5940 = vmatpush1.xpose.msra.mxu0 0.0
    %5941 = vmatprep.subr.mxu0 0.0
    %5942 = vmatpush1.xpose.msra.mxu0 0.0
    %5943 = vmatprep.subr.mxu0 0.0
    %5944 = vmatpush1.xpose.msra.mxu0 0.0
    %5945 = vmatprep.subr.mxu0 0.0
    %5946 = vmatpush1.xpose.msra.mxu0 0.0
    %5947 = vmatprep.subr.mxu0 0.0
    %5948 = vmatpush1.xpose.msra.mxu0 0.0
    %5949 = vmatprep.subr.mxu0 0.0
    %5950 = vmatpush1.xpose.msra.mxu0 0.0
    %5951 = vmatprep.subr.mxu0 0.0
    %5952 = vmatpush1.xpose.msra.mxu0 0.0
    %5953 = vmatprep.subr.mxu0 0.0
    %5954 = vmatpush1.xpose.msra.mxu0 0.0
    %5955 = vmatprep.subr.mxu0 0.0
    %5956 = vmatpush1.xpose.msra.mxu0 0.0
    %5957 = vmatprep.subr.mxu0 0.0
    %5958 = vmatpush1.xpose.msra.mxu0 0.0
    %5959 = vmatprep.subr.mxu0 0.0
    %5960 = vmatpush1.xpose.msra.mxu0 %v5927
    %5961 = vmatprep.subr.mxu0 0.0
    %5962 = vmatpush2.xpose.msra.mxu0 0.0
    %5963 = vmatprep.subr.mxu0 0.0
    %5964 = vmatpush2.xpose.msra.mxu0 0.0
    %5965 = vmatprep.subr.mxu0 0.0
    %5966 = vmatpush2.xpose.msra.mxu0 0.0
    %5967 = vmatprep.subr.mxu0 0.0
    %5968 = vmatpush2.xpose.msra.mxu0 0.0
    %5969 = vmatprep.subr.mxu0 0.0
    %5970 = vmatpush2.xpose.msra.mxu0 0.0
    %5971 = vmatprep.subr.mxu0 0.0
    %5972 = vmatpush2.xpose.msra.mxu0 0.0
    %5973 = vmatprep.subr.mxu0 0.0
    %5974 = vmatpush2.xpose.msra.mxu0 0.0
    %5975 = vmatprep.subr.mxu0 0.0
    %5976 = vmatpush2.xpose.msra.mxu0 0.0
    %5977 = vmatprep.subr.mxu0 0.0
    %5978 = vmatpush2.xpose.msra.mxu0 0.0
    %5979 = vmatprep.subr.mxu0 0.0
    %5980 = vmatpush2.xpose.msra.mxu0 0.0
    %5981 = vmatprep.subr.mxu0 0.0
    %5982 = vmatpush2.xpose.msra.mxu0 0.0
    %5983 = vmatprep.subr.mxu0 0.0
    %5984 = vmatpush2.xpose.msra.mxu0 0.0
    %5985 = vmatprep.subr.mxu0 0.0
    %5986 = vmatpush2.xpose.msra.mxu0 0.0
    %5987 = vmatprep.subr.mxu0 0.0
    %5988 = vmatpush2.xpose.msra.mxu0 0.0
    %5989 = vmatprep.subr.mxu0 0.0
    %5990 = vmatpush2.xpose.msra.mxu0 0.0
    %5991 = vmatprep.subr.mxu0 0.0
    %5992 = vmatpush2.xpose.msra.mxu0 0.0
    %5993 = vmatprep.mubr.f32.mxu0 0.0
    %5994 = vmatmul.mubr.f32.gmra.mxu0 %v5925
    %v5995 = vpop.f32.mrf.mxu0
    %v5996 = vadd.f32 0.0, %v5995
    %v5997 = vpop.f32.mrf.mxu0
    %5998 = vdwg.mxu0
    %v5999 = vmul.f32 %v5918, 0.35355338
    %v6000 = vmul.f32 %v5996, 0.35355338
    %v6001 = vsel %vm277, %v5999, -inf
    %6002 = vmax.xlane.f32.xlu0 %v6001
    %v6003 = vpop.xlane.xlu0 %6002
    %v6004 = vsel %vm277, %v6000, -inf
    %6005 = vmax.xlane.f32.xlu0 %v6004
    %v6006 = vpop.xlane.xlu0 %6005
    %v6007 = vsub.f32 %v5999, %v6003
    %v6008 = vsub.f32 %v6000, %v6006
    %v6009 = vmul.f32 %v6007, 1.442695
    %v6010 = vpow.pop %v6009
    %v6011 = vmul.f32 %v6008, 1.442695
    %v6012 = vpow.pop %v6011
    %v6013 = vsel %vm277, %v6010, 0.0
    %6014 = vadd.xlane.f32.xlu0 %v6013
    %v6015 = vpop.xlane.xlu0 %6014
    %v6016 = vsel %vm277, %v6012, 0.0
    %6017 = vadd.xlane.f32.xlu0 %v6016
    %v6018 = vpop.xlane.xlu0 %6017
    %v6019 = vrcp.pop %v6015
    %v6020 = vmul.f32 %v6010, %v6019
    %v6021 = vrcp.pop %v6018
    %v6022 = vmul.f32 %v6012, %v6021
    %6023 = vrot.lane.b32.xlu0 %v5500, 88
    %v6024 = vpop.permute.xlu0 %6023
    %v6027 = vsel %vm277, %v6020, 0
    %6029 = vmatprep.subr.mxu0 0.0
    %6030 = vmatpush1.msra.mxu0 0.0
    %6031 = vmatprep.subr.mxu0 0.0
    %6032 = vmatpush1.msra.mxu0 0.0
    %6033 = vmatprep.subr.mxu0 0.0
    %6034 = vmatpush1.msra.mxu0 0.0
    %6035 = vmatprep.subr.mxu0 0.0
    %6036 = vmatpush1.msra.mxu0 0.0
    %6037 = vmatprep.subr.mxu0 0.0
    %6038 = vmatpush1.msra.mxu0 0.0
    %6039 = vmatprep.subr.mxu0 0.0
    %6040 = vmatpush1.msra.mxu0 0.0
    %6041 = vmatprep.subr.mxu0 0.0
    %6042 = vmatpush1.msra.mxu0 0.0
    %6043 = vmatprep.subr.mxu0 0.0
    %6044 = vmatpush1.msra.mxu0 0.0
    %6045 = vmatprep.subr.mxu0 0.0
    %6046 = vmatpush1.msra.mxu0 0.0
    %6047 = vmatprep.subr.mxu0 0.0
    %6048 = vmatpush1.msra.mxu0 0.0
    %6049 = vmatprep.subr.mxu0 0.0
    %6050 = vmatpush1.msra.mxu0 0.0
    %6051 = vmatprep.subr.mxu0 0.0
    %6052 = vmatpush1.msra.mxu0 0.0
    %6053 = vmatprep.subr.mxu0 0.0
    %6054 = vmatpush1.msra.mxu0 0.0
    %6055 = vmatprep.subr.mxu0 0.0
    %6056 = vmatpush1.msra.mxu0 0.0
    %6057 = vmatprep.subr.mxu0 0.0
    %6058 = vmatpush1.msra.mxu0 0.0
    %6059 = vmatprep.subr.mxu0 0.0
    %6060 = vmatpush1.msra.mxu0 %v6024
    %6061 = vmatprep.subr.mxu0 0.0
    %6062 = vmatpush2.msra.mxu0 0.0
    %6063 = vmatprep.subr.mxu0 0.0
    %6064 = vmatpush2.msra.mxu0 0.0
    %6065 = vmatprep.subr.mxu0 0.0
    %6066 = vmatpush2.msra.mxu0 0.0
    %6067 = vmatprep.subr.mxu0 0.0
    %6068 = vmatpush2.msra.mxu0 0.0
    %6069 = vmatprep.subr.mxu0 0.0
    %6070 = vmatpush2.msra.mxu0 0.0
    %6071 = vmatprep.subr.mxu0 0.0
    %6072 = vmatpush2.msra.mxu0 0.0
    %6073 = vmatprep.subr.mxu0 0.0
    %6074 = vmatpush2.msra.mxu0 0.0
    %6075 = vmatprep.subr.mxu0 0.0
    %6076 = vmatpush2.msra.mxu0 0.0
    %6077 = vmatprep.subr.mxu0 0.0
    %6078 = vmatpush2.msra.mxu0 0.0
    %6079 = vmatprep.subr.mxu0 0.0
    %6080 = vmatpush2.msra.mxu0 0.0
    %6081 = vmatprep.subr.mxu0 0.0
    %6082 = vmatpush2.msra.mxu0 0.0
    %6083 = vmatprep.subr.mxu0 0.0
    %6084 = vmatpush2.msra.mxu0 0.0
    %6085 = vmatprep.subr.mxu0 0.0
    %6086 = vmatpush2.msra.mxu0 0.0
    %6087 = vmatprep.subr.mxu0 0.0
    %6088 = vmatpush2.msra.mxu0 0.0
    %6089 = vmatprep.subr.mxu0 0.0
    %6090 = vmatpush2.msra.mxu0 0.0
    %6091 = vmatprep.subr.mxu0 0.0
    %6092 = vmatpush2.msra.mxu0 0.0
    %6093 = vmatprep.mubr.f32.mxu0 0.0
    %6094 = vmatmul.mubr.f32.gmra.mxu0 %v6027
    %v6095 = vpop.f32.mrf.mxu0
    %v6096 = vadd.f32 0.0, %v6095
    %v6097 = vpop.f32.mrf.mxu0
    %6098 = vdwg.mxu0
    %6099 = vrot.lane.b32.xlu0 %v5505, 88
    %v6100 = vpop.permute.xlu0 %6099
    %v6103 = vsel %vm277, %v6022, 0
    %6105 = vmatprep.subr.mxu0 0.0
    %6106 = vmatpush1.msra.mxu0 0.0
    %6107 = vmatprep.subr.mxu0 0.0
    %6108 = vmatpush1.msra.mxu0 0.0
    %6109 = vmatprep.subr.mxu0 0.0
    %6110 = vmatpush1.msra.mxu0 0.0
    %6111 = vmatprep.subr.mxu0 0.0
    %6112 = vmatpush1.msra.mxu0 0.0
    %6113 = vmatprep.subr.mxu0 0.0
    %6114 = vmatpush1.msra.mxu0 0.0
    %6115 = vmatprep.subr.mxu0 0.0
    %6116 = vmatpush1.msra.mxu0 0.0
    %6117 = vmatprep.subr.mxu0 0.0
    %6118 = vmatpush1.msra.mxu0 0.0
    %6119 = vmatprep.subr.mxu0 0.0
    %6120 = vmatpush1.msra.mxu0 0.0
    %6121 = vmatprep.subr.mxu0 0.0
    %6122 = vmatpush1.msra.mxu0 0.0
    %6123 = vmatprep.subr.mxu0 0.0
    %6124 = vmatpush1.msra.mxu0 0.0
    %6125 = vmatprep.subr.mxu0 0.0
    %6126 = vmatpush1.msra.mxu0 0.0
    %6127 = vmatprep.subr.mxu0 0.0
    %6128 = vmatpush1.msra.mxu0 0.0
    %6129 = vmatprep.subr.mxu0 0.0
    %6130 = vmatpush1.msra.mxu0 0.0
    %6131 = vmatprep.subr.mxu0 0.0
    %6132 = vmatpush1.msra.mxu0 0.0
    %6133 = vmatprep.subr.mxu0 0.0
    %6134 = vmatpush1.msra.mxu0 0.0
    %6135 = vmatprep.subr.mxu0 0.0
    %6136 = vmatpush1.msra.mxu0 %v6100
    %6137 = vmatprep.subr.mxu0 0.0
    %6138 = vmatpush2.msra.mxu0 0.0
    %6139 = vmatprep.subr.mxu0 0.0
    %6140 = vmatpush2.msra.mxu0 0.0
    %6141 = vmatprep.subr.mxu0 0.0
    %6142 = vmatpush2.msra.mxu0 0.0
    %6143 = vmatprep.subr.mxu0 0.0
    %6144 = vmatpush2.msra.mxu0 0.0
    %6145 = vmatprep.subr.mxu0 0.0
    %6146 = vmatpush2.msra.mxu0 0.0
    %6147 = vmatprep.subr.mxu0 0.0
    %6148 = vmatpush2.msra.mxu0 0.0
    %6149 = vmatprep.subr.mxu0 0.0
    %6150 = vmatpush2.msra.mxu0 0.0
    %6151 = vmatprep.subr.mxu0 0.0
    %6152 = vmatpush2.msra.mxu0 0.0
    %6153 = vmatprep.subr.mxu0 0.0
    %6154 = vmatpush2.msra.mxu0 0.0
    %6155 = vmatprep.subr.mxu0 0.0
    %6156 = vmatpush2.msra.mxu0 0.0
    %6157 = vmatprep.subr.mxu0 0.0
    %6158 = vmatpush2.msra.mxu0 0.0
    %6159 = vmatprep.subr.mxu0 0.0
    %6160 = vmatpush2.msra.mxu0 0.0
    %6161 = vmatprep.subr.mxu0 0.0
    %6162 = vmatpush2.msra.mxu0 0.0
    %6163 = vmatprep.subr.mxu0 0.0
    %6164 = vmatpush2.msra.mxu0 0.0
    %6165 = vmatprep.subr.mxu0 0.0
    %6166 = vmatpush2.msra.mxu0 0.0
    %6167 = vmatprep.subr.mxu0 0.0
    %6168 = vmatpush2.msra.mxu0 0.0
    %6169 = vmatprep.mubr.f32.mxu0 0.0
    %6170 = vmatmul.mubr.f32.gmra.mxu0 %v6103
    %v6171 = vpop.f32.mrf.mxu0
    %v6172 = vadd.f32 0.0, %v6171
    %v6173 = vpop.f32.mrf.mxu0
    %6174 = vdwg.mxu0
    %6175 = vrot.lane.b32.xlu0 %v5412, 112
    %v6176 = vpop.permute.xlu0 %6175
    %6177 = vrot.lane.b32.xlu0 %v5500, 112
    %v6178 = vpop.permute.xlu0 %6177
    %v6179 = vsel %vm277, %v6176, 0
    %v6181 = vsel %vm277, %v6178, 0
    %6183 = vmatprep.subr.mxu0 0.0
    %6184 = vmatpush1.xpose.msra.mxu0 0.0
    %6185 = vmatprep.subr.mxu0 0.0
    %6186 = vmatpush1.xpose.msra.mxu0 0.0
    %6187 = vmatprep.subr.mxu0 0.0
    %6188 = vmatpush1.xpose.msra.mxu0 0.0
    %6189 = vmatprep.subr.mxu0 0.0
    %6190 = vmatpush1.xpose.msra.mxu0 0.0
    %6191 = vmatprep.subr.mxu0 0.0
    %6192 = vmatpush1.xpose.msra.mxu0 0.0
    %6193 = vmatprep.subr.mxu0 0.0
    %6194 = vmatpush1.xpose.msra.mxu0 0.0
    %6195 = vmatprep.subr.mxu0 0.0
    %6196 = vmatpush1.xpose.msra.mxu0 0.0
    %6197 = vmatprep.subr.mxu0 0.0
    %6198 = vmatpush1.xpose.msra.mxu0 0.0
    %6199 = vmatprep.subr.mxu0 0.0
    %6200 = vmatpush1.xpose.msra.mxu0 0.0
    %6201 = vmatprep.subr.mxu0 0.0
    %6202 = vmatpush1.xpose.msra.mxu0 0.0
    %6203 = vmatprep.subr.mxu0 0.0
    %6204 = vmatpush1.xpose.msra.mxu0 0.0
    %6205 = vmatprep.subr.mxu0 0.0
    %6206 = vmatpush1.xpose.msra.mxu0 0.0
    %6207 = vmatprep.subr.mxu0 0.0
    %6208 = vmatpush1.xpose.msra.mxu0 0.0
    %6209 = vmatprep.subr.mxu0 0.0
    %6210 = vmatpush1.xpose.msra.mxu0 0.0
    %6211 = vmatprep.subr.mxu0 0.0
    %6212 = vmatpush1.xpose.msra.mxu0 0.0
    %6213 = vmatprep.subr.mxu0 0.0
    %6214 = vmatpush1.xpose.msra.mxu0 %v6181
    %6215 = vmatprep.subr.mxu0 0.0
    %6216 = vmatpush2.xpose.msra.mxu0 0.0
    %6217 = vmatprep.subr.mxu0 0.0
    %6218 = vmatpush2.xpose.msra.mxu0 0.0
    %6219 = vmatprep.subr.mxu0 0.0
    %6220 = vmatpush2.xpose.msra.mxu0 0.0
    %6221 = vmatprep.subr.mxu0 0.0
    %6222 = vmatpush2.xpose.msra.mxu0 0.0
    %6223 = vmatprep.subr.mxu0 0.0
    %6224 = vmatpush2.xpose.msra.mxu0 0.0
    %6225 = vmatprep.subr.mxu0 0.0
    %6226 = vmatpush2.xpose.msra.mxu0 0.0
    %6227 = vmatprep.subr.mxu0 0.0
    %6228 = vmatpush2.xpose.msra.mxu0 0.0
    %6229 = vmatprep.subr.mxu0 0.0
    %6230 = vmatpush2.xpose.msra.mxu0 0.0
    %6231 = vmatprep.subr.mxu0 0.0
    %6232 = vmatpush2.xpose.msra.mxu0 0.0
    %6233 = vmatprep.subr.mxu0 0.0
    %6234 = vmatpush2.xpose.msra.mxu0 0.0
    %6235 = vmatprep.subr.mxu0 0.0
    %6236 = vmatpush2.xpose.msra.mxu0 0.0
    %6237 = vmatprep.subr.mxu0 0.0
    %6238 = vmatpush2.xpose.msra.mxu0 0.0
    %6239 = vmatprep.subr.mxu0 0.0
    %6240 = vmatpush2.xpose.msra.mxu0 0.0
    %6241 = vmatprep.subr.mxu0 0.0
    %6242 = vmatpush2.xpose.msra.mxu0 0.0
    %6243 = vmatprep.subr.mxu0 0.0
    %6244 = vmatpush2.xpose.msra.mxu0 0.0
    %6245 = vmatprep.subr.mxu0 0.0
    %6246 = vmatpush2.xpose.msra.mxu0 0.0
    %6247 = vmatprep.mubr.f32.mxu0 0.0
    %6248 = vmatmul.mubr.f32.gmra.mxu0 %v6179
    %v6249 = vpop.f32.mrf.mxu0
    %v6250 = vadd.f32 0.0, %v6249
    %v6251 = vpop.f32.mrf.mxu0
    %6252 = vdwg.mxu0
    %6253 = vrot.lane.b32.xlu0 %v5417, 112
    %v6254 = vpop.permute.xlu0 %6253
    %6255 = vrot.lane.b32.xlu0 %v5505, 112
    %v6256 = vpop.permute.xlu0 %6255
    %v6257 = vsel %vm277, %v6254, 0
    %v6259 = vsel %vm277, %v6256, 0
    %6261 = vmatprep.subr.mxu0 0.0
    %6262 = vmatpush1.xpose.msra.mxu0 0.0
    %6263 = vmatprep.subr.mxu0 0.0
    %6264 = vmatpush1.xpose.msra.mxu0 0.0
    %6265 = vmatprep.subr.mxu0 0.0
    %6266 = vmatpush1.xpose.msra.mxu0 0.0
    %6267 = vmatprep.subr.mxu0 0.0
    %6268 = vmatpush1.xpose.msra.mxu0 0.0
    %6269 = vmatprep.subr.mxu0 0.0
    %6270 = vmatpush1.xpose.msra.mxu0 0.0
    %6271 = vmatprep.subr.mxu0 0.0
    %6272 = vmatpush1.xpose.msra.mxu0 0.0
    %6273 = vmatprep.subr.mxu0 0.0
    %6274 = vmatpush1.xpose.msra.mxu0 0.0
    %6275 = vmatprep.subr.mxu0 0.0
    %6276 = vmatpush1.xpose.msra.mxu0 0.0
    %6277 = vmatprep.subr.mxu0 0.0
    %6278 = vmatpush1.xpose.msra.mxu0 0.0
    %6279 = vmatprep.subr.mxu0 0.0
    %6280 = vmatpush1.xpose.msra.mxu0 0.0
    %6281 = vmatprep.subr.mxu0 0.0
    %6282 = vmatpush1.xpose.msra.mxu0 0.0
    %6283 = vmatprep.subr.mxu0 0.0
    %6284 = vmatpush1.xpose.msra.mxu0 0.0
    %6285 = vmatprep.subr.mxu0 0.0
    %6286 = vmatpush1.xpose.msra.mxu0 0.0
    %6287 = vmatprep.subr.mxu0 0.0
    %6288 = vmatpush1.xpose.msra.mxu0 0.0
    %6289 = vmatprep.subr.mxu0 0.0
    %6290 = vmatpush1.xpose.msra.mxu0 0.0
    %6291 = vmatprep.subr.mxu0 0.0
    %6292 = vmatpush1.xpose.msra.mxu0 %v6259
    %6293 = vmatprep.subr.mxu0 0.0
    %6294 = vmatpush2.xpose.msra.mxu0 0.0
    %6295 = vmatprep.subr.mxu0 0.0
    %6296 = vmatpush2.xpose.msra.mxu0 0.0
    %6297 = vmatprep.subr.mxu0 0.0
    %6298 = vmatpush2.xpose.msra.mxu0 0.0
    %6299 = vmatprep.subr.mxu0 0.0
    %6300 = vmatpush2.xpose.msra.mxu0 0.0
    %6301 = vmatprep.subr.mxu0 0.0
    %6302 = vmatpush2.xpose.msra.mxu0 0.0
    %6303 = vmatprep.subr.mxu0 0.0
    %6304 = vmatpush2.xpose.msra.mxu0 0.0
    %6305 = vmatprep.subr.mxu0 0.0
    %6306 = vmatpush2.xpose.msra.mxu0 0.0
    %6307 = vmatprep.subr.mxu0 0.0
    %6308 = vmatpush2.xpose.msra.mxu0 0.0
    %6309 = vmatprep.subr.mxu0 0.0
    %6310 = vmatpush2.xpose.msra.mxu0 0.0
    %6311 = vmatprep.subr.mxu0 0.0
    %6312 = vmatpush2.xpose.msra.mxu0 0.0
    %6313 = vmatprep.subr.mxu0 0.0
    %6314 = vmatpush2.xpose.msra.mxu0 0.0
    %6315 = vmatprep.subr.mxu0 0.0
    %6316 = vmatpush2.xpose.msra.mxu0 0.0
    %6317 = vmatprep.subr.mxu0 0.0
    %6318 = vmatpush2.xpose.msra.mxu0 0.0
    %6319 = vmatprep.subr.mxu0 0.0
    %6320 = vmatpush2.xpose.msra.mxu0 0.0
    %6321 = vmatprep.subr.mxu0 0.0
    %6322 = vmatpush2.xpose.msra.mxu0 0.0
    %6323 = vmatprep.subr.mxu0 0.0
    %6324 = vmatpush2.xpose.msra.mxu0 0.0
    %6325 = vmatprep.mubr.f32.mxu0 0.0
    %6326 = vmatmul.mubr.f32.gmra.mxu0 %v6257
    %v6327 = vpop.f32.mrf.mxu0
    %v6328 = vadd.f32 0.0, %v6327
    %v6329 = vpop.f32.mrf.mxu0
    %6330 = vdwg.mxu0
    %v6331 = vmul.f32 %v6250, 0.35355338
    %v6332 = vmul.f32 %v6328, 0.35355338
    %v6333 = vsel %vm277, %v6331, -inf
    %6334 = vmax.xlane.f32.xlu0 %v6333
    %v6335 = vpop.xlane.xlu0 %6334
    %v6336 = vsel %vm277, %v6332, -inf
    %6337 = vmax.xlane.f32.xlu0 %v6336
    %v6338 = vpop.xlane.xlu0 %6337
    %v6339 = vsub.f32 %v6331, %v6335
    %v6340 = vsub.f32 %v6332, %v6338
    %v6341 = vmul.f32 %v6339, 1.442695
    %v6342 = vpow.pop %v6341
    %v6343 = vmul.f32 %v6340, 1.442695
    %v6344 = vpow.pop %v6343
    %v6345 = vsel %vm277, %v6342, 0.0
    %6346 = vadd.xlane.f32.xlu0 %v6345
    %v6347 = vpop.xlane.xlu0 %6346
    %v6348 = vsel %vm277, %v6344, 0.0
    %6349 = vadd.xlane.f32.xlu0 %v6348
    %v6350 = vpop.xlane.xlu0 %6349
    %v6351 = vrcp.pop %v6347
    %v6352 = vmul.f32 %v6342, %v6351
    %v6353 = vrcp.pop %v6350
    %v6354 = vmul.f32 %v6344, %v6353
    %6355 = vrot.lane.b32.xlu0 %v5500, 80
    %v6356 = vpop.permute.xlu0 %6355
    %v6359 = vsel %vm277, %v6352, 0
    %6361 = vmatprep.subr.mxu0 0.0
    %6362 = vmatpush1.msra.mxu0 0.0
    %6363 = vmatprep.subr.mxu0 0.0
    %6364 = vmatpush1.msra.mxu0 0.0
    %6365 = vmatprep.subr.mxu0 0.0
    %6366 = vmatpush1.msra.mxu0 0.0
    %6367 = vmatprep.subr.mxu0 0.0
    %6368 = vmatpush1.msra.mxu0 0.0
    %6369 = vmatprep.subr.mxu0 0.0
    %6370 = vmatpush1.msra.mxu0 0.0
    %6371 = vmatprep.subr.mxu0 0.0
    %6372 = vmatpush1.msra.mxu0 0.0
    %6373 = vmatprep.subr.mxu0 0.0
    %6374 = vmatpush1.msra.mxu0 0.0
    %6375 = vmatprep.subr.mxu0 0.0
    %6376 = vmatpush1.msra.mxu0 0.0
    %6377 = vmatprep.subr.mxu0 0.0
    %6378 = vmatpush1.msra.mxu0 0.0
    %6379 = vmatprep.subr.mxu0 0.0
    %6380 = vmatpush1.msra.mxu0 0.0
    %6381 = vmatprep.subr.mxu0 0.0
    %6382 = vmatpush1.msra.mxu0 0.0
    %6383 = vmatprep.subr.mxu0 0.0
    %6384 = vmatpush1.msra.mxu0 0.0
    %6385 = vmatprep.subr.mxu0 0.0
    %6386 = vmatpush1.msra.mxu0 0.0
    %6387 = vmatprep.subr.mxu0 0.0
    %6388 = vmatpush1.msra.mxu0 0.0
    %6389 = vmatprep.subr.mxu0 0.0
    %6390 = vmatpush1.msra.mxu0 0.0
    %6391 = vmatprep.subr.mxu0 0.0
    %6392 = vmatpush1.msra.mxu0 %v6356
    %6393 = vmatprep.subr.mxu0 0.0
    %6394 = vmatpush2.msra.mxu0 0.0
    %6395 = vmatprep.subr.mxu0 0.0
    %6396 = vmatpush2.msra.mxu0 0.0
    %6397 = vmatprep.subr.mxu0 0.0
    %6398 = vmatpush2.msra.mxu0 0.0
    %6399 = vmatprep.subr.mxu0 0.0
    %6400 = vmatpush2.msra.mxu0 0.0
    %6401 = vmatprep.subr.mxu0 0.0
    %6402 = vmatpush2.msra.mxu0 0.0
    %6403 = vmatprep.subr.mxu0 0.0
    %6404 = vmatpush2.msra.mxu0 0.0
    %6405 = vmatprep.subr.mxu0 0.0
    %6406 = vmatpush2.msra.mxu0 0.0
    %6407 = vmatprep.subr.mxu0 0.0
    %6408 = vmatpush2.msra.mxu0 0.0
    %6409 = vmatprep.subr.mxu0 0.0
    %6410 = vmatpush2.msra.mxu0 0.0
    %6411 = vmatprep.subr.mxu0 0.0
    %6412 = vmatpush2.msra.mxu0 0.0
    %6413 = vmatprep.subr.mxu0 0.0
    %6414 = vmatpush2.msra.mxu0 0.0
    %6415 = vmatprep.subr.mxu0 0.0
    %6416 = vmatpush2.msra.mxu0 0.0
    %6417 = vmatprep.subr.mxu0 0.0
    %6418 = vmatpush2.msra.mxu0 0.0
    %6419 = vmatprep.subr.mxu0 0.0
    %6420 = vmatpush2.msra.mxu0 0.0
    %6421 = vmatprep.subr.mxu0 0.0
    %6422 = vmatpush2.msra.mxu0 0.0
    %6423 = vmatprep.subr.mxu0 0.0
    %6424 = vmatpush2.msra.mxu0 0.0
    %6425 = vmatprep.mubr.f32.mxu0 0.0
    %6426 = vmatmul.mubr.f32.gmra.mxu0 %v6359
    %v6427 = vpop.f32.mrf.mxu0
    %v6428 = vadd.f32 0.0, %v6427
    %v6429 = vpop.f32.mrf.mxu0
    %6430 = vdwg.mxu0
    %6431 = vrot.lane.b32.xlu0 %v5505, 80
    %v6432 = vpop.permute.xlu0 %6431
    %v6435 = vsel %vm277, %v6354, 0
    %6437 = vmatprep.subr.mxu0 0.0
    %6438 = vmatpush1.msra.mxu0 0.0
    %6439 = vmatprep.subr.mxu0 0.0
    %6440 = vmatpush1.msra.mxu0 0.0
    %6441 = vmatprep.subr.mxu0 0.0
    %6442 = vmatpush1.msra.mxu0 0.0
    %6443 = vmatprep.subr.mxu0 0.0
    %6444 = vmatpush1.msra.mxu0 0.0
    %6445 = vmatprep.subr.mxu0 0.0
    %6446 = vmatpush1.msra.mxu0 0.0
    %6447 = vmatprep.subr.mxu0 0.0
    %6448 = vmatpush1.msra.mxu0 0.0
    %6449 = vmatprep.subr.mxu0 0.0
    %6450 = vmatpush1.msra.mxu0 0.0
    %6451 = vmatprep.subr.mxu0 0.0
    %6452 = vmatpush1.msra.mxu0 0.0
    %6453 = vmatprep.subr.mxu0 0.0
    %6454 = vmatpush1.msra.mxu0 0.0
    %6455 = vmatprep.subr.mxu0 0.0
    %6456 = vmatpush1.msra.mxu0 0.0
    %6457 = vmatprep.subr.mxu0 0.0
    %6458 = vmatpush1.msra.mxu0 0.0
    %6459 = vmatprep.subr.mxu0 0.0
    %6460 = vmatpush1.msra.mxu0 0.0
    %6461 = vmatprep.subr.mxu0 0.0
    %6462 = vmatpush1.msra.mxu0 0.0
    %6463 = vmatprep.subr.mxu0 0.0
    %6464 = vmatpush1.msra.mxu0 0.0
    %6465 = vmatprep.subr.mxu0 0.0
    %6466 = vmatpush1.msra.mxu0 0.0
    %6467 = vmatprep.subr.mxu0 0.0
    %6468 = vmatpush1.msra.mxu0 %v6432
    %6469 = vmatprep.subr.mxu0 0.0
    %6470 = vmatpush2.msra.mxu0 0.0
    %6471 = vmatprep.subr.mxu0 0.0
    %6472 = vmatpush2.msra.mxu0 0.0
    %6473 = vmatprep.subr.mxu0 0.0
    %6474 = vmatpush2.msra.mxu0 0.0
    %6475 = vmatprep.subr.mxu0 0.0
    %6476 = vmatpush2.msra.mxu0 0.0
    %6477 = vmatprep.subr.mxu0 0.0
    %6478 = vmatpush2.msra.mxu0 0.0
    %6479 = vmatprep.subr.mxu0 0.0
    %6480 = vmatpush2.msra.mxu0 0.0
    %6481 = vmatprep.subr.mxu0 0.0
    %6482 = vmatpush2.msra.mxu0 0.0
    %6483 = vmatprep.subr.mxu0 0.0
    %6484 = vmatpush2.msra.mxu0 0.0
    %6485 = vmatprep.subr.mxu0 0.0
    %6486 = vmatpush2.msra.mxu0 0.0
    %6487 = vmatprep.subr.mxu0 0.0
    %6488 = vmatpush2.msra.mxu0 0.0
    %6489 = vmatprep.subr.mxu0 0.0
    %6490 = vmatpush2.msra.mxu0 0.0
    %6491 = vmatprep.subr.mxu0 0.0
    %6492 = vmatpush2.msra.mxu0 0.0
    %6493 = vmatprep.subr.mxu0 0.0
    %6494 = vmatpush2.msra.mxu0 0.0
    %6495 = vmatprep.subr.mxu0 0.0
    %6496 = vmatpush2.msra.mxu0 0.0
    %6497 = vmatprep.subr.mxu0 0.0
    %6498 = vmatpush2.msra.mxu0 0.0
    %6499 = vmatprep.subr.mxu0 0.0
    %6500 = vmatpush2.msra.mxu0 0.0
    %6501 = vmatprep.mubr.f32.mxu0 0.0
    %6502 = vmatmul.mubr.f32.gmra.mxu0 %v6435
    %v6503 = vpop.f32.mrf.mxu0
    %v6504 = vadd.f32 0.0, %v6503
    %v6505 = vpop.f32.mrf.mxu0
    %6506 = vdwg.mxu0
    %6507 = vrot.lane.b32.xlu0 %v5412, 104
    %v6508 = vpop.permute.xlu0 %6507
    %6509 = vrot.lane.b32.xlu0 %v5500, 104
    %v6510 = vpop.permute.xlu0 %6509
    %v6511 = vsel %vm277, %v6508, 0
    %v6513 = vsel %vm277, %v6510, 0
    %6515 = vmatprep.subr.mxu0 0.0
    %6516 = vmatpush1.xpose.msra.mxu0 0.0
    %6517 = vmatprep.subr.mxu0 0.0
    %6518 = vmatpush1.xpose.msra.mxu0 0.0
    %6519 = vmatprep.subr.mxu0 0.0
    %6520 = vmatpush1.xpose.msra.mxu0 0.0
    %6521 = vmatprep.subr.mxu0 0.0
    %6522 = vmatpush1.xpose.msra.mxu0 0.0
    %6523 = vmatprep.subr.mxu0 0.0
    %6524 = vmatpush1.xpose.msra.mxu0 0.0
    %6525 = vmatprep.subr.mxu0 0.0
    %6526 = vmatpush1.xpose.msra.mxu0 0.0
    %6527 = vmatprep.subr.mxu0 0.0
    %6528 = vmatpush1.xpose.msra.mxu0 0.0
    %6529 = vmatprep.subr.mxu0 0.0
    %6530 = vmatpush1.xpose.msra.mxu0 0.0
    %6531 = vmatprep.subr.mxu0 0.0
    %6532 = vmatpush1.xpose.msra.mxu0 0.0
    %6533 = vmatprep.subr.mxu0 0.0
    %6534 = vmatpush1.xpose.msra.mxu0 0.0
    %6535 = vmatprep.subr.mxu0 0.0
    %6536 = vmatpush1.xpose.msra.mxu0 0.0
    %6537 = vmatprep.subr.mxu0 0.0
    %6538 = vmatpush1.xpose.msra.mxu0 0.0
    %6539 = vmatprep.subr.mxu0 0.0
    %6540 = vmatpush1.xpose.msra.mxu0 0.0
    %6541 = vmatprep.subr.mxu0 0.0
    %6542 = vmatpush1.xpose.msra.mxu0 0.0
    %6543 = vmatprep.subr.mxu0 0.0
    %6544 = vmatpush1.xpose.msra.mxu0 0.0
    %6545 = vmatprep.subr.mxu0 0.0
    %6546 = vmatpush1.xpose.msra.mxu0 %v6513
    %6547 = vmatprep.subr.mxu0 0.0
    %6548 = vmatpush2.xpose.msra.mxu0 0.0
    %6549 = vmatprep.subr.mxu0 0.0
    %6550 = vmatpush2.xpose.msra.mxu0 0.0
    %6551 = vmatprep.subr.mxu0 0.0
    %6552 = vmatpush2.xpose.msra.mxu0 0.0
    %6553 = vmatprep.subr.mxu0 0.0
    %6554 = vmatpush2.xpose.msra.mxu0 0.0
    %6555 = vmatprep.subr.mxu0 0.0
    %6556 = vmatpush2.xpose.msra.mxu0 0.0
    %6557 = vmatprep.subr.mxu0 0.0
    %6558 = vmatpush2.xpose.msra.mxu0 0.0
    %6559 = vmatprep.subr.mxu0 0.0
    %6560 = vmatpush2.xpose.msra.mxu0 0.0
    %6561 = vmatprep.subr.mxu0 0.0
    %6562 = vmatpush2.xpose.msra.mxu0 0.0
    %6563 = vmatprep.subr.mxu0 0.0
    %6564 = vmatpush2.xpose.msra.mxu0 0.0
    %6565 = vmatprep.subr.mxu0 0.0
    %6566 = vmatpush2.xpose.msra.mxu0 0.0
    %6567 = vmatprep.subr.mxu0 0.0
    %6568 = vmatpush2.xpose.msra.mxu0 0.0
    %6569 = vmatprep.subr.mxu0 0.0
    %6570 = vmatpush2.xpose.msra.mxu0 0.0
    %6571 = vmatprep.subr.mxu0 0.0
    %6572 = vmatpush2.xpose.msra.mxu0 0.0
    %6573 = vmatprep.subr.mxu0 0.0
    %6574 = vmatpush2.xpose.msra.mxu0 0.0
    %6575 = vmatprep.subr.mxu0 0.0
    %6576 = vmatpush2.xpose.msra.mxu0 0.0
    %6577 = vmatprep.subr.mxu0 0.0
    %6578 = vmatpush2.xpose.msra.mxu0 0.0
    %6579 = vmatprep.mubr.f32.mxu0 0.0
    %6580 = vmatmul.mubr.f32.gmra.mxu0 %v6511
    %v6581 = vpop.f32.mrf.mxu0
    %v6582 = vadd.f32 0.0, %v6581
    %v6583 = vpop.f32.mrf.mxu0
    %6584 = vdwg.mxu0
    %6585 = vrot.lane.b32.xlu0 %v5417, 104
    %v6586 = vpop.permute.xlu0 %6585
    %6587 = vrot.lane.b32.xlu0 %v5505, 104
    %v6588 = vpop.permute.xlu0 %6587
    %v6589 = vsel %vm277, %v6586, 0
    %v6591 = vsel %vm277, %v6588, 0
    %6593 = vmatprep.subr.mxu0 0.0
    %6594 = vmatpush1.xpose.msra.mxu0 0.0
    %6595 = vmatprep.subr.mxu0 0.0
    %6596 = vmatpush1.xpose.msra.mxu0 0.0
    %6597 = vmatprep.subr.mxu0 0.0
    %6598 = vmatpush1.xpose.msra.mxu0 0.0
    %6599 = vmatprep.subr.mxu0 0.0
    %6600 = vmatpush1.xpose.msra.mxu0 0.0
    %6601 = vmatprep.subr.mxu0 0.0
    %6602 = vmatpush1.xpose.msra.mxu0 0.0
    %6603 = vmatprep.subr.mxu0 0.0
    %6604 = vmatpush1.xpose.msra.mxu0 0.0
    %6605 = vmatprep.subr.mxu0 0.0
    %6606 = vmatpush1.xpose.msra.mxu0 0.0
    %6607 = vmatprep.subr.mxu0 0.0
    %6608 = vmatpush1.xpose.msra.mxu0 0.0
    %6609 = vmatprep.subr.mxu0 0.0
    %6610 = vmatpush1.xpose.msra.mxu0 0.0
    %6611 = vmatprep.subr.mxu0 0.0
    %6612 = vmatpush1.xpose.msra.mxu0 0.0
    %6613 = vmatprep.subr.mxu0 0.0
    %6614 = vmatpush1.xpose.msra.mxu0 0.0
    %6615 = vmatprep.subr.mxu0 0.0
    %6616 = vmatpush1.xpose.msra.mxu0 0.0
    %6617 = vmatprep.subr.mxu0 0.0
    %6618 = vmatpush1.xpose.msra.mxu0 0.0
    %6619 = vmatprep.subr.mxu0 0.0
    %6620 = vmatpush1.xpose.msra.mxu0 0.0
    %6621 = vmatprep.subr.mxu0 0.0
    %6622 = vmatpush1.xpose.msra.mxu0 0.0
    %6623 = vmatprep.subr.mxu0 0.0
    %6624 = vmatpush1.xpose.msra.mxu0 %v6591
    %6625 = vmatprep.subr.mxu0 0.0
    %6626 = vmatpush2.xpose.msra.mxu0 0.0
    %6627 = vmatprep.subr.mxu0 0.0
    %6628 = vmatpush2.xpose.msra.mxu0 0.0
    %6629 = vmatprep.subr.mxu0 0.0
    %6630 = vmatpush2.xpose.msra.mxu0 0.0
    %6631 = vmatprep.subr.mxu0 0.0
    %6632 = vmatpush2.xpose.msra.mxu0 0.0
    %6633 = vmatprep.subr.mxu0 0.0
    %6634 = vmatpush2.xpose.msra.mxu0 0.0
    %6635 = vmatprep.subr.mxu0 0.0
    %6636 = vmatpush2.xpose.msra.mxu0 0.0
    %6637 = vmatprep.subr.mxu0 0.0
    %6638 = vmatpush2.xpose.msra.mxu0 0.0
    %6639 = vmatprep.subr.mxu0 0.0
    %6640 = vmatpush2.xpose.msra.mxu0 0.0
    %6641 = vmatprep.subr.mxu0 0.0
    %6642 = vmatpush2.xpose.msra.mxu0 0.0
    %6643 = vmatprep.subr.mxu0 0.0
    %6644 = vmatpush2.xpose.msra.mxu0 0.0
    %6645 = vmatprep.subr.mxu0 0.0
    %6646 = vmatpush2.xpose.msra.mxu0 0.0
    %6647 = vmatprep.subr.mxu0 0.0
    %6648 = vmatpush2.xpose.msra.mxu0 0.0
    %6649 = vmatprep.subr.mxu0 0.0
    %6650 = vmatpush2.xpose.msra.mxu0 0.0
    %6651 = vmatprep.subr.mxu0 0.0
    %6652 = vmatpush2.xpose.msra.mxu0 0.0
    %6653 = vmatprep.subr.mxu0 0.0
    %6654 = vmatpush2.xpose.msra.mxu0 0.0
    %6655 = vmatprep.subr.mxu0 0.0
    %6656 = vmatpush2.xpose.msra.mxu0 0.0
    %6657 = vmatprep.mubr.f32.mxu0 0.0
    %6658 = vmatmul.mubr.f32.gmra.mxu0 %v6589
    %v6659 = vpop.f32.mrf.mxu0
    %v6660 = vadd.f32 0.0, %v6659
    %v6661 = vpop.f32.mrf.mxu0
    %6662 = vdwg.mxu0
    %v6663 = vmul.f32 %v6582, 0.35355338
    %v6664 = vmul.f32 %v6660, 0.35355338
    %v6665 = vsel %vm277, %v6663, -inf
    %6666 = vmax.xlane.f32.xlu0 %v6665
    %v6667 = vpop.xlane.xlu0 %6666
    %v6668 = vsel %vm277, %v6664, -inf
    %6669 = vmax.xlane.f32.xlu0 %v6668
    %v6670 = vpop.xlane.xlu0 %6669
    %v6671 = vsub.f32 %v6663, %v6667
    %v6672 = vsub.f32 %v6664, %v6670
    %v6673 = vmul.f32 %v6671, 1.442695
    %v6674 = vpow.pop %v6673
    %v6675 = vmul.f32 %v6672, 1.442695
    %v6676 = vpow.pop %v6675
    %v6677 = vsel %vm277, %v6674, 0.0
    %6678 = vadd.xlane.f32.xlu0 %v6677
    %v6679 = vpop.xlane.xlu0 %6678
    %v6680 = vsel %vm277, %v6676, 0.0
    %6681 = vadd.xlane.f32.xlu0 %v6680
    %v6682 = vpop.xlane.xlu0 %6681
    %v6683 = vrcp.pop %v6679
    %v6684 = vmul.f32 %v6674, %v6683
    %v6685 = vrcp.pop %v6682
    %v6686 = vmul.f32 %v6676, %v6685
    %6687 = vrot.lane.b32.xlu0 %v5500, 72
    %v6688 = vpop.permute.xlu0 %6687
    %v6691 = vsel %vm277, %v6684, 0
    %6693 = vmatprep.subr.mxu0 0.0
    %6694 = vmatpush1.msra.mxu0 0.0
    %6695 = vmatprep.subr.mxu0 0.0
    %6696 = vmatpush1.msra.mxu0 0.0
    %6697 = vmatprep.subr.mxu0 0.0
    %6698 = vmatpush1.msra.mxu0 0.0
    %6699 = vmatprep.subr.mxu0 0.0
    %6700 = vmatpush1.msra.mxu0 0.0
    %6701 = vmatprep.subr.mxu0 0.0
    %6702 = vmatpush1.msra.mxu0 0.0
    %6703 = vmatprep.subr.mxu0 0.0
    %6704 = vmatpush1.msra.mxu0 0.0
    %6705 = vmatprep.subr.mxu0 0.0
    %6706 = vmatpush1.msra.mxu0 0.0
    %6707 = vmatprep.subr.mxu0 0.0
    %6708 = vmatpush1.msra.mxu0 0.0
    %6709 = vmatprep.subr.mxu0 0.0
    %6710 = vmatpush1.msra.mxu0 0.0
    %6711 = vmatprep.subr.mxu0 0.0
    %6712 = vmatpush1.msra.mxu0 0.0
    %6713 = vmatprep.subr.mxu0 0.0
    %6714 = vmatpush1.msra.mxu0 0.0
    %6715 = vmatprep.subr.mxu0 0.0
    %6716 = vmatpush1.msra.mxu0 0.0
    %6717 = vmatprep.subr.mxu0 0.0
    %6718 = vmatpush1.msra.mxu0 0.0
    %6719 = vmatprep.subr.mxu0 0.0
    %6720 = vmatpush1.msra.mxu0 0.0
    %6721 = vmatprep.subr.mxu0 0.0
    %6722 = vmatpush1.msra.mxu0 0.0
    %6723 = vmatprep.subr.mxu0 0.0
    %6724 = vmatpush1.msra.mxu0 %v6688
    %6725 = vmatprep.subr.mxu0 0.0
    %6726 = vmatpush2.msra.mxu0 0.0
    %6727 = vmatprep.subr.mxu0 0.0
    %6728 = vmatpush2.msra.mxu0 0.0
    %6729 = vmatprep.subr.mxu0 0.0
    %6730 = vmatpush2.msra.mxu0 0.0
    %6731 = vmatprep.subr.mxu0 0.0
    %6732 = vmatpush2.msra.mxu0 0.0
    %6733 = vmatprep.subr.mxu0 0.0
    %6734 = vmatpush2.msra.mxu0 0.0
    %6735 = vmatprep.subr.mxu0 0.0
    %6736 = vmatpush2.msra.mxu0 0.0
    %6737 = vmatprep.subr.mxu0 0.0
    %6738 = vmatpush2.msra.mxu0 0.0
    %6739 = vmatprep.subr.mxu0 0.0
    %6740 = vmatpush2.msra.mxu0 0.0
    %6741 = vmatprep.subr.mxu0 0.0
    %6742 = vmatpush2.msra.mxu0 0.0
    %6743 = vmatprep.subr.mxu0 0.0
    %6744 = vmatpush2.msra.mxu0 0.0
    %6745 = vmatprep.subr.mxu0 0.0
    %6746 = vmatpush2.msra.mxu0 0.0
    %6747 = vmatprep.subr.mxu0 0.0
    %6748 = vmatpush2.msra.mxu0 0.0
    %6749 = vmatprep.subr.mxu0 0.0
    %6750 = vmatpush2.msra.mxu0 0.0
    %6751 = vmatprep.subr.mxu0 0.0
    %6752 = vmatpush2.msra.mxu0 0.0
    %6753 = vmatprep.subr.mxu0 0.0
    %6754 = vmatpush2.msra.mxu0 0.0
    %6755 = vmatprep.subr.mxu0 0.0
    %6756 = vmatpush2.msra.mxu0 0.0
    %6757 = vmatprep.mubr.f32.mxu0 0.0
    %6758 = vmatmul.mubr.f32.gmra.mxu0 %v6691
    %v6759 = vpop.f32.mrf.mxu0
    %v6760 = vadd.f32 0.0, %v6759
    %v6761 = vpop.f32.mrf.mxu0
    %6762 = vdwg.mxu0
    %6763 = vrot.lane.b32.xlu0 %v5505, 72
    %v6764 = vpop.permute.xlu0 %6763
    %v6767 = vsel %vm277, %v6686, 0
    %6769 = vmatprep.subr.mxu0 0.0
    %6770 = vmatpush1.msra.mxu0 0.0
    %6771 = vmatprep.subr.mxu0 0.0
    %6772 = vmatpush1.msra.mxu0 0.0
    %6773 = vmatprep.subr.mxu0 0.0
    %6774 = vmatpush1.msra.mxu0 0.0
    %6775 = vmatprep.subr.mxu0 0.0
    %6776 = vmatpush1.msra.mxu0 0.0
    %6777 = vmatprep.subr.mxu0 0.0
    %6778 = vmatpush1.msra.mxu0 0.0
    %6779 = vmatprep.subr.mxu0 0.0
    %6780 = vmatpush1.msra.mxu0 0.0
    %6781 = vmatprep.subr.mxu0 0.0
    %6782 = vmatpush1.msra.mxu0 0.0
    %6783 = vmatprep.subr.mxu0 0.0
    %6784 = vmatpush1.msra.mxu0 0.0
    %6785 = vmatprep.subr.mxu0 0.0
    %6786 = vmatpush1.msra.mxu0 0.0
    %6787 = vmatprep.subr.mxu0 0.0
    %6788 = vmatpush1.msra.mxu0 0.0
    %6789 = vmatprep.subr.mxu0 0.0
    %6790 = vmatpush1.msra.mxu0 0.0
    %6791 = vmatprep.subr.mxu0 0.0
    %6792 = vmatpush1.msra.mxu0 0.0
    %6793 = vmatprep.subr.mxu0 0.0
    %6794 = vmatpush1.msra.mxu0 0.0
    %6795 = vmatprep.subr.mxu0 0.0
    %6796 = vmatpush1.msra.mxu0 0.0
    %6797 = vmatprep.subr.mxu0 0.0
    %6798 = vmatpush1.msra.mxu0 0.0
    %6799 = vmatprep.subr.mxu0 0.0
    %6800 = vmatpush1.msra.mxu0 %v6764
    %6801 = vmatprep.subr.mxu0 0.0
    %6802 = vmatpush2.msra.mxu0 0.0
    %6803 = vmatprep.subr.mxu0 0.0
    %6804 = vmatpush2.msra.mxu0 0.0
    %6805 = vmatprep.subr.mxu0 0.0
    %6806 = vmatpush2.msra.mxu0 0.0
    %6807 = vmatprep.subr.mxu0 0.0
    %6808 = vmatpush2.msra.mxu0 0.0
    %6809 = vmatprep.subr.mxu0 0.0
    %6810 = vmatpush2.msra.mxu0 0.0
    %6811 = vmatprep.subr.mxu0 0.0
    %6812 = vmatpush2.msra.mxu0 0.0
    %6813 = vmatprep.subr.mxu0 0.0
    %6814 = vmatpush2.msra.mxu0 0.0
    %6815 = vmatprep.subr.mxu0 0.0
    %6816 = vmatpush2.msra.mxu0 0.0
    %6817 = vmatprep.subr.mxu0 0.0
    %6818 = vmatpush2.msra.mxu0 0.0
    %6819 = vmatprep.subr.mxu0 0.0
    %6820 = vmatpush2.msra.mxu0 0.0
    %6821 = vmatprep.subr.mxu0 0.0
    %6822 = vmatpush2.msra.mxu0 0.0
    %6823 = vmatprep.subr.mxu0 0.0
    %6824 = vmatpush2.msra.mxu0 0.0
    %6825 = vmatprep.subr.mxu0 0.0
    %6826 = vmatpush2.msra.mxu0 0.0
    %6827 = vmatprep.subr.mxu0 0.0
    %6828 = vmatpush2.msra.mxu0 0.0
    %6829 = vmatprep.subr.mxu0 0.0
    %6830 = vmatpush2.msra.mxu0 0.0
    %6831 = vmatprep.subr.mxu0 0.0
    %6832 = vmatpush2.msra.mxu0 0.0
    %6833 = vmatprep.mubr.f32.mxu0 0.0
    %6834 = vmatmul.mubr.f32.gmra.mxu0 %v6767
    %v6835 = vpop.f32.mrf.mxu0
    %v6836 = vadd.f32 0.0, %v6835
    %v6837 = vpop.f32.mrf.mxu0
    %6838 = vdwg.mxu0
    %6841 = vrot.lane.b32.xlu0 %v6096, 8
    %v6842 = vpop.permute.xlu0 %6841
    %6843 = vrot.lane.b32.xlu0 %v6172, 8
    %v6844 = vpop.permute.xlu0 %6843
    %6849 = vrot.lane.b32.xlu0 %v6428, 16
    %v6850 = vpop.permute.xlu0 %6849
    %6851 = vrot.lane.b32.xlu0 %v6504, 16
    %v6852 = vpop.permute.xlu0 %6851
    %6857 = vrot.lane.b32.xlu0 %v6760, 24
    %v6858 = vpop.permute.xlu0 %6857
    %6859 = vrot.lane.b32.xlu0 %v6836, 24
    %v6860 = vpop.permute.xlu0 %6859
    %v6863 = vsel %vm277, %v5764, %v6842
    %v6864 = vsel %vm277, %v5840, %v6844
    %v6865 = vsel %vm1627, %v6863, %v6850
    %v6866 = vsel %vm1627, %v6864, %v6852
    %v6867 = vsel %vm1630, %v6865, %v6858
    %v6868 = vsel %vm1630, %v6866, %v6860
    %v6870 = vlaneseq
    %v6871 = vshrl.u32 %v6870, 7
    %v6872 = vsub.s32 0, %v6871
    %v6873 = vrot.slane %v5514, %v6872
    %v6876 = vsel %vm133, %v6867, 0
    %v6879 = vsel %vm133, %v6868, 0
    %6881 = vmatprep.subr.mxu0 0.0
    %6882 = vmatpush1.msra.mxu0 0.0
    %6883 = vmatprep.subr.mxu0 0.0
    %6884 = vmatpush1.msra.mxu0 0.0
    %6885 = vmatprep.subr.mxu0 0.0
    %6886 = vmatpush1.msra.mxu0 0.0
    %6887 = vmatprep.subr.mxu0 0.0
    %6888 = vmatpush1.msra.mxu0 0.0
    %6889 = vmatprep.subr.mxu0 0.0
    %6890 = vmatpush1.msra.mxu0 0.0
    %6891 = vmatprep.subr.mxu0 0.0
    %6892 = vmatpush1.msra.mxu0 0.0
    %6893 = vmatprep.subr.mxu0 0.0
    %6894 = vmatpush1.msra.mxu0 0.0
    %6895 = vmatprep.subr.mxu0 0.0
    %6896 = vmatpush1.msra.mxu0 0.0
    %6897 = vmatprep.subr.mxu0 0.0
    %6898 = vmatpush1.msra.mxu0 0.0
    %6899 = vmatprep.subr.mxu0 0.0
    %6900 = vmatpush1.msra.mxu0 0.0
    %6901 = vmatprep.subr.mxu0 0.0
    %6902 = vmatpush1.msra.mxu0 0.0
    %6903 = vmatprep.subr.mxu0 0.0
    %6904 = vmatpush1.msra.mxu0 0.0
    %6905 = vmatprep.subr.mxu0 0.0
    %6906 = vmatpush1.msra.mxu0 %v5512
    %6907 = vmatprep.subr.mxu0 0.0
    %6908 = vmatpush1.msra.mxu0 %v5511
    %6909 = vmatprep.subr.mxu0 0.0
    %6910 = vmatpush1.msra.mxu0 %v5510
    %6911 = vmatprep.subr.mxu0 0.0
    %6912 = vmatpush1.msra.mxu0 %v5509
    %6913 = vmatprep.subr.mxu0 0.0
    %6914 = vmatpush2.msra.mxu0 0.0
    %6915 = vmatprep.subr.mxu0 0.0
    %6916 = vmatpush2.msra.mxu0 0.0
    %6917 = vmatprep.subr.mxu0 0.0
    %6918 = vmatpush2.msra.mxu0 0.0
    %6919 = vmatprep.subr.mxu0 0.0
    %6920 = vmatpush2.msra.mxu0 0.0
    %6921 = vmatprep.subr.mxu0 0.0
    %6922 = vmatpush2.msra.mxu0 0.0
    %6923 = vmatprep.subr.mxu0 0.0
    %6924 = vmatpush2.msra.mxu0 0.0
    %6925 = vmatprep.subr.mxu0 0.0
    %6926 = vmatpush2.msra.mxu0 0.0
    %6927 = vmatprep.subr.mxu0 0.0
    %6928 = vmatpush2.msra.mxu0 0.0
    %6929 = vmatprep.subr.mxu0 0.0
    %6930 = vmatpush2.msra.mxu0 0.0
    %6931 = vmatprep.subr.mxu0 0.0
    %6932 = vmatpush2.msra.mxu0 0.0
    %6933 = vmatprep.subr.mxu0 0.0
    %6934 = vmatpush2.msra.mxu0 0.0
    %6935 = vmatprep.subr.mxu0 0.0
    %6936 = vmatpush2.msra.mxu0 0.0
    %6937 = vmatprep.subr.mxu0 0.0
    %6938 = vmatpush2.msra.mxu0 0.0
    %6939 = vmatprep.subr.mxu0 0.0
    %6940 = vmatpush2.msra.mxu0 0.0
    %6941 = vmatprep.subr.mxu0 0.0
    %6942 = vmatpush2.msra.mxu0 0.0
    %6943 = vmatprep.subr.mxu0 0.0
    %6944 = vmatpush2.msra.mxu0 0.0
    %6945 = vmatprep.mubr.f32.mxu0 0.0
    %6946 = vmatmul.mubr.f32.gmra.mxu0 %v6876
    %v6947 = vpop.f32.mrf.mxu0
    %v6948 = vadd.f32 %v6873, %v6947
    %v6949 = vpop.f32.mrf.mxu0
    %6950 = vmatprep.mubr.f32.mxu0 0.0
    %6951 = vmatmul.mubr.f32.gmra.mxu0 %v6879
    %v6952 = vpop.f32.mrf.mxu0
    %v6953 = vadd.f32 %v6873, %v6952
    %v6954 = vpop.f32.mrf.mxu0
    %6955 = vdwg.mxu0
    %v6956 = vadd.f32 %v5278, %v6948
    %v6957 = vadd.f32 %v5279, %v6953
    %s6958 = scalar_lea.vmem %s16, 1
    %v6959 = vld [vmem:[%s6958] sm:$0x1]
    %s6960 = scalar_lea.vmem %s17, 1
    %v6961 = vld [vmem:[%s6960] sm:$0x1]
    %v6962 = vsel %vm133, %v6956, 0.0
    %6963 = vadd.xlane.f32.xlu0 %v6962
    %v6964 = vpop.xlane.xlu0 %6963
    %v6965 = vsel %vm133, %v6957, 0.0
    %6966 = vadd.xlane.f32.xlu0 %v6965
    %v6967 = vpop.xlane.xlu0 %6966
    %v6968 = vmul.f32 %v6964, %v140
    %v6969 = vmul.f32 %v6967, %v140
    %v6970 = vsub.f32 %v6956, %v6968
    %v6971 = vsub.f32 %v6957, %v6969
    %v6972 = vmul.f32 %v6970, %v6970
    %v6973 = vmul.f32 %v6971, %v6971
    %v6974 = vsel %vm133, %v6972, 0.0
    %6975 = vadd.xlane.f32.xlu0 %v6974
    %v6976 = vpop.xlane.xlu0 %6975
    %v6977 = vsel %vm133, %v6973, 0.0
    %6978 = vadd.xlane.f32.xlu0 %v6977
    %v6979 = vpop.xlane.xlu0 %6978
    %v6980 = vmul.f32 %v6976, %v140
    %v6981 = vmul.f32 %v6979, %v140
    %v6982 = vadd.f32 %v6980, 1e-05
    %v6983 = vadd.f32 %v6981, 1e-05
    %v6984 = vrsqrt.pop %v6982
    %v6985 = vrsqrt.pop %v6983
    %v6986 = vmul.f32 %v6970, %v6984
    %v6987 = vmul.f32 %v6971, %v6985
    %v6989 = vlaneseq
    %v6990 = vshrl.u32 %v6989, 7
    %v6991 = vsub.s32 0, %v6990
    %v6992 = vrot.slane %v6959, %v6991
    %v6994 = vmul.f32 %v6986, %v6992
    %v6995 = vmul.f32 %v6987, %v6992
    %v6997 = vlaneseq
    %v6998 = vshrl.u32 %v6997, 7
    %v6999 = vsub.s32 0, %v6998
    %v7000 = vrot.slane %v6961, %v6999
    %v7002 = vadd.f32 %v6994, %v7000
    %v7003 = vadd.f32 %v6995, %v7000
    %s7004 = scalar_lea.vmem [#allocation8], 32
    %v7005 = vld [vmem:[%s7004] sm:$0xff]
    %v7006 = vld [vmem:[%s7004 + $0x8] sm:$0xff]
    %v7007 = vld [vmem:[%s7004 + $0x10] sm:$0xff]
    %v7008 = vld [vmem:[%s7004 + $0x18] sm:$0xff]
    %s7009 = scalar_lea.vmem %s19, 1
    %v7010 = vld [vmem:[%s7009] sm:$0x1]
    %v7012 = vlaneseq
    %v7013 = vshrl.u32 %v7012, 7
    %v7014 = vsub.s32 0, %v7013
    %v7015 = vrot.slane %v7010, %v7014
    %v7018 = vsel %vm133, %v7002, 0
    %v7021 = vsel %vm133, %v7003, 0
    %7023 = vmatprep.subr.mxu0 0.0
    %7024 = vmatpush1.msra.mxu0 0.0
    %7025 = vmatprep.subr.mxu0 0.0
    %7026 = vmatpush1.msra.mxu0 0.0
    %7027 = vmatprep.subr.mxu0 0.0
    %7028 = vmatpush1.msra.mxu0 0.0
    %7029 = vmatprep.subr.mxu0 0.0
    %7030 = vmatpush1.msra.mxu0 0.0
    %7031 = vmatprep.subr.mxu0 0.0
    %7032 = vmatpush1.msra.mxu0 0.0
    %7033 = vmatprep.subr.mxu0 0.0
    %7034 = vmatpush1.msra.mxu0 0.0
    %7035 = vmatprep.subr.mxu0 0.0
    %7036 = vmatpush1.msra.mxu0 0.0
    %7037 = vmatprep.subr.mxu0 0.0
    %7038 = vmatpush1.msra.mxu0 0.0
    %7039 = vmatprep.subr.mxu0 0.0
    %7040 = vmatpush1.msra.mxu0 0.0
    %7041 = vmatprep.subr.mxu0 0.0
    %7042 = vmatpush1.msra.mxu0 0.0
    %7043 = vmatprep.subr.mxu0 0.0
    %7044 = vmatpush1.msra.mxu0 0.0
    %7045 = vmatprep.subr.mxu0 0.0
    %7046 = vmatpush1.msra.mxu0 0.0
    %7047 = vmatprep.subr.mxu0 0.0
    %7048 = vmatpush1.msra.mxu0 %v7008
    %7049 = vmatprep.subr.mxu0 0.0
    %7050 = vmatpush1.msra.mxu0 %v7007
    %7051 = vmatprep.subr.mxu0 0.0
    %7052 = vmatpush1.msra.mxu0 %v7006
    %7053 = vmatprep.subr.mxu0 0.0
    %7054 = vmatpush1.msra.mxu0 %v7005
    %7055 = vmatprep.subr.mxu0 0.0
    %7056 = vmatpush2.msra.mxu0 0.0
    %7057 = vmatprep.subr.mxu0 0.0
    %7058 = vmatpush2.msra.mxu0 0.0
    %7059 = vmatprep.subr.mxu0 0.0
    %7060 = vmatpush2.msra.mxu0 0.0
    %7061 = vmatprep.subr.mxu0 0.0
    %7062 = vmatpush2.msra.mxu0 0.0
    %7063 = vmatprep.subr.mxu0 0.0
    %7064 = vmatpush2.msra.mxu0 0.0
    %7065 = vmatprep.subr.mxu0 0.0
    %7066 = vmatpush2.msra.mxu0 0.0
    %7067 = vmatprep.subr.mxu0 0.0
    %7068 = vmatpush2.msra.mxu0 0.0
    %7069 = vmatprep.subr.mxu0 0.0
    %7070 = vmatpush2.msra.mxu0 0.0
    %7071 = vmatprep.subr.mxu0 0.0
    %7072 = vmatpush2.msra.mxu0 0.0
    %7073 = vmatprep.subr.mxu0 0.0
    %7074 = vmatpush2.msra.mxu0 0.0
    %7075 = vmatprep.subr.mxu0 0.0
    %7076 = vmatpush2.msra.mxu0 0.0
    %7077 = vmatprep.subr.mxu0 0.0
    %7078 = vmatpush2.msra.mxu0 0.0
    %7079 = vmatprep.subr.mxu0 0.0
    %7080 = vmatpush2.msra.mxu0 0.0
    %7081 = vmatprep.subr.mxu0 0.0
    %7082 = vmatpush2.msra.mxu0 0.0
    %7083 = vmatprep.subr.mxu0 0.0
    %7084 = vmatpush2.msra.mxu0 0.0
    %7085 = vmatprep.subr.mxu0 0.0
    %7086 = vmatpush2.msra.mxu0 0.0
    %7087 = vmatprep.mubr.f32.mxu0 0.0
    %7088 = vmatmul.mubr.f32.gmra.mxu0 %v7018
    %v7089 = vpop.f32.mrf.mxu0
    %v7090 = vadd.f32 %v7015, %v7089
    %v7091 = vpop.f32.mrf.mxu0
    %7092 = vmatprep.mubr.f32.mxu0 0.0
    %7093 = vmatmul.mubr.f32.gmra.mxu0 %v7021
    %v7094 = vpop.f32.mrf.mxu0
    %v7095 = vadd.f32 %v7015, %v7094
    %v7096 = vpop.f32.mrf.mxu0
    %7097 = vdwg.mxu0
    %v7098 = vmul.f32 %v7090, 0.5
    %v7099 = vmul.f32 %v7095, 0.5
    %v7100 = vmul.f32 %v7090, 0.70710677
    %v7101 = vmul.f32 %v7095, 0.70710677
    %v7102 = vand.u32 2147483647, %v7100
    %v7103 = vand.u32 2147483647, %v7101
    %v7104 = vmul.f32 %v7102, 0.3275911
    %v7105 = vmul.f32 %v7103, 0.3275911
    %v7106 = vadd.f32 %v7104, 1.0
    %v7107 = vadd.f32 %v7105, 1.0
    %v7108 = vrcp.pop %v7106
    %v7109 = vmul.f32 1.0, %v7108
    %v7110 = vrcp.pop %v7107
    %v7111 = vmul.f32 1.0, %v7110
    %v7112 = vmul.f32 %v7109, 1.0614054
    %v7113 = vmul.f32 %v7111, 1.0614054
    %v7114 = vadd.f32 %v7112, -1.4531521
    %v7115 = vadd.f32 %v7113, -1.4531521
    %v7116 = vmul.f32 %v7114, %v7109
    %v7117 = vmul.f32 %v7115, %v7111
    %v7118 = vadd.f32 %v7116, 1.4214138
    %v7119 = vadd.f32 %v7117, 1.4214138
    %v7120 = vmul.f32 %v7118, %v7109
    %v7121 = vmul.f32 %v7119, %v7111
    %v7122 = vadd.f32 %v7120, -0.28449672
    %v7123 = vadd.f32 %v7121, -0.28449672
    %v7124 = vmul.f32 %v7122, %v7109
    %v7125 = vmul.f32 %v7123, %v7111
    %v7126 = vadd.f32 %v7124, 0.2548296
    %v7127 = vadd.f32 %v7125, 0.2548296
    %v7128 = vmul.f32 %v7126, %v7109
    %v7129 = vmul.f32 %v7127, %v7111
    %v7130 = vsub.f32 0.0, %v7102
    %v7131 = vsub.f32 0.0, %v7103
    %v7132 = vmul.f32 %v7130, %v7102
    %v7133 = vmul.f32 %v7131, %v7103
    %v7134 = vmul.f32 %v7132, 1.442695
    %v7135 = vpow.pop %v7134
    %v7136 = vmul.f32 %v7133, 1.442695
    %v7137 = vpow.pop %v7136
    %v7138 = vmul.f32 %v7128, %v7135
    %v7139 = vmul.f32 %v7129, %v7137
    %v7140 = vsub.f32 1.0, %v7138
    %v7141 = vsub.f32 1.0, %v7139
    %vm7142 = vcmp.ge.f32.partialorder %v7100, 0.0
    %vm7143 = vcmp.ge.f32.partialorder %v7101, 0.0
    %v7144 = vsub.f32 0.0, %v7140
    %v7145 = vsub.f32 0.0, %v7141
    %v7146 = vsel %vm7142, %v7140, %v7144
    %v7147 = vsel %vm7143, %v7141, %v7145
    %v7148 = vadd.f32 %v7146, 1.0
    %v7149 = vadd.f32 %v7147, 1.0
    %v7150 = vmul.f32 %v7098, %v7148
    %v7151 = vmul.f32 %v7099, %v7149
    %s7152 = scalar_lea.vmem %s20, 128
    %v7153 = vld [vmem:[%s7152] sm:$0xff]
    %v7154 = vld [vmem:[%s7152 + $0x8] sm:$0xff]
    %v7155 = vld [vmem:[%s7152 + $0x10] sm:$0xff]
    %v7156 = vld [vmem:[%s7152 + $0x18] sm:$0xff]
    %v7157 = vld [vmem:[%s7152 + $0x20] sm:$0xff]
    %v7158 = vld [vmem:[%s7152 + $0x28] sm:$0xff]
    %v7159 = vld [vmem:[%s7152 + $0x30] sm:$0xff]
    %v7160 = vld [vmem:[%s7152 + $0x38] sm:$0xff]
    %v7161 = vld [vmem:[%s7152 + $0x40] sm:$0xff]
    %v7162 = vld [vmem:[%s7152 + $0x48] sm:$0xff]
    %v7163 = vld [vmem:[%s7152 + $0x50] sm:$0xff]
    %v7164 = vld [vmem:[%s7152 + $0x58] sm:$0xff]
    %v7165 = vld [vmem:[%s7152 + $0x60] sm:$0xff]
    %v7166 = vld [vmem:[%s7152 + $0x68] sm:$0xff]
    %v7167 = vld [vmem:[%s7152 + $0x70] sm:$0xff]
    %v7168 = vld [vmem:[%s7152 + $0x78] sm:$0xff]
    %s7169 = scalar_lea.vmem %s21, 1
    %v7170 = vld [vmem:[%s7169] sm:$0x1]
    %v7172 = vlaneseq
    %v7173 = vshrl.u32 %v7172, 7
    %v7174 = vsub.s32 0, %v7173
    %v7175 = vrot.slane %v7170, %v7174
    %7177 = vmatprep.subr.mxu0 0.0
    %7178 = vmatpush1.msra.mxu0 %v7168
    %7179 = vmatprep.subr.mxu0 0.0
    %7180 = vmatpush1.msra.mxu0 %v7167
    %7181 = vmatprep.subr.mxu0 0.0
    %7182 = vmatpush1.msra.mxu0 %v7166
    %7183 = vmatprep.subr.mxu0 0.0
    %7184 = vmatpush1.msra.mxu0 %v7165
    %7185 = vmatprep.subr.mxu0 0.0
    %7186 = vmatpush1.msra.mxu0 %v7164
    %7187 = vmatprep.subr.mxu0 0.0
    %7188 = vmatpush1.msra.mxu0 %v7163
    %7189 = vmatprep.subr.mxu0 0.0
    %7190 = vmatpush1.msra.mxu0 %v7162
    %7191 = vmatprep.subr.mxu0 0.0
    %7192 = vmatpush1.msra.mxu0 %v7161
    %7193 = vmatprep.subr.mxu0 0.0
    %7194 = vmatpush1.msra.mxu0 %v7160
    %7195 = vmatprep.subr.mxu0 0.0
    %7196 = vmatpush1.msra.mxu0 %v7159
    %7197 = vmatprep.subr.mxu0 0.0
    %7198 = vmatpush1.msra.mxu0 %v7158
    %7199 = vmatprep.subr.mxu0 0.0
    %7200 = vmatpush1.msra.mxu0 %v7157
    %7201 = vmatprep.subr.mxu0 0.0
    %7202 = vmatpush1.msra.mxu0 %v7156
    %7203 = vmatprep.subr.mxu0 0.0
    %7204 = vmatpush1.msra.mxu0 %v7155
    %7205 = vmatprep.subr.mxu0 0.0
    %7206 = vmatpush1.msra.mxu0 %v7154
    %7207 = vmatprep.subr.mxu0 0.0
    %7208 = vmatpush1.msra.mxu0 %v7153
    %7209 = vmatprep.subr.mxu0 0.0
    %7210 = vmatpush2.msra.mxu0 0.0
    %7211 = vmatprep.subr.mxu0 0.0
    %7212 = vmatpush2.msra.mxu0 0.0
    %7213 = vmatprep.subr.mxu0 0.0
    %7214 = vmatpush2.msra.mxu0 0.0
    %7215 = vmatprep.subr.mxu0 0.0
    %7216 = vmatpush2.msra.mxu0 0.0
    %7217 = vmatprep.subr.mxu0 0.0
    %7218 = vmatpush2.msra.mxu0 0.0
    %7219 = vmatprep.subr.mxu0 0.0
    %7220 = vmatpush2.msra.mxu0 0.0
    %7221 = vmatprep.subr.mxu0 0.0
    %7222 = vmatpush2.msra.mxu0 0.0
    %7223 = vmatprep.subr.mxu0 0.0
    %7224 = vmatpush2.msra.mxu0 0.0
    %7225 = vmatprep.subr.mxu0 0.0
    %7226 = vmatpush2.msra.mxu0 0.0
    %7227 = vmatprep.subr.mxu0 0.0
    %7228 = vmatpush2.msra.mxu0 0.0
    %7229 = vmatprep.subr.mxu0 0.0
    %7230 = vmatpush2.msra.mxu0 0.0
    %7231 = vmatprep.subr.mxu0 0.0
    %7232 = vmatpush2.msra.mxu0 0.0
    %7233 = vmatprep.subr.mxu0 0.0
    %7234 = vmatpush2.msra.mxu0 0.0
    %7235 = vmatprep.subr.mxu0 0.0
    %7236 = vmatpush2.msra.mxu0 0.0
    %7237 = vmatprep.subr.mxu0 0.0
    %7238 = vmatpush2.msra.mxu0 0.0
    %7239 = vmatprep.subr.mxu0 0.0
    %7240 = vmatpush2.msra.mxu0 0.0
    %7241 = vmatprep.mubr.f32.mxu0 0.0
    %7242 = vmatmul.mubr.f32.gmra.mxu0 %v7150
    %v7243 = vpop.f32.mrf.mxu0
    %v7244 = vadd.f32 %v7175, %v7243
    %v7245 = vpop.f32.mrf.mxu0
    %7246 = vmatprep.mubr.f32.mxu0 0.0
    %7247 = vmatmul.mubr.f32.gmra.mxu0 %v7151
    %v7248 = vpop.f32.mrf.mxu0
    %v7249 = vadd.f32 %v7175, %v7248
    %v7250 = vpop.f32.mrf.mxu0
    %7251 = vdwg.mxu0
    %v7252 = vadd.f32 %v6956, %v7244
    %v7253 = vadd.f32 %v6957, %v7249
    %7254 = vst.msk [vmem:[#allocation10] sm:$0xff] %vm133, %v7252
    %7255 = vst.msk [vmem:[#allocation10 + $0x8] sm:$0xff] %vm133, %v7253
    // Predicated region
    $region106: #{tpu_custom_call.1} parent=1 // pred_check
      _
    $region107: #{tpu_custom_call.1} parent=1 // pred_check_branch
      %7257 = sbr.rel (0) target = $region109
    $region108: #{tpu_custom_call.1} parent=1 // pred_region
      %s7259 = ssub.s32 256, 256
      %7260 = vsyncadd [#allocation4], %s7259
      %s7261 = sshll.u32 [#allocation10], 4
      %s7262 = int_to_ptr.vmem [resolvable:$true] %s7261
      %7267 = dma.vmem_to_hbm [thread:$0]  %s7262, 256, %s22, [#allocation4], 128, 128, 8
    $region109: #{tpu_custom_call.1} parent=1 // pred_fallthru
      _
    // Predicated region
    $region110: #{tpu_custom_call.1} parent=1 // pred_check
      _
    $region111: #{tpu_custom_call.1} parent=1 // pred_check_branch
      %7269 = sbr.rel (0) target = $region113
    $region112: #{tpu_custom_call.1} parent=1 // pred_region
      %7270 = dma.done [#allocation4], 256
    $region113: #{tpu_custom_call.1} parent=1 // pred_fallthru
      _
    %7271 = vsyncpa [#allocation3], 1
    %7272 = vsyncpa [#allocation6], 1
    %7273 = vsyncpa [#allocation9], 1
    %7274 = vsyncpa [#allocation4], 1

</llo_original>
